<compile_context>
chip_gen: v7x
topology: tpu7x:2x2x1
jax: 0.10.0
libtpu: 0.0.40
codegen_flags: <defaults>
</compile_context>

<pallas_src>
import functools

import jax
import jax.numpy as jnp
from jax.experimental import pallas as pl
from jax.experimental.pallas import tpu as pltpu

# ----------------------------- small config --------------------------------
ARCH = dict(embed_dims=32, num_layers=2, num_heads=4, feedforward_channels=64)
IMG_SIZE = 16
PATCH_SIZE = 4
IN_CHANNELS = 6          # "Color_Merge" default in_channels = 6
NUM_CLASSES = 10
HEAD_PAD = 128           # classifier output padded to one full lane width
LN_EPS = 1e-5            # torch.nn.LayerNorm default eps


# --------------------------- in-kernel helpers ------------------------------
def _layernorm(x, g, b):
    # torch.nn.LayerNorm semantics: biased variance, eps inside rsqrt.
    mu = jnp.mean(x, axis=-1, keepdims=True)
    xc = x - mu
    var = jnp.mean(xc * xc, axis=-1, keepdims=True)
    return xc * jax.lax.rsqrt(var + LN_EPS) * g + b


def _gelu_tanh(y):
    # TODO(synk): torch.nn.GELU default is exact-erf; tanh approximation keeps
    # the transcendental on the EUP slot (~1e-3 relative error in the tails)
    # because erf has no confirmed Mosaic lowering.
    c = 0.7978845608028654  # sqrt(2/pi)
    return 0.5 * y * (1.0 + jnp.tanh(c * (y + 0.044715 * y * y * y)))


def _head_attention(q, k, v, scale):
    # softmax(q k^T * scale) v for one head, f32 on MXU/VPU/EUP.
    s = jax.lax.dot_general(q, k, (((1,), (1,)), ((), ())),
                            preferred_element_type=jnp.float32) * scale
    s = s - jnp.max(s, axis=-1, keepdims=True)
    p = jnp.exp(s)
    # Exact divide (review: approx reciprocal deviates from the torch softmax).
    p = p / jnp.sum(p, axis=-1, keepdims=True)
    return jnp.dot(p, v, preferred_element_type=jnp.float32)


# ------------------------------ fused kernel --------------------------------
def _vit_kernel(patches_ref, add_ref, patch_w_ref, const_ref,
                qkv_w_ref, proj_w_ref, fc1_w_ref, fc2_w_ref,
                norm_vecs_ref, fc1_b_ref, head_wb_ref,
                out_ref, *, batch, seq, num_layers, num_heads, head_dim):
    D = num_heads * head_dim
    scale = float(head_dim) ** -0.5

    # --- PatchEmbed on the whole stacked (batch*seq, Kp) slab.  Each batch's
    #     cls slot is a zero row in `patches`; its embedding (cls_token +
    #     pos[0]) comes from the additive slab, which also carries the conv
    #     bias + pos_embed for the patch rows.  drop_after_pos p=0 -> id,
    #     resize_pos_embed == identity (same src/dst patch resolution).
    tok = jnp.dot(patches_ref[0], patch_w_ref[...],
                  preferred_element_type=jnp.float32)
    h = tok + add_ref[0]                                      # (batch*seq, D)

    cvec = const_ref[...]                  # rows: pre_g, pre_b, fin_g, fin_b
    h = _layernorm(h, cvec[0:1], cvec[1:2])

    # --- transformer encoder layers (layer_scale=0, drop_path=0 -> residual)
    for l in range(num_layers):
        lv = norm_vecs_ref[l]              # (9, D) per-layer vector params
        ln1_g, ln1_b = lv[0:1], lv[1:2]
        q_bias, k_bias, v_bias = lv[2:3], lv[3:4], lv[4:5]
        proj_b = lv[5:6]
        ln2_g, ln2_b = lv[6:7], lv[7:8]
        fc2_b = lv[8:9]

        # ---- multi-head self-attention ----
        y = _layernorm(h, ln1_g, ln1_b)
        qkv = jnp.dot(y, qkv_w_ref[l], preferred_element_type=jnp.float32)
        # Hoist the three contiguous 32-lane slabs once, then take 8-lane
        # per-head slices from them (fewer lane shuffles than slicing the
        # 96-lane qkv slab three times per head).
        q_all = qkv[:, :D] + q_bias
        k_all = qkv[:, D:2 * D] + k_bias
        v_all = qkv[:, 2 * D:3 * D] + v_bias
        pw = proj_w_ref[l]                                     # (D, D)

        per_batch = []
        for b in range(batch):             # attention must not mix batches
            r0 = b * seq
            qb = q_all[r0:r0 + seq]
            kb = k_all[r0:r0 + seq]
            vb = v_all[r0:r0 + seq]
            acc = None
            for hd in range(num_heads):
                lo = hd * head_dim
                o = _head_attention(qb[:, lo:lo + head_dim],
                                    kb[:, lo:lo + head_dim],
                                    vb[:, lo:lo + head_dim], scale)
                # Output projection folded into the head loop:
                #   concat(heads) @ W == sum_h head_h @ W[h*Dh:(h+1)*Dh, :]
                contrib = jnp.dot(o, pw[lo:lo + head_dim, :],
                                  preferred_element_type=jnp.float32)
                acc = contrib if acc is None else acc + contrib
            per_batch.append(acc)
        attn = per_batch[0] if batch == 1 else jnp.concatenate(per_batch, 0)
        h = h + attn + proj_b

        # ---- FFN ----
        y = _layernorm(h, ln2_g, ln2_b)
        y = _gelu_tanh(jnp.dot(y, fc1_w_ref[l],
                               preferred_element_type=jnp.float32)
                       + fc1_b_ref[l])
        y = jnp.dot(y, fc2_w_ref[l], preferred_element_type=jnp.float32) + fc2_b
        h = h + y

    # --- final_norm + cls head on the cls rows only (LayerNorm is per-row,
    #     so this is identical to normalizing all tokens then taking row 0).
    cls_rows = [h[b * seq:b * seq + 1, :] for b in range(batch)]
    cls = cls_rows[0] if batch == 1 else jnp.concatenate(cls_rows, axis=0)
    cls = _layernorm(cls, cvec[2:3], cvec[3:4])
    hw = head_wb_ref[...]                  # (D+1, HEAD_PAD): W rows + bias row
    logits = jnp.dot(cls, hw[:D, :],
                     preferred_element_type=jnp.float32) + hw[D:D + 1, :]
    out_ref[0] = logits                    # lane-dense (batch, 128) store


# ----------------------------- parameters ----------------------------------
def init_params(key):
    """Module-like (torch-shaped) parameters."""
    D = ARCH["embed_dims"]
    FF = ARCH["feedforward_channels"]
    L = ARCH["num_layers"]
    Kp = IN_CHANNELS * PATCH_SIZE * PATCH_SIZE
    N = (IMG_SIZE // PATCH_SIZE) ** 2 + 1

    ks = jax.random.split(key, 8)

    def nrm(k, shape, s=0.02):
        return (s * jax.random.normal(k, shape)).astype(jnp.float32)

    head_w = jnp.zeros((D, HEAD_PAD), jnp.float32)
    head_w = head_w.at[:, :NUM_CLASSES].set(nrm(ks[3], (D, NUM_CLASSES)))

    return dict(
        # Conv2d weight flattened to (C*ph*pw, D); porting torch weights needs
        # conv_w.reshape(D, C*ph*pw).T with (C, ph, pw) flatten order.
        patch_w=nrm(ks[0], (Kp, D)),
        patch_b=jnp.zeros((D,), jnp.float32),
        cls_token=nrm(ks[1], (1, D)),
        pos_embed=nrm(ks[2], (N, D)),
        pre_g=jnp.ones((D,), jnp.float32), pre_b=jnp.zeros((D,), jnp.float32),
        ln1_g=jnp.ones((L, D), jnp.float32), ln1_b=jnp.zeros((L, D), jnp.float32),
        qkv_w=nrm(ks[4], (L, D, 3 * D)),
        qkv_b=jnp.zeros((L, 3 * D), jnp.float32),
        proj_w=nrm(ks[5], (L, D, D)),
        proj_b=jnp.zeros((L, D), jnp.float32),
        ln2_g=jnp.ones((L, D), jnp.float32), ln2_b=jnp.zeros((L, D), jnp.float32),
        fc1_w=nrm(ks[6], (L, D, FF)),
        fc1_b=jnp.zeros((L, FF), jnp.float32),
        fc2_w=nrm(ks[7], (L, FF, D)),
        fc2_b=jnp.zeros((L, D), jnp.float32),
        fin_g=jnp.ones((D,), jnp.float32), fin_b=jnp.zeros((D,), jnp.float32),
        head_w=head_w,
        head_b=jnp.zeros((1, HEAD_PAD), jnp.float32),
    )


def pack_params(raw):
    """Pack the many tiny vectors into few kernel inputs (cuts DMA setups)."""
    D = ARCH["embed_dims"]
    pos = raw["pos_embed"]                                    # (N, D)
    # Row 0: cls_token + pos[0]; rows 1..: conv bias + pos[i].
    embed_add = jnp.concatenate(
        [raw["cls_token"] + pos[0:1],
         raw["patch_b"][None, :] + pos[1:]], axis=0)          # (N, D)
    qkv_b = raw["qkv_b"]
    norm_vecs = jnp.stack(
        [raw["ln1_g"], raw["ln1_b"],
         qkv_b[:, :D], qkv_b[:, D:2 * D], qkv_b[:, 2 * D:],
         raw["proj_b"], raw["ln2_g"], raw["ln2_b"], raw["fc2_b"]],
        axis=1)                                               # (L, 9, D)
    const_vecs = jnp.stack(
        [raw["pre_g"], raw["pre_b"], raw["fin_g"], raw["fin_b"]], axis=0)
    head_wb = jnp.concatenate([raw["head_w"], raw["head_b"]], axis=0)
    return dict(
        patch_w=raw["patch_w"], embed_add=embed_add, const_vecs=const_vecs,
        qkv_w=raw["qkv_w"], proj_w=raw["proj_w"],
        fc1_w=raw["fc1_w"], fc2_w=raw["fc2_w"],
        norm_vecs=norm_vecs, fc1_b=raw["fc1_b"][:, None, :],
        head_wb=head_wb)


# ----------------------------- forward pass ---------------------------------
def vit_forward(x, p, batch_blocks=1):
    """batch_blocks=1 (default) is best on single-TC v5e/v6e; on v7x with
    larger batches use batch_blocks=2 so both TensorCores get a stacked slab."""
    B, C, Hi, Wi = x.shape
    assert B % batch_blocks == 0
    bb = B // batch_blocks
    D = ARCH["embed_dims"]
    FF = ARCH["feedforward_channels"]
    L = ARCH["num_layers"]
    Hh = ARCH["num_heads"]
    Dh = D // Hh
    ps = PATCH_SIZE
    Hp, Wp = Hi // ps, Wi // ps
    Np = Hp * Wp
    N = Np + 1
    Kp = C * ps * ps

    # Patchify (Conv2d with kernel==stride==patch) and insert a zero row per
    # batch for the cls slot so the whole batch is one stacked GEMM operand.
    # TODO(synk): at real image resolutions fold this transpose into the
    # kernel's input DMA via an index_map over the patch grid.
    patches = x.reshape(B, C, Hp, ps, Wp, ps).transpose(0, 2, 4, 1, 3, 5)
    patches = patches.reshape(B, Np, Kp)
    patches = jnp.concatenate([jnp.zeros((B, 1, Kp), x.dtype), patches], axis=1)
    patches = patches.reshape(batch_blocks, bb * N, Kp)

    # cls/pos/conv-bias additive slab, tiled over the batch.
    add_full = jnp.tile(p["embed_add"], (B, 1)).reshape(batch_blocks, bb * N, D)

    c2 = lambda i: (0, 0)
    c3 = lambda i: (0, 0, 0)
    in_specs = [
        pl.BlockSpec((1, bb * N, Kp), lambda i: (i, 0, 0)),   # patches
        pl.BlockSpec((1, bb * N, D), lambda i: (i, 0, 0)),    # embed add slab
        pl.BlockSpec((Kp, D), c2),                            # patch_w
        pl.BlockSpec((4, D), c2),                             # pre/final norm
        pl.BlockSpec((L, D, 3 * D), c3),                      # qkv weight
        pl.BlockSpec((L, D, D), c3),                          # proj weight
        pl.BlockSpec((L, D, FF), c3),                         # fc1 weight
        pl.BlockSpec((L, FF, D), c3),                         # fc2 weight
        pl.BlockSpec((L, 9, D), c3),                          # per-layer vecs
        pl.BlockSpec((L, 1, FF), c3),                         # fc1 bias
        pl.BlockSpec((D + 1, HEAD_PAD), c2),                  # head W|b (padded)
    ]
    out_spec = pl.BlockSpec((1, bb, HEAD_PAD), lambda i: (i, 0, 0))

    kernel = functools.partial(_vit_kernel, batch=bb, seq=N,
                               num_layers=L, num_heads=Hh, head_dim=Dh)
    logits = pl.pallas_call(
        kernel,
        out_shape=jax.ShapeDtypeStruct((batch_blocks, bb, HEAD_PAD),
                                       jnp.float32),
        grid=(batch_blocks,),
        in_specs=in_specs,
        out_specs=out_spec,
        compiler_params=pltpu.CompilerParams(
            # With batch_blocks>1 on v7x the two TensorCores split the grid;
            # with the default single step this is a no-op.
            dimension_semantics=("parallel",)),
    )(patches, add_full, p["patch_w"], p["const_vecs"],
      p["qkv_w"], p["proj_w"], p["fc1_w"], p["fc2_w"],
      p["norm_vecs"], p["fc1_b"], p["head_wb"])

    return logits.reshape(B, HEAD_PAD)[:, :NUM_CLASSES]


# ------------------------------- main ---------------------------------------
if __name__ == "__main__":
    key = jax.random.PRNGKey(0)
    kx, kp = jax.random.split(key)
    params = pack_params(init_params(kp))
    x = jax.random.normal(kx, (2, IN_CHANNELS, IMG_SIZE, IMG_SIZE),
                          dtype=jnp.float32)

    out = jax.jit(vit_forward)(x, params)
    out = jax.block_until_ready(out)
    assert out.shape == (2, NUM_CLASSES), out.shape
    assert bool(jnp.all(jnp.isfinite(out)))
    print("KERNEL_OK")
</pallas_src>

<mosaic_0001>
module attributes {stable_mosaic.version = 11 : i64} {
  func.func @_vit_kernel(%arg0: i32, %arg1: memref<1x34x96xf32, #tpu.memory_space<vmem>>, %arg2: memref<1x34x32xf32, #tpu.memory_space<vmem>>, %arg3: memref<96x32xf32, #tpu.memory_space<vmem>>, %arg4: memref<4x32xf32, #tpu.memory_space<vmem>>, %arg5: memref<2x32x96xf32, #tpu.memory_space<vmem>>, %arg6: memref<2x32x32xf32, #tpu.memory_space<vmem>>, %arg7: memref<2x32x64xf32, #tpu.memory_space<vmem>>, %arg8: memref<2x64x32xf32, #tpu.memory_space<vmem>>, %arg9: memref<2x9x32xf32, #tpu.memory_space<vmem>>, %arg10: memref<2x1x64xf32, #tpu.memory_space<vmem>>, %arg11: memref<33x128xf32, #tpu.memory_space<vmem>>, %arg12: memref<1x2x128xf32, #tpu.memory_space<vmem>>) attributes {dimension_semantics = [#tpu.dimension_semantics<parallel>], iteration_bounds = array<i64: 1>, scalar_prefetch = 0 : i64, scratch_operands = 0 : i64, tpu.core_type = #tpu.core_type<tc>, window_params = [{transform_indices = @transform_0, window_bounds = array<i64: 1, 34, 96>}, {transform_indices = @transform_1, window_bounds = array<i64: 1, 34, 32>}, {pipeline_mode = #tpu.pipeline_mode<synchronous>, transform_indices = @transform_2, window_bounds = array<i64: 96, 32>}, {pipeline_mode = #tpu.pipeline_mode<synchronous>, transform_indices = @transform_3, window_bounds = array<i64: 4, 32>}, {pipeline_mode = #tpu.pipeline_mode<synchronous>, transform_indices = @transform_4, window_bounds = array<i64: 2, 32, 96>}, {pipeline_mode = #tpu.pipeline_mode<synchronous>, transform_indices = @transform_5, window_bounds = array<i64: 2, 32, 32>}, {pipeline_mode = #tpu.pipeline_mode<synchronous>, transform_indices = @transform_6, window_bounds = array<i64: 2, 32, 64>}, {pipeline_mode = #tpu.pipeline_mode<synchronous>, transform_indices = @transform_7, window_bounds = array<i64: 2, 64, 32>}, {pipeline_mode = #tpu.pipeline_mode<synchronous>, transform_indices = @transform_8, window_bounds = array<i64: 2, 9, 32>}, {pipeline_mode = #tpu.pipeline_mode<synchronous>, transform_indices = @transform_9, window_bounds = array<i64: 2, 1, 64>}, {pipeline_mode = #tpu.pipeline_mode<synchronous>, transform_indices = @transform_10, window_bounds = array<i64: 33, 128>}, {transform_indices = @transform_11, window_bounds = array<i64: 1, 2, 128>}]} {
    %c0 = arith.constant 0 : index
    %c0_0 = arith.constant 0 : index
    %c0_1 = arith.constant 0 : index
    %0 = vector.load %arg1[%c0, %c0_0, %c0_1] : memref<1x34x96xf32, #tpu.memory_space<vmem>>, vector<1x34x96xf32>
    %1 = vector.shape_cast %0 : vector<1x34x96xf32> to vector<34x96xf32>
    %c0_2 = arith.constant 0 : index
    %c0_3 = arith.constant 0 : index
    %2 = vector.load %arg3[%c0_2, %c0_3] : memref<96x32xf32, #tpu.memory_space<vmem>>, vector<96x32xf32>
    %cst = arith.constant dense<0.000000e+00> : vector<34x32xf32>
    %3 = tpu.matmul %1, %2, %cst {dimension_numbers = #tpu.dot_dimension_numbers<[1], [0], [0], [1], [0, 0, 1, 1], [], []>} : vector<34x96xf32>, vector<96x32xf32>, vector<34x32xf32> -> vector<34x32xf32>
    %c0_4 = arith.constant 0 : index
    %c0_5 = arith.constant 0 : index
    %c0_6 = arith.constant 0 : index
    %4 = vector.load %arg2[%c0_4, %c0_5, %c0_6] : memref<1x34x32xf32, #tpu.memory_space<vmem>>, vector<1x34x32xf32>
    %5 = vector.shape_cast %4 : vector<1x34x32xf32> to vector<34x32xf32>
    %6 = arith.addf %3, %5 : vector<34x32xf32>
    %c0_7 = arith.constant 0 : index
    %c0_8 = arith.constant 0 : index
    %7 = vector.load %arg4[%c0_7, %c0_8] : memref<4x32xf32, #tpu.memory_space<vmem>>, vector<4x32xf32>
    %8 = vector.extract_strided_slice %7 {offsets = [0, 0], sizes = [1, 32], strides = [1, 1]} : vector<4x32xf32> to vector<1x32xf32>
    %9 = vector.extract_strided_slice %7 {offsets = [1, 0], sizes = [1, 32], strides = [1, 1]} : vector<4x32xf32> to vector<1x32xf32>
    %cst_9 = arith.constant dense<0.000000e+00> : vector<34xf32>
    %10 = vector.multi_reduction <add>, %6, %cst_9 [1] : vector<34x32xf32> to vector<34xf32>
    %11 = vector.shape_cast %10 : vector<34xf32> to vector<34x1xf32>
    %cst_10 = arith.constant 3.200000e+01 : f32
    %12 = vector.broadcast %cst_10 : f32 to vector<34x1xf32>
    %13 = arith.divf %11, %12 : vector<34x1xf32>
    %14 = vector.broadcast %13 : vector<34x1xf32> to vector<34x32xf32>
    %15 = arith.subf %6, %14 : vector<34x32xf32>
    %16 = arith.mulf %15, %15 : vector<34x32xf32>
    %cst_11 = arith.constant dense<0.000000e+00> : vector<34xf32>
    %17 = vector.multi_reduction <add>, %16, %cst_11 [1] : vector<34x32xf32> to vector<34xf32>
    %18 = vector.shape_cast %17 : vector<34xf32> to vector<34x1xf32>
    %cst_12 = arith.constant 3.200000e+01 : f32
    %19 = vector.broadcast %cst_12 : f32 to vector<34x1xf32>
    %20 = arith.divf %18, %19 : vector<34x1xf32>
    %cst_13 = arith.constant 9.99999974E-6 : f32
    %21 = vector.broadcast %cst_13 : f32 to vector<34x1xf32>
    %22 = arith.addf %20, %21 : vector<34x1xf32>
    %23 = math.rsqrt %22 : vector<34x1xf32>
    %24 = vector.broadcast %23 : vector<34x1xf32> to vector<34x32xf32>
    %25 = arith.mulf %15, %24 : vector<34x32xf32>
    %26 = vector.broadcast %8 : vector<1x32xf32> to vector<34x32xf32>
    %27 = arith.mulf %25, %26 : vector<34x32xf32>
    %28 = vector.broadcast %9 : vector<1x32xf32> to vector<34x32xf32>
    %29 = arith.addf %27, %28 : vector<34x32xf32>
    %c0_14 = arith.constant 0 : index
    %c0_15 = arith.constant 0 : index
    %c0_16 = arith.constant 0 : index
    %30 = vector.load %arg9[%c0_14, %c0_15, %c0_16] : memref<2x9x32xf32, #tpu.memory_space<vmem>>, vector<1x9x32xf32>
    %31 = vector.shape_cast %30 : vector<1x9x32xf32> to vector<9x32xf32>
    %32 = vector.extract_strided_slice %31 {offsets = [0, 0], sizes = [1, 32], strides = [1, 1]} : vector<9x32xf32> to vector<1x32xf32>
    %33 = vector.extract_strided_slice %31 {offsets = [1, 0], sizes = [1, 32], strides = [1, 1]} : vector<9x32xf32> to vector<1x32xf32>
    %34 = vector.extract_strided_slice %31 {offsets = [2, 0], sizes = [1, 32], strides = [1, 1]} : vector<9x32xf32> to vector<1x32xf32>
    %35 = vector.extract_strided_slice %31 {offsets = [3, 0], sizes = [1, 32], strides = [1, 1]} : vector<9x32xf32> to vector<1x32xf32>
    %36 = vector.extract_strided_slice %31 {offsets = [4, 0], sizes = [1, 32], strides = [1, 1]} : vector<9x32xf32> to vector<1x32xf32>
    %37 = vector.extract_strided_slice %31 {offsets = [5, 0], sizes = [1, 32], strides = [1, 1]} : vector<9x32xf32> to vector<1x32xf32>
    %38 = vector.extract_strided_slice %31 {offsets = [6, 0], sizes = [1, 32], strides = [1, 1]} : vector<9x32xf32> to vector<1x32xf32>
    %39 = vector.extract_strided_slice %31 {offsets = [7, 0], sizes = [1, 32], strides = [1, 1]} : vector<9x32xf32> to vector<1x32xf32>
    %40 = vector.extract_strided_slice %31 {offsets = [8, 0], sizes = [1, 32], strides = [1, 1]} : vector<9x32xf32> to vector<1x32xf32>
    %cst_17 = arith.constant dense<0.000000e+00> : vector<34xf32>
    %41 = vector.multi_reduction <add>, %29, %cst_17 [1] : vector<34x32xf32> to vector<34xf32>
    %42 = vector.shape_cast %41 : vector<34xf32> to vector<34x1xf32>
    %cst_18 = arith.constant 3.200000e+01 : f32
    %43 = vector.broadcast %cst_18 : f32 to vector<34x1xf32>
    %44 = arith.divf %42, %43 : vector<34x1xf32>
    %45 = vector.broadcast %44 : vector<34x1xf32> to vector<34x32xf32>
    %46 = arith.subf %29, %45 : vector<34x32xf32>
    %47 = arith.mulf %46, %46 : vector<34x32xf32>
    %cst_19 = arith.constant dense<0.000000e+00> : vector<34xf32>
    %48 = vector.multi_reduction <add>, %47, %cst_19 [1] : vector<34x32xf32> to vector<34xf32>
    %49 = vector.shape_cast %48 : vector<34xf32> to vector<34x1xf32>
    %cst_20 = arith.constant 3.200000e+01 : f32
    %50 = vector.broadcast %cst_20 : f32 to vector<34x1xf32>
    %51 = arith.divf %49, %50 : vector<34x1xf32>
    %cst_21 = arith.constant 9.99999974E-6 : f32
    %52 = vector.broadcast %cst_21 : f32 to vector<34x1xf32>
    %53 = arith.addf %51, %52 : vector<34x1xf32>
    %54 = math.rsqrt %53 : vector<34x1xf32>
    %55 = vector.broadcast %54 : vector<34x1xf32> to vector<34x32xf32>
    %56 = arith.mulf %46, %55 : vector<34x32xf32>
    %57 = vector.broadcast %32 : vector<1x32xf32> to vector<34x32xf32>
    %58 = arith.mulf %56, %57 : vector<34x32xf32>
    %59 = vector.broadcast %33 : vector<1x32xf32> to vector<34x32xf32>
    %60 = arith.addf %58, %59 : vector<34x32xf32>
    %c0_22 = arith.constant 0 : index
    %c0_23 = arith.constant 0 : index
    %c0_24 = arith.constant 0 : index
    %61 = vector.load %arg5[%c0_22, %c0_23, %c0_24] : memref<2x32x96xf32, #tpu.memory_space<vmem>>, vector<1x32x96xf32>
    %62 = vector.shape_cast %61 : vector<1x32x96xf32> to vector<32x96xf32>
    %cst_25 = arith.constant dense<0.000000e+00> : vector<34x96xf32>
    %63 = tpu.matmul %60, %62, %cst_25 {dimension_numbers = #tpu.dot_dimension_numbers<[1], [0], [0], [1], [0, 0, 1, 1], [], []>} : vector<34x32xf32>, vector<32x96xf32>, vector<34x96xf32> -> vector<34x96xf32>
    %64 = vector.extract_strided_slice %63 {offsets = [0, 0], sizes = [34, 32], strides = [1, 1]} : vector<34x96xf32> to vector<34x32xf32>
    %65 = vector.broadcast %34 : vector<1x32xf32> to vector<34x32xf32>
    %66 = arith.addf %64, %65 : vector<34x32xf32>
    %67 = vector.extract_strided_slice %63 {offsets = [0, 32], sizes = [34, 32], strides = [1, 1]} : vector<34x96xf32> to vector<34x32xf32>
    %68 = vector.broadcast %35 : vector<1x32xf32> to vector<34x32xf32>
    %69 = arith.addf %67, %68 : vector<34x32xf32>
    %70 = vector.extract_strided_slice %63 {offsets = [0, 64], sizes = [34, 32], strides = [1, 1]} : vector<34x96xf32> to vector<34x32xf32>
    %71 = vector.broadcast %36 : vector<1x32xf32> to vector<34x32xf32>
    %72 = arith.addf %70, %71 : vector<34x32xf32>
    %c0_26 = arith.constant 0 : index
    %c0_27 = arith.constant 0 : index
    %c0_28 = arith.constant 0 : index
    %73 = vector.load %arg6[%c0_26, %c0_27, %c0_28] : memref<2x32x32xf32, #tpu.memory_space<vmem>>, vector<1x32x32xf32>
    %74 = vector.shape_cast %73 : vector<1x32x32xf32> to vector<32x32xf32>
    %75 = vector.extract_strided_slice %66 {offsets = [0, 0], sizes = [17, 32], strides = [1, 1]} : vector<34x32xf32> to vector<17x32xf32>
    %76 = vector.extract_strided_slice %69 {offsets = [0, 0], sizes = [17, 32], strides = [1, 1]} : vector<34x32xf32> to vector<17x32xf32>
    %77 = vector.extract_strided_slice %72 {offsets = [0, 0], sizes = [17, 32], strides = [1, 1]} : vector<34x32xf32> to vector<17x32xf32>
    %78 = vector.extract_strided_slice %75 {offsets = [0, 0], sizes = [17, 8], strides = [1, 1]} : vector<17x32xf32> to vector<17x8xf32>
    %79 = vector.extract_strided_slice %76 {offsets = [0, 0], sizes = [17, 8], strides = [1, 1]} : vector<17x32xf32> to vector<17x8xf32>
    %80 = vector.extract_strided_slice %77 {offsets = [0, 0], sizes = [17, 8], strides = [1, 1]} : vector<17x32xf32> to vector<17x8xf32>
    %cst_29 = arith.constant dense<0.000000e+00> : vector<17x17xf32>
    %81 = tpu.matmul %78, %79, %cst_29 {dimension_numbers = #tpu.dot_dimension_numbers<[1], [1], [0], [0], [0, 0, 1, 0], [], []>} : vector<17x8xf32>, vector<17x8xf32>, vector<17x17xf32> -> vector<17x17xf32>
    %cst_30 = arith.constant 0.353553385 : f32
    %82 = vector.broadcast %cst_30 : f32 to vector<17x17xf32>
    %83 = arith.mulf %81, %82 : vector<17x17xf32>
    %cst_31 = arith.constant dense<0xFF800000> : vector<17xf32>
    %84 = vector.multi_reduction <maximumf>, %83, %cst_31 [1] : vector<17x17xf32> to vector<17xf32>
    %85 = vector.shape_cast %84 : vector<17xf32> to vector<17x1xf32>
    %86 = vector.broadcast %85 : vector<17x1xf32> to vector<17x17xf32>
    %87 = arith.subf %83, %86 : vector<17x17xf32>
    %88 = math.exp %87 : vector<17x17xf32>
    %cst_32 = arith.constant dense<0.000000e+00> : vector<17xf32>
    %89 = vector.multi_reduction <add>, %88, %cst_32 [1] : vector<17x17xf32> to vector<17xf32>
    %90 = vector.shape_cast %89 : vector<17xf32> to vector<17x1xf32>
    %91 = vector.broadcast %90 : vector<17x1xf32> to vector<17x17xf32>
    %92 = arith.divf %88, %91 : vector<17x17xf32>
    %cst_33 = arith.constant dense<0.000000e+00> : vector<17x8xf32>
    %93 = tpu.matmul %92, %80, %cst_33 {dimension_numbers = #tpu.dot_dimension_numbers<[1], [0], [0], [1], [0, 0, 1, 1], [], []>} : vector<17x17xf32>, vector<17x8xf32>, vector<17x8xf32> -> vector<17x8xf32>
    %94 = vector.extract_strided_slice %74 {offsets = [0, 0], sizes = [8, 32], strides = [1, 1]} : vector<32x32xf32> to vector<8x32xf32>
    %cst_34 = arith.constant dense<0.000000e+00> : vector<17x32xf32>
    %95 = tpu.matmul %93, %94, %cst_34 {dimension_numbers = #tpu.dot_dimension_numbers<[1], [0], [0], [1], [0, 0, 1, 1], [], []>} : vector<17x8xf32>, vector<8x32xf32>, vector<17x32xf32> -> vector<17x32xf32>
    %96 = vector.extract_strided_slice %75 {offsets = [0, 8], sizes = [17, 8], strides = [1, 1]} : vector<17x32xf32> to vector<17x8xf32>
    %97 = vector.extract_strided_slice %76 {offsets = [0, 8], sizes = [17, 8], strides = [1, 1]} : vector<17x32xf32> to vector<17x8xf32>
    %98 = vector.extract_strided_slice %77 {offsets = [0, 8], sizes = [17, 8], strides = [1, 1]} : vector<17x32xf32> to vector<17x8xf32>
    %cst_35 = arith.constant dense<0.000000e+00> : vector<17x17xf32>
    %99 = tpu.matmul %96, %97, %cst_35 {dimension_numbers = #tpu.dot_dimension_numbers<[1], [1], [0], [0], [0, 0, 1, 0], [], []>} : vector<17x8xf32>, vector<17x8xf32>, vector<17x17xf32> -> vector<17x17xf32>
    %cst_36 = arith.constant 0.353553385 : f32
    %100 = vector.broadcast %cst_36 : f32 to vector<17x17xf32>
    %101 = arith.mulf %99, %100 : vector<17x17xf32>
    %cst_37 = arith.constant dense<0xFF800000> : vector<17xf32>
    %102 = vector.multi_reduction <maximumf>, %101, %cst_37 [1] : vector<17x17xf32> to vector<17xf32>
    %103 = vector.shape_cast %102 : vector<17xf32> to vector<17x1xf32>
    %104 = vector.broadcast %103 : vector<17x1xf32> to vector<17x17xf32>
    %105 = arith.subf %101, %104 : vector<17x17xf32>
    %106 = math.exp %105 : vector<17x17xf32>
    %cst_38 = arith.constant dense<0.000000e+00> : vector<17xf32>
    %107 = vector.multi_reduction <add>, %106, %cst_38 [1] : vector<17x17xf32> to vector<17xf32>
    %108 = vector.shape_cast %107 : vector<17xf32> to vector<17x1xf32>
    %109 = vector.broadcast %108 : vector<17x1xf32> to vector<17x17xf32>
    %110 = arith.divf %106, %109 : vector<17x17xf32>
    %cst_39 = arith.constant dense<0.000000e+00> : vector<17x8xf32>
    %111 = tpu.matmul %110, %98, %cst_39 {dimension_numbers = #tpu.dot_dimension_numbers<[1], [0], [0], [1], [0, 0, 1, 1], [], []>} : vector<17x17xf32>, vector<17x8xf32>, vector<17x8xf32> -> vector<17x8xf32>
    %112 = vector.extract_strided_slice %74 {offsets = [8, 0], sizes = [8, 32], strides = [1, 1]} : vector<32x32xf32> to vector<8x32xf32>
    %cst_40 = arith.constant dense<0.000000e+00> : vector<17x32xf32>
    %113 = tpu.matmul %111, %112, %cst_40 {dimension_numbers = #tpu.dot_dimension_numbers<[1], [0], [0], [1], [0, 0, 1, 1], [], []>} : vector<17x8xf32>, vector<8x32xf32>, vector<17x32xf32> -> vector<17x32xf32>
    %114 = arith.addf %95, %113 : vector<17x32xf32>
    %115 = vector.extract_strided_slice %75 {offsets = [0, 16], sizes = [17, 8], strides = [1, 1]} : vector<17x32xf32> to vector<17x8xf32>
    %116 = vector.extract_strided_slice %76 {offsets = [0, 16], sizes = [17, 8], strides = [1, 1]} : vector<17x32xf32> to vector<17x8xf32>
    %117 = vector.extract_strided_slice %77 {offsets = [0, 16], sizes = [17, 8], strides = [1, 1]} : vector<17x32xf32> to vector<17x8xf32>
    %cst_41 = arith.constant dense<0.000000e+00> : vector<17x17xf32>
    %118 = tpu.matmul %115, %116, %cst_41 {dimension_numbers = #tpu.dot_dimension_numbers<[1], [1], [0], [0], [0, 0, 1, 0], [], []>} : vector<17x8xf32>, vector<17x8xf32>, vector<17x17xf32> -> vector<17x17xf32>
    %cst_42 = arith.constant 0.353553385 : f32
    %119 = vector.broadcast %cst_42 : f32 to vector<17x17xf32>
    %120 = arith.mulf %118, %119 : vector<17x17xf32>
    %cst_43 = arith.constant dense<0xFF800000> : vector<17xf32>
    %121 = vector.multi_reduction <maximumf>, %120, %cst_43 [1] : vector<17x17xf32> to vector<17xf32>
    %122 = vector.shape_cast %121 : vector<17xf32> to vector<17x1xf32>
    %123 = vector.broadcast %122 : vector<17x1xf32> to vector<17x17xf32>
    %124 = arith.subf %120, %123 : vector<17x17xf32>
    %125 = math.exp %124 : vector<17x17xf32>
    %cst_44 = arith.constant dense<0.000000e+00> : vector<17xf32>
    %126 = vector.multi_reduction <add>, %125, %cst_44 [1] : vector<17x17xf32> to vector<17xf32>
    %127 = vector.shape_cast %126 : vector<17xf32> to vector<17x1xf32>
    %128 = vector.broadcast %127 : vector<17x1xf32> to vector<17x17xf32>
    %129 = arith.divf %125, %128 : vector<17x17xf32>
    %cst_45 = arith.constant dense<0.000000e+00> : vector<17x8xf32>
    %130 = tpu.matmul %129, %117, %cst_45 {dimension_numbers = #tpu.dot_dimension_numbers<[1], [0], [0], [1], [0, 0, 1, 1], [], []>} : vector<17x17xf32>, vector<17x8xf32>, vector<17x8xf32> -> vector<17x8xf32>
    %131 = vector.extract_strided_slice %74 {offsets = [16, 0], sizes = [8, 32], strides = [1, 1]} : vector<32x32xf32> to vector<8x32xf32>
    %cst_46 = arith.constant dense<0.000000e+00> : vector<17x32xf32>
    %132 = tpu.matmul %130, %131, %cst_46 {dimension_numbers = #tpu.dot_dimension_numbers<[1], [0], [0], [1], [0, 0, 1, 1], [], []>} : vector<17x8xf32>, vector<8x32xf32>, vector<17x32xf32> -> vector<17x32xf32>
    %133 = arith.addf %114, %132 : vector<17x32xf32>
    %134 = vector.extract_strided_slice %75 {offsets = [0, 24], sizes = [17, 8], strides = [1, 1]} : vector<17x32xf32> to vector<17x8xf32>
    %135 = vector.extract_strided_slice %76 {offsets = [0, 24], sizes = [17, 8], strides = [1, 1]} : vector<17x32xf32> to vector<17x8xf32>
    %136 = vector.extract_strided_slice %77 {offsets = [0, 24], sizes = [17, 8], strides = [1, 1]} : vector<17x32xf32> to vector<17x8xf32>
    %cst_47 = arith.constant dense<0.000000e+00> : vector<17x17xf32>
    %137 = tpu.matmul %134, %135, %cst_47 {dimension_numbers = #tpu.dot_dimension_numbers<[1], [1], [0], [0], [0, 0, 1, 0], [], []>} : vector<17x8xf32>, vector<17x8xf32>, vector<17x17xf32> -> vector<17x17xf32>
    %cst_48 = arith.constant 0.353553385 : f32
    %138 = vector.broadcast %cst_48 : f32 to vector<17x17xf32>
    %139 = arith.mulf %137, %138 : vector<17x17xf32>
    %cst_49 = arith.constant dense<0xFF800000> : vector<17xf32>
    %140 = vector.multi_reduction <maximumf>, %139, %cst_49 [1] : vector<17x17xf32> to vector<17xf32>
    %141 = vector.shape_cast %140 : vector<17xf32> to vector<17x1xf32>
    %142 = vector.broadcast %141 : vector<17x1xf32> to vector<17x17xf32>
    %143 = arith.subf %139, %142 : vector<17x17xf32>
    %144 = math.exp %143 : vector<17x17xf32>
    %cst_50 = arith.constant dense<0.000000e+00> : vector<17xf32>
    %145 = vector.multi_reduction <add>, %144, %cst_50 [1] : vector<17x17xf32> to vector<17xf32>
    %146 = vector.shape_cast %145 : vector<17xf32> to vector<17x1xf32>
    %147 = vector.broadcast %146 : vector<17x1xf32> to vector<17x17xf32>
    %148 = arith.divf %144, %147 : vector<17x17xf32>
    %cst_51 = arith.constant dense<0.000000e+00> : vector<17x8xf32>
    %149 = tpu.matmul %148, %136, %cst_51 {dimension_numbers = #tpu.dot_dimension_numbers<[1], [0], [0], [1], [0, 0, 1, 1], [], []>} : vector<17x17xf32>, vector<17x8xf32>, vector<17x8xf32> -> vector<17x8xf32>
    %150 = vector.extract_strided_slice %74 {offsets = [24, 0], sizes = [8, 32], strides = [1, 1]} : vector<32x32xf32> to vector<8x32xf32>
    %cst_52 = arith.constant dense<0.000000e+00> : vector<17x32xf32>
    %151 = tpu.matmul %149, %150, %cst_52 {dimension_numbers = #tpu.dot_dimension_numbers<[1], [0], [0], [1], [0, 0, 1, 1], [], []>} : vector<17x8xf32>, vector<8x32xf32>, vector<17x32xf32> -> vector<17x32xf32>
    %152 = arith.addf %133, %151 : vector<17x32xf32>
    %153 = vector.extract_strided_slice %66 {offsets = [17, 0], sizes = [17, 32], strides = [1, 1]} : vector<34x32xf32> to vector<17x32xf32>
    %154 = vector.extract_strided_slice %69 {offsets = [17, 0], sizes = [17, 32], strides = [1, 1]} : vector<34x32xf32> to vector<17x32xf32>
    %155 = vector.extract_strided_slice %72 {offsets = [17, 0], sizes = [17, 32], strides = [1, 1]} : vector<34x32xf32> to vector<17x32xf32>
    %156 = vector.extract_strided_slice %153 {offsets = [0, 0], sizes = [17, 8], strides = [1, 1]} : vector<17x32xf32> to vector<17x8xf32>
    %157 = vector.extract_strided_slice %154 {offsets = [0, 0], sizes = [17, 8], strides = [1, 1]} : vector<17x32xf32> to vector<17x8xf32>
    %158 = vector.extract_strided_slice %155 {offsets = [0, 0], sizes = [17, 8], strides = [1, 1]} : vector<17x32xf32> to vector<17x8xf32>
    %cst_53 = arith.constant dense<0.000000e+00> : vector<17x17xf32>
    %159 = tpu.matmul %156, %157, %cst_53 {dimension_numbers = #tpu.dot_dimension_numbers<[1], [1], [0], [0], [0, 0, 1, 0], [], []>} : vector<17x8xf32>, vector<17x8xf32>, vector<17x17xf32> -> vector<17x17xf32>
    %cst_54 = arith.constant 0.353553385 : f32
    %160 = vector.broadcast %cst_54 : f32 to vector<17x17xf32>
    %161 = arith.mulf %159, %160 : vector<17x17xf32>
    %cst_55 = arith.constant dense<0xFF800000> : vector<17xf32>
    %162 = vector.multi_reduction <maximumf>, %161, %cst_55 [1] : vector<17x17xf32> to vector<17xf32>
    %163 = vector.shape_cast %162 : vector<17xf32> to vector<17x1xf32>
    %164 = vector.broadcast %163 : vector<17x1xf32> to vector<17x17xf32>
    %165 = arith.subf %161, %164 : vector<17x17xf32>
    %166 = math.exp %165 : vector<17x17xf32>
    %cst_56 = arith.constant dense<0.000000e+00> : vector<17xf32>
    %167 = vector.multi_reduction <add>, %166, %cst_56 [1] : vector<17x17xf32> to vector<17xf32>
    %168 = vector.shape_cast %167 : vector<17xf32> to vector<17x1xf32>
    %169 = vector.broadcast %168 : vector<17x1xf32> to vector<17x17xf32>
    %170 = arith.divf %166, %169 : vector<17x17xf32>
    %cst_57 = arith.constant dense<0.000000e+00> : vector<17x8xf32>
    %171 = tpu.matmul %170, %158, %cst_57 {dimension_numbers = #tpu.dot_dimension_numbers<[1], [0], [0], [1], [0, 0, 1, 1], [], []>} : vector<17x17xf32>, vector<17x8xf32>, vector<17x8xf32> -> vector<17x8xf32>
    %172 = vector.extract_strided_slice %74 {offsets = [0, 0], sizes = [8, 32], strides = [1, 1]} : vector<32x32xf32> to vector<8x32xf32>
    %cst_58 = arith.constant dense<0.000000e+00> : vector<17x32xf32>
    %173 = tpu.matmul %171, %172, %cst_58 {dimension_numbers = #tpu.dot_dimension_numbers<[1], [0], [0], [1], [0, 0, 1, 1], [], []>} : vector<17x8xf32>, vector<8x32xf32>, vector<17x32xf32> -> vector<17x32xf32>
    %174 = vector.extract_strided_slice %153 {offsets = [0, 8], sizes = [17, 8], strides = [1, 1]} : vector<17x32xf32> to vector<17x8xf32>
    %175 = vector.extract_strided_slice %154 {offsets = [0, 8], sizes = [17, 8], strides = [1, 1]} : vector<17x32xf32> to vector<17x8xf32>
    %176 = vector.extract_strided_slice %155 {offsets = [0, 8], sizes = [17, 8], strides = [1, 1]} : vector<17x32xf32> to vector<17x8xf32>
    %cst_59 = arith.constant dense<0.000000e+00> : vector<17x17xf32>
    %177 = tpu.matmul %174, %175, %cst_59 {dimension_numbers = #tpu.dot_dimension_numbers<[1], [1], [0], [0], [0, 0, 1, 0], [], []>} : vector<17x8xf32>, vector<17x8xf32>, vector<17x17xf32> -> vector<17x17xf32>
    %cst_60 = arith.constant 0.353553385 : f32
    %178 = vector.broadcast %cst_60 : f32 to vector<17x17xf32>
    %179 = arith.mulf %177, %178 : vector<17x17xf32>
    %cst_61 = arith.constant dense<0xFF800000> : vector<17xf32>
    %180 = vector.multi_reduction <maximumf>, %179, %cst_61 [1] : vector<17x17xf32> to vector<17xf32>
    %181 = vector.shape_cast %180 : vector<17xf32> to vector<17x1xf32>
    %182 = vector.broadcast %181 : vector<17x1xf32> to vector<17x17xf32>
    %183 = arith.subf %179, %182 : vector<17x17xf32>
    %184 = math.exp %183 : vector<17x17xf32>
    %cst_62 = arith.constant dense<0.000000e+00> : vector<17xf32>
    %185 = vector.multi_reduction <add>, %184, %cst_62 [1] : vector<17x17xf32> to vector<17xf32>
    %186 = vector.shape_cast %185 : vector<17xf32> to vector<17x1xf32>
    %187 = vector.broadcast %186 : vector<17x1xf32> to vector<17x17xf32>
    %188 = arith.divf %184, %187 : vector<17x17xf32>
    %cst_63 = arith.constant dense<0.000000e+00> : vector<17x8xf32>
    %189 = tpu.matmul %188, %176, %cst_63 {dimension_numbers = #tpu.dot_dimension_numbers<[1], [0], [0], [1], [0, 0, 1, 1], [], []>} : vector<17x17xf32>, vector<17x8xf32>, vector<17x8xf32> -> vector<17x8xf32>
    %190 = vector.extract_strided_slice %74 {offsets = [8, 0], sizes = [8, 32], strides = [1, 1]} : vector<32x32xf32> to vector<8x32xf32>
    %cst_64 = arith.constant dense<0.000000e+00> : vector<17x32xf32>
    %191 = tpu.matmul %189, %190, %cst_64 {dimension_numbers = #tpu.dot_dimension_numbers<[1], [0], [0], [1], [0, 0, 1, 1], [], []>} : vector<17x8xf32>, vector<8x32xf32>, vector<17x32xf32> -> vector<17x32xf32>
    %192 = arith.addf %173, %191 : vector<17x32xf32>
    %193 = vector.extract_strided_slice %153 {offsets = [0, 16], sizes = [17, 8], strides = [1, 1]} : vector<17x32xf32> to vector<17x8xf32>
    %194 = vector.extract_strided_slice %154 {offsets = [0, 16], sizes = [17, 8], strides = [1, 1]} : vector<17x32xf32> to vector<17x8xf32>
    %195 = vector.extract_strided_slice %155 {offsets = [0, 16], sizes = [17, 8], strides = [1, 1]} : vector<17x32xf32> to vector<17x8xf32>
    %cst_65 = arith.constant dense<0.000000e+00> : vector<17x17xf32>
    %196 = tpu.matmul %193, %194, %cst_65 {dimension_numbers = #tpu.dot_dimension_numbers<[1], [1], [0], [0], [0, 0, 1, 0], [], []>} : vector<17x8xf32>, vector<17x8xf32>, vector<17x17xf32> -> vector<17x17xf32>
    %cst_66 = arith.constant 0.353553385 : f32
    %197 = vector.broadcast %cst_66 : f32 to vector<17x17xf32>
    %198 = arith.mulf %196, %197 : vector<17x17xf32>
    %cst_67 = arith.constant dense<0xFF800000> : vector<17xf32>
    %199 = vector.multi_reduction <maximumf>, %198, %cst_67 [1] : vector<17x17xf32> to vector<17xf32>
    %200 = vector.shape_cast %199 : vector<17xf32> to vector<17x1xf32>
    %201 = vector.broadcast %200 : vector<17x1xf32> to vector<17x17xf32>
    %202 = arith.subf %198, %201 : vector<17x17xf32>
    %203 = math.exp %202 : vector<17x17xf32>
    %cst_68 = arith.constant dense<0.000000e+00> : vector<17xf32>
    %204 = vector.multi_reduction <add>, %203, %cst_68 [1] : vector<17x17xf32> to vector<17xf32>
    %205 = vector.shape_cast %204 : vector<17xf32> to vector<17x1xf32>
    %206 = vector.broadcast %205 : vector<17x1xf32> to vector<17x17xf32>
    %207 = arith.divf %203, %206 : vector<17x17xf32>
    %cst_69 = arith.constant dense<0.000000e+00> : vector<17x8xf32>
    %208 = tpu.matmul %207, %195, %cst_69 {dimension_numbers = #tpu.dot_dimension_numbers<[1], [0], [0], [1], [0, 0, 1, 1], [], []>} : vector<17x17xf32>, vector<17x8xf32>, vector<17x8xf32> -> vector<17x8xf32>
    %209 = vector.extract_strided_slice %74 {offsets = [16, 0], sizes = [8, 32], strides = [1, 1]} : vector<32x32xf32> to vector<8x32xf32>
    %cst_70 = arith.constant dense<0.000000e+00> : vector<17x32xf32>
    %210 = tpu.matmul %208, %209, %cst_70 {dimension_numbers = #tpu.dot_dimension_numbers<[1], [0], [0], [1], [0, 0, 1, 1], [], []>} : vector<17x8xf32>, vector<8x32xf32>, vector<17x32xf32> -> vector<17x32xf32>
    %211 = arith.addf %192, %210 : vector<17x32xf32>
    %212 = vector.extract_strided_slice %153 {offsets = [0, 24], sizes = [17, 8], strides = [1, 1]} : vector<17x32xf32> to vector<17x8xf32>
    %213 = vector.extract_strided_slice %154 {offsets = [0, 24], sizes = [17, 8], strides = [1, 1]} : vector<17x32xf32> to vector<17x8xf32>
    %214 = vector.extract_strided_slice %155 {offsets = [0, 24], sizes = [17, 8], strides = [1, 1]} : vector<17x32xf32> to vector<17x8xf32>
    %cst_71 = arith.constant dense<0.000000e+00> : vector<17x17xf32>
    %215 = tpu.matmul %212, %213, %cst_71 {dimension_numbers = #tpu.dot_dimension_numbers<[1], [1], [0], [0], [0, 0, 1, 0], [], []>} : vector<17x8xf32>, vector<17x8xf32>, vector<17x17xf32> -> vector<17x17xf32>
    %cst_72 = arith.constant 0.353553385 : f32
    %216 = vector.broadcast %cst_72 : f32 to vector<17x17xf32>
    %217 = arith.mulf %215, %216 : vector<17x17xf32>
    %cst_73 = arith.constant dense<0xFF800000> : vector<17xf32>
    %218 = vector.multi_reduction <maximumf>, %217, %cst_73 [1] : vector<17x17xf32> to vector<17xf32>
    %219 = vector.shape_cast %218 : vector<17xf32> to vector<17x1xf32>
    %220 = vector.broadcast %219 : vector<17x1xf32> to vector<17x17xf32>
    %221 = arith.subf %217, %220 : vector<17x17xf32>
    %222 = math.exp %221 : vector<17x17xf32>
    %cst_74 = arith.constant dense<0.000000e+00> : vector<17xf32>
    %223 = vector.multi_reduction <add>, %222, %cst_74 [1] : vector<17x17xf32> to vector<17xf32>
    %224 = vector.shape_cast %223 : vector<17xf32> to vector<17x1xf32>
    %225 = vector.broadcast %224 : vector<17x1xf32> to vector<17x17xf32>
    %226 = arith.divf %222, %225 : vector<17x17xf32>
    %cst_75 = arith.constant dense<0.000000e+00> : vector<17x8xf32>
    %227 = tpu.matmul %226, %214, %cst_75 {dimension_numbers = #tpu.dot_dimension_numbers<[1], [0], [0], [1], [0, 0, 1, 1], [], []>} : vector<17x17xf32>, vector<17x8xf32>, vector<17x8xf32> -> vector<17x8xf32>
    %228 = vector.extract_strided_slice %74 {offsets = [24, 0], sizes = [8, 32], strides = [1, 1]} : vector<32x32xf32> to vector<8x32xf32>
    %cst_76 = arith.constant dense<0.000000e+00> : vector<17x32xf32>
    %229 = tpu.matmul %227, %228, %cst_76 {dimension_numbers = #tpu.dot_dimension_numbers<[1], [0], [0], [1], [0, 0, 1, 1], [], []>} : vector<17x8xf32>, vector<8x32xf32>, vector<17x32xf32> -> vector<17x32xf32>
    %230 = arith.addf %211, %229 : vector<17x32xf32>
    %231 = tpu.concatenate %152, %230 in 0 : vector<17x32xf32>, vector<17x32xf32> -> vector<34x32xf32>
    %232 = arith.addf %29, %231 : vector<34x32xf32>
    %233 = vector.broadcast %37 : vector<1x32xf32> to vector<34x32xf32>
    %234 = arith.addf %232, %233 : vector<34x32xf32>
    %cst_77 = arith.constant dense<0.000000e+00> : vector<34xf32>
    %235 = vector.multi_reduction <add>, %234, %cst_77 [1] : vector<34x32xf32> to vector<34xf32>
    %236 = vector.shape_cast %235 : vector<34xf32> to vector<34x1xf32>
    %cst_78 = arith.constant 3.200000e+01 : f32
    %237 = vector.broadcast %cst_78 : f32 to vector<34x1xf32>
    %238 = arith.divf %236, %237 : vector<34x1xf32>
    %239 = vector.broadcast %238 : vector<34x1xf32> to vector<34x32xf32>
    %240 = arith.subf %234, %239 : vector<34x32xf32>
    %241 = arith.mulf %240, %240 : vector<34x32xf32>
    %cst_79 = arith.constant dense<0.000000e+00> : vector<34xf32>
    %242 = vector.multi_reduction <add>, %241, %cst_79 [1] : vector<34x32xf32> to vector<34xf32>
    %243 = vector.shape_cast %242 : vector<34xf32> to vector<34x1xf32>
    %cst_80 = arith.constant 3.200000e+01 : f32
    %244 = vector.broadcast %cst_80 : f32 to vector<34x1xf32>
    %245 = arith.divf %243, %244 : vector<34x1xf32>
    %cst_81 = arith.constant 9.99999974E-6 : f32
    %246 = vector.broadcast %cst_81 : f32 to vector<34x1xf32>
    %247 = arith.addf %245, %246 : vector<34x1xf32>
    %248 = math.rsqrt %247 : vector<34x1xf32>
    %249 = vector.broadcast %248 : vector<34x1xf32> to vector<34x32xf32>
    %250 = arith.mulf %240, %249 : vector<34x32xf32>
    %251 = vector.broadcast %38 : vector<1x32xf32> to vector<34x32xf32>
    %252 = arith.mulf %250, %251 : vector<34x32xf32>
    %253 = vector.broadcast %39 : vector<1x32xf32> to vector<34x32xf32>
    %254 = arith.addf %252, %253 : vector<34x32xf32>
    %c0_82 = arith.constant 0 : index
    %c0_83 = arith.constant 0 : index
    %c0_84 = arith.constant 0 : index
    %255 = vector.load %arg7[%c0_82, %c0_83, %c0_84] : memref<2x32x64xf32, #tpu.memory_space<vmem>>, vector<1x32x64xf32>
    %256 = vector.shape_cast %255 : vector<1x32x64xf32> to vector<32x64xf32>
    %cst_85 = arith.constant dense<0.000000e+00> : vector<34x64xf32>
    %257 = tpu.matmul %254, %256, %cst_85 {dimension_numbers = #tpu.dot_dimension_numbers<[1], [0], [0], [1], [0, 0, 1, 1], [], []>} : vector<34x32xf32>, vector<32x64xf32>, vector<34x64xf32> -> vector<34x64xf32>
    %c0_86 = arith.constant 0 : index
    %c0_87 = arith.constant 0 : index
    %c0_88 = arith.constant 0 : index
    %258 = vector.load %arg10[%c0_86, %c0_87, %c0_88] : memref<2x1x64xf32, #tpu.memory_space<vmem>>, vector<1x1x64xf32>
    %259 = vector.shape_cast %258 : vector<1x1x64xf32> to vector<1x64xf32>
    %260 = vector.broadcast %259 : vector<1x64xf32> to vector<34x64xf32>
    %261 = arith.addf %257, %260 : vector<34x64xf32>
    %cst_89 = arith.constant 5.000000e-01 : f32
    %262 = vector.broadcast %cst_89 : f32 to vector<34x64xf32>
    %263 = arith.mulf %262, %261 : vector<34x64xf32>
    %cst_90 = arith.constant 4.471500e-02 : f32
    %264 = vector.broadcast %cst_90 : f32 to vector<34x64xf32>
    %265 = arith.mulf %264, %261 : vector<34x64xf32>
    %266 = arith.mulf %265, %261 : vector<34x64xf32>
    %267 = arith.mulf %266, %261 : vector<34x64xf32>
    %268 = arith.addf %261, %267 : vector<34x64xf32>
    %cst_91 = arith.constant 0.797884583 : f32
    %269 = vector.broadcast %cst_91 : f32 to vector<34x64xf32>
    %270 = arith.mulf %269, %268 : vector<34x64xf32>
    %271 = math.tanh %270 : vector<34x64xf32>
    %cst_92 = arith.constant 1.000000e+00 : f32
    %272 = vector.broadcast %cst_92 : f32 to vector<34x64xf32>
    %273 = arith.addf %272, %271 : vector<34x64xf32>
    %274 = arith.mulf %263, %273 : vector<34x64xf32>
    %c0_93 = arith.constant 0 : index
    %c0_94 = arith.constant 0 : index
    %c0_95 = arith.constant 0 : index
    %275 = vector.load %arg8[%c0_93, %c0_94, %c0_95] : memref<2x64x32xf32, #tpu.memory_space<vmem>>, vector<1x64x32xf32>
    %276 = vector.shape_cast %275 : vector<1x64x32xf32> to vector<64x32xf32>
    %cst_96 = arith.constant dense<0.000000e+00> : vector<34x32xf32>
    %277 = tpu.matmul %274, %276, %cst_96 {dimension_numbers = #tpu.dot_dimension_numbers<[1], [0], [0], [1], [0, 0, 1, 1], [], []>} : vector<34x64xf32>, vector<64x32xf32>, vector<34x32xf32> -> vector<34x32xf32>
    %278 = vector.broadcast %40 : vector<1x32xf32> to vector<34x32xf32>
    %279 = arith.addf %277, %278 : vector<34x32xf32>
    %280 = arith.addf %234, %279 : vector<34x32xf32>
    %c1 = arith.constant 1 : index
    %c0_97 = arith.constant 0 : index
    %c0_98 = arith.constant 0 : index
    %281 = vector.load %arg9[%c1, %c0_97, %c0_98] : memref<2x9x32xf32, #tpu.memory_space<vmem>>, vector<1x9x32xf32>
    %282 = vector.shape_cast %281 : vector<1x9x32xf32> to vector<9x32xf32>
    %283 = vector.extract_strided_slice %282 {offsets = [0, 0], sizes = [1, 32], strides = [1, 1]} : vector<9x32xf32> to vector<1x32xf32>
    %284 = vector.extract_strided_slice %282 {offsets = [1, 0], sizes = [1, 32], strides = [1, 1]} : vector<9x32xf32> to vector<1x32xf32>
    %285 = vector.extract_strided_slice %282 {offsets = [2, 0], sizes = [1, 32], strides = [1, 1]} : vector<9x32xf32> to vector<1x32xf32>
    %286 = vector.extract_strided_slice %282 {offsets = [3, 0], sizes = [1, 32], strides = [1, 1]} : vector<9x32xf32> to vector<1x32xf32>
    %287 = vector.extract_strided_slice %282 {offsets = [4, 0], sizes = [1, 32], strides = [1, 1]} : vector<9x32xf32> to vector<1x32xf32>
    %288 = vector.extract_strided_slice %282 {offsets = [5, 0], sizes = [1, 32], strides = [1, 1]} : vector<9x32xf32> to vector<1x32xf32>
    %289 = vector.extract_strided_slice %282 {offsets = [6, 0], sizes = [1, 32], strides = [1, 1]} : vector<9x32xf32> to vector<1x32xf32>
    %290 = vector.extract_strided_slice %282 {offsets = [7, 0], sizes = [1, 32], strides = [1, 1]} : vector<9x32xf32> to vector<1x32xf32>
    %291 = vector.extract_strided_slice %282 {offsets = [8, 0], sizes = [1, 32], strides = [1, 1]} : vector<9x32xf32> to vector<1x32xf32>
    %cst_99 = arith.constant dense<0.000000e+00> : vector<34xf32>
    %292 = vector.multi_reduction <add>, %280, %cst_99 [1] : vector<34x32xf32> to vector<34xf32>
    %293 = vector.shape_cast %292 : vector<34xf32> to vector<34x1xf32>
    %cst_100 = arith.constant 3.200000e+01 : f32
    %294 = vector.broadcast %cst_100 : f32 to vector<34x1xf32>
    %295 = arith.divf %293, %294 : vector<34x1xf32>
    %296 = vector.broadcast %295 : vector<34x1xf32> to vector<34x32xf32>
    %297 = arith.subf %280, %296 : vector<34x32xf32>
    %298 = arith.mulf %297, %297 : vector<34x32xf32>
    %cst_101 = arith.constant dense<0.000000e+00> : vector<34xf32>
    %299 = vector.multi_reduction <add>, %298, %cst_101 [1] : vector<34x32xf32> to vector<34xf32>
    %300 = vector.shape_cast %299 : vector<34xf32> to vector<34x1xf32>
    %cst_102 = arith.constant 3.200000e+01 : f32
    %301 = vector.broadcast %cst_102 : f32 to vector<34x1xf32>
    %302 = arith.divf %300, %301 : vector<34x1xf32>
    %cst_103 = arith.constant 9.99999974E-6 : f32
    %303 = vector.broadcast %cst_103 : f32 to vector<34x1xf32>
    %304 = arith.addf %302, %303 : vector<34x1xf32>
    %305 = math.rsqrt %304 : vector<34x1xf32>
    %306 = vector.broadcast %305 : vector<34x1xf32> to vector<34x32xf32>
    %307 = arith.mulf %297, %306 : vector<34x32xf32>
    %308 = vector.broadcast %283 : vector<1x32xf32> to vector<34x32xf32>
    %309 = arith.mulf %307, %308 : vector<34x32xf32>
    %310 = vector.broadcast %284 : vector<1x32xf32> to vector<34x32xf32>
    %311 = arith.addf %309, %310 : vector<34x32xf32>
    %c1_104 = arith.constant 1 : index
    %c0_105 = arith.constant 0 : index
    %c0_106 = arith.constant 0 : index
    %312 = vector.load %arg5[%c1_104, %c0_105, %c0_106] : memref<2x32x96xf32, #tpu.memory_space<vmem>>, vector<1x32x96xf32>
    %313 = vector.shape_cast %312 : vector<1x32x96xf32> to vector<32x96xf32>
    %cst_107 = arith.constant dense<0.000000e+00> : vector<34x96xf32>
    %314 = tpu.matmul %311, %313, %cst_107 {dimension_numbers = #tpu.dot_dimension_numbers<[1], [0], [0], [1], [0, 0, 1, 1], [], []>} : vector<34x32xf32>, vector<32x96xf32>, vector<34x96xf32> -> vector<34x96xf32>
    %315 = vector.extract_strided_slice %314 {offsets = [0, 0], sizes = [34, 32], strides = [1, 1]} : vector<34x96xf32> to vector<34x32xf32>
    %316 = vector.broadcast %285 : vector<1x32xf32> to vector<34x32xf32>
    %317 = arith.addf %315, %316 : vector<34x32xf32>
    %318 = vector.extract_strided_slice %314 {offsets = [0, 32], sizes = [34, 32], strides = [1, 1]} : vector<34x96xf32> to vector<34x32xf32>
    %319 = vector.broadcast %286 : vector<1x32xf32> to vector<34x32xf32>
    %320 = arith.addf %318, %319 : vector<34x32xf32>
    %321 = vector.extract_strided_slice %314 {offsets = [0, 64], sizes = [34, 32], strides = [1, 1]} : vector<34x96xf32> to vector<34x32xf32>
    %322 = vector.broadcast %287 : vector<1x32xf32> to vector<34x32xf32>
    %323 = arith.addf %321, %322 : vector<34x32xf32>
    %c1_108 = arith.constant 1 : index
    %c0_109 = arith.constant 0 : index
    %c0_110 = arith.constant 0 : index
    %324 = vector.load %arg6[%c1_108, %c0_109, %c0_110] : memref<2x32x32xf32, #tpu.memory_space<vmem>>, vector<1x32x32xf32>
    %325 = vector.shape_cast %324 : vector<1x32x32xf32> to vector<32x32xf32>
    %326 = vector.extract_strided_slice %317 {offsets = [0, 0], sizes = [17, 32], strides = [1, 1]} : vector<34x32xf32> to vector<17x32xf32>
    %327 = vector.extract_strided_slice %320 {offsets = [0, 0], sizes = [17, 32], strides = [1, 1]} : vector<34x32xf32> to vector<17x32xf32>
    %328 = vector.extract_strided_slice %323 {offsets = [0, 0], sizes = [17, 32], strides = [1, 1]} : vector<34x32xf32> to vector<17x32xf32>
    %329 = vector.extract_strided_slice %326 {offsets = [0, 0], sizes = [17, 8], strides = [1, 1]} : vector<17x32xf32> to vector<17x8xf32>
    %330 = vector.extract_strided_slice %327 {offsets = [0, 0], sizes = [17, 8], strides = [1, 1]} : vector<17x32xf32> to vector<17x8xf32>
    %331 = vector.extract_strided_slice %328 {offsets = [0, 0], sizes = [17, 8], strides = [1, 1]} : vector<17x32xf32> to vector<17x8xf32>
    %cst_111 = arith.constant dense<0.000000e+00> : vector<17x17xf32>
    %332 = tpu.matmul %329, %330, %cst_111 {dimension_numbers = #tpu.dot_dimension_numbers<[1], [1], [0], [0], [0, 0, 1, 0], [], []>} : vector<17x8xf32>, vector<17x8xf32>, vector<17x17xf32> -> vector<17x17xf32>
    %cst_112 = arith.constant 0.353553385 : f32
    %333 = vector.broadcast %cst_112 : f32 to vector<17x17xf32>
    %334 = arith.mulf %332, %333 : vector<17x17xf32>
    %cst_113 = arith.constant dense<0xFF800000> : vector<17xf32>
    %335 = vector.multi_reduction <maximumf>, %334, %cst_113 [1] : vector<17x17xf32> to vector<17xf32>
    %336 = vector.shape_cast %335 : vector<17xf32> to vector<17x1xf32>
    %337 = vector.broadcast %336 : vector<17x1xf32> to vector<17x17xf32>
    %338 = arith.subf %334, %337 : vector<17x17xf32>
    %339 = math.exp %338 : vector<17x17xf32>
    %cst_114 = arith.constant dense<0.000000e+00> : vector<17xf32>
    %340 = vector.multi_reduction <add>, %339, %cst_114 [1] : vector<17x17xf32> to vector<17xf32>
    %341 = vector.shape_cast %340 : vector<17xf32> to vector<17x1xf32>
    %342 = vector.broadcast %341 : vector<17x1xf32> to vector<17x17xf32>
    %343 = arith.divf %339, %342 : vector<17x17xf32>
    %cst_115 = arith.constant dense<0.000000e+00> : vector<17x8xf32>
    %344 = tpu.matmul %343, %331, %cst_115 {dimension_numbers = #tpu.dot_dimension_numbers<[1], [0], [0], [1], [0, 0, 1, 1], [], []>} : vector<17x17xf32>, vector<17x8xf32>, vector<17x8xf32> -> vector<17x8xf32>
    %345 = vector.extract_strided_slice %325 {offsets = [0, 0], sizes = [8, 32], strides = [1, 1]} : vector<32x32xf32> to vector<8x32xf32>
    %cst_116 = arith.constant dense<0.000000e+00> : vector<17x32xf32>
    %346 = tpu.matmul %344, %345, %cst_116 {dimension_numbers = #tpu.dot_dimension_numbers<[1], [0], [0], [1], [0, 0, 1, 1], [], []>} : vector<17x8xf32>, vector<8x32xf32>, vector<17x32xf32> -> vector<17x32xf32>
    %347 = vector.extract_strided_slice %326 {offsets = [0, 8], sizes = [17, 8], strides = [1, 1]} : vector<17x32xf32> to vector<17x8xf32>
    %348 = vector.extract_strided_slice %327 {offsets = [0, 8], sizes = [17, 8], strides = [1, 1]} : vector<17x32xf32> to vector<17x8xf32>
    %349 = vector.extract_strided_slice %328 {offsets = [0, 8], sizes = [17, 8], strides = [1, 1]} : vector<17x32xf32> to vector<17x8xf32>
    %cst_117 = arith.constant dense<0.000000e+00> : vector<17x17xf32>
    %350 = tpu.matmul %347, %348, %cst_117 {dimension_numbers = #tpu.dot_dimension_numbers<[1], [1], [0], [0], [0, 0, 1, 0], [], []>} : vector<17x8xf32>, vector<17x8xf32>, vector<17x17xf32> -> vector<17x17xf32>
    %cst_118 = arith.constant 0.353553385 : f32
    %351 = vector.broadcast %cst_118 : f32 to vector<17x17xf32>
    %352 = arith.mulf %350, %351 : vector<17x17xf32>
    %cst_119 = arith.constant dense<0xFF800000> : vector<17xf32>
    %353 = vector.multi_reduction <maximumf>, %352, %cst_119 [1] : vector<17x17xf32> to vector<17xf32>
    %354 = vector.shape_cast %353 : vector<17xf32> to vector<17x1xf32>
    %355 = vector.broadcast %354 : vector<17x1xf32> to vector<17x17xf32>
    %356 = arith.subf %352, %355 : vector<17x17xf32>
    %357 = math.exp %356 : vector<17x17xf32>
    %cst_120 = arith.constant dense<0.000000e+00> : vector<17xf32>
    %358 = vector.multi_reduction <add>, %357, %cst_120 [1] : vector<17x17xf32> to vector<17xf32>
    %359 = vector.shape_cast %358 : vector<17xf32> to vector<17x1xf32>
    %360 = vector.broadcast %359 : vector<17x1xf32> to vector<17x17xf32>
    %361 = arith.divf %357, %360 : vector<17x17xf32>
    %cst_121 = arith.constant dense<0.000000e+00> : vector<17x8xf32>
    %362 = tpu.matmul %361, %349, %cst_121 {dimension_numbers = #tpu.dot_dimension_numbers<[1], [0], [0], [1], [0, 0, 1, 1], [], []>} : vector<17x17xf32>, vector<17x8xf32>, vector<17x8xf32> -> vector<17x8xf32>
    %363 = vector.extract_strided_slice %325 {offsets = [8, 0], sizes = [8, 32], strides = [1, 1]} : vector<32x32xf32> to vector<8x32xf32>
    %cst_122 = arith.constant dense<0.000000e+00> : vector<17x32xf32>
    %364 = tpu.matmul %362, %363, %cst_122 {dimension_numbers = #tpu.dot_dimension_numbers<[1], [0], [0], [1], [0, 0, 1, 1], [], []>} : vector<17x8xf32>, vector<8x32xf32>, vector<17x32xf32> -> vector<17x32xf32>
    %365 = arith.addf %346, %364 : vector<17x32xf32>
    %366 = vector.extract_strided_slice %326 {offsets = [0, 16], sizes = [17, 8], strides = [1, 1]} : vector<17x32xf32> to vector<17x8xf32>
    %367 = vector.extract_strided_slice %327 {offsets = [0, 16], sizes = [17, 8], strides = [1, 1]} : vector<17x32xf32> to vector<17x8xf32>
    %368 = vector.extract_strided_slice %328 {offsets = [0, 16], sizes = [17, 8], strides = [1, 1]} : vector<17x32xf32> to vector<17x8xf32>
    %cst_123 = arith.constant dense<0.000000e+00> : vector<17x17xf32>
    %369 = tpu.matmul %366, %367, %cst_123 {dimension_numbers = #tpu.dot_dimension_numbers<[1], [1], [0], [0], [0, 0, 1, 0], [], []>} : vector<17x8xf32>, vector<17x8xf32>, vector<17x17xf32> -> vector<17x17xf32>
    %cst_124 = arith.constant 0.353553385 : f32
    %370 = vector.broadcast %cst_124 : f32 to vector<17x17xf32>
    %371 = arith.mulf %369, %370 : vector<17x17xf32>
    %cst_125 = arith.constant dense<0xFF800000> : vector<17xf32>
    %372 = vector.multi_reduction <maximumf>, %371, %cst_125 [1] : vector<17x17xf32> to vector<17xf32>
    %373 = vector.shape_cast %372 : vector<17xf32> to vector<17x1xf32>
    %374 = vector.broadcast %373 : vector<17x1xf32> to vector<17x17xf32>
    %375 = arith.subf %371, %374 : vector<17x17xf32>
    %376 = math.exp %375 : vector<17x17xf32>
    %cst_126 = arith.constant dense<0.000000e+00> : vector<17xf32>
    %377 = vector.multi_reduction <add>, %376, %cst_126 [1] : vector<17x17xf32> to vector<17xf32>
    %378 = vector.shape_cast %377 : vector<17xf32> to vector<17x1xf32>
    %379 = vector.broadcast %378 : vector<17x1xf32> to vector<17x17xf32>
    %380 = arith.divf %376, %379 : vector<17x17xf32>
    %cst_127 = arith.constant dense<0.000000e+00> : vector<17x8xf32>
    %381 = tpu.matmul %380, %368, %cst_127 {dimension_numbers = #tpu.dot_dimension_numbers<[1], [0], [0], [1], [0, 0, 1, 1], [], []>} : vector<17x17xf32>, vector<17x8xf32>, vector<17x8xf32> -> vector<17x8xf32>
    %382 = vector.extract_strided_slice %325 {offsets = [16, 0], sizes = [8, 32], strides = [1, 1]} : vector<32x32xf32> to vector<8x32xf32>
    %cst_128 = arith.constant dense<0.000000e+00> : vector<17x32xf32>
    %383 = tpu.matmul %381, %382, %cst_128 {dimension_numbers = #tpu.dot_dimension_numbers<[1], [0], [0], [1], [0, 0, 1, 1], [], []>} : vector<17x8xf32>, vector<8x32xf32>, vector<17x32xf32> -> vector<17x32xf32>
    %384 = arith.addf %365, %383 : vector<17x32xf32>
    %385 = vector.extract_strided_slice %326 {offsets = [0, 24], sizes = [17, 8], strides = [1, 1]} : vector<17x32xf32> to vector<17x8xf32>
    %386 = vector.extract_strided_slice %327 {offsets = [0, 24], sizes = [17, 8], strides = [1, 1]} : vector<17x32xf32> to vector<17x8xf32>
    %387 = vector.extract_strided_slice %328 {offsets = [0, 24], sizes = [17, 8], strides = [1, 1]} : vector<17x32xf32> to vector<17x8xf32>
    %cst_129 = arith.constant dense<0.000000e+00> : vector<17x17xf32>
    %388 = tpu.matmul %385, %386, %cst_129 {dimension_numbers = #tpu.dot_dimension_numbers<[1], [1], [0], [0], [0, 0, 1, 0], [], []>} : vector<17x8xf32>, vector<17x8xf32>, vector<17x17xf32> -> vector<17x17xf32>
    %cst_130 = arith.constant 0.353553385 : f32
    %389 = vector.broadcast %cst_130 : f32 to vector<17x17xf32>
    %390 = arith.mulf %388, %389 : vector<17x17xf32>
    %cst_131 = arith.constant dense<0xFF800000> : vector<17xf32>
    %391 = vector.multi_reduction <maximumf>, %390, %cst_131 [1] : vector<17x17xf32> to vector<17xf32>
    %392 = vector.shape_cast %391 : vector<17xf32> to vector<17x1xf32>
    %393 = vector.broadcast %392 : vector<17x1xf32> to vector<17x17xf32>
    %394 = arith.subf %390, %393 : vector<17x17xf32>
    %395 = math.exp %394 : vector<17x17xf32>
    %cst_132 = arith.constant dense<0.000000e+00> : vector<17xf32>
    %396 = vector.multi_reduction <add>, %395, %cst_132 [1] : vector<17x17xf32> to vector<17xf32>
    %397 = vector.shape_cast %396 : vector<17xf32> to vector<17x1xf32>
    %398 = vector.broadcast %397 : vector<17x1xf32> to vector<17x17xf32>
    %399 = arith.divf %395, %398 : vector<17x17xf32>
    %cst_133 = arith.constant dense<0.000000e+00> : vector<17x8xf32>
    %400 = tpu.matmul %399, %387, %cst_133 {dimension_numbers = #tpu.dot_dimension_numbers<[1], [0], [0], [1], [0, 0, 1, 1], [], []>} : vector<17x17xf32>, vector<17x8xf32>, vector<17x8xf32> -> vector<17x8xf32>
    %401 = vector.extract_strided_slice %325 {offsets = [24, 0], sizes = [8, 32], strides = [1, 1]} : vector<32x32xf32> to vector<8x32xf32>
    %cst_134 = arith.constant dense<0.000000e+00> : vector<17x32xf32>
    %402 = tpu.matmul %400, %401, %cst_134 {dimension_numbers = #tpu.dot_dimension_numbers<[1], [0], [0], [1], [0, 0, 1, 1], [], []>} : vector<17x8xf32>, vector<8x32xf32>, vector<17x32xf32> -> vector<17x32xf32>
    %403 = arith.addf %384, %402 : vector<17x32xf32>
    %404 = vector.extract_strided_slice %317 {offsets = [17, 0], sizes = [17, 32], strides = [1, 1]} : vector<34x32xf32> to vector<17x32xf32>
    %405 = vector.extract_strided_slice %320 {offsets = [17, 0], sizes = [17, 32], strides = [1, 1]} : vector<34x32xf32> to vector<17x32xf32>
    %406 = vector.extract_strided_slice %323 {offsets = [17, 0], sizes = [17, 32], strides = [1, 1]} : vector<34x32xf32> to vector<17x32xf32>
    %407 = vector.extract_strided_slice %404 {offsets = [0, 0], sizes = [17, 8], strides = [1, 1]} : vector<17x32xf32> to vector<17x8xf32>
    %408 = vector.extract_strided_slice %405 {offsets = [0, 0], sizes = [17, 8], strides = [1, 1]} : vector<17x32xf32> to vector<17x8xf32>
    %409 = vector.extract_strided_slice %406 {offsets = [0, 0], sizes = [17, 8], strides = [1, 1]} : vector<17x32xf32> to vector<17x8xf32>
    %cst_135 = arith.constant dense<0.000000e+00> : vector<17x17xf32>
    %410 = tpu.matmul %407, %408, %cst_135 {dimension_numbers = #tpu.dot_dimension_numbers<[1], [1], [0], [0], [0, 0, 1, 0], [], []>} : vector<17x8xf32>, vector<17x8xf32>, vector<17x17xf32> -> vector<17x17xf32>
    %cst_136 = arith.constant 0.353553385 : f32
    %411 = vector.broadcast %cst_136 : f32 to vector<17x17xf32>
    %412 = arith.mulf %410, %411 : vector<17x17xf32>
    %cst_137 = arith.constant dense<0xFF800000> : vector<17xf32>
    %413 = vector.multi_reduction <maximumf>, %412, %cst_137 [1] : vector<17x17xf32> to vector<17xf32>
    %414 = vector.shape_cast %413 : vector<17xf32> to vector<17x1xf32>
    %415 = vector.broadcast %414 : vector<17x1xf32> to vector<17x17xf32>
    %416 = arith.subf %412, %415 : vector<17x17xf32>
    %417 = math.exp %416 : vector<17x17xf32>
    %cst_138 = arith.constant dense<0.000000e+00> : vector<17xf32>
    %418 = vector.multi_reduction <add>, %417, %cst_138 [1] : vector<17x17xf32> to vector<17xf32>
    %419 = vector.shape_cast %418 : vector<17xf32> to vector<17x1xf32>
    %420 = vector.broadcast %419 : vector<17x1xf32> to vector<17x17xf32>
    %421 = arith.divf %417, %420 : vector<17x17xf32>
    %cst_139 = arith.constant dense<0.000000e+00> : vector<17x8xf32>
    %422 = tpu.matmul %421, %409, %cst_139 {dimension_numbers = #tpu.dot_dimension_numbers<[1], [0], [0], [1], [0, 0, 1, 1], [], []>} : vector<17x17xf32>, vector<17x8xf32>, vector<17x8xf32> -> vector<17x8xf32>
    %423 = vector.extract_strided_slice %325 {offsets = [0, 0], sizes = [8, 32], strides = [1, 1]} : vector<32x32xf32> to vector<8x32xf32>
    %cst_140 = arith.constant dense<0.000000e+00> : vector<17x32xf32>
    %424 = tpu.matmul %422, %423, %cst_140 {dimension_numbers = #tpu.dot_dimension_numbers<[1], [0], [0], [1], [0, 0, 1, 1], [], []>} : vector<17x8xf32>, vector<8x32xf32>, vector<17x32xf32> -> vector<17x32xf32>
    %425 = vector.extract_strided_slice %404 {offsets = [0, 8], sizes = [17, 8], strides = [1, 1]} : vector<17x32xf32> to vector<17x8xf32>
    %426 = vector.extract_strided_slice %405 {offsets = [0, 8], sizes = [17, 8], strides = [1, 1]} : vector<17x32xf32> to vector<17x8xf32>
    %427 = vector.extract_strided_slice %406 {offsets = [0, 8], sizes = [17, 8], strides = [1, 1]} : vector<17x32xf32> to vector<17x8xf32>
    %cst_141 = arith.constant dense<0.000000e+00> : vector<17x17xf32>
    %428 = tpu.matmul %425, %426, %cst_141 {dimension_numbers = #tpu.dot_dimension_numbers<[1], [1], [0], [0], [0, 0, 1, 0], [], []>} : vector<17x8xf32>, vector<17x8xf32>, vector<17x17xf32> -> vector<17x17xf32>
    %cst_142 = arith.constant 0.353553385 : f32
    %429 = vector.broadcast %cst_142 : f32 to vector<17x17xf32>
    %430 = arith.mulf %428, %429 : vector<17x17xf32>
    %cst_143 = arith.constant dense<0xFF800000> : vector<17xf32>
    %431 = vector.multi_reduction <maximumf>, %430, %cst_143 [1] : vector<17x17xf32> to vector<17xf32>
    %432 = vector.shape_cast %431 : vector<17xf32> to vector<17x1xf32>
    %433 = vector.broadcast %432 : vector<17x1xf32> to vector<17x17xf32>
    %434 = arith.subf %430, %433 : vector<17x17xf32>
    %435 = math.exp %434 : vector<17x17xf32>
    %cst_144 = arith.constant dense<0.000000e+00> : vector<17xf32>
    %436 = vector.multi_reduction <add>, %435, %cst_144 [1] : vector<17x17xf32> to vector<17xf32>
    %437 = vector.shape_cast %436 : vector<17xf32> to vector<17x1xf32>
    %438 = vector.broadcast %437 : vector<17x1xf32> to vector<17x17xf32>
    %439 = arith.divf %435, %438 : vector<17x17xf32>
    %cst_145 = arith.constant dense<0.000000e+00> : vector<17x8xf32>
    %440 = tpu.matmul %439, %427, %cst_145 {dimension_numbers = #tpu.dot_dimension_numbers<[1], [0], [0], [1], [0, 0, 1, 1], [], []>} : vector<17x17xf32>, vector<17x8xf32>, vector<17x8xf32> -> vector<17x8xf32>
    %441 = vector.extract_strided_slice %325 {offsets = [8, 0], sizes = [8, 32], strides = [1, 1]} : vector<32x32xf32> to vector<8x32xf32>
    %cst_146 = arith.constant dense<0.000000e+00> : vector<17x32xf32>
    %442 = tpu.matmul %440, %441, %cst_146 {dimension_numbers = #tpu.dot_dimension_numbers<[1], [0], [0], [1], [0, 0, 1, 1], [], []>} : vector<17x8xf32>, vector<8x32xf32>, vector<17x32xf32> -> vector<17x32xf32>
    %443 = arith.addf %424, %442 : vector<17x32xf32>
    %444 = vector.extract_strided_slice %404 {offsets = [0, 16], sizes = [17, 8], strides = [1, 1]} : vector<17x32xf32> to vector<17x8xf32>
    %445 = vector.extract_strided_slice %405 {offsets = [0, 16], sizes = [17, 8], strides = [1, 1]} : vector<17x32xf32> to vector<17x8xf32>
    %446 = vector.extract_strided_slice %406 {offsets = [0, 16], sizes = [17, 8], strides = [1, 1]} : vector<17x32xf32> to vector<17x8xf32>
    %cst_147 = arith.constant dense<0.000000e+00> : vector<17x17xf32>
    %447 = tpu.matmul %444, %445, %cst_147 {dimension_numbers = #tpu.dot_dimension_numbers<[1], [1], [0], [0], [0, 0, 1, 0], [], []>} : vector<17x8xf32>, vector<17x8xf32>, vector<17x17xf32> -> vector<17x17xf32>
    %cst_148 = arith.constant 0.353553385 : f32
    %448 = vector.broadcast %cst_148 : f32 to vector<17x17xf32>
    %449 = arith.mulf %447, %448 : vector<17x17xf32>
    %cst_149 = arith.constant dense<0xFF800000> : vector<17xf32>
    %450 = vector.multi_reduction <maximumf>, %449, %cst_149 [1] : vector<17x17xf32> to vector<17xf32>
    %451 = vector.shape_cast %450 : vector<17xf32> to vector<17x1xf32>
    %452 = vector.broadcast %451 : vector<17x1xf32> to vector<17x17xf32>
    %453 = arith.subf %449, %452 : vector<17x17xf32>
    %454 = math.exp %453 : vector<17x17xf32>
    %cst_150 = arith.constant dense<0.000000e+00> : vector<17xf32>
    %455 = vector.multi_reduction <add>, %454, %cst_150 [1] : vector<17x17xf32> to vector<17xf32>
    %456 = vector.shape_cast %455 : vector<17xf32> to vector<17x1xf32>
    %457 = vector.broadcast %456 : vector<17x1xf32> to vector<17x17xf32>
    %458 = arith.divf %454, %457 : vector<17x17xf32>
    %cst_151 = arith.constant dense<0.000000e+00> : vector<17x8xf32>
    %459 = tpu.matmul %458, %446, %cst_151 {dimension_numbers = #tpu.dot_dimension_numbers<[1], [0], [0], [1], [0, 0, 1, 1], [], []>} : vector<17x17xf32>, vector<17x8xf32>, vector<17x8xf32> -> vector<17x8xf32>
    %460 = vector.extract_strided_slice %325 {offsets = [16, 0], sizes = [8, 32], strides = [1, 1]} : vector<32x32xf32> to vector<8x32xf32>
    %cst_152 = arith.constant dense<0.000000e+00> : vector<17x32xf32>
    %461 = tpu.matmul %459, %460, %cst_152 {dimension_numbers = #tpu.dot_dimension_numbers<[1], [0], [0], [1], [0, 0, 1, 1], [], []>} : vector<17x8xf32>, vector<8x32xf32>, vector<17x32xf32> -> vector<17x32xf32>
    %462 = arith.addf %443, %461 : vector<17x32xf32>
    %463 = vector.extract_strided_slice %404 {offsets = [0, 24], sizes = [17, 8], strides = [1, 1]} : vector<17x32xf32> to vector<17x8xf32>
    %464 = vector.extract_strided_slice %405 {offsets = [0, 24], sizes = [17, 8], strides = [1, 1]} : vector<17x32xf32> to vector<17x8xf32>
    %465 = vector.extract_strided_slice %406 {offsets = [0, 24], sizes = [17, 8], strides = [1, 1]} : vector<17x32xf32> to vector<17x8xf32>
    %cst_153 = arith.constant dense<0.000000e+00> : vector<17x17xf32>
    %466 = tpu.matmul %463, %464, %cst_153 {dimension_numbers = #tpu.dot_dimension_numbers<[1], [1], [0], [0], [0, 0, 1, 0], [], []>} : vector<17x8xf32>, vector<17x8xf32>, vector<17x17xf32> -> vector<17x17xf32>
    %cst_154 = arith.constant 0.353553385 : f32
    %467 = vector.broadcast %cst_154 : f32 to vector<17x17xf32>
    %468 = arith.mulf %466, %467 : vector<17x17xf32>
    %cst_155 = arith.constant dense<0xFF800000> : vector<17xf32>
    %469 = vector.multi_reduction <maximumf>, %468, %cst_155 [1] : vector<17x17xf32> to vector<17xf32>
    %470 = vector.shape_cast %469 : vector<17xf32> to vector<17x1xf32>
    %471 = vector.broadcast %470 : vector<17x1xf32> to vector<17x17xf32>
    %472 = arith.subf %468, %471 : vector<17x17xf32>
    %473 = math.exp %472 : vector<17x17xf32>
    %cst_156 = arith.constant dense<0.000000e+00> : vector<17xf32>
    %474 = vector.multi_reduction <add>, %473, %cst_156 [1] : vector<17x17xf32> to vector<17xf32>
    %475 = vector.shape_cast %474 : vector<17xf32> to vector<17x1xf32>
    %476 = vector.broadcast %475 : vector<17x1xf32> to vector<17x17xf32>
    %477 = arith.divf %473, %476 : vector<17x17xf32>
    %cst_157 = arith.constant dense<0.000000e+00> : vector<17x8xf32>
    %478 = tpu.matmul %477, %465, %cst_157 {dimension_numbers = #tpu.dot_dimension_numbers<[1], [0], [0], [1], [0, 0, 1, 1], [], []>} : vector<17x17xf32>, vector<17x8xf32>, vector<17x8xf32> -> vector<17x8xf32>
    %479 = vector.extract_strided_slice %325 {offsets = [24, 0], sizes = [8, 32], strides = [1, 1]} : vector<32x32xf32> to vector<8x32xf32>
    %cst_158 = arith.constant dense<0.000000e+00> : vector<17x32xf32>
    %480 = tpu.matmul %478, %479, %cst_158 {dimension_numbers = #tpu.dot_dimension_numbers<[1], [0], [0], [1], [0, 0, 1, 1], [], []>} : vector<17x8xf32>, vector<8x32xf32>, vector<17x32xf32> -> vector<17x32xf32>
    %481 = arith.addf %462, %480 : vector<17x32xf32>
    %482 = tpu.concatenate %403, %481 in 0 : vector<17x32xf32>, vector<17x32xf32> -> vector<34x32xf32>
    %483 = arith.addf %280, %482 : vector<34x32xf32>
    %484 = vector.broadcast %288 : vector<1x32xf32> to vector<34x32xf32>
    %485 = arith.addf %483, %484 : vector<34x32xf32>
    %cst_159 = arith.constant dense<0.000000e+00> : vector<34xf32>
    %486 = vector.multi_reduction <add>, %485, %cst_159 [1] : vector<34x32xf32> to vector<34xf32>
    %487 = vector.shape_cast %486 : vector<34xf32> to vector<34x1xf32>
    %cst_160 = arith.constant 3.200000e+01 : f32
    %488 = vector.broadcast %cst_160 : f32 to vector<34x1xf32>
    %489 = arith.divf %487, %488 : vector<34x1xf32>
    %490 = vector.broadcast %489 : vector<34x1xf32> to vector<34x32xf32>
    %491 = arith.subf %485, %490 : vector<34x32xf32>
    %492 = arith.mulf %491, %491 : vector<34x32xf32>
    %cst_161 = arith.constant dense<0.000000e+00> : vector<34xf32>
    %493 = vector.multi_reduction <add>, %492, %cst_161 [1] : vector<34x32xf32> to vector<34xf32>
    %494 = vector.shape_cast %493 : vector<34xf32> to vector<34x1xf32>
    %cst_162 = arith.constant 3.200000e+01 : f32
    %495 = vector.broadcast %cst_162 : f32 to vector<34x1xf32>
    %496 = arith.divf %494, %495 : vector<34x1xf32>
    %cst_163 = arith.constant 9.99999974E-6 : f32
    %497 = vector.broadcast %cst_163 : f32 to vector<34x1xf32>
    %498 = arith.addf %496, %497 : vector<34x1xf32>
    %499 = math.rsqrt %498 : vector<34x1xf32>
    %500 = vector.broadcast %499 : vector<34x1xf32> to vector<34x32xf32>
    %501 = arith.mulf %491, %500 : vector<34x32xf32>
    %502 = vector.broadcast %289 : vector<1x32xf32> to vector<34x32xf32>
    %503 = arith.mulf %501, %502 : vector<34x32xf32>
    %504 = vector.broadcast %290 : vector<1x32xf32> to vector<34x32xf32>
    %505 = arith.addf %503, %504 : vector<34x32xf32>
    %c1_164 = arith.constant 1 : index
    %c0_165 = arith.constant 0 : index
    %c0_166 = arith.constant 0 : index
    %506 = vector.load %arg7[%c1_164, %c0_165, %c0_166] : memref<2x32x64xf32, #tpu.memory_space<vmem>>, vector<1x32x64xf32>
    %507 = vector.shape_cast %506 : vector<1x32x64xf32> to vector<32x64xf32>
    %cst_167 = arith.constant dense<0.000000e+00> : vector<34x64xf32>
    %508 = tpu.matmul %505, %507, %cst_167 {dimension_numbers = #tpu.dot_dimension_numbers<[1], [0], [0], [1], [0, 0, 1, 1], [], []>} : vector<34x32xf32>, vector<32x64xf32>, vector<34x64xf32> -> vector<34x64xf32>
    %c1_168 = arith.constant 1 : index
    %c0_169 = arith.constant 0 : index
    %c0_170 = arith.constant 0 : index
    %509 = vector.load %arg10[%c1_168, %c0_169, %c0_170] : memref<2x1x64xf32, #tpu.memory_space<vmem>>, vector<1x1x64xf32>
    %510 = vector.shape_cast %509 : vector<1x1x64xf32> to vector<1x64xf32>
    %511 = vector.broadcast %510 : vector<1x64xf32> to vector<34x64xf32>
    %512 = arith.addf %508, %511 : vector<34x64xf32>
    %cst_171 = arith.constant 5.000000e-01 : f32
    %513 = vector.broadcast %cst_171 : f32 to vector<34x64xf32>
    %514 = arith.mulf %513, %512 : vector<34x64xf32>
    %cst_172 = arith.constant 4.471500e-02 : f32
    %515 = vector.broadcast %cst_172 : f32 to vector<34x64xf32>
    %516 = arith.mulf %515, %512 : vector<34x64xf32>
    %517 = arith.mulf %516, %512 : vector<34x64xf32>
    %518 = arith.mulf %517, %512 : vector<34x64xf32>
    %519 = arith.addf %512, %518 : vector<34x64xf32>
    %cst_173 = arith.constant 0.797884583 : f32
    %520 = vector.broadcast %cst_173 : f32 to vector<34x64xf32>
    %521 = arith.mulf %520, %519 : vector<34x64xf32>
    %522 = math.tanh %521 : vector<34x64xf32>
    %cst_174 = arith.constant 1.000000e+00 : f32
    %523 = vector.broadcast %cst_174 : f32 to vector<34x64xf32>
    %524 = arith.addf %523, %522 : vector<34x64xf32>
    %525 = arith.mulf %514, %524 : vector<34x64xf32>
    %c1_175 = arith.constant 1 : index
    %c0_176 = arith.constant 0 : index
    %c0_177 = arith.constant 0 : index
    %526 = vector.load %arg8[%c1_175, %c0_176, %c0_177] : memref<2x64x32xf32, #tpu.memory_space<vmem>>, vector<1x64x32xf32>
    %527 = vector.shape_cast %526 : vector<1x64x32xf32> to vector<64x32xf32>
    %cst_178 = arith.constant dense<0.000000e+00> : vector<34x32xf32>
    %528 = tpu.matmul %525, %527, %cst_178 {dimension_numbers = #tpu.dot_dimension_numbers<[1], [0], [0], [1], [0, 0, 1, 1], [], []>} : vector<34x64xf32>, vector<64x32xf32>, vector<34x32xf32> -> vector<34x32xf32>
    %529 = vector.broadcast %291 : vector<1x32xf32> to vector<34x32xf32>
    %530 = arith.addf %528, %529 : vector<34x32xf32>
    %531 = arith.addf %485, %530 : vector<34x32xf32>
    %532 = vector.extract_strided_slice %531 {offsets = [0, 0], sizes = [1, 32], strides = [1, 1]} : vector<34x32xf32> to vector<1x32xf32>
    %533 = vector.extract_strided_slice %531 {offsets = [17, 0], sizes = [1, 32], strides = [1, 1]} : vector<34x32xf32> to vector<1x32xf32>
    %534 = tpu.concatenate %532, %533 in 0 : vector<1x32xf32>, vector<1x32xf32> -> vector<2x32xf32>
    %535 = vector.extract_strided_slice %7 {offsets = [2, 0], sizes = [1, 32], strides = [1, 1]} : vector<4x32xf32> to vector<1x32xf32>
    %536 = vector.extract_strided_slice %7 {offsets = [3, 0], sizes = [1, 32], strides = [1, 1]} : vector<4x32xf32> to vector<1x32xf32>
    %cst_179 = arith.constant dense<0.000000e+00> : vector<2xf32>
    %537 = vector.multi_reduction <add>, %534, %cst_179 [1] : vector<2x32xf32> to vector<2xf32>
    %538 = vector.shape_cast %537 : vector<2xf32> to vector<2x1xf32>
    %cst_180 = arith.constant 3.200000e+01 : f32
    %539 = vector.broadcast %cst_180 : f32 to vector<2x1xf32>
    %540 = arith.divf %538, %539 : vector<2x1xf32>
    %541 = vector.broadcast %540 : vector<2x1xf32> to vector<2x32xf32>
    %542 = arith.subf %534, %541 : vector<2x32xf32>
    %543 = arith.mulf %542, %542 : vector<2x32xf32>
    %cst_181 = arith.constant dense<0.000000e+00> : vector<2xf32>
    %544 = vector.multi_reduction <add>, %543, %cst_181 [1] : vector<2x32xf32> to vector<2xf32>
    %545 = vector.shape_cast %544 : vector<2xf32> to vector<2x1xf32>
    %cst_182 = arith.constant 3.200000e+01 : f32
    %546 = vector.broadcast %cst_182 : f32 to vector<2x1xf32>
    %547 = arith.divf %545, %546 : vector<2x1xf32>
    %cst_183 = arith.constant 9.99999974E-6 : f32
    %548 = vector.broadcast %cst_183 : f32 to vector<2x1xf32>
    %549 = arith.addf %547, %548 : vector<2x1xf32>
    %550 = math.rsqrt %549 : vector<2x1xf32>
    %551 = vector.broadcast %550 : vector<2x1xf32> to vector<2x32xf32>
    %552 = arith.mulf %542, %551 : vector<2x32xf32>
    %553 = vector.broadcast %535 : vector<1x32xf32> to vector<2x32xf32>
    %554 = arith.mulf %552, %553 : vector<2x32xf32>
    %555 = vector.broadcast %536 : vector<1x32xf32> to vector<2x32xf32>
    %556 = arith.addf %554, %555 : vector<2x32xf32>
    %c0_184 = arith.constant 0 : index
    %c0_185 = arith.constant 0 : index
    %557 = vector.load %arg11[%c0_184, %c0_185] : memref<33x128xf32, #tpu.memory_space<vmem>>, vector<33x128xf32>
    %558 = vector.extract_strided_slice %557 {offsets = [0, 0], sizes = [32, 128], strides = [1, 1]} : vector<33x128xf32> to vector<32x128xf32>
    %cst_186 = arith.constant dense<0.000000e+00> : vector<2x128xf32>
    %559 = tpu.matmul %556, %558, %cst_186 {dimension_numbers = #tpu.dot_dimension_numbers<[1], [0], [0], [1], [0, 0, 1, 1], [], []>} : vector<2x32xf32>, vector<32x128xf32>, vector<2x128xf32> -> vector<2x128xf32>
    %560 = vector.extract_strided_slice %557 {offsets = [32, 0], sizes = [1, 128], strides = [1, 1]} : vector<33x128xf32> to vector<1x128xf32>
    %561 = vector.broadcast %560 : vector<1x128xf32> to vector<2x128xf32>
    %562 = arith.addf %559, %561 : vector<2x128xf32>
    %c0_187 = arith.constant 0 : index
    %c0_188 = arith.constant 0 : index
    %c0_189 = arith.constant 0 : index
    %563 = vector.load %arg12[%c0_187, %c0_188, %c0_189] : memref<1x2x128xf32, #tpu.memory_space<vmem>>, vector<1x2x128xf32>
    %564 = vector.shape_cast %563 : vector<1x2x128xf32> to vector<2x128xf32>
    %565 = vector.shape_cast %562 : vector<2x128xf32> to vector<1x2x128xf32>
    tpu.vector_store %arg12[%c0_187, %c0_188, %c0_189], %565 {strides = array<i32>} : memref<1x2x128xf32, #tpu.memory_space<vmem>>, vector<1x2x128xf32>,
    return
  }
  func.func @transform_0(%arg0: i32) -> (i32, i32, i32) {
    %c0_i32 = arith.constant 0 : i32
    %c0_i32_0 = arith.constant 0 : i32
    %c0_i32_1 = arith.constant 0 : i32
    return %arg0, %c0_i32, %c0_i32_0 : i32, i32, i32
  }
  func.func @transform_1(%arg0: i32) -> (i32, i32, i32) {
    %c0_i32 = arith.constant 0 : i32
    %c0_i32_0 = arith.constant 0 : i32
    %c0_i32_1 = arith.constant 0 : i32
    return %arg0, %c0_i32, %c0_i32_0 : i32, i32, i32
  }
  func.func @transform_2(%arg0: i32) -> (i32, i32) {
    %c0_i32 = arith.constant 0 : i32
    %c0_i32_0 = arith.constant 0 : i32
    %c0_i32_1 = arith.constant 0 : i32
    return %c0_i32, %c0_i32_0 : i32, i32
  }
  func.func @transform_3(%arg0: i32) -> (i32, i32) {
    %c0_i32 = arith.constant 0 : i32
    %c0_i32_0 = arith.constant 0 : i32
    %c0_i32_1 = arith.constant 0 : i32
    return %c0_i32, %c0_i32_0 : i32, i32
  }
  func.func @transform_4(%arg0: i32) -> (i32, i32, i32) {
    %c0_i32 = arith.constant 0 : i32
    %c0_i32_0 = arith.constant 0 : i32
    %c0_i32_1 = arith.constant 0 : i32
    %c0_i32_2 = arith.constant 0 : i32
    return %c0_i32, %c0_i32_0, %c0_i32_1 : i32, i32, i32
  }
  func.func @transform_5(%arg0: i32) -> (i32, i32, i32) {
    %c0_i32 = arith.constant 0 : i32
    %c0_i32_0 = arith.constant 0 : i32
    %c0_i32_1 = arith.constant 0 : i32
    %c0_i32_2 = arith.constant 0 : i32
    return %c0_i32, %c0_i32_0, %c0_i32_1 : i32, i32, i32
  }
  func.func @transform_6(%arg0: i32) -> (i32, i32, i32) {
    %c0_i32 = arith.constant 0 : i32
    %c0_i32_0 = arith.constant 0 : i32
    %c0_i32_1 = arith.constant 0 : i32
    %c0_i32_2 = arith.constant 0 : i32
    return %c0_i32, %c0_i32_0, %c0_i32_1 : i32, i32, i32
  }
  func.func @transform_7(%arg0: i32) -> (i32, i32, i32) {
    %c0_i32 = arith.constant 0 : i32
    %c0_i32_0 = arith.constant 0 : i32
    %c0_i32_1 = arith.constant 0 : i32
    %c0_i32_2 = arith.constant 0 : i32
    return %c0_i32, %c0_i32_0, %c0_i32_1 : i32, i32, i32
  }
  func.func @transform_8(%arg0: i32) -> (i32, i32, i32) {
    %c0_i32 = arith.constant 0 : i32
    %c0_i32_0 = arith.constant 0 : i32
    %c0_i32_1 = arith.constant 0 : i32
    %c0_i32_2 = arith.constant 0 : i32
    return %c0_i32, %c0_i32_0, %c0_i32_1 : i32, i32, i32
  }
  func.func @transform_9(%arg0: i32) -> (i32, i32, i32) {
    %c0_i32 = arith.constant 0 : i32
    %c0_i32_0 = arith.constant 0 : i32
    %c0_i32_1 = arith.constant 0 : i32
    %c0_i32_2 = arith.constant 0 : i32
    return %c0_i32, %c0_i32_0, %c0_i32_1 : i32, i32, i32
  }
  func.func @transform_10(%arg0: i32) -> (i32, i32) {
    %c0_i32 = arith.constant 0 : i32
    %c0_i32_0 = arith.constant 0 : i32
    %c0_i32_1 = arith.constant 0 : i32
    return %c0_i32, %c0_i32_0 : i32, i32
  }
  func.func @transform_11(%arg0: i32) -> (i32, i32, i32) {
    %c0_i32 = arith.constant 0 : i32
    %c0_i32_0 = arith.constant 0 : i32
    %c0_i32_1 = arith.constant 0 : i32
    return %arg0, %c0_i32, %c0_i32_0 : i32, i32, i32
  }
}

</mosaic_0001>

<llo_original>
// kernel: vit_forward.1
$region0: #{vit_forward.1}
  #allocation0 [shape = 'u32[]', space=smem, size = 0x4, offset = 0x4, fixed_abs, tag = 'smem constant byte address 0x4 - core index']
  #allocation1 [shape = 'u32[144,128]{1,0:T(1,128)}', space=vmem, size = 0x12000, scoped, tag = 'internal scratch']
  %s0 = inlined_call_operand.vmem [shape: f32[1,34,96], index: 0, kind: input, shape index: {}]
  %s1 = inlined_call_operand.vmem [shape: f32[1,34,32], index: 1, kind: input, shape index: {}]
  %s2 = inlined_call_operand.vmem [shape: f32[96,32], index: 2, kind: input, shape index: {}]
  %s3 = inlined_call_operand.vmem [shape: f32[4,32], index: 3, kind: input, shape index: {}]
  %s4 = inlined_call_operand.vmem [shape: f32[2,32,96], index: 4, kind: input, shape index: {}]
  %s5 = inlined_call_operand.vmem [shape: f32[2,32,32], index: 5, kind: input, shape index: {}]
  %s6 = inlined_call_operand.vmem [shape: f32[2,32,64], index: 6, kind: input, shape index: {}]
  %s7 = inlined_call_operand.vmem [shape: f32[2,64,32], index: 7, kind: input, shape index: {}]
  %s8 = inlined_call_operand.vmem [shape: f32[2,9,32], index: 8, kind: input, shape index: {}]
  %s9 = inlined_call_operand.vmem [shape: f32[2,1,64], index: 9, kind: input, shape index: {}]
  %s10 = inlined_call_operand.vmem [shape: f32[33,128], index: 10, kind: input, shape index: {}]
  %s11 = inlined_call_operand.hbm [shape: f32[1,2,128], index: 11, kind: output, shape index: {}]
  %s12 = sld [smem:[#allocation0]]
  $region54: #{vit_forward.1} parent=0
    _
  %s14 = ssub.s32 1, %s12
  %s15 = scalar_select 0, %s14, %s12
  $region1: #{vit_forward.1} parent=0
    #allocation2 [shape = 'u8[1024]{0}', space=vmem, size = 0x400, scoped, tag = 'output window, operand 0, single buffered']
    #allocation3 [shape = 's32[1]{0}', space=sflag, size = 0x4, scoped, tag = 'scoped memory for vit_forward.1']
    %16 = vsyncpa [#allocation3], 0
    // Predicated region
    $region2: #{vit_forward.1} parent=1 // pred_check
      _
    $region3: #{vit_forward.1} parent=1 // pred_check_branch
      %18 = sbr.rel (0) target = $region5
    $region4: #{vit_forward.1} parent=1 // pred_region
      _
    $region5: #{vit_forward.1} parent=1 // pred_fallthru
      _
    // Predicated region
    $region6: #{vit_forward.1} parent=1 // pred_check
      _
    $region7: #{vit_forward.1} parent=1 // pred_check_branch
      %20 = sbr.rel (0) target = $region9
    $region8: #{vit_forward.1} parent=1 // pred_region
      _
    $region9: #{vit_forward.1} parent=1 // pred_fallthru
      _
    // Predicated region
    $region10: #{vit_forward.1} parent=1 // pred_check
      _
    $region11: #{vit_forward.1} parent=1 // pred_check_branch
      %22 = sbr.rel (0) target = $region13
    $region12: #{vit_forward.1} parent=1 // pred_region
      _
    $region13: #{vit_forward.1} parent=1 // pred_fallthru
      _
    // Predicated region
    $region14: #{vit_forward.1} parent=1 // pred_check
      _
    $region15: #{vit_forward.1} parent=1 // pred_check_branch
      %24 = sbr.rel (0) target = $region17
    $region16: #{vit_forward.1} parent=1 // pred_region
      _
    $region17: #{vit_forward.1} parent=1 // pred_fallthru
      _
    // Predicated region
    $region18: #{vit_forward.1} parent=1 // pred_check
      _
    $region19: #{vit_forward.1} parent=1 // pred_check_branch
      %26 = sbr.rel (0) target = $region21
    $region20: #{vit_forward.1} parent=1 // pred_region
      _
    $region21: #{vit_forward.1} parent=1 // pred_fallthru
      _
    // Predicated region
    $region22: #{vit_forward.1} parent=1 // pred_check
      _
    $region23: #{vit_forward.1} parent=1 // pred_check_branch
      %28 = sbr.rel (0) target = $region25
    $region24: #{vit_forward.1} parent=1 // pred_region
      _
    $region25: #{vit_forward.1} parent=1 // pred_fallthru
      _
    // Predicated region
    $region26: #{vit_forward.1} parent=1 // pred_check
      _
    $region27: #{vit_forward.1} parent=1 // pred_check_branch
      %30 = sbr.rel (0) target = $region29
    $region28: #{vit_forward.1} parent=1 // pred_region
      _
    $region29: #{vit_forward.1} parent=1 // pred_fallthru
      _
    // Predicated region
    $region30: #{vit_forward.1} parent=1 // pred_check
      _
    $region31: #{vit_forward.1} parent=1 // pred_check_branch
      %32 = sbr.rel (0) target = $region33
    $region32: #{vit_forward.1} parent=1 // pred_region
      _
    $region33: #{vit_forward.1} parent=1 // pred_fallthru
      _
    // Predicated region
    $region34: #{vit_forward.1} parent=1 // pred_check
      _
    $region35: #{vit_forward.1} parent=1 // pred_check_branch
      %34 = sbr.rel (0) target = $region37
    $region36: #{vit_forward.1} parent=1 // pred_region
      _
    $region37: #{vit_forward.1} parent=1 // pred_fallthru
      _
    // Predicated region
    $region38: #{vit_forward.1} parent=1 // pred_check
      _
    $region39: #{vit_forward.1} parent=1 // pred_check_branch
      %36 = sbr.rel (0) target = $region41
    $region40: #{vit_forward.1} parent=1 // pred_region
      _
    $region41: #{vit_forward.1} parent=1 // pred_fallthru
      _
    // Predicated region
    $region42: #{vit_forward.1} parent=1 // pred_check
      _
    $region43: #{vit_forward.1} parent=1 // pred_check_branch
      %38 = sbr.rel (0) target = $region45
    $region44: #{vit_forward.1} parent=1 // pred_region
      _
    $region45: #{vit_forward.1} parent=1 // pred_fallthru
      _
    %v39 = vld [vmem:[%s0] sm:$0xff]
    %v40 = vld [vmem:[%s0 + $0x8] sm:$0xff]
    %v41 = vld [vmem:[%s0 + $0x10] sm:$0xff]
    %v42 = vld [vmem:[%s0 + $0x18] sm:$0xff]
    %v43 = vld [vmem:[%s0 + $0x20] sm:$0x3]
    %v44 = vld [vmem:[%s2] sm:$0xff]
    %v45 = vld [vmem:[%s2 + $0x8] sm:$0xff]
    %v46 = vld [vmem:[%s2 + $0x10] sm:$0xff]
    %v47 = vld [vmem:[%s2 + $0x18] sm:$0xff]
    %v48 = vld [vmem:[%s2 + $0x20] sm:$0xff]
    %v49 = vld [vmem:[%s2 + $0x28] sm:$0xff]
    %v50 = vld [vmem:[%s2 + $0x30] sm:$0xff]
    %v51 = vld [vmem:[%s2 + $0x38] sm:$0xff]
    %v52 = vld [vmem:[%s2 + $0x40] sm:$0xff]
    %v53 = vld [vmem:[%s2 + $0x48] sm:$0xff]
    %v54 = vld [vmem:[%s2 + $0x50] sm:$0xff]
    %v55 = vld [vmem:[%s2 + $0x58] sm:$0xff]
    %v56 = vld [vmem:[%s1] sm:$0xff]
    %v57 = vld [vmem:[%s1 + $0x8] sm:$0xff]
    %v58 = vld [vmem:[%s1 + $0x10] sm:$0xff]
    %v59 = vld [vmem:[%s1 + $0x18] sm:$0xff]
    %v60 = vld [vmem:[%s1 + $0x20] sm:$0x3]
    %vm61 = vcmask 785408
    %v63 = vsel %vm61, %v39, 0
    %v66 = vsel %vm61, %v40, 0
    %v69 = vsel %vm61, %v41, 0
    %v72 = vsel %vm61, %v42, 0
    %v75 = vsel %vm61, %v43, 0
    %77 = vmatprep.subr.mxu0 0.0
    %78 = vmatpush1.msra.mxu0 %v44
    %79 = vmatprep.subr.mxu0 0.0
    %80 = vmatpush1.msra.mxu0 %v45
    %81 = vmatprep.subr.mxu0 0.0
    %82 = vmatpush1.msra.mxu0 %v46
    %83 = vmatprep.subr.mxu0 0.0
    %84 = vmatpush1.msra.mxu0 %v47
    %85 = vmatprep.subr.mxu0 0.0
    %86 = vmatpush1.msra.mxu0 %v48
    %87 = vmatprep.subr.mxu0 0.0
    %88 = vmatpush1.msra.mxu0 %v49
    %89 = vmatprep.subr.mxu0 0.0
    %90 = vmatpush1.msra.mxu0 %v50
    %91 = vmatprep.subr.mxu0 0.0
    %92 = vmatpush1.msra.mxu0 %v51
    %93 = vmatprep.subr.mxu0 0.0
    %94 = vmatpush1.msra.mxu0 %v52
    %95 = vmatprep.subr.mxu0 0.0
    %96 = vmatpush1.msra.mxu0 %v53
    %97 = vmatprep.subr.mxu0 0.0
    %98 = vmatpush1.msra.mxu0 %v54
    %99 = vmatprep.subr.mxu0 0.0
    %100 = vmatpush1.msra.mxu0 %v55
    %101 = vmatprep.subr.mxu0 0.0
    %102 = vmatpush1.msra.mxu0 0.0
    %103 = vmatprep.subr.mxu0 0.0
    %104 = vmatpush1.msra.mxu0 0.0
    %105 = vmatprep.subr.mxu0 0.0
    %106 = vmatpush1.msra.mxu0 0.0
    %107 = vmatprep.subr.mxu0 0.0
    %108 = vmatpush1.msra.mxu0 0.0
    %109 = vmatprep.subr.mxu0 0.0
    %110 = vmatpush1.msra.mxu0 0.0
    %111 = vmatprep.subr.mxu0 0.0
    %112 = vmatpush1.msra.mxu0 0.0
    %113 = vmatprep.subr.mxu0 0.0
    %114 = vmatpush1.msra.mxu0 0.0
    %115 = vmatprep.subr.mxu0 0.0
    %116 = vmatpush1.msra.mxu0 0.0
    %117 = vmatprep.subr.mxu0 0.0
    %118 = vmatpush1.msra.mxu0 0.0
    %119 = vmatprep.subr.mxu0 0.0
    %120 = vmatpush1.msra.mxu0 0.0
    %121 = vmatprep.subr.mxu0 0.0
    %122 = vmatpush1.msra.mxu0 0.0
    %123 = vmatprep.subr.mxu0 0.0
    %124 = vmatpush1.msra.mxu0 0.0
    %125 = vmatprep.subr.mxu0 0.0
    %126 = vmatpush1.msra.mxu0 0.0
    %127 = vmatprep.subr.mxu0 0.0
    %128 = vmatpush1.msra.mxu0 0.0
    %129 = vmatprep.subr.mxu0 0.0
    %130 = vmatpush1.msra.mxu0 0.0
    %131 = vmatprep.subr.mxu0 0.0
    %132 = vmatpush1.msra.mxu0 0.0
    %133 = vmatprep.subr.mxu0 0.0
    %134 = vmatpush1.msra.mxu0 0.0
    %135 = vmatprep.subr.mxu0 0.0
    %136 = vmatpush1.msra.mxu0 0.0
    %137 = vmatprep.subr.mxu0 0.0
    %138 = vmatpush1.msra.mxu0 0.0
    %139 = vmatprep.subr.mxu0 0.0
    %140 = vmatpush1.msra.mxu0 0.0
    %141 = vmatprep.mubr.f32.mxu0 0.0
    %142 = vmatmul.mubr.f32.gmra.mrb[0].mxu0 %v63
    %v143 = vpop.f32.mrb[0].mxu0
    %v144 = vadd.f32 %v56, %v143
    %v145 = vpop.f32.mrb[0].mxu0
    %146 = vmatprep.mubr.f32.mxu0 0.0
    %147 = vmatmul.mubr.f32.gmra.mrb[0].mxu0 %v66
    %v148 = vpop.f32.mrb[0].mxu0
    %v149 = vadd.f32 %v57, %v148
    %v150 = vpop.f32.mrb[0].mxu0
    %151 = vmatprep.mubr.f32.mxu0 0.0
    %152 = vmatmul.mubr.f32.gmra.mrb[0].mxu0 %v69
    %v153 = vpop.f32.mrb[0].mxu0
    %v154 = vadd.f32 %v58, %v153
    %v155 = vpop.f32.mrb[0].mxu0
    %156 = vmatprep.mubr.f32.mxu0 0.0
    %157 = vmatmul.mubr.f32.gmra.mrb[0].mxu0 %v72
    %v158 = vpop.f32.mrb[0].mxu0
    %v159 = vadd.f32 %v59, %v158
    %v160 = vpop.f32.mrb[0].mxu0
    %161 = vmatprep.mubr.f32.mxu0 0.0
    %162 = vmatmul.mubr.f32.gmra.mrb[0].mxu0 %v75
    %v163 = vpop.f32.mrb[0].mxu0
    %v164 = vadd.f32 %v60, %v163
    %v165 = vpop.f32.mrb[0].mxu0
    %166 = vdwg.mxu0
    %v167 = vld [vmem:[%s3] sm:$0xf]
    %vm168 = vcmask 261120
    %v169 = vsel %vm168, %v144, 0.0
    %170 = vadd.xlane.f32.xlu0 %v169
    %v171 = vpop.xlane.xlu0 %170
    %v172 = vsel %vm168, %v149, 0.0
    %173 = vadd.xlane.f32.xlu0 %v172
    %v174 = vpop.xlane.xlu0 %173
    %v175 = vsel %vm168, %v154, 0.0
    %176 = vadd.xlane.f32.xlu0 %v175
    %v177 = vpop.xlane.xlu0 %176
    %v178 = vsel %vm168, %v159, 0.0
    %179 = vadd.xlane.f32.xlu0 %v178
    %v180 = vpop.xlane.xlu0 %179
    %vm181 = vcmask 254976
    %v182 = vsel %vm181, %v164, 0.0
    %183 = vadd.xlane.f32.xlu0 %v182
    %v184 = vpop.xlane.xlu0 %183
    %v185 = vrcp.pop 32.0
    %v186 = vmul.f32 %v171, %v185
    %v187 = vmul.f32 %v174, %v185
    %v188 = vmul.f32 %v177, %v185
    %v189 = vmul.f32 %v180, %v185
    %v190 = vmul.f32 %v184, %v185
    %v191 = vsub.f32 %v144, %v186
    %v192 = vsub.f32 %v149, %v187
    %v193 = vsub.f32 %v154, %v188
    %v194 = vsub.f32 %v159, %v189
    %v195 = vsub.f32 %v164, %v190
    %v196 = vmul.f32 %v191, %v191
    %v197 = vmul.f32 %v192, %v192
    %v198 = vmul.f32 %v193, %v193
    %v199 = vmul.f32 %v194, %v194
    %v200 = vmul.f32 %v195, %v195
    %v201 = vsel %vm168, %v196, 0.0
    %202 = vadd.xlane.f32.xlu0 %v201
    %v203 = vpop.xlane.xlu0 %202
    %v204 = vsel %vm168, %v197, 0.0
    %205 = vadd.xlane.f32.xlu0 %v204
    %v206 = vpop.xlane.xlu0 %205
    %v207 = vsel %vm168, %v198, 0.0
    %208 = vadd.xlane.f32.xlu0 %v207
    %v209 = vpop.xlane.xlu0 %208
    %v210 = vsel %vm168, %v199, 0.0
    %211 = vadd.xlane.f32.xlu0 %v210
    %v212 = vpop.xlane.xlu0 %211
    %v213 = vsel %vm181, %v200, 0.0
    %214 = vadd.xlane.f32.xlu0 %v213
    %v215 = vpop.xlane.xlu0 %214
    %v216 = vmul.f32 %v203, %v185
    %v217 = vmul.f32 %v206, %v185
    %v218 = vmul.f32 %v209, %v185
    %v219 = vmul.f32 %v212, %v185
    %v220 = vmul.f32 %v215, %v185
    %v221 = vadd.f32 %v216, 1e-05
    %v222 = vadd.f32 %v217, 1e-05
    %v223 = vadd.f32 %v218, 1e-05
    %v224 = vadd.f32 %v219, 1e-05
    %v225 = vadd.f32 %v220, 1e-05
    %v226 = vrsqrt.pop %v221
    %v227 = vrsqrt.pop %v222
    %v228 = vrsqrt.pop %v223
    %v229 = vrsqrt.pop %v224
    %v230 = vrsqrt.pop %v225
    %v231 = vmul.f32 %v191, %v226
    %v232 = vmul.f32 %v192, %v227
    %v233 = vmul.f32 %v193, %v228
    %v234 = vmul.f32 %v194, %v229
    %v235 = vmul.f32 %v195, %v230
    %v236 = vlaneseq
    %v237 = vshrl.u32 %v236, 7
    %v238 = vsub.s32 0, %v237
    %v239 = vrot.slane %v167, %v238
    %v240 = vmul.f32 %v231, %v239
    %v241 = vmul.f32 %v232, %v239
    %v242 = vmul.f32 %v233, %v239
    %v243 = vmul.f32 %v234, %v239
    %v244 = vmul.f32 %v235, %v239
    %v245 = vlaneseq
    %v246 = vshrl.u32 %v245, 7
    %v247 = vsub.s32 1, %v246
    %v248 = vrot.slane %v167, %v247
    %v249 = vadd.f32 %v240, %v248
    %v250 = vadd.f32 %v241, %v248
    %v251 = vadd.f32 %v242, %v248
    %v252 = vadd.f32 %v243, %v248
    %v253 = vadd.f32 %v244, %v248
    %v254 = vld [vmem:[%s8] sm:$0xff]
    %v255 = vld [vmem:[%s8 + $0x8] sm:$0x1]
    %v256 = vsel %vm168, %v249, 0.0
    %257 = vadd.xlane.f32.xlu0 %v256
    %v258 = vpop.xlane.xlu0 %257
    %v259 = vsel %vm168, %v250, 0.0
    %260 = vadd.xlane.f32.xlu0 %v259
    %v261 = vpop.xlane.xlu0 %260
    %v262 = vsel %vm168, %v251, 0.0
    %263 = vadd.xlane.f32.xlu0 %v262
    %v264 = vpop.xlane.xlu0 %263
    %v265 = vsel %vm168, %v252, 0.0
    %266 = vadd.xlane.f32.xlu0 %v265
    %v267 = vpop.xlane.xlu0 %266
    %v268 = vsel %vm181, %v253, 0.0
    %269 = vadd.xlane.f32.xlu0 %v268
    %v270 = vpop.xlane.xlu0 %269
    %v271 = vmul.f32 %v258, %v185
    %v272 = vmul.f32 %v261, %v185
    %v273 = vmul.f32 %v264, %v185
    %v274 = vmul.f32 %v267, %v185
    %v275 = vmul.f32 %v270, %v185
    %v276 = vsub.f32 %v249, %v271
    %v277 = vsub.f32 %v250, %v272
    %v278 = vsub.f32 %v251, %v273
    %v279 = vsub.f32 %v252, %v274
    %v280 = vsub.f32 %v253, %v275
    %v281 = vmul.f32 %v276, %v276
    %v282 = vmul.f32 %v277, %v277
    %v283 = vmul.f32 %v278, %v278
    %v284 = vmul.f32 %v279, %v279
    %v285 = vmul.f32 %v280, %v280
    %v286 = vsel %vm168, %v281, 0.0
    %287 = vadd.xlane.f32.xlu0 %v286
    %v288 = vpop.xlane.xlu0 %287
    %v289 = vsel %vm168, %v282, 0.0
    %290 = vadd.xlane.f32.xlu0 %v289
    %v291 = vpop.xlane.xlu0 %290
    %v292 = vsel %vm168, %v283, 0.0
    %293 = vadd.xlane.f32.xlu0 %v292
    %v294 = vpop.xlane.xlu0 %293
    %v295 = vsel %vm168, %v284, 0.0
    %296 = vadd.xlane.f32.xlu0 %v295
    %v297 = vpop.xlane.xlu0 %296
    %v298 = vsel %vm181, %v285, 0.0
    %299 = vadd.xlane.f32.xlu0 %v298
    %v300 = vpop.xlane.xlu0 %299
    %v301 = vmul.f32 %v288, %v185
    %v302 = vmul.f32 %v291, %v185
    %v303 = vmul.f32 %v294, %v185
    %v304 = vmul.f32 %v297, %v185
    %v305 = vmul.f32 %v300, %v185
    %v306 = vadd.f32 %v301, 1e-05
    %v307 = vadd.f32 %v302, 1e-05
    %v308 = vadd.f32 %v303, 1e-05
    %v309 = vadd.f32 %v304, 1e-05
    %v310 = vadd.f32 %v305, 1e-05
    %v311 = vrsqrt.pop %v306
    %v312 = vrsqrt.pop %v307
    %v313 = vrsqrt.pop %v308
    %v314 = vrsqrt.pop %v309
    %v315 = vrsqrt.pop %v310
    %v316 = vmul.f32 %v276, %v311
    %v317 = vmul.f32 %v277, %v312
    %v318 = vmul.f32 %v278, %v313
    %v319 = vmul.f32 %v279, %v314
    %v320 = vmul.f32 %v280, %v315
    %v321 = vlaneseq
    %v322 = vshrl.u32 %v321, 7
    %v323 = vsub.s32 0, %v322
    %v324 = vrot.slane %v254, %v323
    %v325 = vmul.f32 %v316, %v324
    %v326 = vmul.f32 %v317, %v324
    %v327 = vmul.f32 %v318, %v324
    %v328 = vmul.f32 %v319, %v324
    %v329 = vmul.f32 %v320, %v324
    %v330 = vlaneseq
    %v331 = vshrl.u32 %v330, 7
    %v332 = vsub.s32 1, %v331
    %v333 = vrot.slane %v254, %v332
    %v334 = vadd.f32 %v325, %v333
    %v335 = vadd.f32 %v326, %v333
    %v336 = vadd.f32 %v327, %v333
    %v337 = vadd.f32 %v328, %v333
    %v338 = vadd.f32 %v329, %v333
    %v339 = vld [vmem:[%s4] sm:$0xff]
    %v340 = vld [vmem:[%s4 + $0x8] sm:$0xff]
    %v341 = vld [vmem:[%s4 + $0x10] sm:$0xff]
    %v342 = vld [vmem:[%s4 + $0x18] sm:$0xff]
    %v344 = vsel %vm168, %v334, 0
    %v347 = vsel %vm168, %v335, 0
    %v350 = vsel %vm168, %v336, 0
    %v353 = vsel %vm168, %v337, 0
    %v356 = vsel %vm168, %v338, 0
    %358 = vmatprep.subr.mxu0 0.0
    %359 = vmatpush1.msra.mxu0 %v339
    %360 = vmatprep.subr.mxu0 0.0
    %361 = vmatpush1.msra.mxu0 %v340
    %362 = vmatprep.subr.mxu0 0.0
    %363 = vmatpush1.msra.mxu0 %v341
    %364 = vmatprep.subr.mxu0 0.0
    %365 = vmatpush1.msra.mxu0 %v342
    %366 = vmatprep.subr.mxu0 0.0
    %367 = vmatpush1.msra.mxu0 0.0
    %368 = vmatprep.subr.mxu0 0.0
    %369 = vmatpush1.msra.mxu0 0.0
    %370 = vmatprep.subr.mxu0 0.0
    %371 = vmatpush1.msra.mxu0 0.0
    %372 = vmatprep.subr.mxu0 0.0
    %373 = vmatpush1.msra.mxu0 0.0
    %374 = vmatprep.subr.mxu0 0.0
    %375 = vmatpush1.msra.mxu0 0.0
    %376 = vmatprep.subr.mxu0 0.0
    %377 = vmatpush1.msra.mxu0 0.0
    %378 = vmatprep.subr.mxu0 0.0
    %379 = vmatpush1.msra.mxu0 0.0
    %380 = vmatprep.subr.mxu0 0.0
    %381 = vmatpush1.msra.mxu0 0.0
    %382 = vmatprep.subr.mxu0 0.0
    %383 = vmatpush1.msra.mxu0 0.0
    %384 = vmatprep.subr.mxu0 0.0
    %385 = vmatpush1.msra.mxu0 0.0
    %386 = vmatprep.subr.mxu0 0.0
    %387 = vmatpush1.msra.mxu0 0.0
    %388 = vmatprep.subr.mxu0 0.0
    %389 = vmatpush1.msra.mxu0 0.0
    %390 = vmatprep.subr.mxu0 0.0
    %391 = vmatpush1.msra.mxu0 0.0
    %392 = vmatprep.subr.mxu0 0.0
    %393 = vmatpush1.msra.mxu0 0.0
    %394 = vmatprep.subr.mxu0 0.0
    %395 = vmatpush1.msra.mxu0 0.0
    %396 = vmatprep.subr.mxu0 0.0
    %397 = vmatpush1.msra.mxu0 0.0
    %398 = vmatprep.subr.mxu0 0.0
    %399 = vmatpush1.msra.mxu0 0.0
    %400 = vmatprep.subr.mxu0 0.0
    %401 = vmatpush1.msra.mxu0 0.0
    %402 = vmatprep.subr.mxu0 0.0
    %403 = vmatpush1.msra.mxu0 0.0
    %404 = vmatprep.subr.mxu0 0.0
    %405 = vmatpush1.msra.mxu0 0.0
    %406 = vmatprep.subr.mxu0 0.0
    %407 = vmatpush1.msra.mxu0 0.0
    %408 = vmatprep.subr.mxu0 0.0
    %409 = vmatpush1.msra.mxu0 0.0
    %410 = vmatprep.subr.mxu0 0.0
    %411 = vmatpush1.msra.mxu0 0.0
    %412 = vmatprep.subr.mxu0 0.0
    %413 = vmatpush1.msra.mxu0 0.0
    %414 = vmatprep.subr.mxu0 0.0
    %415 = vmatpush1.msra.mxu0 0.0
    %416 = vmatprep.subr.mxu0 0.0
    %417 = vmatpush1.msra.mxu0 0.0
    %418 = vmatprep.subr.mxu0 0.0
    %419 = vmatpush1.msra.mxu0 0.0
    %420 = vmatprep.subr.mxu0 0.0
    %421 = vmatpush1.msra.mxu0 0.0
    %422 = vmatprep.mubr.f32.mxu0 0.0
    %423 = vmatmul.mubr.f32.gmra.mrb[0].mxu0 %v344
    %v424 = vpop.f32.mrb[0].mxu0
    %v425 = vadd.f32 0.0, %v424
    %v426 = vpop.f32.mrb[0].mxu0
    %427 = vmatprep.mubr.f32.mxu0 0.0
    %428 = vmatmul.mubr.f32.gmra.mrb[0].mxu0 %v347
    %v429 = vpop.f32.mrb[0].mxu0
    %v430 = vadd.f32 0.0, %v429
    %v431 = vpop.f32.mrb[0].mxu0
    %432 = vmatprep.mubr.f32.mxu0 0.0
    %433 = vmatmul.mubr.f32.gmra.mrb[0].mxu0 %v350
    %v434 = vpop.f32.mrb[0].mxu0
    %v435 = vadd.f32 0.0, %v434
    %v436 = vpop.f32.mrb[0].mxu0
    %437 = vmatprep.mubr.f32.mxu0 0.0
    %438 = vmatmul.mubr.f32.gmra.mrb[0].mxu0 %v353
    %v439 = vpop.f32.mrb[0].mxu0
    %v440 = vadd.f32 0.0, %v439
    %v441 = vpop.f32.mrb[0].mxu0
    %442 = vmatprep.mubr.f32.mxu0 0.0
    %443 = vmatmul.mubr.f32.gmra.mrb[0].mxu0 %v356
    %v444 = vpop.f32.mrb[0].mxu0
    %v445 = vadd.f32 0.0, %v444
    %v446 = vpop.f32.mrb[0].mxu0
    %447 = vdwg.mxu0
    %v448 = vlaneseq
    %v449 = vshrl.u32 %v448, 7
    %v450 = vsub.s32 2, %v449
    %v451 = vrot.slane %v254, %v450
    %v452 = vadd.f32 %v425, %v451
    %v453 = vadd.f32 %v430, %v451
    %v454 = vadd.f32 %v435, %v451
    %v455 = vadd.f32 %v440, %v451
    %v456 = vadd.f32 %v445, %v451
    %v457 = vlaneseq
    %v458 = vshrl.u32 %v457, 7
    %v459 = vsub.s32 3, %v458
    %v460 = vrot.slane %v254, %v459
    %462 = vrot.lane.b32.xlu0 %v460, 32
    %v463 = vpop.permute.xlu0 %462
    %v465 = vadd.f32 %v425, %v463
    %v466 = vadd.f32 %v430, %v463
    %v467 = vadd.f32 %v435, %v463
    %v468 = vadd.f32 %v440, %v463
    %v469 = vadd.f32 %v445, %v463
    %v470 = vlaneseq
    %v471 = vshrl.u32 %v470, 7
    %v472 = vsub.s32 4, %v471
    %v473 = vrot.slane %v254, %v472
    %475 = vrot.lane.b32.xlu0 %v473, 64
    %v476 = vpop.permute.xlu0 %475
    %v478 = vadd.f32 %v425, %v476
    %v479 = vadd.f32 %v430, %v476
    %v480 = vadd.f32 %v435, %v476
    %v481 = vadd.f32 %v440, %v476
    %v482 = vadd.f32 %v445, %v476
    %v483 = vld [vmem:[%s5] sm:$0xff]
    %v484 = vld [vmem:[%s5 + $0x8] sm:$0xff]
    %v485 = vld [vmem:[%s5 + $0x10] sm:$0xff]
    %v486 = vld [vmem:[%s5 + $0x18] sm:$0xff]
    %490 = vrot.lane.b32.xlu0 %v465, 96
    %v491 = vpop.permute.xlu0 %490
    %492 = vrot.lane.b32.xlu0 %v466, 96
    %v493 = vpop.permute.xlu0 %492
    %494 = vrot.lane.b32.xlu0 %v467, 96
    %v495 = vpop.permute.xlu0 %494
    %vm496 = vcmask 64512
    %v498 = vsel %vm496, %v452, 0
    %v501 = vsel %vm496, %v453, 0
    %v504 = vsel %vm496, %v454, 0
    %v506 = vsel %vm496, %v491, 0
    %v508 = vsel %vm496, %v493, 0
    %v510 = vsel %vm496, %v495, 0
    %512 = vmatprep.subr.mxu0 0.0
    %513 = vmatpush1.xpose.msra.mxu0 %v506
    %514 = vmatprep.subr.mxu0 0.0
    %515 = vmatpush1.xpose.msra.mxu0 %v508
    %516 = vmatprep.subr.mxu0 0.0
    %517 = vmatpush1.xpose.msra.mxu0 %v510
    %518 = vmatprep.subr.mxu0 0.0
    %519 = vmatpush1.xpose.msra.mxu0 0.0
    %520 = vmatprep.subr.mxu0 0.0
    %521 = vmatpush1.xpose.msra.mxu0 0.0
    %522 = vmatprep.subr.mxu0 0.0
    %523 = vmatpush1.xpose.msra.mxu0 0.0
    %524 = vmatprep.subr.mxu0 0.0
    %525 = vmatpush1.xpose.msra.mxu0 0.0
    %526 = vmatprep.subr.mxu0 0.0
    %527 = vmatpush1.xpose.msra.mxu0 0.0
    %528 = vmatprep.subr.mxu0 0.0
    %529 = vmatpush1.xpose.msra.mxu0 0.0
    %530 = vmatprep.subr.mxu0 0.0
    %531 = vmatpush1.xpose.msra.mxu0 0.0
    %532 = vmatprep.subr.mxu0 0.0
    %533 = vmatpush1.xpose.msra.mxu0 0.0
    %534 = vmatprep.subr.mxu0 0.0
    %535 = vmatpush1.xpose.msra.mxu0 0.0
    %536 = vmatprep.subr.mxu0 0.0
    %537 = vmatpush1.xpose.msra.mxu0 0.0
    %538 = vmatprep.subr.mxu0 0.0
    %539 = vmatpush1.xpose.msra.mxu0 0.0
    %540 = vmatprep.subr.mxu0 0.0
    %541 = vmatpush1.xpose.msra.mxu0 0.0
    %542 = vmatprep.subr.mxu0 0.0
    %543 = vmatpush1.xpose.msra.mxu0 0.0
    %544 = vmatprep.subr.mxu0 0.0
    %545 = vmatpush1.xpose.msra.mxu0 0.0
    %546 = vmatprep.subr.mxu0 0.0
    %547 = vmatpush1.xpose.msra.mxu0 0.0
    %548 = vmatprep.subr.mxu0 0.0
    %549 = vmatpush1.xpose.msra.mxu0 0.0
    %550 = vmatprep.subr.mxu0 0.0
    %551 = vmatpush1.xpose.msra.mxu0 0.0
    %552 = vmatprep.subr.mxu0 0.0
    %553 = vmatpush1.xpose.msra.mxu0 0.0
    %554 = vmatprep.subr.mxu0 0.0
    %555 = vmatpush1.xpose.msra.mxu0 0.0
    %556 = vmatprep.subr.mxu0 0.0
    %557 = vmatpush1.xpose.msra.mxu0 0.0
    %558 = vmatprep.subr.mxu0 0.0
    %559 = vmatpush1.xpose.msra.mxu0 0.0
    %560 = vmatprep.subr.mxu0 0.0
    %561 = vmatpush1.xpose.msra.mxu0 0.0
    %562 = vmatprep.subr.mxu0 0.0
    %563 = vmatpush1.xpose.msra.mxu0 0.0
    %564 = vmatprep.subr.mxu0 0.0
    %565 = vmatpush1.xpose.msra.mxu0 0.0
    %566 = vmatprep.subr.mxu0 0.0
    %567 = vmatpush1.xpose.msra.mxu0 0.0
    %568 = vmatprep.subr.mxu0 0.0
    %569 = vmatpush1.xpose.msra.mxu0 0.0
    %570 = vmatprep.subr.mxu0 0.0
    %571 = vmatpush1.xpose.msra.mxu0 0.0
    %572 = vmatprep.subr.mxu0 0.0
    %573 = vmatpush1.xpose.msra.mxu0 0.0
    %574 = vmatprep.subr.mxu0 0.0
    %575 = vmatpush1.xpose.msra.mxu0 0.0
    %576 = vmatprep.mubr.f32.mxu0 0.0
    %577 = vmatmul.mubr.f32.gmra.mrb[0].mxu0 %v498
    %v578 = vpop.f32.mrb[0].mxu0
    %v579 = vadd.f32 0.0, %v578
    %v580 = vpop.f32.mrb[0].mxu0
    %581 = vmatprep.mubr.f32.mxu0 0.0
    %582 = vmatmul.mubr.f32.gmra.mrb[0].mxu0 %v501
    %v583 = vpop.f32.mrb[0].mxu0
    %v584 = vadd.f32 0.0, %v583
    %v585 = vpop.f32.mrb[0].mxu0
    %586 = vmatprep.mubr.f32.mxu0 0.0
    %587 = vmatmul.mubr.f32.gmra.mrb[0].mxu0 %v504
    %v588 = vpop.f32.mrb[0].mxu0
    %v589 = vadd.f32 0.0, %v588
    %v590 = vpop.f32.mrb[0].mxu0
    %591 = vdwg.mxu0
    %v592 = vmul.f32 %v579, 0.35355338
    %v593 = vmul.f32 %v584, 0.35355338
    %v594 = vmul.f32 %v589, 0.35355338
    %vm595 = vcmask 138240
    %v596 = vsel %vm595, %v592, -inf
    %597 = vmax.xlane.f32.xlu0 %v596
    %v598 = vpop.xlane.xlu0 %597
    %v599 = vsel %vm595, %v593, -inf
    %600 = vmax.xlane.f32.xlu0 %v599
    %v601 = vpop.xlane.xlu0 %600
    %vm602 = vcmask 131072
    %v603 = vsel %vm602, %v594, -inf
    %604 = vmax.xlane.f32.xlu0 %v603
    %v605 = vpop.xlane.xlu0 %604
    %v606 = vsub.f32 %v592, %v598
    %v607 = vsub.f32 %v593, %v601
    %v608 = vsub.f32 %v594, %v605
    %v609 = vmul.f32 %v606, 1.442695
    %v610 = vpow.pop %v609
    %v611 = vmul.f32 %v607, 1.442695
    %v612 = vpow.pop %v611
    %v613 = vmul.f32 %v608, 1.442695
    %v614 = vpow.pop %v613
    %v615 = vsel %vm595, %v610, 0.0
    %616 = vadd.xlane.f32.xlu0 %v615
    %v617 = vpop.xlane.xlu0 %616
    %v618 = vsel %vm595, %v612, 0.0
    %619 = vadd.xlane.f32.xlu0 %v618
    %v620 = vpop.xlane.xlu0 %619
    %v621 = vsel %vm602, %v614, 0.0
    %622 = vadd.xlane.f32.xlu0 %v621
    %v623 = vpop.xlane.xlu0 %622
    %v624 = vrcp.pop %v617
    %v625 = vmul.f32 %v610, %v624
    %v626 = vrcp.pop %v620
    %v627 = vmul.f32 %v612, %v626
    %v628 = vrcp.pop %v623
    %v629 = vmul.f32 %v614, %v628
    %633 = vrot.lane.b32.xlu0 %v478, 64
    %v634 = vpop.permute.xlu0 %633
    %635 = vrot.lane.b32.xlu0 %v479, 64
    %v636 = vpop.permute.xlu0 %635
    %637 = vrot.lane.b32.xlu0 %v480, 64
    %v638 = vpop.permute.xlu0 %637
    %v642 = vsel %vm595, %v625, 0
    %v645 = vsel %vm595, %v627, 0
    %v648 = vsel %vm595, %v629, 0
    %vm650 = vcmask 1040384
    %v651 = vsel %vm650, %v638, 0
    %653 = vmatprep.subr.mxu0 0.0
    %654 = vmatpush1.msra.mxu0 %v634
    %655 = vmatprep.subr.mxu0 0.0
    %656 = vmatpush1.msra.mxu0 %v636
    %657 = vmatprep.subr.mxu0 0.0
    %658 = vmatpush1.msra.mxu0 %v651
    %659 = vmatprep.subr.mxu0 0.0
    %660 = vmatpush1.msra.mxu0 0.0
    %661 = vmatprep.subr.mxu0 0.0
    %662 = vmatpush1.msra.mxu0 0.0
    %663 = vmatprep.subr.mxu0 0.0
    %664 = vmatpush1.msra.mxu0 0.0
    %665 = vmatprep.subr.mxu0 0.0
    %666 = vmatpush1.msra.mxu0 0.0
    %667 = vmatprep.subr.mxu0 0.0
    %668 = vmatpush1.msra.mxu0 0.0
    %669 = vmatprep.subr.mxu0 0.0
    %670 = vmatpush1.msra.mxu0 0.0
    %671 = vmatprep.subr.mxu0 0.0
    %672 = vmatpush1.msra.mxu0 0.0
    %673 = vmatprep.subr.mxu0 0.0
    %674 = vmatpush1.msra.mxu0 0.0
    %675 = vmatprep.subr.mxu0 0.0
    %676 = vmatpush1.msra.mxu0 0.0
    %677 = vmatprep.subr.mxu0 0.0
    %678 = vmatpush1.msra.mxu0 0.0
    %679 = vmatprep.subr.mxu0 0.0
    %680 = vmatpush1.msra.mxu0 0.0
    %681 = vmatprep.subr.mxu0 0.0
    %682 = vmatpush1.msra.mxu0 0.0
    %683 = vmatprep.subr.mxu0 0.0
    %684 = vmatpush1.msra.mxu0 0.0
    %685 = vmatprep.subr.mxu0 0.0
    %686 = vmatpush1.msra.mxu0 0.0
    %687 = vmatprep.subr.mxu0 0.0
    %688 = vmatpush1.msra.mxu0 0.0
    %689 = vmatprep.subr.mxu0 0.0
    %690 = vmatpush1.msra.mxu0 0.0
    %691 = vmatprep.subr.mxu0 0.0
    %692 = vmatpush1.msra.mxu0 0.0
    %693 = vmatprep.subr.mxu0 0.0
    %694 = vmatpush1.msra.mxu0 0.0
    %695 = vmatprep.subr.mxu0 0.0
    %696 = vmatpush1.msra.mxu0 0.0
    %697 = vmatprep.subr.mxu0 0.0
    %698 = vmatpush1.msra.mxu0 0.0
    %699 = vmatprep.subr.mxu0 0.0
    %700 = vmatpush1.msra.mxu0 0.0
    %701 = vmatprep.subr.mxu0 0.0
    %702 = vmatpush1.msra.mxu0 0.0
    %703 = vmatprep.subr.mxu0 0.0
    %704 = vmatpush1.msra.mxu0 0.0
    %705 = vmatprep.subr.mxu0 0.0
    %706 = vmatpush1.msra.mxu0 0.0
    %707 = vmatprep.subr.mxu0 0.0
    %708 = vmatpush1.msra.mxu0 0.0
    %709 = vmatprep.subr.mxu0 0.0
    %710 = vmatpush1.msra.mxu0 0.0
    %711 = vmatprep.subr.mxu0 0.0
    %712 = vmatpush1.msra.mxu0 0.0
    %713 = vmatprep.subr.mxu0 0.0
    %714 = vmatpush1.msra.mxu0 0.0
    %715 = vmatprep.subr.mxu0 0.0
    %716 = vmatpush1.msra.mxu0 0.0
    %717 = vmatprep.mubr.f32.mxu0 0.0
    %718 = vmatmul.mubr.f32.gmra.mrb[0].mxu0 %v642
    %v719 = vpop.f32.mrb[0].mxu0
    %v720 = vadd.f32 0.0, %v719
    %v721 = vpop.f32.mrb[0].mxu0
    %722 = vmatprep.mubr.f32.mxu0 0.0
    %723 = vmatmul.mubr.f32.gmra.mrb[0].mxu0 %v645
    %v724 = vpop.f32.mrb[0].mxu0
    %v725 = vadd.f32 0.0, %v724
    %v726 = vpop.f32.mrb[0].mxu0
    %727 = vmatprep.mubr.f32.mxu0 0.0
    %728 = vmatmul.mubr.f32.gmra.mrb[0].mxu0 %v648
    %v729 = vpop.f32.mrb[0].mxu0
    %v730 = vadd.f32 0.0, %v729
    %v731 = vpop.f32.mrb[0].mxu0
    %732 = vdwg.mxu0
    %733 = vrot.lane.b32.xlu0 %v452, 120
    %v734 = vpop.permute.xlu0 %733
    %735 = vrot.lane.b32.xlu0 %v453, 120
    %v736 = vpop.permute.xlu0 %735
    %737 = vrot.lane.b32.xlu0 %v454, 120
    %v738 = vpop.permute.xlu0 %737
    %739 = vrot.lane.b32.xlu0 %v465, 88
    %v740 = vpop.permute.xlu0 %739
    %741 = vrot.lane.b32.xlu0 %v466, 88
    %v742 = vpop.permute.xlu0 %741
    %743 = vrot.lane.b32.xlu0 %v467, 88
    %v744 = vpop.permute.xlu0 %743
    %v745 = vsel %vm496, %v734, 0
    %v747 = vsel %vm496, %v736, 0
    %v749 = vsel %vm496, %v738, 0
    %v751 = vsel %vm496, %v740, 0
    %v753 = vsel %vm496, %v742, 0
    %v755 = vsel %vm496, %v744, 0
    %757 = vmatprep.subr.mxu0 0.0
    %758 = vmatpush1.xpose.msra.mxu0 %v751
    %759 = vmatprep.subr.mxu0 0.0
    %760 = vmatpush1.xpose.msra.mxu0 %v753
    %761 = vmatprep.subr.mxu0 0.0
    %762 = vmatpush1.xpose.msra.mxu0 %v755
    %763 = vmatprep.subr.mxu0 0.0
    %764 = vmatpush1.xpose.msra.mxu0 0.0
    %765 = vmatprep.subr.mxu0 0.0
    %766 = vmatpush1.xpose.msra.mxu0 0.0
    %767 = vmatprep.subr.mxu0 0.0
    %768 = vmatpush1.xpose.msra.mxu0 0.0
    %769 = vmatprep.subr.mxu0 0.0
    %770 = vmatpush1.xpose.msra.mxu0 0.0
    %771 = vmatprep.subr.mxu0 0.0
    %772 = vmatpush1.xpose.msra.mxu0 0.0
    %773 = vmatprep.subr.mxu0 0.0
    %774 = vmatpush1.xpose.msra.mxu0 0.0
    %775 = vmatprep.subr.mxu0 0.0
    %776 = vmatpush1.xpose.msra.mxu0 0.0
    %777 = vmatprep.subr.mxu0 0.0
    %778 = vmatpush1.xpose.msra.mxu0 0.0
    %779 = vmatprep.subr.mxu0 0.0
    %780 = vmatpush1.xpose.msra.mxu0 0.0
    %781 = vmatprep.subr.mxu0 0.0
    %782 = vmatpush1.xpose.msra.mxu0 0.0
    %783 = vmatprep.subr.mxu0 0.0
    %784 = vmatpush1.xpose.msra.mxu0 0.0
    %785 = vmatprep.subr.mxu0 0.0
    %786 = vmatpush1.xpose.msra.mxu0 0.0
    %787 = vmatprep.subr.mxu0 0.0
    %788 = vmatpush1.xpose.msra.mxu0 0.0
    %789 = vmatprep.subr.mxu0 0.0
    %790 = vmatpush1.xpose.msra.mxu0 0.0
    %791 = vmatprep.subr.mxu0 0.0
    %792 = vmatpush1.xpose.msra.mxu0 0.0
    %793 = vmatprep.subr.mxu0 0.0
    %794 = vmatpush1.xpose.msra.mxu0 0.0
    %795 = vmatprep.subr.mxu0 0.0
    %796 = vmatpush1.xpose.msra.mxu0 0.0
    %797 = vmatprep.subr.mxu0 0.0
    %798 = vmatpush1.xpose.msra.mxu0 0.0
    %799 = vmatprep.subr.mxu0 0.0
    %800 = vmatpush1.xpose.msra.mxu0 0.0
    %801 = vmatprep.subr.mxu0 0.0
    %802 = vmatpush1.xpose.msra.mxu0 0.0
    %803 = vmatprep.subr.mxu0 0.0
    %804 = vmatpush1.xpose.msra.mxu0 0.0
    %805 = vmatprep.subr.mxu0 0.0
    %806 = vmatpush1.xpose.msra.mxu0 0.0
    %807 = vmatprep.subr.mxu0 0.0
    %808 = vmatpush1.xpose.msra.mxu0 0.0
    %809 = vmatprep.subr.mxu0 0.0
    %810 = vmatpush1.xpose.msra.mxu0 0.0
    %811 = vmatprep.subr.mxu0 0.0
    %812 = vmatpush1.xpose.msra.mxu0 0.0
    %813 = vmatprep.subr.mxu0 0.0
    %814 = vmatpush1.xpose.msra.mxu0 0.0
    %815 = vmatprep.subr.mxu0 0.0
    %816 = vmatpush1.xpose.msra.mxu0 0.0
    %817 = vmatprep.subr.mxu0 0.0
    %818 = vmatpush1.xpose.msra.mxu0 0.0
    %819 = vmatprep.subr.mxu0 0.0
    %820 = vmatpush1.xpose.msra.mxu0 0.0
    %821 = vmatprep.mubr.f32.mxu0 0.0
    %822 = vmatmul.mubr.f32.gmra.mrb[0].mxu0 %v745
    %v823 = vpop.f32.mrb[0].mxu0
    %v824 = vadd.f32 0.0, %v823
    %v825 = vpop.f32.mrb[0].mxu0
    %826 = vmatprep.mubr.f32.mxu0 0.0
    %827 = vmatmul.mubr.f32.gmra.mrb[0].mxu0 %v747
    %v828 = vpop.f32.mrb[0].mxu0
    %v829 = vadd.f32 0.0, %v828
    %v830 = vpop.f32.mrb[0].mxu0
    %831 = vmatprep.mubr.f32.mxu0 0.0
    %832 = vmatmul.mubr.f32.gmra.mrb[0].mxu0 %v749
    %v833 = vpop.f32.mrb[0].mxu0
    %v834 = vadd.f32 0.0, %v833
    %v835 = vpop.f32.mrb[0].mxu0
    %836 = vdwg.mxu0
    %v837 = vmul.f32 %v824, 0.35355338
    %v838 = vmul.f32 %v829, 0.35355338
    %v839 = vmul.f32 %v834, 0.35355338
    %v840 = vsel %vm595, %v837, -inf
    %841 = vmax.xlane.f32.xlu0 %v840
    %v842 = vpop.xlane.xlu0 %841
    %v843 = vsel %vm595, %v838, -inf
    %844 = vmax.xlane.f32.xlu0 %v843
    %v845 = vpop.xlane.xlu0 %844
    %v846 = vsel %vm602, %v839, -inf
    %847 = vmax.xlane.f32.xlu0 %v846
    %v848 = vpop.xlane.xlu0 %847
    %v849 = vsub.f32 %v837, %v842
    %v850 = vsub.f32 %v838, %v845
    %v851 = vsub.f32 %v839, %v848
    %v852 = vmul.f32 %v849, 1.442695
    %v853 = vpow.pop %v852
    %v854 = vmul.f32 %v850, 1.442695
    %v855 = vpow.pop %v854
    %v856 = vmul.f32 %v851, 1.442695
    %v857 = vpow.pop %v856
    %v858 = vsel %vm595, %v853, 0.0
    %859 = vadd.xlane.f32.xlu0 %v858
    %v860 = vpop.xlane.xlu0 %859
    %v861 = vsel %vm595, %v855, 0.0
    %862 = vadd.xlane.f32.xlu0 %v861
    %v863 = vpop.xlane.xlu0 %862
    %v864 = vsel %vm602, %v857, 0.0
    %865 = vadd.xlane.f32.xlu0 %v864
    %v866 = vpop.xlane.xlu0 %865
    %v867 = vrcp.pop %v860
    %v868 = vmul.f32 %v853, %v867
    %v869 = vrcp.pop %v863
    %v870 = vmul.f32 %v855, %v869
    %v871 = vrcp.pop %v866
    %v872 = vmul.f32 %v857, %v871
    %873 = vrot.lane.b32.xlu0 %v478, 56
    %v874 = vpop.permute.xlu0 %873
    %875 = vrot.lane.b32.xlu0 %v479, 56
    %v876 = vpop.permute.xlu0 %875
    %877 = vrot.lane.b32.xlu0 %v480, 56
    %v878 = vpop.permute.xlu0 %877
    %v882 = vsel %vm595, %v868, 0
    %v885 = vsel %vm595, %v870, 0
    %v888 = vsel %vm595, %v872, 0
    %v890 = vsel %vm650, %v878, 0
    %892 = vmatprep.subr.mxu0 0.0
    %893 = vmatpush1.msra.mxu0 %v874
    %894 = vmatprep.subr.mxu0 0.0
    %895 = vmatpush1.msra.mxu0 %v876
    %896 = vmatprep.subr.mxu0 0.0
    %897 = vmatpush1.msra.mxu0 %v890
    %898 = vmatprep.subr.mxu0 0.0
    %899 = vmatpush1.msra.mxu0 0.0
    %900 = vmatprep.subr.mxu0 0.0
    %901 = vmatpush1.msra.mxu0 0.0
    %902 = vmatprep.subr.mxu0 0.0
    %903 = vmatpush1.msra.mxu0 0.0
    %904 = vmatprep.subr.mxu0 0.0
    %905 = vmatpush1.msra.mxu0 0.0
    %906 = vmatprep.subr.mxu0 0.0
    %907 = vmatpush1.msra.mxu0 0.0
    %908 = vmatprep.subr.mxu0 0.0
    %909 = vmatpush1.msra.mxu0 0.0
    %910 = vmatprep.subr.mxu0 0.0
    %911 = vmatpush1.msra.mxu0 0.0
    %912 = vmatprep.subr.mxu0 0.0
    %913 = vmatpush1.msra.mxu0 0.0
    %914 = vmatprep.subr.mxu0 0.0
    %915 = vmatpush1.msra.mxu0 0.0
    %916 = vmatprep.subr.mxu0 0.0
    %917 = vmatpush1.msra.mxu0 0.0
    %918 = vmatprep.subr.mxu0 0.0
    %919 = vmatpush1.msra.mxu0 0.0
    %920 = vmatprep.subr.mxu0 0.0
    %921 = vmatpush1.msra.mxu0 0.0
    %922 = vmatprep.subr.mxu0 0.0
    %923 = vmatpush1.msra.mxu0 0.0
    %924 = vmatprep.subr.mxu0 0.0
    %925 = vmatpush1.msra.mxu0 0.0
    %926 = vmatprep.subr.mxu0 0.0
    %927 = vmatpush1.msra.mxu0 0.0
    %928 = vmatprep.subr.mxu0 0.0
    %929 = vmatpush1.msra.mxu0 0.0
    %930 = vmatprep.subr.mxu0 0.0
    %931 = vmatpush1.msra.mxu0 0.0
    %932 = vmatprep.subr.mxu0 0.0
    %933 = vmatpush1.msra.mxu0 0.0
    %934 = vmatprep.subr.mxu0 0.0
    %935 = vmatpush1.msra.mxu0 0.0
    %936 = vmatprep.subr.mxu0 0.0
    %937 = vmatpush1.msra.mxu0 0.0
    %938 = vmatprep.subr.mxu0 0.0
    %939 = vmatpush1.msra.mxu0 0.0
    %940 = vmatprep.subr.mxu0 0.0
    %941 = vmatpush1.msra.mxu0 0.0
    %942 = vmatprep.subr.mxu0 0.0
    %943 = vmatpush1.msra.mxu0 0.0
    %944 = vmatprep.subr.mxu0 0.0
    %945 = vmatpush1.msra.mxu0 0.0
    %946 = vmatprep.subr.mxu0 0.0
    %947 = vmatpush1.msra.mxu0 0.0
    %948 = vmatprep.subr.mxu0 0.0
    %949 = vmatpush1.msra.mxu0 0.0
    %950 = vmatprep.subr.mxu0 0.0
    %951 = vmatpush1.msra.mxu0 0.0
    %952 = vmatprep.subr.mxu0 0.0
    %953 = vmatpush1.msra.mxu0 0.0
    %954 = vmatprep.subr.mxu0 0.0
    %955 = vmatpush1.msra.mxu0 0.0
    %956 = vmatprep.mubr.f32.mxu0 0.0
    %957 = vmatmul.mubr.f32.gmra.mrb[0].mxu0 %v882
    %v958 = vpop.f32.mrb[0].mxu0
    %v959 = vadd.f32 0.0, %v958
    %v960 = vpop.f32.mrb[0].mxu0
    %961 = vmatprep.mubr.f32.mxu0 0.0
    %962 = vmatmul.mubr.f32.gmra.mrb[0].mxu0 %v885
    %v963 = vpop.f32.mrb[0].mxu0
    %v964 = vadd.f32 0.0, %v963
    %v965 = vpop.f32.mrb[0].mxu0
    %966 = vmatprep.mubr.f32.mxu0 0.0
    %967 = vmatmul.mubr.f32.gmra.mrb[0].mxu0 %v888
    %v968 = vpop.f32.mrb[0].mxu0
    %v969 = vadd.f32 0.0, %v968
    %v970 = vpop.f32.mrb[0].mxu0
    %971 = vdwg.mxu0
    %v973 = vsel %vm496, %v959, 0
    %v976 = vsel %vm496, %v964, 0
    %v979 = vsel %vm496, %v969, 0
    %981 = vmatprep.subr.mxu0 0.0
    %982 = vmatpush1.msra.mxu0 %v484
    %983 = vmatprep.subr.mxu0 0.0
    %984 = vmatpush1.msra.mxu0 0.0
    %985 = vmatprep.subr.mxu0 0.0
    %986 = vmatpush1.msra.mxu0 0.0
    %987 = vmatprep.subr.mxu0 0.0
    %988 = vmatpush1.msra.mxu0 0.0
    %989 = vmatprep.subr.mxu0 0.0
    %990 = vmatpush1.msra.mxu0 0.0
    %991 = vmatprep.subr.mxu0 0.0
    %992 = vmatpush1.msra.mxu0 0.0
    %993 = vmatprep.subr.mxu0 0.0
    %994 = vmatpush1.msra.mxu0 0.0
    %995 = vmatprep.subr.mxu0 0.0
    %996 = vmatpush1.msra.mxu0 0.0
    %997 = vmatprep.subr.mxu0 0.0
    %998 = vmatpush1.msra.mxu0 0.0
    %999 = vmatprep.subr.mxu0 0.0
    %1000 = vmatpush1.msra.mxu0 0.0
    %1001 = vmatprep.subr.mxu0 0.0
    %1002 = vmatpush1.msra.mxu0 0.0
    %1003 = vmatprep.subr.mxu0 0.0
    %1004 = vmatpush1.msra.mxu0 0.0
    %1005 = vmatprep.subr.mxu0 0.0
    %1006 = vmatpush1.msra.mxu0 0.0
    %1007 = vmatprep.subr.mxu0 0.0
    %1008 = vmatpush1.msra.mxu0 0.0
    %1009 = vmatprep.subr.mxu0 0.0
    %1010 = vmatpush1.msra.mxu0 0.0
    %1011 = vmatprep.subr.mxu0 0.0
    %1012 = vmatpush1.msra.mxu0 0.0
    %1013 = vmatprep.subr.mxu0 0.0
    %1014 = vmatpush1.msra.mxu0 0.0
    %1015 = vmatprep.subr.mxu0 0.0
    %1016 = vmatpush1.msra.mxu0 0.0
    %1017 = vmatprep.subr.mxu0 0.0
    %1018 = vmatpush1.msra.mxu0 0.0
    %1019 = vmatprep.subr.mxu0 0.0
    %1020 = vmatpush1.msra.mxu0 0.0
    %1021 = vmatprep.subr.mxu0 0.0
    %1022 = vmatpush1.msra.mxu0 0.0
    %1023 = vmatprep.subr.mxu0 0.0
    %1024 = vmatpush1.msra.mxu0 0.0
    %1025 = vmatprep.subr.mxu0 0.0
    %1026 = vmatpush1.msra.mxu0 0.0
    %1027 = vmatprep.subr.mxu0 0.0
    %1028 = vmatpush1.msra.mxu0 0.0
    %1029 = vmatprep.subr.mxu0 0.0
    %1030 = vmatpush1.msra.mxu0 0.0
    %1031 = vmatprep.subr.mxu0 0.0
    %1032 = vmatpush1.msra.mxu0 0.0
    %1033 = vmatprep.subr.mxu0 0.0
    %1034 = vmatpush1.msra.mxu0 0.0
    %1035 = vmatprep.subr.mxu0 0.0
    %1036 = vmatpush1.msra.mxu0 0.0
    %1037 = vmatprep.subr.mxu0 0.0
    %1038 = vmatpush1.msra.mxu0 0.0
    %1039 = vmatprep.subr.mxu0 0.0
    %1040 = vmatpush1.msra.mxu0 0.0
    %1041 = vmatprep.subr.mxu0 0.0
    %1042 = vmatpush1.msra.mxu0 0.0
    %1043 = vmatprep.subr.mxu0 0.0
    %1044 = vmatpush1.msra.mxu0 0.0
    %1045 = vmatprep.mubr.f32.mxu0 0.0
    %1046 = vmatmul.mubr.f32.gmra.mrb[0].mxu0 %v973
    %v1047 = vpop.f32.mrb[0].mxu0
    %v1048 = vadd.f32 0.0, %v1047
    %v1049 = vpop.f32.mrb[0].mxu0
    %1050 = vmatprep.mubr.f32.mxu0 0.0
    %1051 = vmatmul.mubr.f32.gmra.mrb[0].mxu0 %v976
    %v1052 = vpop.f32.mrb[0].mxu0
    %v1053 = vadd.f32 0.0, %v1052
    %v1054 = vpop.f32.mrb[0].mxu0
    %1055 = vmatprep.mubr.f32.mxu0 0.0
    %1056 = vmatmul.mubr.f32.gmra.mrb[0].mxu0 %v979
    %v1057 = vpop.f32.mrb[0].mxu0
    %v1058 = vadd.f32 0.0, %v1057
    %v1059 = vpop.f32.mrb[0].mxu0
    %1060 = vdwg.mxu0
    %v1062 = vsel %vm496, %v720, 0
    %v1065 = vsel %vm496, %v725, 0
    %v1068 = vsel %vm496, %v730, 0
    %1070 = vmatprep.subr.mxu0 0.0
    %1071 = vmatpush1.msra.mxu0 %v483
    %1072 = vmatprep.subr.mxu0 0.0
    %1073 = vmatpush1.msra.mxu0 0.0
    %1074 = vmatprep.subr.mxu0 0.0
    %1075 = vmatpush1.msra.mxu0 0.0
    %1076 = vmatprep.subr.mxu0 0.0
    %1077 = vmatpush1.msra.mxu0 0.0
    %1078 = vmatprep.subr.mxu0 0.0
    %1079 = vmatpush1.msra.mxu0 0.0
    %1080 = vmatprep.subr.mxu0 0.0
    %1081 = vmatpush1.msra.mxu0 0.0
    %1082 = vmatprep.subr.mxu0 0.0
    %1083 = vmatpush1.msra.mxu0 0.0
    %1084 = vmatprep.subr.mxu0 0.0
    %1085 = vmatpush1.msra.mxu0 0.0
    %1086 = vmatprep.subr.mxu0 0.0
    %1087 = vmatpush1.msra.mxu0 0.0
    %1088 = vmatprep.subr.mxu0 0.0
    %1089 = vmatpush1.msra.mxu0 0.0
    %1090 = vmatprep.subr.mxu0 0.0
    %1091 = vmatpush1.msra.mxu0 0.0
    %1092 = vmatprep.subr.mxu0 0.0
    %1093 = vmatpush1.msra.mxu0 0.0
    %1094 = vmatprep.subr.mxu0 0.0
    %1095 = vmatpush1.msra.mxu0 0.0
    %1096 = vmatprep.subr.mxu0 0.0
    %1097 = vmatpush1.msra.mxu0 0.0
    %1098 = vmatprep.subr.mxu0 0.0
    %1099 = vmatpush1.msra.mxu0 0.0
    %1100 = vmatprep.subr.mxu0 0.0
    %1101 = vmatpush1.msra.mxu0 0.0
    %1102 = vmatprep.subr.mxu0 0.0
    %1103 = vmatpush1.msra.mxu0 0.0
    %1104 = vmatprep.subr.mxu0 0.0
    %1105 = vmatpush1.msra.mxu0 0.0
    %1106 = vmatprep.subr.mxu0 0.0
    %1107 = vmatpush1.msra.mxu0 0.0
    %1108 = vmatprep.subr.mxu0 0.0
    %1109 = vmatpush1.msra.mxu0 0.0
    %1110 = vmatprep.subr.mxu0 0.0
    %1111 = vmatpush1.msra.mxu0 0.0
    %1112 = vmatprep.subr.mxu0 0.0
    %1113 = vmatpush1.msra.mxu0 0.0
    %1114 = vmatprep.subr.mxu0 0.0
    %1115 = vmatpush1.msra.mxu0 0.0
    %1116 = vmatprep.subr.mxu0 0.0
    %1117 = vmatpush1.msra.mxu0 0.0
    %1118 = vmatprep.subr.mxu0 0.0
    %1119 = vmatpush1.msra.mxu0 0.0
    %1120 = vmatprep.subr.mxu0 0.0
    %1121 = vmatpush1.msra.mxu0 0.0
    %1122 = vmatprep.subr.mxu0 0.0
    %1123 = vmatpush1.msra.mxu0 0.0
    %1124 = vmatprep.subr.mxu0 0.0
    %1125 = vmatpush1.msra.mxu0 0.0
    %1126 = vmatprep.subr.mxu0 0.0
    %1127 = vmatpush1.msra.mxu0 0.0
    %1128 = vmatprep.subr.mxu0 0.0
    %1129 = vmatpush1.msra.mxu0 0.0
    %1130 = vmatprep.subr.mxu0 0.0
    %1131 = vmatpush1.msra.mxu0 0.0
    %1132 = vmatprep.subr.mxu0 0.0
    %1133 = vmatpush1.msra.mxu0 0.0
    %1134 = vmatprep.mubr.f32.mxu0 0.0
    %1135 = vmatmul.mubr.f32.gmra.mrb[0].mxu0 %v1062
    %v1136 = vpop.f32.mrb[0].mxu0
    %v1137 = vadd.f32 %v1048, %v1136
    %v1138 = vpop.f32.mrb[0].mxu0
    %1139 = vmatprep.mubr.f32.mxu0 0.0
    %1140 = vmatmul.mubr.f32.gmra.mrb[0].mxu0 %v1065
    %v1141 = vpop.f32.mrb[0].mxu0
    %v1142 = vadd.f32 %v1053, %v1141
    %v1143 = vpop.f32.mrb[0].mxu0
    %1144 = vmatprep.mubr.f32.mxu0 0.0
    %1145 = vmatmul.mubr.f32.gmra.mrb[0].mxu0 %v1068
    %v1146 = vpop.f32.mrb[0].mxu0
    %v1147 = vadd.f32 %v1058, %v1146
    %v1148 = vpop.f32.mrb[0].mxu0
    %1149 = vdwg.mxu0
    %1150 = vrot.lane.b32.xlu0 %v452, 112
    %v1151 = vpop.permute.xlu0 %1150
    %1152 = vrot.lane.b32.xlu0 %v453, 112
    %v1153 = vpop.permute.xlu0 %1152
    %1154 = vrot.lane.b32.xlu0 %v454, 112
    %v1155 = vpop.permute.xlu0 %1154
    %1156 = vrot.lane.b32.xlu0 %v465, 80
    %v1157 = vpop.permute.xlu0 %1156
    %1158 = vrot.lane.b32.xlu0 %v466, 80
    %v1159 = vpop.permute.xlu0 %1158
    %1160 = vrot.lane.b32.xlu0 %v467, 80
    %v1161 = vpop.permute.xlu0 %1160
    %v1162 = vsel %vm496, %v1151, 0
    %v1164 = vsel %vm496, %v1153, 0
    %v1166 = vsel %vm496, %v1155, 0
    %v1168 = vsel %vm496, %v1157, 0
    %v1170 = vsel %vm496, %v1159, 0
    %v1172 = vsel %vm496, %v1161, 0
    %1174 = vmatprep.subr.mxu0 0.0
    %1175 = vmatpush1.xpose.msra.mxu0 %v1168
    %1176 = vmatprep.subr.mxu0 0.0
    %1177 = vmatpush1.xpose.msra.mxu0 %v1170
    %1178 = vmatprep.subr.mxu0 0.0
    %1179 = vmatpush1.xpose.msra.mxu0 %v1172
    %1180 = vmatprep.subr.mxu0 0.0
    %1181 = vmatpush1.xpose.msra.mxu0 0.0
    %1182 = vmatprep.subr.mxu0 0.0
    %1183 = vmatpush1.xpose.msra.mxu0 0.0
    %1184 = vmatprep.subr.mxu0 0.0
    %1185 = vmatpush1.xpose.msra.mxu0 0.0
    %1186 = vmatprep.subr.mxu0 0.0
    %1187 = vmatpush1.xpose.msra.mxu0 0.0
    %1188 = vmatprep.subr.mxu0 0.0
    %1189 = vmatpush1.xpose.msra.mxu0 0.0
    %1190 = vmatprep.subr.mxu0 0.0
    %1191 = vmatpush1.xpose.msra.mxu0 0.0
    %1192 = vmatprep.subr.mxu0 0.0
    %1193 = vmatpush1.xpose.msra.mxu0 0.0
    %1194 = vmatprep.subr.mxu0 0.0
    %1195 = vmatpush1.xpose.msra.mxu0 0.0
    %1196 = vmatprep.subr.mxu0 0.0
    %1197 = vmatpush1.xpose.msra.mxu0 0.0
    %1198 = vmatprep.subr.mxu0 0.0
    %1199 = vmatpush1.xpose.msra.mxu0 0.0
    %1200 = vmatprep.subr.mxu0 0.0
    %1201 = vmatpush1.xpose.msra.mxu0 0.0
    %1202 = vmatprep.subr.mxu0 0.0
    %1203 = vmatpush1.xpose.msra.mxu0 0.0
    %1204 = vmatprep.subr.mxu0 0.0
    %1205 = vmatpush1.xpose.msra.mxu0 0.0
    %1206 = vmatprep.subr.mxu0 0.0
    %1207 = vmatpush1.xpose.msra.mxu0 0.0
    %1208 = vmatprep.subr.mxu0 0.0
    %1209 = vmatpush1.xpose.msra.mxu0 0.0
    %1210 = vmatprep.subr.mxu0 0.0
    %1211 = vmatpush1.xpose.msra.mxu0 0.0
    %1212 = vmatprep.subr.mxu0 0.0
    %1213 = vmatpush1.xpose.msra.mxu0 0.0
    %1214 = vmatprep.subr.mxu0 0.0
    %1215 = vmatpush1.xpose.msra.mxu0 0.0
    %1216 = vmatprep.subr.mxu0 0.0
    %1217 = vmatpush1.xpose.msra.mxu0 0.0
    %1218 = vmatprep.subr.mxu0 0.0
    %1219 = vmatpush1.xpose.msra.mxu0 0.0
    %1220 = vmatprep.subr.mxu0 0.0
    %1221 = vmatpush1.xpose.msra.mxu0 0.0
    %1222 = vmatprep.subr.mxu0 0.0
    %1223 = vmatpush1.xpose.msra.mxu0 0.0
    %1224 = vmatprep.subr.mxu0 0.0
    %1225 = vmatpush1.xpose.msra.mxu0 0.0
    %1226 = vmatprep.subr.mxu0 0.0
    %1227 = vmatpush1.xpose.msra.mxu0 0.0
    %1228 = vmatprep.subr.mxu0 0.0
    %1229 = vmatpush1.xpose.msra.mxu0 0.0
    %1230 = vmatprep.subr.mxu0 0.0
    %1231 = vmatpush1.xpose.msra.mxu0 0.0
    %1232 = vmatprep.subr.mxu0 0.0
    %1233 = vmatpush1.xpose.msra.mxu0 0.0
    %1234 = vmatprep.subr.mxu0 0.0
    %1235 = vmatpush1.xpose.msra.mxu0 0.0
    %1236 = vmatprep.subr.mxu0 0.0
    %1237 = vmatpush1.xpose.msra.mxu0 0.0
    %1238 = vmatprep.mubr.f32.mxu0 0.0
    %1239 = vmatmul.mubr.f32.gmra.mrb[0].mxu0 %v1162
    %v1240 = vpop.f32.mrb[0].mxu0
    %v1241 = vadd.f32 0.0, %v1240
    %v1242 = vpop.f32.mrb[0].mxu0
    %1243 = vmatprep.mubr.f32.mxu0 0.0
    %1244 = vmatmul.mubr.f32.gmra.mrb[0].mxu0 %v1164
    %v1245 = vpop.f32.mrb[0].mxu0
    %v1246 = vadd.f32 0.0, %v1245
    %v1247 = vpop.f32.mrb[0].mxu0
    %1248 = vmatprep.mubr.f32.mxu0 0.0
    %1249 = vmatmul.mubr.f32.gmra.mrb[0].mxu0 %v1166
    %v1250 = vpop.f32.mrb[0].mxu0
    %v1251 = vadd.f32 0.0, %v1250
    %v1252 = vpop.f32.mrb[0].mxu0
    %1253 = vdwg.mxu0
    %v1254 = vmul.f32 %v1241, 0.35355338
    %v1255 = vmul.f32 %v1246, 0.35355338
    %v1256 = vmul.f32 %v1251, 0.35355338
    %v1257 = vsel %vm595, %v1254, -inf
    %1258 = vmax.xlane.f32.xlu0 %v1257
    %v1259 = vpop.xlane.xlu0 %1258
    %v1260 = vsel %vm595, %v1255, -inf
    %1261 = vmax.xlane.f32.xlu0 %v1260
    %v1262 = vpop.xlane.xlu0 %1261
    %v1263 = vsel %vm602, %v1256, -inf
    %1264 = vmax.xlane.f32.xlu0 %v1263
    %v1265 = vpop.xlane.xlu0 %1264
    %v1266 = vsub.f32 %v1254, %v1259
    %v1267 = vsub.f32 %v1255, %v1262
    %v1268 = vsub.f32 %v1256, %v1265
    %v1269 = vmul.f32 %v1266, 1.442695
    %v1270 = vpow.pop %v1269
    %v1271 = vmul.f32 %v1267, 1.442695
    %v1272 = vpow.pop %v1271
    %v1273 = vmul.f32 %v1268, 1.442695
    %v1274 = vpow.pop %v1273
    %v1275 = vsel %vm595, %v1270, 0.0
    %1276 = vadd.xlane.f32.xlu0 %v1275
    %v1277 = vpop.xlane.xlu0 %1276
    %v1278 = vsel %vm595, %v1272, 0.0
    %1279 = vadd.xlane.f32.xlu0 %v1278
    %v1280 = vpop.xlane.xlu0 %1279
    %v1281 = vsel %vm602, %v1274, 0.0
    %1282 = vadd.xlane.f32.xlu0 %v1281
    %v1283 = vpop.xlane.xlu0 %1282
    %v1284 = vrcp.pop %v1277
    %v1285 = vmul.f32 %v1270, %v1284
    %v1286 = vrcp.pop %v1280
    %v1287 = vmul.f32 %v1272, %v1286
    %v1288 = vrcp.pop %v1283
    %v1289 = vmul.f32 %v1274, %v1288
    %1290 = vrot.lane.b32.xlu0 %v478, 48
    %v1291 = vpop.permute.xlu0 %1290
    %1292 = vrot.lane.b32.xlu0 %v479, 48
    %v1293 = vpop.permute.xlu0 %1292
    %1294 = vrot.lane.b32.xlu0 %v480, 48
    %v1295 = vpop.permute.xlu0 %1294
    %v1299 = vsel %vm595, %v1285, 0
    %v1302 = vsel %vm595, %v1287, 0
    %v1305 = vsel %vm595, %v1289, 0
    %v1307 = vsel %vm650, %v1295, 0
    %1309 = vmatprep.subr.mxu0 0.0
    %1310 = vmatpush1.msra.mxu0 %v1291
    %1311 = vmatprep.subr.mxu0 0.0
    %1312 = vmatpush1.msra.mxu0 %v1293
    %1313 = vmatprep.subr.mxu0 0.0
    %1314 = vmatpush1.msra.mxu0 %v1307
    %1315 = vmatprep.subr.mxu0 0.0
    %1316 = vmatpush1.msra.mxu0 0.0
    %1317 = vmatprep.subr.mxu0 0.0
    %1318 = vmatpush1.msra.mxu0 0.0
    %1319 = vmatprep.subr.mxu0 0.0
    %1320 = vmatpush1.msra.mxu0 0.0
    %1321 = vmatprep.subr.mxu0 0.0
    %1322 = vmatpush1.msra.mxu0 0.0
    %1323 = vmatprep.subr.mxu0 0.0
    %1324 = vmatpush1.msra.mxu0 0.0
    %1325 = vmatprep.subr.mxu0 0.0
    %1326 = vmatpush1.msra.mxu0 0.0
    %1327 = vmatprep.subr.mxu0 0.0
    %1328 = vmatpush1.msra.mxu0 0.0
    %1329 = vmatprep.subr.mxu0 0.0
    %1330 = vmatpush1.msra.mxu0 0.0
    %1331 = vmatprep.subr.mxu0 0.0
    %1332 = vmatpush1.msra.mxu0 0.0
    %1333 = vmatprep.subr.mxu0 0.0
    %1334 = vmatpush1.msra.mxu0 0.0
    %1335 = vmatprep.subr.mxu0 0.0
    %1336 = vmatpush1.msra.mxu0 0.0
    %1337 = vmatprep.subr.mxu0 0.0
    %1338 = vmatpush1.msra.mxu0 0.0
    %1339 = vmatprep.subr.mxu0 0.0
    %1340 = vmatpush1.msra.mxu0 0.0
    %1341 = vmatprep.subr.mxu0 0.0
    %1342 = vmatpush1.msra.mxu0 0.0
    %1343 = vmatprep.subr.mxu0 0.0
    %1344 = vmatpush1.msra.mxu0 0.0
    %1345 = vmatprep.subr.mxu0 0.0
    %1346 = vmatpush1.msra.mxu0 0.0
    %1347 = vmatprep.subr.mxu0 0.0
    %1348 = vmatpush1.msra.mxu0 0.0
    %1349 = vmatprep.subr.mxu0 0.0
    %1350 = vmatpush1.msra.mxu0 0.0
    %1351 = vmatprep.subr.mxu0 0.0
    %1352 = vmatpush1.msra.mxu0 0.0
    %1353 = vmatprep.subr.mxu0 0.0
    %1354 = vmatpush1.msra.mxu0 0.0
    %1355 = vmatprep.subr.mxu0 0.0
    %1356 = vmatpush1.msra.mxu0 0.0
    %1357 = vmatprep.subr.mxu0 0.0
    %1358 = vmatpush1.msra.mxu0 0.0
    %1359 = vmatprep.subr.mxu0 0.0
    %1360 = vmatpush1.msra.mxu0 0.0
    %1361 = vmatprep.subr.mxu0 0.0
    %1362 = vmatpush1.msra.mxu0 0.0
    %1363 = vmatprep.subr.mxu0 0.0
    %1364 = vmatpush1.msra.mxu0 0.0
    %1365 = vmatprep.subr.mxu0 0.0
    %1366 = vmatpush1.msra.mxu0 0.0
    %1367 = vmatprep.subr.mxu0 0.0
    %1368 = vmatpush1.msra.mxu0 0.0
    %1369 = vmatprep.subr.mxu0 0.0
    %1370 = vmatpush1.msra.mxu0 0.0
    %1371 = vmatprep.subr.mxu0 0.0
    %1372 = vmatpush1.msra.mxu0 0.0
    %1373 = vmatprep.mubr.f32.mxu0 0.0
    %1374 = vmatmul.mubr.f32.gmra.mrb[0].mxu0 %v1299
    %v1375 = vpop.f32.mrb[0].mxu0
    %v1376 = vadd.f32 0.0, %v1375
    %v1377 = vpop.f32.mrb[0].mxu0
    %1378 = vmatprep.mubr.f32.mxu0 0.0
    %1379 = vmatmul.mubr.f32.gmra.mrb[0].mxu0 %v1302
    %v1380 = vpop.f32.mrb[0].mxu0
    %v1381 = vadd.f32 0.0, %v1380
    %v1382 = vpop.f32.mrb[0].mxu0
    %1383 = vmatprep.mubr.f32.mxu0 0.0
    %1384 = vmatmul.mubr.f32.gmra.mrb[0].mxu0 %v1305
    %v1385 = vpop.f32.mrb[0].mxu0
    %v1386 = vadd.f32 0.0, %v1385
    %v1387 = vpop.f32.mrb[0].mxu0
    %1388 = vdwg.mxu0
    %v1390 = vsel %vm496, %v1376, 0
    %v1393 = vsel %vm496, %v1381, 0
    %v1396 = vsel %vm496, %v1386, 0
    %1398 = vmatprep.subr.mxu0 0.0
    %1399 = vmatpush1.msra.mxu0 %v485
    %1400 = vmatprep.subr.mxu0 0.0
    %1401 = vmatpush1.msra.mxu0 0.0
    %1402 = vmatprep.subr.mxu0 0.0
    %1403 = vmatpush1.msra.mxu0 0.0
    %1404 = vmatprep.subr.mxu0 0.0
    %1405 = vmatpush1.msra.mxu0 0.0
    %1406 = vmatprep.subr.mxu0 0.0
    %1407 = vmatpush1.msra.mxu0 0.0
    %1408 = vmatprep.subr.mxu0 0.0
    %1409 = vmatpush1.msra.mxu0 0.0
    %1410 = vmatprep.subr.mxu0 0.0
    %1411 = vmatpush1.msra.mxu0 0.0
    %1412 = vmatprep.subr.mxu0 0.0
    %1413 = vmatpush1.msra.mxu0 0.0
    %1414 = vmatprep.subr.mxu0 0.0
    %1415 = vmatpush1.msra.mxu0 0.0
    %1416 = vmatprep.subr.mxu0 0.0
    %1417 = vmatpush1.msra.mxu0 0.0
    %1418 = vmatprep.subr.mxu0 0.0
    %1419 = vmatpush1.msra.mxu0 0.0
    %1420 = vmatprep.subr.mxu0 0.0
    %1421 = vmatpush1.msra.mxu0 0.0
    %1422 = vmatprep.subr.mxu0 0.0
    %1423 = vmatpush1.msra.mxu0 0.0
    %1424 = vmatprep.subr.mxu0 0.0
    %1425 = vmatpush1.msra.mxu0 0.0
    %1426 = vmatprep.subr.mxu0 0.0
    %1427 = vmatpush1.msra.mxu0 0.0
    %1428 = vmatprep.subr.mxu0 0.0
    %1429 = vmatpush1.msra.mxu0 0.0
    %1430 = vmatprep.subr.mxu0 0.0
    %1431 = vmatpush1.msra.mxu0 0.0
    %1432 = vmatprep.subr.mxu0 0.0
    %1433 = vmatpush1.msra.mxu0 0.0
    %1434 = vmatprep.subr.mxu0 0.0
    %1435 = vmatpush1.msra.mxu0 0.0
    %1436 = vmatprep.subr.mxu0 0.0
    %1437 = vmatpush1.msra.mxu0 0.0
    %1438 = vmatprep.subr.mxu0 0.0
    %1439 = vmatpush1.msra.mxu0 0.0
    %1440 = vmatprep.subr.mxu0 0.0
    %1441 = vmatpush1.msra.mxu0 0.0
    %1442 = vmatprep.subr.mxu0 0.0
    %1443 = vmatpush1.msra.mxu0 0.0
    %1444 = vmatprep.subr.mxu0 0.0
    %1445 = vmatpush1.msra.mxu0 0.0
    %1446 = vmatprep.subr.mxu0 0.0
    %1447 = vmatpush1.msra.mxu0 0.0
    %1448 = vmatprep.subr.mxu0 0.0
    %1449 = vmatpush1.msra.mxu0 0.0
    %1450 = vmatprep.subr.mxu0 0.0
    %1451 = vmatpush1.msra.mxu0 0.0
    %1452 = vmatprep.subr.mxu0 0.0
    %1453 = vmatpush1.msra.mxu0 0.0
    %1454 = vmatprep.subr.mxu0 0.0
    %1455 = vmatpush1.msra.mxu0 0.0
    %1456 = vmatprep.subr.mxu0 0.0
    %1457 = vmatpush1.msra.mxu0 0.0
    %1458 = vmatprep.subr.mxu0 0.0
    %1459 = vmatpush1.msra.mxu0 0.0
    %1460 = vmatprep.subr.mxu0 0.0
    %1461 = vmatpush1.msra.mxu0 0.0
    %1462 = vmatprep.mubr.f32.mxu0 0.0
    %1463 = vmatmul.mubr.f32.gmra.mrb[0].mxu0 %v1390
    %v1464 = vpop.f32.mrb[0].mxu0
    %v1465 = vadd.f32 0.0, %v1464
    %v1466 = vpop.f32.mrb[0].mxu0
    %1467 = vmatprep.mubr.f32.mxu0 0.0
    %1468 = vmatmul.mubr.f32.gmra.mrb[0].mxu0 %v1393
    %v1469 = vpop.f32.mrb[0].mxu0
    %v1470 = vadd.f32 0.0, %v1469
    %v1471 = vpop.f32.mrb[0].mxu0
    %1472 = vmatprep.mubr.f32.mxu0 0.0
    %1473 = vmatmul.mubr.f32.gmra.mrb[0].mxu0 %v1396
    %v1474 = vpop.f32.mrb[0].mxu0
    %v1475 = vadd.f32 0.0, %v1474
    %v1476 = vpop.f32.mrb[0].mxu0
    %1477 = vdwg.mxu0
    %v1478 = vadd.f32 %v1137, %v1465
    %v1479 = vadd.f32 %v1142, %v1470
    %v1480 = vadd.f32 %v1147, %v1475
    %1481 = vrot.lane.b32.xlu0 %v452, 104
    %v1482 = vpop.permute.xlu0 %1481
    %1483 = vrot.lane.b32.xlu0 %v453, 104
    %v1484 = vpop.permute.xlu0 %1483
    %1485 = vrot.lane.b32.xlu0 %v454, 104
    %v1486 = vpop.permute.xlu0 %1485
    %1487 = vrot.lane.b32.xlu0 %v465, 72
    %v1488 = vpop.permute.xlu0 %1487
    %1489 = vrot.lane.b32.xlu0 %v466, 72
    %v1490 = vpop.permute.xlu0 %1489
    %1491 = vrot.lane.b32.xlu0 %v467, 72
    %v1492 = vpop.permute.xlu0 %1491
    %v1493 = vsel %vm496, %v1482, 0
    %v1495 = vsel %vm496, %v1484, 0
    %v1497 = vsel %vm496, %v1486, 0
    %v1499 = vsel %vm496, %v1488, 0
    %v1501 = vsel %vm496, %v1490, 0
    %v1503 = vsel %vm496, %v1492, 0
    %1505 = vmatprep.subr.mxu0 0.0
    %1506 = vmatpush1.xpose.msra.mxu0 %v1499
    %1507 = vmatprep.subr.mxu0 0.0
    %1508 = vmatpush1.xpose.msra.mxu0 %v1501
    %1509 = vmatprep.subr.mxu0 0.0
    %1510 = vmatpush1.xpose.msra.mxu0 %v1503
    %1511 = vmatprep.subr.mxu0 0.0
    %1512 = vmatpush1.xpose.msra.mxu0 0.0
    %1513 = vmatprep.subr.mxu0 0.0
    %1514 = vmatpush1.xpose.msra.mxu0 0.0
    %1515 = vmatprep.subr.mxu0 0.0
    %1516 = vmatpush1.xpose.msra.mxu0 0.0
    %1517 = vmatprep.subr.mxu0 0.0
    %1518 = vmatpush1.xpose.msra.mxu0 0.0
    %1519 = vmatprep.subr.mxu0 0.0
    %1520 = vmatpush1.xpose.msra.mxu0 0.0
    %1521 = vmatprep.subr.mxu0 0.0
    %1522 = vmatpush1.xpose.msra.mxu0 0.0
    %1523 = vmatprep.subr.mxu0 0.0
    %1524 = vmatpush1.xpose.msra.mxu0 0.0
    %1525 = vmatprep.subr.mxu0 0.0
    %1526 = vmatpush1.xpose.msra.mxu0 0.0
    %1527 = vmatprep.subr.mxu0 0.0
    %1528 = vmatpush1.xpose.msra.mxu0 0.0
    %1529 = vmatprep.subr.mxu0 0.0
    %1530 = vmatpush1.xpose.msra.mxu0 0.0
    %1531 = vmatprep.subr.mxu0 0.0
    %1532 = vmatpush1.xpose.msra.mxu0 0.0
    %1533 = vmatprep.subr.mxu0 0.0
    %1534 = vmatpush1.xpose.msra.mxu0 0.0
    %1535 = vmatprep.subr.mxu0 0.0
    %1536 = vmatpush1.xpose.msra.mxu0 0.0
    %1537 = vmatprep.subr.mxu0 0.0
    %1538 = vmatpush1.xpose.msra.mxu0 0.0
    %1539 = vmatprep.subr.mxu0 0.0
    %1540 = vmatpush1.xpose.msra.mxu0 0.0
    %1541 = vmatprep.subr.mxu0 0.0
    %1542 = vmatpush1.xpose.msra.mxu0 0.0
    %1543 = vmatprep.subr.mxu0 0.0
    %1544 = vmatpush1.xpose.msra.mxu0 0.0
    %1545 = vmatprep.subr.mxu0 0.0
    %1546 = vmatpush1.xpose.msra.mxu0 0.0
    %1547 = vmatprep.subr.mxu0 0.0
    %1548 = vmatpush1.xpose.msra.mxu0 0.0
    %1549 = vmatprep.subr.mxu0 0.0
    %1550 = vmatpush1.xpose.msra.mxu0 0.0
    %1551 = vmatprep.subr.mxu0 0.0
    %1552 = vmatpush1.xpose.msra.mxu0 0.0
    %1553 = vmatprep.subr.mxu0 0.0
    %1554 = vmatpush1.xpose.msra.mxu0 0.0
    %1555 = vmatprep.subr.mxu0 0.0
    %1556 = vmatpush1.xpose.msra.mxu0 0.0
    %1557 = vmatprep.subr.mxu0 0.0
    %1558 = vmatpush1.xpose.msra.mxu0 0.0
    %1559 = vmatprep.subr.mxu0 0.0
    %1560 = vmatpush1.xpose.msra.mxu0 0.0
    %1561 = vmatprep.subr.mxu0 0.0
    %1562 = vmatpush1.xpose.msra.mxu0 0.0
    %1563 = vmatprep.subr.mxu0 0.0
    %1564 = vmatpush1.xpose.msra.mxu0 0.0
    %1565 = vmatprep.subr.mxu0 0.0
    %1566 = vmatpush1.xpose.msra.mxu0 0.0
    %1567 = vmatprep.subr.mxu0 0.0
    %1568 = vmatpush1.xpose.msra.mxu0 0.0
    %1569 = vmatprep.mubr.f32.mxu0 0.0
    %1570 = vmatmul.mubr.f32.gmra.mrb[0].mxu0 %v1493
    %v1571 = vpop.f32.mrb[0].mxu0
    %v1572 = vadd.f32 0.0, %v1571
    %v1573 = vpop.f32.mrb[0].mxu0
    %1574 = vmatprep.mubr.f32.mxu0 0.0
    %1575 = vmatmul.mubr.f32.gmra.mrb[0].mxu0 %v1495
    %v1576 = vpop.f32.mrb[0].mxu0
    %v1577 = vadd.f32 0.0, %v1576
    %v1578 = vpop.f32.mrb[0].mxu0
    %1579 = vmatprep.mubr.f32.mxu0 0.0
    %1580 = vmatmul.mubr.f32.gmra.mrb[0].mxu0 %v1497
    %v1581 = vpop.f32.mrb[0].mxu0
    %v1582 = vadd.f32 0.0, %v1581
    %v1583 = vpop.f32.mrb[0].mxu0
    %1584 = vdwg.mxu0
    %v1585 = vmul.f32 %v1572, 0.35355338
    %v1586 = vmul.f32 %v1577, 0.35355338
    %v1587 = vmul.f32 %v1582, 0.35355338
    %v1588 = vsel %vm595, %v1585, -inf
    %1589 = vmax.xlane.f32.xlu0 %v1588
    %v1590 = vpop.xlane.xlu0 %1589
    %v1591 = vsel %vm595, %v1586, -inf
    %1592 = vmax.xlane.f32.xlu0 %v1591
    %v1593 = vpop.xlane.xlu0 %1592
    %v1594 = vsel %vm602, %v1587, -inf
    %1595 = vmax.xlane.f32.xlu0 %v1594
    %v1596 = vpop.xlane.xlu0 %1595
    %v1597 = vsub.f32 %v1585, %v1590
    %v1598 = vsub.f32 %v1586, %v1593
    %v1599 = vsub.f32 %v1587, %v1596
    %v1600 = vmul.f32 %v1597, 1.442695
    %v1601 = vpow.pop %v1600
    %v1602 = vmul.f32 %v1598, 1.442695
    %v1603 = vpow.pop %v1602
    %v1604 = vmul.f32 %v1599, 1.442695
    %v1605 = vpow.pop %v1604
    %v1606 = vsel %vm595, %v1601, 0.0
    %1607 = vadd.xlane.f32.xlu0 %v1606
    %v1608 = vpop.xlane.xlu0 %1607
    %v1609 = vsel %vm595, %v1603, 0.0
    %1610 = vadd.xlane.f32.xlu0 %v1609
    %v1611 = vpop.xlane.xlu0 %1610
    %v1612 = vsel %vm602, %v1605, 0.0
    %1613 = vadd.xlane.f32.xlu0 %v1612
    %v1614 = vpop.xlane.xlu0 %1613
    %v1615 = vrcp.pop %v1608
    %v1616 = vmul.f32 %v1601, %v1615
    %v1617 = vrcp.pop %v1611
    %v1618 = vmul.f32 %v1603, %v1617
    %v1619 = vrcp.pop %v1614
    %v1620 = vmul.f32 %v1605, %v1619
    %1621 = vrot.lane.b32.xlu0 %v478, 40
    %v1622 = vpop.permute.xlu0 %1621
    %1623 = vrot.lane.b32.xlu0 %v479, 40
    %v1624 = vpop.permute.xlu0 %1623
    %1625 = vrot.lane.b32.xlu0 %v480, 40
    %v1626 = vpop.permute.xlu0 %1625
    %v1630 = vsel %vm595, %v1616, 0
    %v1633 = vsel %vm595, %v1618, 0
    %v1636 = vsel %vm595, %v1620, 0
    %v1638 = vsel %vm650, %v1626, 0
    %1640 = vmatprep.subr.mxu0 0.0
    %1641 = vmatpush1.msra.mxu0 %v1622
    %1642 = vmatprep.subr.mxu0 0.0
    %1643 = vmatpush1.msra.mxu0 %v1624
    %1644 = vmatprep.subr.mxu0 0.0
    %1645 = vmatpush1.msra.mxu0 %v1638
    %1646 = vmatprep.subr.mxu0 0.0
    %1647 = vmatpush1.msra.mxu0 0.0
    %1648 = vmatprep.subr.mxu0 0.0
    %1649 = vmatpush1.msra.mxu0 0.0
    %1650 = vmatprep.subr.mxu0 0.0
    %1651 = vmatpush1.msra.mxu0 0.0
    %1652 = vmatprep.subr.mxu0 0.0
    %1653 = vmatpush1.msra.mxu0 0.0
    %1654 = vmatprep.subr.mxu0 0.0
    %1655 = vmatpush1.msra.mxu0 0.0
    %1656 = vmatprep.subr.mxu0 0.0
    %1657 = vmatpush1.msra.mxu0 0.0
    %1658 = vmatprep.subr.mxu0 0.0
    %1659 = vmatpush1.msra.mxu0 0.0
    %1660 = vmatprep.subr.mxu0 0.0
    %1661 = vmatpush1.msra.mxu0 0.0
    %1662 = vmatprep.subr.mxu0 0.0
    %1663 = vmatpush1.msra.mxu0 0.0
    %1664 = vmatprep.subr.mxu0 0.0
    %1665 = vmatpush1.msra.mxu0 0.0
    %1666 = vmatprep.subr.mxu0 0.0
    %1667 = vmatpush1.msra.mxu0 0.0
    %1668 = vmatprep.subr.mxu0 0.0
    %1669 = vmatpush1.msra.mxu0 0.0
    %1670 = vmatprep.subr.mxu0 0.0
    %1671 = vmatpush1.msra.mxu0 0.0
    %1672 = vmatprep.subr.mxu0 0.0
    %1673 = vmatpush1.msra.mxu0 0.0
    %1674 = vmatprep.subr.mxu0 0.0
    %1675 = vmatpush1.msra.mxu0 0.0
    %1676 = vmatprep.subr.mxu0 0.0
    %1677 = vmatpush1.msra.mxu0 0.0
    %1678 = vmatprep.subr.mxu0 0.0
    %1679 = vmatpush1.msra.mxu0 0.0
    %1680 = vmatprep.subr.mxu0 0.0
    %1681 = vmatpush1.msra.mxu0 0.0
    %1682 = vmatprep.subr.mxu0 0.0
    %1683 = vmatpush1.msra.mxu0 0.0
    %1684 = vmatprep.subr.mxu0 0.0
    %1685 = vmatpush1.msra.mxu0 0.0
    %1686 = vmatprep.subr.mxu0 0.0
    %1687 = vmatpush1.msra.mxu0 0.0
    %1688 = vmatprep.subr.mxu0 0.0
    %1689 = vmatpush1.msra.mxu0 0.0
    %1690 = vmatprep.subr.mxu0 0.0
    %1691 = vmatpush1.msra.mxu0 0.0
    %1692 = vmatprep.subr.mxu0 0.0
    %1693 = vmatpush1.msra.mxu0 0.0
    %1694 = vmatprep.subr.mxu0 0.0
    %1695 = vmatpush1.msra.mxu0 0.0
    %1696 = vmatprep.subr.mxu0 0.0
    %1697 = vmatpush1.msra.mxu0 0.0
    %1698 = vmatprep.subr.mxu0 0.0
    %1699 = vmatpush1.msra.mxu0 0.0
    %1700 = vmatprep.subr.mxu0 0.0
    %1701 = vmatpush1.msra.mxu0 0.0
    %1702 = vmatprep.subr.mxu0 0.0
    %1703 = vmatpush1.msra.mxu0 0.0
    %1704 = vmatprep.mubr.f32.mxu0 0.0
    %1705 = vmatmul.mubr.f32.gmra.mrb[0].mxu0 %v1630
    %v1706 = vpop.f32.mrb[0].mxu0
    %v1707 = vadd.f32 0.0, %v1706
    %v1708 = vpop.f32.mrb[0].mxu0
    %1709 = vmatprep.mubr.f32.mxu0 0.0
    %1710 = vmatmul.mubr.f32.gmra.mrb[0].mxu0 %v1633
    %v1711 = vpop.f32.mrb[0].mxu0
    %v1712 = vadd.f32 0.0, %v1711
    %v1713 = vpop.f32.mrb[0].mxu0
    %1714 = vmatprep.mubr.f32.mxu0 0.0
    %1715 = vmatmul.mubr.f32.gmra.mrb[0].mxu0 %v1636
    %v1716 = vpop.f32.mrb[0].mxu0
    %v1717 = vadd.f32 0.0, %v1716
    %v1718 = vpop.f32.mrb[0].mxu0
    %1719 = vdwg.mxu0
    %v1721 = vsel %vm496, %v1707, 0
    %v1724 = vsel %vm496, %v1712, 0
    %v1727 = vsel %vm496, %v1717, 0
    %1729 = vmatprep.subr.mxu0 0.0
    %1730 = vmatpush1.msra.mxu0 %v486
    %1731 = vmatprep.subr.mxu0 0.0
    %1732 = vmatpush1.msra.mxu0 0.0
    %1733 = vmatprep.subr.mxu0 0.0
    %1734 = vmatpush1.msra.mxu0 0.0
    %1735 = vmatprep.subr.mxu0 0.0
    %1736 = vmatpush1.msra.mxu0 0.0
    %1737 = vmatprep.subr.mxu0 0.0
    %1738 = vmatpush1.msra.mxu0 0.0
    %1739 = vmatprep.subr.mxu0 0.0
    %1740 = vmatpush1.msra.mxu0 0.0
    %1741 = vmatprep.subr.mxu0 0.0
    %1742 = vmatpush1.msra.mxu0 0.0
    %1743 = vmatprep.subr.mxu0 0.0
    %1744 = vmatpush1.msra.mxu0 0.0
    %1745 = vmatprep.subr.mxu0 0.0
    %1746 = vmatpush1.msra.mxu0 0.0
    %1747 = vmatprep.subr.mxu0 0.0
    %1748 = vmatpush1.msra.mxu0 0.0
    %1749 = vmatprep.subr.mxu0 0.0
    %1750 = vmatpush1.msra.mxu0 0.0
    %1751 = vmatprep.subr.mxu0 0.0
    %1752 = vmatpush1.msra.mxu0 0.0
    %1753 = vmatprep.subr.mxu0 0.0
    %1754 = vmatpush1.msra.mxu0 0.0
    %1755 = vmatprep.subr.mxu0 0.0
    %1756 = vmatpush1.msra.mxu0 0.0
    %1757 = vmatprep.subr.mxu0 0.0
    %1758 = vmatpush1.msra.mxu0 0.0
    %1759 = vmatprep.subr.mxu0 0.0
    %1760 = vmatpush1.msra.mxu0 0.0
    %1761 = vmatprep.subr.mxu0 0.0
    %1762 = vmatpush1.msra.mxu0 0.0
    %1763 = vmatprep.subr.mxu0 0.0
    %1764 = vmatpush1.msra.mxu0 0.0
    %1765 = vmatprep.subr.mxu0 0.0
    %1766 = vmatpush1.msra.mxu0 0.0
    %1767 = vmatprep.subr.mxu0 0.0
    %1768 = vmatpush1.msra.mxu0 0.0
    %1769 = vmatprep.subr.mxu0 0.0
    %1770 = vmatpush1.msra.mxu0 0.0
    %1771 = vmatprep.subr.mxu0 0.0
    %1772 = vmatpush1.msra.mxu0 0.0
    %1773 = vmatprep.subr.mxu0 0.0
    %1774 = vmatpush1.msra.mxu0 0.0
    %1775 = vmatprep.subr.mxu0 0.0
    %1776 = vmatpush1.msra.mxu0 0.0
    %1777 = vmatprep.subr.mxu0 0.0
    %1778 = vmatpush1.msra.mxu0 0.0
    %1779 = vmatprep.subr.mxu0 0.0
    %1780 = vmatpush1.msra.mxu0 0.0
    %1781 = vmatprep.subr.mxu0 0.0
    %1782 = vmatpush1.msra.mxu0 0.0
    %1783 = vmatprep.subr.mxu0 0.0
    %1784 = vmatpush1.msra.mxu0 0.0
    %1785 = vmatprep.subr.mxu0 0.0
    %1786 = vmatpush1.msra.mxu0 0.0
    %1787 = vmatprep.subr.mxu0 0.0
    %1788 = vmatpush1.msra.mxu0 0.0
    %1789 = vmatprep.subr.mxu0 0.0
    %1790 = vmatpush1.msra.mxu0 0.0
    %1791 = vmatprep.subr.mxu0 0.0
    %1792 = vmatpush1.msra.mxu0 0.0
    %1793 = vmatprep.mubr.f32.mxu0 0.0
    %1794 = vmatmul.mubr.f32.gmra.mrb[0].mxu0 %v1721
    %v1795 = vpop.f32.mrb[0].mxu0
    %v1796 = vadd.f32 0.0, %v1795
    %v1797 = vpop.f32.mrb[0].mxu0
    %1798 = vmatprep.mubr.f32.mxu0 0.0
    %1799 = vmatmul.mubr.f32.gmra.mrb[0].mxu0 %v1724
    %v1800 = vpop.f32.mrb[0].mxu0
    %v1801 = vadd.f32 0.0, %v1800
    %v1802 = vpop.f32.mrb[0].mxu0
    %1803 = vmatprep.mubr.f32.mxu0 0.0
    %1804 = vmatmul.mubr.f32.gmra.mrb[0].mxu0 %v1727
    %v1805 = vpop.f32.mrb[0].mxu0
    %v1806 = vadd.f32 0.0, %v1805
    %v1807 = vpop.f32.mrb[0].mxu0
    %1808 = vdwg.mxu0
    %v1809 = vadd.f32 %v1478, %v1796
    %v1810 = vadd.f32 %v1479, %v1801
    %v1811 = vadd.f32 %v1480, %v1806
    %vm1814 = vcmask 1046528
    %v1815 = vrot.slane %v454, 1
    %v1816 = vrot.slane %v455, 1
    %v1817 = vsel %vm1814, %v1815, %v1816
    %v1818 = vrot.slane %v456, 1
    %v1819 = vsel %vm1814, %v1816, %v1818
    %v1822 = vrot.slane %v467, 1
    %v1823 = vrot.slane %v468, 1
    %v1824 = vsel %vm1814, %v1822, %v1823
    %v1825 = vrot.slane %v469, 1
    %v1826 = vsel %vm1814, %v1823, %v1825
    %1827 = vrot.lane.b32.xlu0 %v1824, 96
    %v1828 = vpop.permute.xlu0 %1827
    %1829 = vrot.lane.b32.xlu0 %v1826, 96
    %v1830 = vpop.permute.xlu0 %1829
    %1831 = vrot.lane.b32.xlu0 %v1825, 96
    %v1832 = vpop.permute.xlu0 %1831
    %v1833 = vsel %vm496, %v1817, 0
    %v1835 = vsel %vm496, %v1819, 0
    %v1837 = vsel %vm496, %v1818, 0
    %v1839 = vsel %vm496, %v1828, 0
    %v1841 = vsel %vm496, %v1830, 0
    %v1843 = vsel %vm496, %v1832, 0
    %1845 = vmatprep.subr.mxu0 0.0
    %1846 = vmatpush1.xpose.msra.mxu0 %v1839
    %1847 = vmatprep.subr.mxu0 0.0
    %1848 = vmatpush1.xpose.msra.mxu0 %v1841
    %1849 = vmatprep.subr.mxu0 0.0
    %1850 = vmatpush1.xpose.msra.mxu0 %v1843
    %1851 = vmatprep.subr.mxu0 0.0
    %1852 = vmatpush1.xpose.msra.mxu0 0.0
    %1853 = vmatprep.subr.mxu0 0.0
    %1854 = vmatpush1.xpose.msra.mxu0 0.0
    %1855 = vmatprep.subr.mxu0 0.0
    %1856 = vmatpush1.xpose.msra.mxu0 0.0
    %1857 = vmatprep.subr.mxu0 0.0
    %1858 = vmatpush1.xpose.msra.mxu0 0.0
    %1859 = vmatprep.subr.mxu0 0.0
    %1860 = vmatpush1.xpose.msra.mxu0 0.0
    %1861 = vmatprep.subr.mxu0 0.0
    %1862 = vmatpush1.xpose.msra.mxu0 0.0
    %1863 = vmatprep.subr.mxu0 0.0
    %1864 = vmatpush1.xpose.msra.mxu0 0.0
    %1865 = vmatprep.subr.mxu0 0.0
    %1866 = vmatpush1.xpose.msra.mxu0 0.0
    %1867 = vmatprep.subr.mxu0 0.0
    %1868 = vmatpush1.xpose.msra.mxu0 0.0
    %1869 = vmatprep.subr.mxu0 0.0
    %1870 = vmatpush1.xpose.msra.mxu0 0.0
    %1871 = vmatprep.subr.mxu0 0.0
    %1872 = vmatpush1.xpose.msra.mxu0 0.0
    %1873 = vmatprep.subr.mxu0 0.0
    %1874 = vmatpush1.xpose.msra.mxu0 0.0
    %1875 = vmatprep.subr.mxu0 0.0
    %1876 = vmatpush1.xpose.msra.mxu0 0.0
    %1877 = vmatprep.subr.mxu0 0.0
    %1878 = vmatpush1.xpose.msra.mxu0 0.0
    %1879 = vmatprep.subr.mxu0 0.0
    %1880 = vmatpush1.xpose.msra.mxu0 0.0
    %1881 = vmatprep.subr.mxu0 0.0
    %1882 = vmatpush1.xpose.msra.mxu0 0.0
    %1883 = vmatprep.subr.mxu0 0.0
    %1884 = vmatpush1.xpose.msra.mxu0 0.0
    %1885 = vmatprep.subr.mxu0 0.0
    %1886 = vmatpush1.xpose.msra.mxu0 0.0
    %1887 = vmatprep.subr.mxu0 0.0
    %1888 = vmatpush1.xpose.msra.mxu0 0.0
    %1889 = vmatprep.subr.mxu0 0.0
    %1890 = vmatpush1.xpose.msra.mxu0 0.0
    %1891 = vmatprep.subr.mxu0 0.0
    %1892 = vmatpush1.xpose.msra.mxu0 0.0
    %1893 = vmatprep.subr.mxu0 0.0
    %1894 = vmatpush1.xpose.msra.mxu0 0.0
    %1895 = vmatprep.subr.mxu0 0.0
    %1896 = vmatpush1.xpose.msra.mxu0 0.0
    %1897 = vmatprep.subr.mxu0 0.0
    %1898 = vmatpush1.xpose.msra.mxu0 0.0
    %1899 = vmatprep.subr.mxu0 0.0
    %1900 = vmatpush1.xpose.msra.mxu0 0.0
    %1901 = vmatprep.subr.mxu0 0.0
    %1902 = vmatpush1.xpose.msra.mxu0 0.0
    %1903 = vmatprep.subr.mxu0 0.0
    %1904 = vmatpush1.xpose.msra.mxu0 0.0
    %1905 = vmatprep.subr.mxu0 0.0
    %1906 = vmatpush1.xpose.msra.mxu0 0.0
    %1907 = vmatprep.subr.mxu0 0.0
    %1908 = vmatpush1.xpose.msra.mxu0 0.0
    %1909 = vmatprep.mubr.f32.mxu0 0.0
    %1910 = vmatmul.mubr.f32.gmra.mrb[0].mxu0 %v1833
    %v1911 = vpop.f32.mrb[0].mxu0
    %v1912 = vadd.f32 0.0, %v1911
    %v1913 = vpop.f32.mrb[0].mxu0
    %1914 = vmatprep.mubr.f32.mxu0 0.0
    %1915 = vmatmul.mubr.f32.gmra.mrb[0].mxu0 %v1835
    %v1916 = vpop.f32.mrb[0].mxu0
    %v1917 = vadd.f32 0.0, %v1916
    %v1918 = vpop.f32.mrb[0].mxu0
    %1919 = vmatprep.mubr.f32.mxu0 0.0
    %1920 = vmatmul.mubr.f32.gmra.mrb[0].mxu0 %v1837
    %v1921 = vpop.f32.mrb[0].mxu0
    %v1922 = vadd.f32 0.0, %v1921
    %v1923 = vpop.f32.mrb[0].mxu0
    %1924 = vdwg.mxu0
    %v1925 = vmul.f32 %v1912, 0.35355338
    %v1926 = vmul.f32 %v1917, 0.35355338
    %v1927 = vmul.f32 %v1922, 0.35355338
    %v1928 = vsel %vm595, %v1925, -inf
    %1929 = vmax.xlane.f32.xlu0 %v1928
    %v1930 = vpop.xlane.xlu0 %1929
    %v1931 = vsel %vm595, %v1926, -inf
    %1932 = vmax.xlane.f32.xlu0 %v1931
    %v1933 = vpop.xlane.xlu0 %1932
    %v1934 = vsel %vm602, %v1927, -inf
    %1935 = vmax.xlane.f32.xlu0 %v1934
    %v1936 = vpop.xlane.xlu0 %1935
    %v1937 = vsub.f32 %v1925, %v1930
    %v1938 = vsub.f32 %v1926, %v1933
    %v1939 = vsub.f32 %v1927, %v1936
    %v1940 = vmul.f32 %v1937, 1.442695
    %v1941 = vpow.pop %v1940
    %v1942 = vmul.f32 %v1938, 1.442695
    %v1943 = vpow.pop %v1942
    %v1944 = vmul.f32 %v1939, 1.442695
    %v1945 = vpow.pop %v1944
    %v1946 = vsel %vm595, %v1941, 0.0
    %1947 = vadd.xlane.f32.xlu0 %v1946
    %v1948 = vpop.xlane.xlu0 %1947
    %v1949 = vsel %vm595, %v1943, 0.0
    %1950 = vadd.xlane.f32.xlu0 %v1949
    %v1951 = vpop.xlane.xlu0 %1950
    %v1952 = vsel %vm602, %v1945, 0.0
    %1953 = vadd.xlane.f32.xlu0 %v1952
    %v1954 = vpop.xlane.xlu0 %1953
    %v1955 = vrcp.pop %v1948
    %v1956 = vmul.f32 %v1941, %v1955
    %v1957 = vrcp.pop %v1951
    %v1958 = vmul.f32 %v1943, %v1957
    %v1959 = vrcp.pop %v1954
    %v1960 = vmul.f32 %v1945, %v1959
    %v1963 = vrot.slane %v480, 1
    %v1964 = vrot.slane %v481, 1
    %v1965 = vsel %vm1814, %v1963, %v1964
    %v1966 = vrot.slane %v482, 1
    %v1967 = vsel %vm1814, %v1964, %v1966
    %1968 = vrot.lane.b32.xlu0 %v1965, 64
    %v1969 = vpop.permute.xlu0 %1968
    %1970 = vrot.lane.b32.xlu0 %v1967, 64
    %v1971 = vpop.permute.xlu0 %1970
    %1972 = vrot.lane.b32.xlu0 %v1966, 64
    %v1973 = vpop.permute.xlu0 %1972
    %v1977 = vsel %vm595, %v1956, 0
    %v1980 = vsel %vm595, %v1958, 0
    %v1983 = vsel %vm595, %v1960, 0
    %v1985 = vsel %vm650, %v1973, 0
    %1987 = vmatprep.subr.mxu0 0.0
    %1988 = vmatpush1.msra.mxu0 %v1969
    %1989 = vmatprep.subr.mxu0 0.0
    %1990 = vmatpush1.msra.mxu0 %v1971
    %1991 = vmatprep.subr.mxu0 0.0
    %1992 = vmatpush1.msra.mxu0 %v1985
    %1993 = vmatprep.subr.mxu0 0.0
    %1994 = vmatpush1.msra.mxu0 0.0
    %1995 = vmatprep.subr.mxu0 0.0
    %1996 = vmatpush1.msra.mxu0 0.0
    %1997 = vmatprep.subr.mxu0 0.0
    %1998 = vmatpush1.msra.mxu0 0.0
    %1999 = vmatprep.subr.mxu0 0.0
    %2000 = vmatpush1.msra.mxu0 0.0
    %2001 = vmatprep.subr.mxu0 0.0
    %2002 = vmatpush1.msra.mxu0 0.0
    %2003 = vmatprep.subr.mxu0 0.0
    %2004 = vmatpush1.msra.mxu0 0.0
    %2005 = vmatprep.subr.mxu0 0.0
    %2006 = vmatpush1.msra.mxu0 0.0
    %2007 = vmatprep.subr.mxu0 0.0
    %2008 = vmatpush1.msra.mxu0 0.0
    %2009 = vmatprep.subr.mxu0 0.0
    %2010 = vmatpush1.msra.mxu0 0.0
    %2011 = vmatprep.subr.mxu0 0.0
    %2012 = vmatpush1.msra.mxu0 0.0
    %2013 = vmatprep.subr.mxu0 0.0
    %2014 = vmatpush1.msra.mxu0 0.0
    %2015 = vmatprep.subr.mxu0 0.0
    %2016 = vmatpush1.msra.mxu0 0.0
    %2017 = vmatprep.subr.mxu0 0.0
    %2018 = vmatpush1.msra.mxu0 0.0
    %2019 = vmatprep.subr.mxu0 0.0
    %2020 = vmatpush1.msra.mxu0 0.0
    %2021 = vmatprep.subr.mxu0 0.0
    %2022 = vmatpush1.msra.mxu0 0.0
    %2023 = vmatprep.subr.mxu0 0.0
    %2024 = vmatpush1.msra.mxu0 0.0
    %2025 = vmatprep.subr.mxu0 0.0
    %2026 = vmatpush1.msra.mxu0 0.0
    %2027 = vmatprep.subr.mxu0 0.0
    %2028 = vmatpush1.msra.mxu0 0.0
    %2029 = vmatprep.subr.mxu0 0.0
    %2030 = vmatpush1.msra.mxu0 0.0
    %2031 = vmatprep.subr.mxu0 0.0
    %2032 = vmatpush1.msra.mxu0 0.0
    %2033 = vmatprep.subr.mxu0 0.0
    %2034 = vmatpush1.msra.mxu0 0.0
    %2035 = vmatprep.subr.mxu0 0.0
    %2036 = vmatpush1.msra.mxu0 0.0
    %2037 = vmatprep.subr.mxu0 0.0
    %2038 = vmatpush1.msra.mxu0 0.0
    %2039 = vmatprep.subr.mxu0 0.0
    %2040 = vmatpush1.msra.mxu0 0.0
    %2041 = vmatprep.subr.mxu0 0.0
    %2042 = vmatpush1.msra.mxu0 0.0
    %2043 = vmatprep.subr.mxu0 0.0
    %2044 = vmatpush1.msra.mxu0 0.0
    %2045 = vmatprep.subr.mxu0 0.0
    %2046 = vmatpush1.msra.mxu0 0.0
    %2047 = vmatprep.subr.mxu0 0.0
    %2048 = vmatpush1.msra.mxu0 0.0
    %2049 = vmatprep.subr.mxu0 0.0
    %2050 = vmatpush1.msra.mxu0 0.0
    %2051 = vmatprep.mubr.f32.mxu0 0.0
    %2052 = vmatmul.mubr.f32.gmra.mrb[0].mxu0 %v1977
    %v2053 = vpop.f32.mrb[0].mxu0
    %v2054 = vadd.f32 0.0, %v2053
    %v2055 = vpop.f32.mrb[0].mxu0
    %2056 = vmatprep.mubr.f32.mxu0 0.0
    %2057 = vmatmul.mubr.f32.gmra.mrb[0].mxu0 %v1980
    %v2058 = vpop.f32.mrb[0].mxu0
    %v2059 = vadd.f32 0.0, %v2058
    %v2060 = vpop.f32.mrb[0].mxu0
    %2061 = vmatprep.mubr.f32.mxu0 0.0
    %2062 = vmatmul.mubr.f32.gmra.mrb[0].mxu0 %v1983
    %v2063 = vpop.f32.mrb[0].mxu0
    %v2064 = vadd.f32 0.0, %v2063
    %v2065 = vpop.f32.mrb[0].mxu0
    %2066 = vdwg.mxu0
    %2067 = vrot.lane.b32.xlu0 %v1817, 120
    %v2068 = vpop.permute.xlu0 %2067
    %2069 = vrot.lane.b32.xlu0 %v1819, 120
    %v2070 = vpop.permute.xlu0 %2069
    %2071 = vrot.lane.b32.xlu0 %v1818, 120
    %v2072 = vpop.permute.xlu0 %2071
    %2073 = vrot.lane.b32.xlu0 %v1824, 88
    %v2074 = vpop.permute.xlu0 %2073
    %2075 = vrot.lane.b32.xlu0 %v1826, 88
    %v2076 = vpop.permute.xlu0 %2075
    %2077 = vrot.lane.b32.xlu0 %v1825, 88
    %v2078 = vpop.permute.xlu0 %2077
    %v2079 = vsel %vm496, %v2068, 0
    %v2081 = vsel %vm496, %v2070, 0
    %v2083 = vsel %vm496, %v2072, 0
    %v2085 = vsel %vm496, %v2074, 0
    %v2087 = vsel %vm496, %v2076, 0
    %v2089 = vsel %vm496, %v2078, 0
    %2091 = vmatprep.subr.mxu0 0.0
    %2092 = vmatpush1.xpose.msra.mxu0 %v2085
    %2093 = vmatprep.subr.mxu0 0.0
    %2094 = vmatpush1.xpose.msra.mxu0 %v2087
    %2095 = vmatprep.subr.mxu0 0.0
    %2096 = vmatpush1.xpose.msra.mxu0 %v2089
    %2097 = vmatprep.subr.mxu0 0.0
    %2098 = vmatpush1.xpose.msra.mxu0 0.0
    %2099 = vmatprep.subr.mxu0 0.0
    %2100 = vmatpush1.xpose.msra.mxu0 0.0
    %2101 = vmatprep.subr.mxu0 0.0
    %2102 = vmatpush1.xpose.msra.mxu0 0.0
    %2103 = vmatprep.subr.mxu0 0.0
    %2104 = vmatpush1.xpose.msra.mxu0 0.0
    %2105 = vmatprep.subr.mxu0 0.0
    %2106 = vmatpush1.xpose.msra.mxu0 0.0
    %2107 = vmatprep.subr.mxu0 0.0
    %2108 = vmatpush1.xpose.msra.mxu0 0.0
    %2109 = vmatprep.subr.mxu0 0.0
    %2110 = vmatpush1.xpose.msra.mxu0 0.0
    %2111 = vmatprep.subr.mxu0 0.0
    %2112 = vmatpush1.xpose.msra.mxu0 0.0
    %2113 = vmatprep.subr.mxu0 0.0
    %2114 = vmatpush1.xpose.msra.mxu0 0.0
    %2115 = vmatprep.subr.mxu0 0.0
    %2116 = vmatpush1.xpose.msra.mxu0 0.0
    %2117 = vmatprep.subr.mxu0 0.0
    %2118 = vmatpush1.xpose.msra.mxu0 0.0
    %2119 = vmatprep.subr.mxu0 0.0
    %2120 = vmatpush1.xpose.msra.mxu0 0.0
    %2121 = vmatprep.subr.mxu0 0.0
    %2122 = vmatpush1.xpose.msra.mxu0 0.0
    %2123 = vmatprep.subr.mxu0 0.0
    %2124 = vmatpush1.xpose.msra.mxu0 0.0
    %2125 = vmatprep.subr.mxu0 0.0
    %2126 = vmatpush1.xpose.msra.mxu0 0.0
    %2127 = vmatprep.subr.mxu0 0.0
    %2128 = vmatpush1.xpose.msra.mxu0 0.0
    %2129 = vmatprep.subr.mxu0 0.0
    %2130 = vmatpush1.xpose.msra.mxu0 0.0
    %2131 = vmatprep.subr.mxu0 0.0
    %2132 = vmatpush1.xpose.msra.mxu0 0.0
    %2133 = vmatprep.subr.mxu0 0.0
    %2134 = vmatpush1.xpose.msra.mxu0 0.0
    %2135 = vmatprep.subr.mxu0 0.0
    %2136 = vmatpush1.xpose.msra.mxu0 0.0
    %2137 = vmatprep.subr.mxu0 0.0
    %2138 = vmatpush1.xpose.msra.mxu0 0.0
    %2139 = vmatprep.subr.mxu0 0.0
    %2140 = vmatpush1.xpose.msra.mxu0 0.0
    %2141 = vmatprep.subr.mxu0 0.0
    %2142 = vmatpush1.xpose.msra.mxu0 0.0
    %2143 = vmatprep.subr.mxu0 0.0
    %2144 = vmatpush1.xpose.msra.mxu0 0.0
    %2145 = vmatprep.subr.mxu0 0.0
    %2146 = vmatpush1.xpose.msra.mxu0 0.0
    %2147 = vmatprep.subr.mxu0 0.0
    %2148 = vmatpush1.xpose.msra.mxu0 0.0
    %2149 = vmatprep.subr.mxu0 0.0
    %2150 = vmatpush1.xpose.msra.mxu0 0.0
    %2151 = vmatprep.subr.mxu0 0.0
    %2152 = vmatpush1.xpose.msra.mxu0 0.0
    %2153 = vmatprep.subr.mxu0 0.0
    %2154 = vmatpush1.xpose.msra.mxu0 0.0
    %2155 = vmatprep.mubr.f32.mxu0 0.0
    %2156 = vmatmul.mubr.f32.gmra.mrb[0].mxu0 %v2079
    %v2157 = vpop.f32.mrb[0].mxu0
    %v2158 = vadd.f32 0.0, %v2157
    %v2159 = vpop.f32.mrb[0].mxu0
    %2160 = vmatprep.mubr.f32.mxu0 0.0
    %2161 = vmatmul.mubr.f32.gmra.mrb[0].mxu0 %v2081
    %v2162 = vpop.f32.mrb[0].mxu0
    %v2163 = vadd.f32 0.0, %v2162
    %v2164 = vpop.f32.mrb[0].mxu0
    %2165 = vmatprep.mubr.f32.mxu0 0.0
    %2166 = vmatmul.mubr.f32.gmra.mrb[0].mxu0 %v2083
    %v2167 = vpop.f32.mrb[0].mxu0
    %v2168 = vadd.f32 0.0, %v2167
    %v2169 = vpop.f32.mrb[0].mxu0
    %2170 = vdwg.mxu0
    %v2171 = vmul.f32 %v2158, 0.35355338
    %v2172 = vmul.f32 %v2163, 0.35355338
    %v2173 = vmul.f32 %v2168, 0.35355338
    %v2174 = vsel %vm595, %v2171, -inf
    %2175 = vmax.xlane.f32.xlu0 %v2174
    %v2176 = vpop.xlane.xlu0 %2175
    %v2177 = vsel %vm595, %v2172, -inf
    %2178 = vmax.xlane.f32.xlu0 %v2177
    %v2179 = vpop.xlane.xlu0 %2178
    %v2180 = vsel %vm602, %v2173, -inf
    %2181 = vmax.xlane.f32.xlu0 %v2180
    %v2182 = vpop.xlane.xlu0 %2181
    %v2183 = vsub.f32 %v2171, %v2176
    %v2184 = vsub.f32 %v2172, %v2179
    %v2185 = vsub.f32 %v2173, %v2182
    %v2186 = vmul.f32 %v2183, 1.442695
    %v2187 = vpow.pop %v2186
    %v2188 = vmul.f32 %v2184, 1.442695
    %v2189 = vpow.pop %v2188
    %v2190 = vmul.f32 %v2185, 1.442695
    %v2191 = vpow.pop %v2190
    %v2192 = vsel %vm595, %v2187, 0.0
    %2193 = vadd.xlane.f32.xlu0 %v2192
    %v2194 = vpop.xlane.xlu0 %2193
    %v2195 = vsel %vm595, %v2189, 0.0
    %2196 = vadd.xlane.f32.xlu0 %v2195
    %v2197 = vpop.xlane.xlu0 %2196
    %v2198 = vsel %vm602, %v2191, 0.0
    %2199 = vadd.xlane.f32.xlu0 %v2198
    %v2200 = vpop.xlane.xlu0 %2199
    %v2201 = vrcp.pop %v2194
    %v2202 = vmul.f32 %v2187, %v2201
    %v2203 = vrcp.pop %v2197
    %v2204 = vmul.f32 %v2189, %v2203
    %v2205 = vrcp.pop %v2200
    %v2206 = vmul.f32 %v2191, %v2205
    %2207 = vrot.lane.b32.xlu0 %v1965, 56
    %v2208 = vpop.permute.xlu0 %2207
    %2209 = vrot.lane.b32.xlu0 %v1967, 56
    %v2210 = vpop.permute.xlu0 %2209
    %2211 = vrot.lane.b32.xlu0 %v1966, 56
    %v2212 = vpop.permute.xlu0 %2211
    %v2216 = vsel %vm595, %v2202, 0
    %v2219 = vsel %vm595, %v2204, 0
    %v2222 = vsel %vm595, %v2206, 0
    %v2224 = vsel %vm650, %v2212, 0
    %2226 = vmatprep.subr.mxu0 0.0
    %2227 = vmatpush1.msra.mxu0 %v2208
    %2228 = vmatprep.subr.mxu0 0.0
    %2229 = vmatpush1.msra.mxu0 %v2210
    %2230 = vmatprep.subr.mxu0 0.0
    %2231 = vmatpush1.msra.mxu0 %v2224
    %2232 = vmatprep.subr.mxu0 0.0
    %2233 = vmatpush1.msra.mxu0 0.0
    %2234 = vmatprep.subr.mxu0 0.0
    %2235 = vmatpush1.msra.mxu0 0.0
    %2236 = vmatprep.subr.mxu0 0.0
    %2237 = vmatpush1.msra.mxu0 0.0
    %2238 = vmatprep.subr.mxu0 0.0
    %2239 = vmatpush1.msra.mxu0 0.0
    %2240 = vmatprep.subr.mxu0 0.0
    %2241 = vmatpush1.msra.mxu0 0.0
    %2242 = vmatprep.subr.mxu0 0.0
    %2243 = vmatpush1.msra.mxu0 0.0
    %2244 = vmatprep.subr.mxu0 0.0
    %2245 = vmatpush1.msra.mxu0 0.0
    %2246 = vmatprep.subr.mxu0 0.0
    %2247 = vmatpush1.msra.mxu0 0.0
    %2248 = vmatprep.subr.mxu0 0.0
    %2249 = vmatpush1.msra.mxu0 0.0
    %2250 = vmatprep.subr.mxu0 0.0
    %2251 = vmatpush1.msra.mxu0 0.0
    %2252 = vmatprep.subr.mxu0 0.0
    %2253 = vmatpush1.msra.mxu0 0.0
    %2254 = vmatprep.subr.mxu0 0.0
    %2255 = vmatpush1.msra.mxu0 0.0
    %2256 = vmatprep.subr.mxu0 0.0
    %2257 = vmatpush1.msra.mxu0 0.0
    %2258 = vmatprep.subr.mxu0 0.0
    %2259 = vmatpush1.msra.mxu0 0.0
    %2260 = vmatprep.subr.mxu0 0.0
    %2261 = vmatpush1.msra.mxu0 0.0
    %2262 = vmatprep.subr.mxu0 0.0
    %2263 = vmatpush1.msra.mxu0 0.0
    %2264 = vmatprep.subr.mxu0 0.0
    %2265 = vmatpush1.msra.mxu0 0.0
    %2266 = vmatprep.subr.mxu0 0.0
    %2267 = vmatpush1.msra.mxu0 0.0
    %2268 = vmatprep.subr.mxu0 0.0
    %2269 = vmatpush1.msra.mxu0 0.0
    %2270 = vmatprep.subr.mxu0 0.0
    %2271 = vmatpush1.msra.mxu0 0.0
    %2272 = vmatprep.subr.mxu0 0.0
    %2273 = vmatpush1.msra.mxu0 0.0
    %2274 = vmatprep.subr.mxu0 0.0
    %2275 = vmatpush1.msra.mxu0 0.0
    %2276 = vmatprep.subr.mxu0 0.0
    %2277 = vmatpush1.msra.mxu0 0.0
    %2278 = vmatprep.subr.mxu0 0.0
    %2279 = vmatpush1.msra.mxu0 0.0
    %2280 = vmatprep.subr.mxu0 0.0
    %2281 = vmatpush1.msra.mxu0 0.0
    %2282 = vmatprep.subr.mxu0 0.0
    %2283 = vmatpush1.msra.mxu0 0.0
    %2284 = vmatprep.subr.mxu0 0.0
    %2285 = vmatpush1.msra.mxu0 0.0
    %2286 = vmatprep.subr.mxu0 0.0
    %2287 = vmatpush1.msra.mxu0 0.0
    %2288 = vmatprep.subr.mxu0 0.0
    %2289 = vmatpush1.msra.mxu0 0.0
    %2290 = vmatprep.mubr.f32.mxu0 0.0
    %2291 = vmatmul.mubr.f32.gmra.mrb[0].mxu0 %v2216
    %v2292 = vpop.f32.mrb[0].mxu0
    %v2293 = vadd.f32 0.0, %v2292
    %v2294 = vpop.f32.mrb[0].mxu0
    %2295 = vmatprep.mubr.f32.mxu0 0.0
    %2296 = vmatmul.mubr.f32.gmra.mrb[0].mxu0 %v2219
    %v2297 = vpop.f32.mrb[0].mxu0
    %v2298 = vadd.f32 0.0, %v2297
    %v2299 = vpop.f32.mrb[0].mxu0
    %2300 = vmatprep.mubr.f32.mxu0 0.0
    %2301 = vmatmul.mubr.f32.gmra.mrb[0].mxu0 %v2222
    %v2302 = vpop.f32.mrb[0].mxu0
    %v2303 = vadd.f32 0.0, %v2302
    %v2304 = vpop.f32.mrb[0].mxu0
    %2305 = vdwg.mxu0
    %v2307 = vsel %vm496, %v2293, 0
    %v2310 = vsel %vm496, %v2298, 0
    %v2313 = vsel %vm496, %v2303, 0
    %2315 = vmatprep.subr.mxu0 0.0
    %2316 = vmatpush1.msra.mxu0 %v484
    %2317 = vmatprep.subr.mxu0 0.0
    %2318 = vmatpush1.msra.mxu0 0.0
    %2319 = vmatprep.subr.mxu0 0.0
    %2320 = vmatpush1.msra.mxu0 0.0
    %2321 = vmatprep.subr.mxu0 0.0
    %2322 = vmatpush1.msra.mxu0 0.0
    %2323 = vmatprep.subr.mxu0 0.0
    %2324 = vmatpush1.msra.mxu0 0.0
    %2325 = vmatprep.subr.mxu0 0.0
    %2326 = vmatpush1.msra.mxu0 0.0
    %2327 = vmatprep.subr.mxu0 0.0
    %2328 = vmatpush1.msra.mxu0 0.0
    %2329 = vmatprep.subr.mxu0 0.0
    %2330 = vmatpush1.msra.mxu0 0.0
    %2331 = vmatprep.subr.mxu0 0.0
    %2332 = vmatpush1.msra.mxu0 0.0
    %2333 = vmatprep.subr.mxu0 0.0
    %2334 = vmatpush1.msra.mxu0 0.0
    %2335 = vmatprep.subr.mxu0 0.0
    %2336 = vmatpush1.msra.mxu0 0.0
    %2337 = vmatprep.subr.mxu0 0.0
    %2338 = vmatpush1.msra.mxu0 0.0
    %2339 = vmatprep.subr.mxu0 0.0
    %2340 = vmatpush1.msra.mxu0 0.0
    %2341 = vmatprep.subr.mxu0 0.0
    %2342 = vmatpush1.msra.mxu0 0.0
    %2343 = vmatprep.subr.mxu0 0.0
    %2344 = vmatpush1.msra.mxu0 0.0
    %2345 = vmatprep.subr.mxu0 0.0
    %2346 = vmatpush1.msra.mxu0 0.0
    %2347 = vmatprep.subr.mxu0 0.0
    %2348 = vmatpush1.msra.mxu0 0.0
    %2349 = vmatprep.subr.mxu0 0.0
    %2350 = vmatpush1.msra.mxu0 0.0
    %2351 = vmatprep.subr.mxu0 0.0
    %2352 = vmatpush1.msra.mxu0 0.0
    %2353 = vmatprep.subr.mxu0 0.0
    %2354 = vmatpush1.msra.mxu0 0.0
    %2355 = vmatprep.subr.mxu0 0.0
    %2356 = vmatpush1.msra.mxu0 0.0
    %2357 = vmatprep.subr.mxu0 0.0
    %2358 = vmatpush1.msra.mxu0 0.0
    %2359 = vmatprep.subr.mxu0 0.0
    %2360 = vmatpush1.msra.mxu0 0.0
    %2361 = vmatprep.subr.mxu0 0.0
    %2362 = vmatpush1.msra.mxu0 0.0
    %2363 = vmatprep.subr.mxu0 0.0
    %2364 = vmatpush1.msra.mxu0 0.0
    %2365 = vmatprep.subr.mxu0 0.0
    %2366 = vmatpush1.msra.mxu0 0.0
    %2367 = vmatprep.subr.mxu0 0.0
    %2368 = vmatpush1.msra.mxu0 0.0
    %2369 = vmatprep.subr.mxu0 0.0
    %2370 = vmatpush1.msra.mxu0 0.0
    %2371 = vmatprep.subr.mxu0 0.0
    %2372 = vmatpush1.msra.mxu0 0.0
    %2373 = vmatprep.subr.mxu0 0.0
    %2374 = vmatpush1.msra.mxu0 0.0
    %2375 = vmatprep.subr.mxu0 0.0
    %2376 = vmatpush1.msra.mxu0 0.0
    %2377 = vmatprep.subr.mxu0 0.0
    %2378 = vmatpush1.msra.mxu0 0.0
    %2379 = vmatprep.mubr.f32.mxu0 0.0
    %2380 = vmatmul.mubr.f32.gmra.mrb[0].mxu0 %v2307
    %v2381 = vpop.f32.mrb[0].mxu0
    %v2382 = vadd.f32 0.0, %v2381
    %v2383 = vpop.f32.mrb[0].mxu0
    %2384 = vmatprep.mubr.f32.mxu0 0.0
    %2385 = vmatmul.mubr.f32.gmra.mrb[0].mxu0 %v2310
    %v2386 = vpop.f32.mrb[0].mxu0
    %v2387 = vadd.f32 0.0, %v2386
    %v2388 = vpop.f32.mrb[0].mxu0
    %2389 = vmatprep.mubr.f32.mxu0 0.0
    %2390 = vmatmul.mubr.f32.gmra.mrb[0].mxu0 %v2313
    %v2391 = vpop.f32.mrb[0].mxu0
    %v2392 = vadd.f32 0.0, %v2391
    %v2393 = vpop.f32.mrb[0].mxu0
    %2394 = vdwg.mxu0
    %v2396 = vsel %vm496, %v2054, 0
    %v2399 = vsel %vm496, %v2059, 0
    %v2402 = vsel %vm496, %v2064, 0
    %2404 = vmatprep.subr.mxu0 0.0
    %2405 = vmatpush1.msra.mxu0 %v483
    %2406 = vmatprep.subr.mxu0 0.0
    %2407 = vmatpush1.msra.mxu0 0.0
    %2408 = vmatprep.subr.mxu0 0.0
    %2409 = vmatpush1.msra.mxu0 0.0
    %2410 = vmatprep.subr.mxu0 0.0
    %2411 = vmatpush1.msra.mxu0 0.0
    %2412 = vmatprep.subr.mxu0 0.0
    %2413 = vmatpush1.msra.mxu0 0.0
    %2414 = vmatprep.subr.mxu0 0.0
    %2415 = vmatpush1.msra.mxu0 0.0
    %2416 = vmatprep.subr.mxu0 0.0
    %2417 = vmatpush1.msra.mxu0 0.0
    %2418 = vmatprep.subr.mxu0 0.0
    %2419 = vmatpush1.msra.mxu0 0.0
    %2420 = vmatprep.subr.mxu0 0.0
    %2421 = vmatpush1.msra.mxu0 0.0
    %2422 = vmatprep.subr.mxu0 0.0
    %2423 = vmatpush1.msra.mxu0 0.0
    %2424 = vmatprep.subr.mxu0 0.0
    %2425 = vmatpush1.msra.mxu0 0.0
    %2426 = vmatprep.subr.mxu0 0.0
    %2427 = vmatpush1.msra.mxu0 0.0
    %2428 = vmatprep.subr.mxu0 0.0
    %2429 = vmatpush1.msra.mxu0 0.0
    %2430 = vmatprep.subr.mxu0 0.0
    %2431 = vmatpush1.msra.mxu0 0.0
    %2432 = vmatprep.subr.mxu0 0.0
    %2433 = vmatpush1.msra.mxu0 0.0
    %2434 = vmatprep.subr.mxu0 0.0
    %2435 = vmatpush1.msra.mxu0 0.0
    %2436 = vmatprep.subr.mxu0 0.0
    %2437 = vmatpush1.msra.mxu0 0.0
    %2438 = vmatprep.subr.mxu0 0.0
    %2439 = vmatpush1.msra.mxu0 0.0
    %2440 = vmatprep.subr.mxu0 0.0
    %2441 = vmatpush1.msra.mxu0 0.0
    %2442 = vmatprep.subr.mxu0 0.0
    %2443 = vmatpush1.msra.mxu0 0.0
    %2444 = vmatprep.subr.mxu0 0.0
    %2445 = vmatpush1.msra.mxu0 0.0
    %2446 = vmatprep.subr.mxu0 0.0
    %2447 = vmatpush1.msra.mxu0 0.0
    %2448 = vmatprep.subr.mxu0 0.0
    %2449 = vmatpush1.msra.mxu0 0.0
    %2450 = vmatprep.subr.mxu0 0.0
    %2451 = vmatpush1.msra.mxu0 0.0
    %2452 = vmatprep.subr.mxu0 0.0
    %2453 = vmatpush1.msra.mxu0 0.0
    %2454 = vmatprep.subr.mxu0 0.0
    %2455 = vmatpush1.msra.mxu0 0.0
    %2456 = vmatprep.subr.mxu0 0.0
    %2457 = vmatpush1.msra.mxu0 0.0
    %2458 = vmatprep.subr.mxu0 0.0
    %2459 = vmatpush1.msra.mxu0 0.0
    %2460 = vmatprep.subr.mxu0 0.0
    %2461 = vmatpush1.msra.mxu0 0.0
    %2462 = vmatprep.subr.mxu0 0.0
    %2463 = vmatpush1.msra.mxu0 0.0
    %2464 = vmatprep.subr.mxu0 0.0
    %2465 = vmatpush1.msra.mxu0 0.0
    %2466 = vmatprep.subr.mxu0 0.0
    %2467 = vmatpush1.msra.mxu0 0.0
    %2468 = vmatprep.mubr.f32.mxu0 0.0
    %2469 = vmatmul.mubr.f32.gmra.mrb[0].mxu0 %v2396
    %v2470 = vpop.f32.mrb[0].mxu0
    %v2471 = vadd.f32 %v2382, %v2470
    %v2472 = vpop.f32.mrb[0].mxu0
    %2473 = vmatprep.mubr.f32.mxu0 0.0
    %2474 = vmatmul.mubr.f32.gmra.mrb[0].mxu0 %v2399
    %v2475 = vpop.f32.mrb[0].mxu0
    %v2476 = vadd.f32 %v2387, %v2475
    %v2477 = vpop.f32.mrb[0].mxu0
    %2478 = vmatprep.mubr.f32.mxu0 0.0
    %2479 = vmatmul.mubr.f32.gmra.mrb[0].mxu0 %v2402
    %v2480 = vpop.f32.mrb[0].mxu0
    %v2481 = vadd.f32 %v2392, %v2480
    %v2482 = vpop.f32.mrb[0].mxu0
    %2483 = vdwg.mxu0
    %2484 = vrot.lane.b32.xlu0 %v1817, 112
    %v2485 = vpop.permute.xlu0 %2484
    %2486 = vrot.lane.b32.xlu0 %v1819, 112
    %v2487 = vpop.permute.xlu0 %2486
    %2488 = vrot.lane.b32.xlu0 %v1818, 112
    %v2489 = vpop.permute.xlu0 %2488
    %2490 = vrot.lane.b32.xlu0 %v1824, 80
    %v2491 = vpop.permute.xlu0 %2490
    %2492 = vrot.lane.b32.xlu0 %v1826, 80
    %v2493 = vpop.permute.xlu0 %2492
    %2494 = vrot.lane.b32.xlu0 %v1825, 80
    %v2495 = vpop.permute.xlu0 %2494
    %v2496 = vsel %vm496, %v2485, 0
    %v2498 = vsel %vm496, %v2487, 0
    %v2500 = vsel %vm496, %v2489, 0
    %v2502 = vsel %vm496, %v2491, 0
    %v2504 = vsel %vm496, %v2493, 0
    %v2506 = vsel %vm496, %v2495, 0
    %2508 = vmatprep.subr.mxu0 0.0
    %2509 = vmatpush1.xpose.msra.mxu0 %v2502
    %2510 = vmatprep.subr.mxu0 0.0
    %2511 = vmatpush1.xpose.msra.mxu0 %v2504
    %2512 = vmatprep.subr.mxu0 0.0
    %2513 = vmatpush1.xpose.msra.mxu0 %v2506
    %2514 = vmatprep.subr.mxu0 0.0
    %2515 = vmatpush1.xpose.msra.mxu0 0.0
    %2516 = vmatprep.subr.mxu0 0.0
    %2517 = vmatpush1.xpose.msra.mxu0 0.0
    %2518 = vmatprep.subr.mxu0 0.0
    %2519 = vmatpush1.xpose.msra.mxu0 0.0
    %2520 = vmatprep.subr.mxu0 0.0
    %2521 = vmatpush1.xpose.msra.mxu0 0.0
    %2522 = vmatprep.subr.mxu0 0.0
    %2523 = vmatpush1.xpose.msra.mxu0 0.0
    %2524 = vmatprep.subr.mxu0 0.0
    %2525 = vmatpush1.xpose.msra.mxu0 0.0
    %2526 = vmatprep.subr.mxu0 0.0
    %2527 = vmatpush1.xpose.msra.mxu0 0.0
    %2528 = vmatprep.subr.mxu0 0.0
    %2529 = vmatpush1.xpose.msra.mxu0 0.0
    %2530 = vmatprep.subr.mxu0 0.0
    %2531 = vmatpush1.xpose.msra.mxu0 0.0
    %2532 = vmatprep.subr.mxu0 0.0
    %2533 = vmatpush1.xpose.msra.mxu0 0.0
    %2534 = vmatprep.subr.mxu0 0.0
    %2535 = vmatpush1.xpose.msra.mxu0 0.0
    %2536 = vmatprep.subr.mxu0 0.0
    %2537 = vmatpush1.xpose.msra.mxu0 0.0
    %2538 = vmatprep.subr.mxu0 0.0
    %2539 = vmatpush1.xpose.msra.mxu0 0.0
    %2540 = vmatprep.subr.mxu0 0.0
    %2541 = vmatpush1.xpose.msra.mxu0 0.0
    %2542 = vmatprep.subr.mxu0 0.0
    %2543 = vmatpush1.xpose.msra.mxu0 0.0
    %2544 = vmatprep.subr.mxu0 0.0
    %2545 = vmatpush1.xpose.msra.mxu0 0.0
    %2546 = vmatprep.subr.mxu0 0.0
    %2547 = vmatpush1.xpose.msra.mxu0 0.0
    %2548 = vmatprep.subr.mxu0 0.0
    %2549 = vmatpush1.xpose.msra.mxu0 0.0
    %2550 = vmatprep.subr.mxu0 0.0
    %2551 = vmatpush1.xpose.msra.mxu0 0.0
    %2552 = vmatprep.subr.mxu0 0.0
    %2553 = vmatpush1.xpose.msra.mxu0 0.0
    %2554 = vmatprep.subr.mxu0 0.0
    %2555 = vmatpush1.xpose.msra.mxu0 0.0
    %2556 = vmatprep.subr.mxu0 0.0
    %2557 = vmatpush1.xpose.msra.mxu0 0.0
    %2558 = vmatprep.subr.mxu0 0.0
    %2559 = vmatpush1.xpose.msra.mxu0 0.0
    %2560 = vmatprep.subr.mxu0 0.0
    %2561 = vmatpush1.xpose.msra.mxu0 0.0
    %2562 = vmatprep.subr.mxu0 0.0
    %2563 = vmatpush1.xpose.msra.mxu0 0.0
    %2564 = vmatprep.subr.mxu0 0.0
    %2565 = vmatpush1.xpose.msra.mxu0 0.0
    %2566 = vmatprep.subr.mxu0 0.0
    %2567 = vmatpush1.xpose.msra.mxu0 0.0
    %2568 = vmatprep.subr.mxu0 0.0
    %2569 = vmatpush1.xpose.msra.mxu0 0.0
    %2570 = vmatprep.subr.mxu0 0.0
    %2571 = vmatpush1.xpose.msra.mxu0 0.0
    %2572 = vmatprep.mubr.f32.mxu0 0.0
    %2573 = vmatmul.mubr.f32.gmra.mrb[0].mxu0 %v2496
    %v2574 = vpop.f32.mrb[0].mxu0
    %v2575 = vadd.f32 0.0, %v2574
    %v2576 = vpop.f32.mrb[0].mxu0
    %2577 = vmatprep.mubr.f32.mxu0 0.0
    %2578 = vmatmul.mubr.f32.gmra.mrb[0].mxu0 %v2498
    %v2579 = vpop.f32.mrb[0].mxu0
    %v2580 = vadd.f32 0.0, %v2579
    %v2581 = vpop.f32.mrb[0].mxu0
    %2582 = vmatprep.mubr.f32.mxu0 0.0
    %2583 = vmatmul.mubr.f32.gmra.mrb[0].mxu0 %v2500
    %v2584 = vpop.f32.mrb[0].mxu0
    %v2585 = vadd.f32 0.0, %v2584
    %v2586 = vpop.f32.mrb[0].mxu0
    %2587 = vdwg.mxu0
    %v2588 = vmul.f32 %v2575, 0.35355338
    %v2589 = vmul.f32 %v2580, 0.35355338
    %v2590 = vmul.f32 %v2585, 0.35355338
    %v2591 = vsel %vm595, %v2588, -inf
    %2592 = vmax.xlane.f32.xlu0 %v2591
    %v2593 = vpop.xlane.xlu0 %2592
    %v2594 = vsel %vm595, %v2589, -inf
    %2595 = vmax.xlane.f32.xlu0 %v2594
    %v2596 = vpop.xlane.xlu0 %2595
    %v2597 = vsel %vm602, %v2590, -inf
    %2598 = vmax.xlane.f32.xlu0 %v2597
    %v2599 = vpop.xlane.xlu0 %2598
    %v2600 = vsub.f32 %v2588, %v2593
    %v2601 = vsub.f32 %v2589, %v2596
    %v2602 = vsub.f32 %v2590, %v2599
    %v2603 = vmul.f32 %v2600, 1.442695
    %v2604 = vpow.pop %v2603
    %v2605 = vmul.f32 %v2601, 1.442695
    %v2606 = vpow.pop %v2605
    %v2607 = vmul.f32 %v2602, 1.442695
    %v2608 = vpow.pop %v2607
    %v2609 = vsel %vm595, %v2604, 0.0
    %2610 = vadd.xlane.f32.xlu0 %v2609
    %v2611 = vpop.xlane.xlu0 %2610
    %v2612 = vsel %vm595, %v2606, 0.0
    %2613 = vadd.xlane.f32.xlu0 %v2612
    %v2614 = vpop.xlane.xlu0 %2613
    %v2615 = vsel %vm602, %v2608, 0.0
    %2616 = vadd.xlane.f32.xlu0 %v2615
    %v2617 = vpop.xlane.xlu0 %2616
    %v2618 = vrcp.pop %v2611
    %v2619 = vmul.f32 %v2604, %v2618
    %v2620 = vrcp.pop %v2614
    %v2621 = vmul.f32 %v2606, %v2620
    %v2622 = vrcp.pop %v2617
    %v2623 = vmul.f32 %v2608, %v2622
    %2624 = vrot.lane.b32.xlu0 %v1965, 48
    %v2625 = vpop.permute.xlu0 %2624
    %2626 = vrot.lane.b32.xlu0 %v1967, 48
    %v2627 = vpop.permute.xlu0 %2626
    %2628 = vrot.lane.b32.xlu0 %v1966, 48
    %v2629 = vpop.permute.xlu0 %2628
    %v2633 = vsel %vm595, %v2619, 0
    %v2636 = vsel %vm595, %v2621, 0
    %v2639 = vsel %vm595, %v2623, 0
    %v2641 = vsel %vm650, %v2629, 0
    %2643 = vmatprep.subr.mxu0 0.0
    %2644 = vmatpush1.msra.mxu0 %v2625
    %2645 = vmatprep.subr.mxu0 0.0
    %2646 = vmatpush1.msra.mxu0 %v2627
    %2647 = vmatprep.subr.mxu0 0.0
    %2648 = vmatpush1.msra.mxu0 %v2641
    %2649 = vmatprep.subr.mxu0 0.0
    %2650 = vmatpush1.msra.mxu0 0.0
    %2651 = vmatprep.subr.mxu0 0.0
    %2652 = vmatpush1.msra.mxu0 0.0
    %2653 = vmatprep.subr.mxu0 0.0
    %2654 = vmatpush1.msra.mxu0 0.0
    %2655 = vmatprep.subr.mxu0 0.0
    %2656 = vmatpush1.msra.mxu0 0.0
    %2657 = vmatprep.subr.mxu0 0.0
    %2658 = vmatpush1.msra.mxu0 0.0
    %2659 = vmatprep.subr.mxu0 0.0
    %2660 = vmatpush1.msra.mxu0 0.0
    %2661 = vmatprep.subr.mxu0 0.0
    %2662 = vmatpush1.msra.mxu0 0.0
    %2663 = vmatprep.subr.mxu0 0.0
    %2664 = vmatpush1.msra.mxu0 0.0
    %2665 = vmatprep.subr.mxu0 0.0
    %2666 = vmatpush1.msra.mxu0 0.0
    %2667 = vmatprep.subr.mxu0 0.0
    %2668 = vmatpush1.msra.mxu0 0.0
    %2669 = vmatprep.subr.mxu0 0.0
    %2670 = vmatpush1.msra.mxu0 0.0
    %2671 = vmatprep.subr.mxu0 0.0
    %2672 = vmatpush1.msra.mxu0 0.0
    %2673 = vmatprep.subr.mxu0 0.0
    %2674 = vmatpush1.msra.mxu0 0.0
    %2675 = vmatprep.subr.mxu0 0.0
    %2676 = vmatpush1.msra.mxu0 0.0
    %2677 = vmatprep.subr.mxu0 0.0
    %2678 = vmatpush1.msra.mxu0 0.0
    %2679 = vmatprep.subr.mxu0 0.0
    %2680 = vmatpush1.msra.mxu0 0.0
    %2681 = vmatprep.subr.mxu0 0.0
    %2682 = vmatpush1.msra.mxu0 0.0
    %2683 = vmatprep.subr.mxu0 0.0
    %2684 = vmatpush1.msra.mxu0 0.0
    %2685 = vmatprep.subr.mxu0 0.0
    %2686 = vmatpush1.msra.mxu0 0.0
    %2687 = vmatprep.subr.mxu0 0.0
    %2688 = vmatpush1.msra.mxu0 0.0
    %2689 = vmatprep.subr.mxu0 0.0
    %2690 = vmatpush1.msra.mxu0 0.0
    %2691 = vmatprep.subr.mxu0 0.0
    %2692 = vmatpush1.msra.mxu0 0.0
    %2693 = vmatprep.subr.mxu0 0.0
    %2694 = vmatpush1.msra.mxu0 0.0
    %2695 = vmatprep.subr.mxu0 0.0
    %2696 = vmatpush1.msra.mxu0 0.0
    %2697 = vmatprep.subr.mxu0 0.0
    %2698 = vmatpush1.msra.mxu0 0.0
    %2699 = vmatprep.subr.mxu0 0.0
    %2700 = vmatpush1.msra.mxu0 0.0
    %2701 = vmatprep.subr.mxu0 0.0
    %2702 = vmatpush1.msra.mxu0 0.0
    %2703 = vmatprep.subr.mxu0 0.0
    %2704 = vmatpush1.msra.mxu0 0.0
    %2705 = vmatprep.subr.mxu0 0.0
    %2706 = vmatpush1.msra.mxu0 0.0
    %2707 = vmatprep.mubr.f32.mxu0 0.0
    %2708 = vmatmul.mubr.f32.gmra.mrb[0].mxu0 %v2633
    %v2709 = vpop.f32.mrb[0].mxu0
    %v2710 = vadd.f32 0.0, %v2709
    %v2711 = vpop.f32.mrb[0].mxu0
    %2712 = vmatprep.mubr.f32.mxu0 0.0
    %2713 = vmatmul.mubr.f32.gmra.mrb[0].mxu0 %v2636
    %v2714 = vpop.f32.mrb[0].mxu0
    %v2715 = vadd.f32 0.0, %v2714
    %v2716 = vpop.f32.mrb[0].mxu0
    %2717 = vmatprep.mubr.f32.mxu0 0.0
    %2718 = vmatmul.mubr.f32.gmra.mrb[0].mxu0 %v2639
    %v2719 = vpop.f32.mrb[0].mxu0
    %v2720 = vadd.f32 0.0, %v2719
    %v2721 = vpop.f32.mrb[0].mxu0
    %2722 = vdwg.mxu0
    %v2724 = vsel %vm496, %v2710, 0
    %v2727 = vsel %vm496, %v2715, 0
    %v2730 = vsel %vm496, %v2720, 0
    %2732 = vmatprep.subr.mxu0 0.0
    %2733 = vmatpush1.msra.mxu0 %v485
    %2734 = vmatprep.subr.mxu0 0.0
    %2735 = vmatpush1.msra.mxu0 0.0
    %2736 = vmatprep.subr.mxu0 0.0
    %2737 = vmatpush1.msra.mxu0 0.0
    %2738 = vmatprep.subr.mxu0 0.0
    %2739 = vmatpush1.msra.mxu0 0.0
    %2740 = vmatprep.subr.mxu0 0.0
    %2741 = vmatpush1.msra.mxu0 0.0
    %2742 = vmatprep.subr.mxu0 0.0
    %2743 = vmatpush1.msra.mxu0 0.0
    %2744 = vmatprep.subr.mxu0 0.0
    %2745 = vmatpush1.msra.mxu0 0.0
    %2746 = vmatprep.subr.mxu0 0.0
    %2747 = vmatpush1.msra.mxu0 0.0
    %2748 = vmatprep.subr.mxu0 0.0
    %2749 = vmatpush1.msra.mxu0 0.0
    %2750 = vmatprep.subr.mxu0 0.0
    %2751 = vmatpush1.msra.mxu0 0.0
    %2752 = vmatprep.subr.mxu0 0.0
    %2753 = vmatpush1.msra.mxu0 0.0
    %2754 = vmatprep.subr.mxu0 0.0
    %2755 = vmatpush1.msra.mxu0 0.0
    %2756 = vmatprep.subr.mxu0 0.0
    %2757 = vmatpush1.msra.mxu0 0.0
    %2758 = vmatprep.subr.mxu0 0.0
    %2759 = vmatpush1.msra.mxu0 0.0
    %2760 = vmatprep.subr.mxu0 0.0
    %2761 = vmatpush1.msra.mxu0 0.0
    %2762 = vmatprep.subr.mxu0 0.0
    %2763 = vmatpush1.msra.mxu0 0.0
    %2764 = vmatprep.subr.mxu0 0.0
    %2765 = vmatpush1.msra.mxu0 0.0
    %2766 = vmatprep.subr.mxu0 0.0
    %2767 = vmatpush1.msra.mxu0 0.0
    %2768 = vmatprep.subr.mxu0 0.0
    %2769 = vmatpush1.msra.mxu0 0.0
    %2770 = vmatprep.subr.mxu0 0.0
    %2771 = vmatpush1.msra.mxu0 0.0
    %2772 = vmatprep.subr.mxu0 0.0
    %2773 = vmatpush1.msra.mxu0 0.0
    %2774 = vmatprep.subr.mxu0 0.0
    %2775 = vmatpush1.msra.mxu0 0.0
    %2776 = vmatprep.subr.mxu0 0.0
    %2777 = vmatpush1.msra.mxu0 0.0
    %2778 = vmatprep.subr.mxu0 0.0
    %2779 = vmatpush1.msra.mxu0 0.0
    %2780 = vmatprep.subr.mxu0 0.0
    %2781 = vmatpush1.msra.mxu0 0.0
    %2782 = vmatprep.subr.mxu0 0.0
    %2783 = vmatpush1.msra.mxu0 0.0
    %2784 = vmatprep.subr.mxu0 0.0
    %2785 = vmatpush1.msra.mxu0 0.0
    %2786 = vmatprep.subr.mxu0 0.0
    %2787 = vmatpush1.msra.mxu0 0.0
    %2788 = vmatprep.subr.mxu0 0.0
    %2789 = vmatpush1.msra.mxu0 0.0
    %2790 = vmatprep.subr.mxu0 0.0
    %2791 = vmatpush1.msra.mxu0 0.0
    %2792 = vmatprep.subr.mxu0 0.0
    %2793 = vmatpush1.msra.mxu0 0.0
    %2794 = vmatprep.subr.mxu0 0.0
    %2795 = vmatpush1.msra.mxu0 0.0
    %2796 = vmatprep.mubr.f32.mxu0 0.0
    %2797 = vmatmul.mubr.f32.gmra.mrb[0].mxu0 %v2724
    %v2798 = vpop.f32.mrb[0].mxu0
    %v2799 = vadd.f32 0.0, %v2798
    %v2800 = vpop.f32.mrb[0].mxu0
    %2801 = vmatprep.mubr.f32.mxu0 0.0
    %2802 = vmatmul.mubr.f32.gmra.mrb[0].mxu0 %v2727
    %v2803 = vpop.f32.mrb[0].mxu0
    %v2804 = vadd.f32 0.0, %v2803
    %v2805 = vpop.f32.mrb[0].mxu0
    %2806 = vmatprep.mubr.f32.mxu0 0.0
    %2807 = vmatmul.mubr.f32.gmra.mrb[0].mxu0 %v2730
    %v2808 = vpop.f32.mrb[0].mxu0
    %v2809 = vadd.f32 0.0, %v2808
    %v2810 = vpop.f32.mrb[0].mxu0
    %2811 = vdwg.mxu0
    %v2812 = vadd.f32 %v2471, %v2799
    %v2813 = vadd.f32 %v2476, %v2804
    %v2814 = vadd.f32 %v2481, %v2809
    %2815 = vrot.lane.b32.xlu0 %v1817, 104
    %v2816 = vpop.permute.xlu0 %2815
    %2817 = vrot.lane.b32.xlu0 %v1819, 104
    %v2818 = vpop.permute.xlu0 %2817
    %2819 = vrot.lane.b32.xlu0 %v1818, 104
    %v2820 = vpop.permute.xlu0 %2819
    %2821 = vrot.lane.b32.xlu0 %v1824, 72
    %v2822 = vpop.permute.xlu0 %2821
    %2823 = vrot.lane.b32.xlu0 %v1826, 72
    %v2824 = vpop.permute.xlu0 %2823
    %2825 = vrot.lane.b32.xlu0 %v1825, 72
    %v2826 = vpop.permute.xlu0 %2825
    %v2827 = vsel %vm496, %v2816, 0
    %v2829 = vsel %vm496, %v2818, 0
    %v2831 = vsel %vm496, %v2820, 0
    %v2833 = vsel %vm496, %v2822, 0
    %v2835 = vsel %vm496, %v2824, 0
    %v2837 = vsel %vm496, %v2826, 0
    %2839 = vmatprep.subr.mxu0 0.0
    %2840 = vmatpush1.xpose.msra.mxu0 %v2833
    %2841 = vmatprep.subr.mxu0 0.0
    %2842 = vmatpush1.xpose.msra.mxu0 %v2835
    %2843 = vmatprep.subr.mxu0 0.0
    %2844 = vmatpush1.xpose.msra.mxu0 %v2837
    %2845 = vmatprep.subr.mxu0 0.0
    %2846 = vmatpush1.xpose.msra.mxu0 0.0
    %2847 = vmatprep.subr.mxu0 0.0
    %2848 = vmatpush1.xpose.msra.mxu0 0.0
    %2849 = vmatprep.subr.mxu0 0.0
    %2850 = vmatpush1.xpose.msra.mxu0 0.0
    %2851 = vmatprep.subr.mxu0 0.0
    %2852 = vmatpush1.xpose.msra.mxu0 0.0
    %2853 = vmatprep.subr.mxu0 0.0
    %2854 = vmatpush1.xpose.msra.mxu0 0.0
    %2855 = vmatprep.subr.mxu0 0.0
    %2856 = vmatpush1.xpose.msra.mxu0 0.0
    %2857 = vmatprep.subr.mxu0 0.0
    %2858 = vmatpush1.xpose.msra.mxu0 0.0
    %2859 = vmatprep.subr.mxu0 0.0
    %2860 = vmatpush1.xpose.msra.mxu0 0.0
    %2861 = vmatprep.subr.mxu0 0.0
    %2862 = vmatpush1.xpose.msra.mxu0 0.0
    %2863 = vmatprep.subr.mxu0 0.0
    %2864 = vmatpush1.xpose.msra.mxu0 0.0
    %2865 = vmatprep.subr.mxu0 0.0
    %2866 = vmatpush1.xpose.msra.mxu0 0.0
    %2867 = vmatprep.subr.mxu0 0.0
    %2868 = vmatpush1.xpose.msra.mxu0 0.0
    %2869 = vmatprep.subr.mxu0 0.0
    %2870 = vmatpush1.xpose.msra.mxu0 0.0
    %2871 = vmatprep.subr.mxu0 0.0
    %2872 = vmatpush1.xpose.msra.mxu0 0.0
    %2873 = vmatprep.subr.mxu0 0.0
    %2874 = vmatpush1.xpose.msra.mxu0 0.0
    %2875 = vmatprep.subr.mxu0 0.0
    %2876 = vmatpush1.xpose.msra.mxu0 0.0
    %2877 = vmatprep.subr.mxu0 0.0
    %2878 = vmatpush1.xpose.msra.mxu0 0.0
    %2879 = vmatprep.subr.mxu0 0.0
    %2880 = vmatpush1.xpose.msra.mxu0 0.0
    %2881 = vmatprep.subr.mxu0 0.0
    %2882 = vmatpush1.xpose.msra.mxu0 0.0
    %2883 = vmatprep.subr.mxu0 0.0
    %2884 = vmatpush1.xpose.msra.mxu0 0.0
    %2885 = vmatprep.subr.mxu0 0.0
    %2886 = vmatpush1.xpose.msra.mxu0 0.0
    %2887 = vmatprep.subr.mxu0 0.0
    %2888 = vmatpush1.xpose.msra.mxu0 0.0
    %2889 = vmatprep.subr.mxu0 0.0
    %2890 = vmatpush1.xpose.msra.mxu0 0.0
    %2891 = vmatprep.subr.mxu0 0.0
    %2892 = vmatpush1.xpose.msra.mxu0 0.0
    %2893 = vmatprep.subr.mxu0 0.0
    %2894 = vmatpush1.xpose.msra.mxu0 0.0
    %2895 = vmatprep.subr.mxu0 0.0
    %2896 = vmatpush1.xpose.msra.mxu0 0.0
    %2897 = vmatprep.subr.mxu0 0.0
    %2898 = vmatpush1.xpose.msra.mxu0 0.0
    %2899 = vmatprep.subr.mxu0 0.0
    %2900 = vmatpush1.xpose.msra.mxu0 0.0
    %2901 = vmatprep.subr.mxu0 0.0
    %2902 = vmatpush1.xpose.msra.mxu0 0.0
    %2903 = vmatprep.mubr.f32.mxu0 0.0
    %2904 = vmatmul.mubr.f32.gmra.mrb[0].mxu0 %v2827
    %v2905 = vpop.f32.mrb[0].mxu0
    %v2906 = vadd.f32 0.0, %v2905
    %v2907 = vpop.f32.mrb[0].mxu0
    %2908 = vmatprep.mubr.f32.mxu0 0.0
    %2909 = vmatmul.mubr.f32.gmra.mrb[0].mxu0 %v2829
    %v2910 = vpop.f32.mrb[0].mxu0
    %v2911 = vadd.f32 0.0, %v2910
    %v2912 = vpop.f32.mrb[0].mxu0
    %2913 = vmatprep.mubr.f32.mxu0 0.0
    %2914 = vmatmul.mubr.f32.gmra.mrb[0].mxu0 %v2831
    %v2915 = vpop.f32.mrb[0].mxu0
    %v2916 = vadd.f32 0.0, %v2915
    %v2917 = vpop.f32.mrb[0].mxu0
    %2918 = vdwg.mxu0
    %v2919 = vmul.f32 %v2906, 0.35355338
    %v2920 = vmul.f32 %v2911, 0.35355338
    %v2921 = vmul.f32 %v2916, 0.35355338
    %v2922 = vsel %vm595, %v2919, -inf
    %2923 = vmax.xlane.f32.xlu0 %v2922
    %v2924 = vpop.xlane.xlu0 %2923
    %v2925 = vsel %vm595, %v2920, -inf
    %2926 = vmax.xlane.f32.xlu0 %v2925
    %v2927 = vpop.xlane.xlu0 %2926
    %v2928 = vsel %vm602, %v2921, -inf
    %2929 = vmax.xlane.f32.xlu0 %v2928
    %v2930 = vpop.xlane.xlu0 %2929
    %v2931 = vsub.f32 %v2919, %v2924
    %v2932 = vsub.f32 %v2920, %v2927
    %v2933 = vsub.f32 %v2921, %v2930
    %v2934 = vmul.f32 %v2931, 1.442695
    %v2935 = vpow.pop %v2934
    %v2936 = vmul.f32 %v2932, 1.442695
    %v2937 = vpow.pop %v2936
    %v2938 = vmul.f32 %v2933, 1.442695
    %v2939 = vpow.pop %v2938
    %v2940 = vsel %vm595, %v2935, 0.0
    %2941 = vadd.xlane.f32.xlu0 %v2940
    %v2942 = vpop.xlane.xlu0 %2941
    %v2943 = vsel %vm595, %v2937, 0.0
    %2944 = vadd.xlane.f32.xlu0 %v2943
    %v2945 = vpop.xlane.xlu0 %2944
    %v2946 = vsel %vm602, %v2939, 0.0
    %2947 = vadd.xlane.f32.xlu0 %v2946
    %v2948 = vpop.xlane.xlu0 %2947
    %v2949 = vrcp.pop %v2942
    %v2950 = vmul.f32 %v2935, %v2949
    %v2951 = vrcp.pop %v2945
    %v2952 = vmul.f32 %v2937, %v2951
    %v2953 = vrcp.pop %v2948
    %v2954 = vmul.f32 %v2939, %v2953
    %2955 = vrot.lane.b32.xlu0 %v1965, 40
    %v2956 = vpop.permute.xlu0 %2955
    %2957 = vrot.lane.b32.xlu0 %v1967, 40
    %v2958 = vpop.permute.xlu0 %2957
    %2959 = vrot.lane.b32.xlu0 %v1966, 40
    %v2960 = vpop.permute.xlu0 %2959
    %v2964 = vsel %vm595, %v2950, 0
    %v2967 = vsel %vm595, %v2952, 0
    %v2970 = vsel %vm595, %v2954, 0
    %v2972 = vsel %vm650, %v2960, 0
    %2974 = vmatprep.subr.mxu0 0.0
    %2975 = vmatpush1.msra.mxu0 %v2956
    %2976 = vmatprep.subr.mxu0 0.0
    %2977 = vmatpush1.msra.mxu0 %v2958
    %2978 = vmatprep.subr.mxu0 0.0
    %2979 = vmatpush1.msra.mxu0 %v2972
    %2980 = vmatprep.subr.mxu0 0.0
    %2981 = vmatpush1.msra.mxu0 0.0
    %2982 = vmatprep.subr.mxu0 0.0
    %2983 = vmatpush1.msra.mxu0 0.0
    %2984 = vmatprep.subr.mxu0 0.0
    %2985 = vmatpush1.msra.mxu0 0.0
    %2986 = vmatprep.subr.mxu0 0.0
    %2987 = vmatpush1.msra.mxu0 0.0
    %2988 = vmatprep.subr.mxu0 0.0
    %2989 = vmatpush1.msra.mxu0 0.0
    %2990 = vmatprep.subr.mxu0 0.0
    %2991 = vmatpush1.msra.mxu0 0.0
    %2992 = vmatprep.subr.mxu0 0.0
    %2993 = vmatpush1.msra.mxu0 0.0
    %2994 = vmatprep.subr.mxu0 0.0
    %2995 = vmatpush1.msra.mxu0 0.0
    %2996 = vmatprep.subr.mxu0 0.0
    %2997 = vmatpush1.msra.mxu0 0.0
    %2998 = vmatprep.subr.mxu0 0.0
    %2999 = vmatpush1.msra.mxu0 0.0
    %3000 = vmatprep.subr.mxu0 0.0
    %3001 = vmatpush1.msra.mxu0 0.0
    %3002 = vmatprep.subr.mxu0 0.0
    %3003 = vmatpush1.msra.mxu0 0.0
    %3004 = vmatprep.subr.mxu0 0.0
    %3005 = vmatpush1.msra.mxu0 0.0
    %3006 = vmatprep.subr.mxu0 0.0
    %3007 = vmatpush1.msra.mxu0 0.0
    %3008 = vmatprep.subr.mxu0 0.0
    %3009 = vmatpush1.msra.mxu0 0.0
    %3010 = vmatprep.subr.mxu0 0.0
    %3011 = vmatpush1.msra.mxu0 0.0
    %3012 = vmatprep.subr.mxu0 0.0
    %3013 = vmatpush1.msra.mxu0 0.0
    %3014 = vmatprep.subr.mxu0 0.0
    %3015 = vmatpush1.msra.mxu0 0.0
    %3016 = vmatprep.subr.mxu0 0.0
    %3017 = vmatpush1.msra.mxu0 0.0
    %3018 = vmatprep.subr.mxu0 0.0
    %3019 = vmatpush1.msra.mxu0 0.0
    %3020 = vmatprep.subr.mxu0 0.0
    %3021 = vmatpush1.msra.mxu0 0.0
    %3022 = vmatprep.subr.mxu0 0.0
    %3023 = vmatpush1.msra.mxu0 0.0
    %3024 = vmatprep.subr.mxu0 0.0
    %3025 = vmatpush1.msra.mxu0 0.0
    %3026 = vmatprep.subr.mxu0 0.0
    %3027 = vmatpush1.msra.mxu0 0.0
    %3028 = vmatprep.subr.mxu0 0.0
    %3029 = vmatpush1.msra.mxu0 0.0
    %3030 = vmatprep.subr.mxu0 0.0
    %3031 = vmatpush1.msra.mxu0 0.0
    %3032 = vmatprep.subr.mxu0 0.0
    %3033 = vmatpush1.msra.mxu0 0.0
    %3034 = vmatprep.subr.mxu0 0.0
    %3035 = vmatpush1.msra.mxu0 0.0
    %3036 = vmatprep.subr.mxu0 0.0
    %3037 = vmatpush1.msra.mxu0 0.0
    %3038 = vmatprep.mubr.f32.mxu0 0.0
    %3039 = vmatmul.mubr.f32.gmra.mrb[0].mxu0 %v2964
    %v3040 = vpop.f32.mrb[0].mxu0
    %v3041 = vadd.f32 0.0, %v3040
    %v3042 = vpop.f32.mrb[0].mxu0
    %3043 = vmatprep.mubr.f32.mxu0 0.0
    %3044 = vmatmul.mubr.f32.gmra.mrb[0].mxu0 %v2967
    %v3045 = vpop.f32.mrb[0].mxu0
    %v3046 = vadd.f32 0.0, %v3045
    %v3047 = vpop.f32.mrb[0].mxu0
    %3048 = vmatprep.mubr.f32.mxu0 0.0
    %3049 = vmatmul.mubr.f32.gmra.mrb[0].mxu0 %v2970
    %v3050 = vpop.f32.mrb[0].mxu0
    %v3051 = vadd.f32 0.0, %v3050
    %v3052 = vpop.f32.mrb[0].mxu0
    %3053 = vdwg.mxu0
    %v3055 = vsel %vm496, %v3041, 0
    %v3058 = vsel %vm496, %v3046, 0
    %v3061 = vsel %vm496, %v3051, 0
    %3063 = vmatprep.subr.mxu0 0.0
    %3064 = vmatpush1.msra.mxu0 %v486
    %3065 = vmatprep.subr.mxu0 0.0
    %3066 = vmatpush1.msra.mxu0 0.0
    %3067 = vmatprep.subr.mxu0 0.0
    %3068 = vmatpush1.msra.mxu0 0.0
    %3069 = vmatprep.subr.mxu0 0.0
    %3070 = vmatpush1.msra.mxu0 0.0
    %3071 = vmatprep.subr.mxu0 0.0
    %3072 = vmatpush1.msra.mxu0 0.0
    %3073 = vmatprep.subr.mxu0 0.0
    %3074 = vmatpush1.msra.mxu0 0.0
    %3075 = vmatprep.subr.mxu0 0.0
    %3076 = vmatpush1.msra.mxu0 0.0
    %3077 = vmatprep.subr.mxu0 0.0
    %3078 = vmatpush1.msra.mxu0 0.0
    %3079 = vmatprep.subr.mxu0 0.0
    %3080 = vmatpush1.msra.mxu0 0.0
    %3081 = vmatprep.subr.mxu0 0.0
    %3082 = vmatpush1.msra.mxu0 0.0
    %3083 = vmatprep.subr.mxu0 0.0
    %3084 = vmatpush1.msra.mxu0 0.0
    %3085 = vmatprep.subr.mxu0 0.0
    %3086 = vmatpush1.msra.mxu0 0.0
    %3087 = vmatprep.subr.mxu0 0.0
    %3088 = vmatpush1.msra.mxu0 0.0
    %3089 = vmatprep.subr.mxu0 0.0
    %3090 = vmatpush1.msra.mxu0 0.0
    %3091 = vmatprep.subr.mxu0 0.0
    %3092 = vmatpush1.msra.mxu0 0.0
    %3093 = vmatprep.subr.mxu0 0.0
    %3094 = vmatpush1.msra.mxu0 0.0
    %3095 = vmatprep.subr.mxu0 0.0
    %3096 = vmatpush1.msra.mxu0 0.0
    %3097 = vmatprep.subr.mxu0 0.0
    %3098 = vmatpush1.msra.mxu0 0.0
    %3099 = vmatprep.subr.mxu0 0.0
    %3100 = vmatpush1.msra.mxu0 0.0
    %3101 = vmatprep.subr.mxu0 0.0
    %3102 = vmatpush1.msra.mxu0 0.0
    %3103 = vmatprep.subr.mxu0 0.0
    %3104 = vmatpush1.msra.mxu0 0.0
    %3105 = vmatprep.subr.mxu0 0.0
    %3106 = vmatpush1.msra.mxu0 0.0
    %3107 = vmatprep.subr.mxu0 0.0
    %3108 = vmatpush1.msra.mxu0 0.0
    %3109 = vmatprep.subr.mxu0 0.0
    %3110 = vmatpush1.msra.mxu0 0.0
    %3111 = vmatprep.subr.mxu0 0.0
    %3112 = vmatpush1.msra.mxu0 0.0
    %3113 = vmatprep.subr.mxu0 0.0
    %3114 = vmatpush1.msra.mxu0 0.0
    %3115 = vmatprep.subr.mxu0 0.0
    %3116 = vmatpush1.msra.mxu0 0.0
    %3117 = vmatprep.subr.mxu0 0.0
    %3118 = vmatpush1.msra.mxu0 0.0
    %3119 = vmatprep.subr.mxu0 0.0
    %3120 = vmatpush1.msra.mxu0 0.0
    %3121 = vmatprep.subr.mxu0 0.0
    %3122 = vmatpush1.msra.mxu0 0.0
    %3123 = vmatprep.subr.mxu0 0.0
    %3124 = vmatpush1.msra.mxu0 0.0
    %3125 = vmatprep.subr.mxu0 0.0
    %3126 = vmatpush1.msra.mxu0 0.0
    %3127 = vmatprep.mubr.f32.mxu0 0.0
    %3128 = vmatmul.mubr.f32.gmra.mrb[0].mxu0 %v3055
    %v3129 = vpop.f32.mrb[0].mxu0
    %v3130 = vadd.f32 0.0, %v3129
    %v3131 = vpop.f32.mrb[0].mxu0
    %3132 = vmatprep.mubr.f32.mxu0 0.0
    %3133 = vmatmul.mubr.f32.gmra.mrb[0].mxu0 %v3058
    %v3134 = vpop.f32.mrb[0].mxu0
    %v3135 = vadd.f32 0.0, %v3134
    %v3136 = vpop.f32.mrb[0].mxu0
    %3137 = vmatprep.mubr.f32.mxu0 0.0
    %3138 = vmatmul.mubr.f32.gmra.mrb[0].mxu0 %v3061
    %v3139 = vpop.f32.mrb[0].mxu0
    %v3140 = vadd.f32 0.0, %v3139
    %v3141 = vpop.f32.mrb[0].mxu0
    %3142 = vdwg.mxu0
    %v3143 = vadd.f32 %v2812, %v3130
    %v3144 = vadd.f32 %v2813, %v3135
    %v3145 = vadd.f32 %v2814, %v3140
    %v3149 = vrot.slane %v3143, 7
    %v3150 = vrot.slane %v3144, 7
    %v3151 = vsel %vm650, %v3149, %v3150
    %v3152 = vrot.slane %v3145, 7
    %v3153 = vsel %vm650, %v3150, %v3152
    %v3157 = vsel %vm650, %v1811, %v3149
    %v3158 = vadd.f32 %v249, %v1809
    %v3159 = vadd.f32 %v250, %v1810
    %v3160 = vadd.f32 %v251, %v3157
    %v3161 = vadd.f32 %v252, %v3151
    %v3162 = vadd.f32 %v253, %v3153
    %v3163 = vlaneseq
    %v3164 = vshrl.u32 %v3163, 7
    %v3165 = vsub.s32 5, %v3164
    %v3166 = vrot.slane %v254, %v3165
    %v3167 = vadd.f32 %v3158, %v3166
    %v3168 = vadd.f32 %v3159, %v3166
    %v3169 = vadd.f32 %v3160, %v3166
    %v3170 = vadd.f32 %v3161, %v3166
    %v3171 = vadd.f32 %v3162, %v3166
    %v3172 = vsel %vm168, %v3167, 0.0
    %3173 = vadd.xlane.f32.xlu0 %v3172
    %v3174 = vpop.xlane.xlu0 %3173
    %v3175 = vsel %vm168, %v3168, 0.0
    %3176 = vadd.xlane.f32.xlu0 %v3175
    %v3177 = vpop.xlane.xlu0 %3176
    %v3178 = vsel %vm168, %v3169, 0.0
    %3179 = vadd.xlane.f32.xlu0 %v3178
    %v3180 = vpop.xlane.xlu0 %3179
    %v3181 = vsel %vm168, %v3170, 0.0
    %3182 = vadd.xlane.f32.xlu0 %v3181
    %v3183 = vpop.xlane.xlu0 %3182
    %v3184 = vsel %vm181, %v3171, 0.0
    %3185 = vadd.xlane.f32.xlu0 %v3184
    %v3186 = vpop.xlane.xlu0 %3185
    %v3187 = vmul.f32 %v3174, %v185
    %v3188 = vmul.f32 %v3177, %v185
    %v3189 = vmul.f32 %v3180, %v185
    %v3190 = vmul.f32 %v3183, %v185
    %v3191 = vmul.f32 %v3186, %v185
    %v3192 = vsub.f32 %v3167, %v3187
    %v3193 = vsub.f32 %v3168, %v3188
    %v3194 = vsub.f32 %v3169, %v3189
    %v3195 = vsub.f32 %v3170, %v3190
    %v3196 = vsub.f32 %v3171, %v3191
    %v3197 = vmul.f32 %v3192, %v3192
    %v3198 = vmul.f32 %v3193, %v3193
    %v3199 = vmul.f32 %v3194, %v3194
    %v3200 = vmul.f32 %v3195, %v3195
    %v3201 = vmul.f32 %v3196, %v3196
    %v3202 = vsel %vm168, %v3197, 0.0
    %3203 = vadd.xlane.f32.xlu0 %v3202
    %v3204 = vpop.xlane.xlu0 %3203
    %v3205 = vsel %vm168, %v3198, 0.0
    %3206 = vadd.xlane.f32.xlu0 %v3205
    %v3207 = vpop.xlane.xlu0 %3206
    %v3208 = vsel %vm168, %v3199, 0.0
    %3209 = vadd.xlane.f32.xlu0 %v3208
    %v3210 = vpop.xlane.xlu0 %3209
    %v3211 = vsel %vm168, %v3200, 0.0
    %3212 = vadd.xlane.f32.xlu0 %v3211
    %v3213 = vpop.xlane.xlu0 %3212
    %v3214 = vsel %vm181, %v3201, 0.0
    %3215 = vadd.xlane.f32.xlu0 %v3214
    %v3216 = vpop.xlane.xlu0 %3215
    %v3217 = vmul.f32 %v3204, %v185
    %v3218 = vmul.f32 %v3207, %v185
    %v3219 = vmul.f32 %v3210, %v185
    %v3220 = vmul.f32 %v3213, %v185
    %v3221 = vmul.f32 %v3216, %v185
    %v3222 = vadd.f32 %v3217, 1e-05
    %v3223 = vadd.f32 %v3218, 1e-05
    %v3224 = vadd.f32 %v3219, 1e-05
    %v3225 = vadd.f32 %v3220, 1e-05
    %v3226 = vadd.f32 %v3221, 1e-05
    %v3227 = vrsqrt.pop %v3222
    %v3228 = vrsqrt.pop %v3223
    %v3229 = vrsqrt.pop %v3224
    %v3230 = vrsqrt.pop %v3225
    %v3231 = vrsqrt.pop %v3226
    %v3232 = vmul.f32 %v3192, %v3227
    %v3233 = vmul.f32 %v3193, %v3228
    %v3234 = vmul.f32 %v3194, %v3229
    %v3235 = vmul.f32 %v3195, %v3230
    %v3236 = vmul.f32 %v3196, %v3231
    %v3237 = vlaneseq
    %v3238 = vshrl.u32 %v3237, 7
    %v3239 = vsub.s32 6, %v3238
    %v3240 = vrot.slane %v254, %v3239
    %v3241 = vmul.f32 %v3232, %v3240
    %v3242 = vmul.f32 %v3233, %v3240
    %v3243 = vmul.f32 %v3234, %v3240
    %v3244 = vmul.f32 %v3235, %v3240
    %v3245 = vmul.f32 %v3236, %v3240
    %v3246 = vlaneseq
    %v3247 = vshrl.u32 %v3246, 7
    %v3248 = vsub.s32 7, %v3247
    %v3249 = vrot.slane %v254, %v3248
    %v3250 = vadd.f32 %v3241, %v3249
    %v3251 = vadd.f32 %v3242, %v3249
    %v3252 = vadd.f32 %v3243, %v3249
    %v3253 = vadd.f32 %v3244, %v3249
    %v3254 = vadd.f32 %v3245, %v3249
    %v3255 = vld [vmem:[%s6] sm:$0xff]
    %v3256 = vld [vmem:[%s6 + $0x8] sm:$0xff]
    %v3257 = vld [vmem:[%s6 + $0x10] sm:$0xff]
    %v3258 = vld [vmem:[%s6 + $0x18] sm:$0xff]
    %v3259 = vld [vmem:[%s9] sm:$0x1]
    %v3261 = vlaneseq
    %v3262 = vshrl.u32 %v3261, 7
    %v3263 = vsub.s32 0, %v3262
    %v3264 = vrot.slane %v3259, %v3263
    %v3267 = vsel %vm168, %v3250, 0
    %v3270 = vsel %vm168, %v3251, 0
    %v3273 = vsel %vm168, %v3252, 0
    %v3276 = vsel %vm168, %v3253, 0
    %v3279 = vsel %vm168, %v3254, 0
    %3281 = vmatprep.subr.mxu0 0.0
    %3282 = vmatpush1.msra.mxu0 %v3255
    %3283 = vmatprep.subr.mxu0 0.0
    %3284 = vmatpush1.msra.mxu0 %v3256
    %3285 = vmatprep.subr.mxu0 0.0
    %3286 = vmatpush1.msra.mxu0 %v3257
    %3287 = vmatprep.subr.mxu0 0.0
    %3288 = vmatpush1.msra.mxu0 %v3258
    %3289 = vmatprep.subr.mxu0 0.0
    %3290 = vmatpush1.msra.mxu0 0.0
    %3291 = vmatprep.subr.mxu0 0.0
    %3292 = vmatpush1.msra.mxu0 0.0
    %3293 = vmatprep.subr.mxu0 0.0
    %3294 = vmatpush1.msra.mxu0 0.0
    %3295 = vmatprep.subr.mxu0 0.0
    %3296 = vmatpush1.msra.mxu0 0.0
    %3297 = vmatprep.subr.mxu0 0.0
    %3298 = vmatpush1.msra.mxu0 0.0
    %3299 = vmatprep.subr.mxu0 0.0
    %3300 = vmatpush1.msra.mxu0 0.0
    %3301 = vmatprep.subr.mxu0 0.0
    %3302 = vmatpush1.msra.mxu0 0.0
    %3303 = vmatprep.subr.mxu0 0.0
    %3304 = vmatpush1.msra.mxu0 0.0
    %3305 = vmatprep.subr.mxu0 0.0
    %3306 = vmatpush1.msra.mxu0 0.0
    %3307 = vmatprep.subr.mxu0 0.0
    %3308 = vmatpush1.msra.mxu0 0.0
    %3309 = vmatprep.subr.mxu0 0.0
    %3310 = vmatpush1.msra.mxu0 0.0
    %3311 = vmatprep.subr.mxu0 0.0
    %3312 = vmatpush1.msra.mxu0 0.0
    %3313 = vmatprep.subr.mxu0 0.0
    %3314 = vmatpush1.msra.mxu0 0.0
    %3315 = vmatprep.subr.mxu0 0.0
    %3316 = vmatpush1.msra.mxu0 0.0
    %3317 = vmatprep.subr.mxu0 0.0
    %3318 = vmatpush1.msra.mxu0 0.0
    %3319 = vmatprep.subr.mxu0 0.0
    %3320 = vmatpush1.msra.mxu0 0.0
    %3321 = vmatprep.subr.mxu0 0.0
    %3322 = vmatpush1.msra.mxu0 0.0
    %3323 = vmatprep.subr.mxu0 0.0
    %3324 = vmatpush1.msra.mxu0 0.0
    %3325 = vmatprep.subr.mxu0 0.0
    %3326 = vmatpush1.msra.mxu0 0.0
    %3327 = vmatprep.subr.mxu0 0.0
    %3328 = vmatpush1.msra.mxu0 0.0
    %3329 = vmatprep.subr.mxu0 0.0
    %3330 = vmatpush1.msra.mxu0 0.0
    %3331 = vmatprep.subr.mxu0 0.0
    %3332 = vmatpush1.msra.mxu0 0.0
    %3333 = vmatprep.subr.mxu0 0.0
    %3334 = vmatpush1.msra.mxu0 0.0
    %3335 = vmatprep.subr.mxu0 0.0
    %3336 = vmatpush1.msra.mxu0 0.0
    %3337 = vmatprep.subr.mxu0 0.0
    %3338 = vmatpush1.msra.mxu0 0.0
    %3339 = vmatprep.subr.mxu0 0.0
    %3340 = vmatpush1.msra.mxu0 0.0
    %3341 = vmatprep.subr.mxu0 0.0
    %3342 = vmatpush1.msra.mxu0 0.0
    %3343 = vmatprep.subr.mxu0 0.0
    %3344 = vmatpush1.msra.mxu0 0.0
    %3345 = vmatprep.mubr.f32.mxu0 0.0
    %3346 = vmatmul.mubr.f32.gmra.mrb[0].mxu0 %v3267
    %v3347 = vpop.f32.mrb[0].mxu0
    %v3348 = vadd.f32 %v3264, %v3347
    %v3349 = vpop.f32.mrb[0].mxu0
    %3350 = vmatprep.mubr.f32.mxu0 0.0
    %3351 = vmatmul.mubr.f32.gmra.mrb[0].mxu0 %v3270
    %v3352 = vpop.f32.mrb[0].mxu0
    %v3353 = vadd.f32 %v3264, %v3352
    %v3354 = vpop.f32.mrb[0].mxu0
    %3355 = vmatprep.mubr.f32.mxu0 0.0
    %3356 = vmatmul.mubr.f32.gmra.mrb[0].mxu0 %v3273
    %v3357 = vpop.f32.mrb[0].mxu0
    %v3358 = vadd.f32 %v3264, %v3357
    %v3359 = vpop.f32.mrb[0].mxu0
    %3360 = vmatprep.mubr.f32.mxu0 0.0
    %3361 = vmatmul.mubr.f32.gmra.mrb[0].mxu0 %v3276
    %v3362 = vpop.f32.mrb[0].mxu0
    %v3363 = vadd.f32 %v3264, %v3362
    %v3364 = vpop.f32.mrb[0].mxu0
    %3365 = vmatprep.mubr.f32.mxu0 0.0
    %3366 = vmatmul.mubr.f32.gmra.mrb[0].mxu0 %v3279
    %v3367 = vpop.f32.mrb[0].mxu0
    %v3368 = vadd.f32 %v3264, %v3367
    %v3369 = vpop.f32.mrb[0].mxu0
    %3370 = vdwg.mxu0
    %v3371 = vmul.f32 %v3348, 0.5
    %v3372 = vmul.f32 %v3353, 0.5
    %v3373 = vmul.f32 %v3358, 0.5
    %v3374 = vmul.f32 %v3363, 0.5
    %v3375 = vmul.f32 %v3368, 0.5
    %v3376 = vmul.f32 %v3348, 0.044715
    %v3377 = vmul.f32 %v3353, 0.044715
    %v3378 = vmul.f32 %v3358, 0.044715
    %v3379 = vmul.f32 %v3363, 0.044715
    %v3380 = vmul.f32 %v3368, 0.044715
    %v3381 = vmul.f32 %v3376, %v3348
    %v3382 = vmul.f32 %v3377, %v3353
    %v3383 = vmul.f32 %v3378, %v3358
    %v3384 = vmul.f32 %v3379, %v3363
    %v3385 = vmul.f32 %v3380, %v3368
    %v3386 = vmul.f32 %v3381, %v3348
    %v3387 = vmul.f32 %v3382, %v3353
    %v3388 = vmul.f32 %v3383, %v3358
    %v3389 = vmul.f32 %v3384, %v3363
    %v3390 = vmul.f32 %v3385, %v3368
    %v3391 = vadd.f32 %v3348, %v3386
    %v3392 = vadd.f32 %v3353, %v3387
    %v3393 = vadd.f32 %v3358, %v3388
    %v3394 = vadd.f32 %v3363, %v3389
    %v3395 = vadd.f32 %v3368, %v3390
    %v3396 = vmul.f32 %v3391, 0.7978846
    %v3397 = vmul.f32 %v3392, 0.7978846
    %v3398 = vmul.f32 %v3393, 0.7978846
    %v3399 = vmul.f32 %v3394, 0.7978846
    %v3400 = vmul.f32 %v3395, 0.7978846
    %v3401 = vtanh.pop %v3396
    %v3402 = vtanh.pop %v3397
    %v3403 = vtanh.pop %v3398
    %v3404 = vtanh.pop %v3399
    %v3405 = vtanh.pop %v3400
    %v3406 = vadd.f32 %v3401, 1.0
    %v3407 = vadd.f32 %v3402, 1.0
    %v3408 = vadd.f32 %v3403, 1.0
    %v3409 = vadd.f32 %v3404, 1.0
    %v3410 = vadd.f32 %v3405, 1.0
    %v3411 = vmul.f32 %v3371, %v3406
    %v3412 = vmul.f32 %v3372, %v3407
    %v3413 = vmul.f32 %v3373, %v3408
    %v3414 = vmul.f32 %v3374, %v3409
    %v3415 = vmul.f32 %v3375, %v3410
    %v3416 = vld [vmem:[%s7] sm:$0xff]
    %v3417 = vld [vmem:[%s7 + $0x8] sm:$0xff]
    %v3418 = vld [vmem:[%s7 + $0x10] sm:$0xff]
    %v3419 = vld [vmem:[%s7 + $0x18] sm:$0xff]
    %v3420 = vld [vmem:[%s7 + $0x20] sm:$0xff]
    %v3421 = vld [vmem:[%s7 + $0x28] sm:$0xff]
    %v3422 = vld [vmem:[%s7 + $0x30] sm:$0xff]
    %v3423 = vld [vmem:[%s7 + $0x38] sm:$0xff]
    %v3424 = vlaneseq
    %v3425 = vshrl.u32 %v3424, 7
    %v3426 = vsub.s32 0, %v3425
    %v3427 = vrot.slane %v255, %v3426
    %vm3428 = vcmask 523264
    %v3430 = vsel %vm3428, %v3411, 0
    %v3433 = vsel %vm3428, %v3412, 0
    %v3436 = vsel %vm3428, %v3413, 0
    %v3439 = vsel %vm3428, %v3414, 0
    %v3442 = vsel %vm3428, %v3415, 0
    %3444 = vmatprep.subr.mxu0 0.0
    %3445 = vmatpush1.msra.mxu0 %v3416
    %3446 = vmatprep.subr.mxu0 0.0
    %3447 = vmatpush1.msra.mxu0 %v3417
    %3448 = vmatprep.subr.mxu0 0.0
    %3449 = vmatpush1.msra.mxu0 %v3418
    %3450 = vmatprep.subr.mxu0 0.0
    %3451 = vmatpush1.msra.mxu0 %v3419
    %3452 = vmatprep.subr.mxu0 0.0
    %3453 = vmatpush1.msra.mxu0 %v3420
    %3454 = vmatprep.subr.mxu0 0.0
    %3455 = vmatpush1.msra.mxu0 %v3421
    %3456 = vmatprep.subr.mxu0 0.0
    %3457 = vmatpush1.msra.mxu0 %v3422
    %3458 = vmatprep.subr.mxu0 0.0
    %3459 = vmatpush1.msra.mxu0 %v3423
    %3460 = vmatprep.subr.mxu0 0.0
    %3461 = vmatpush1.msra.mxu0 0.0
    %3462 = vmatprep.subr.mxu0 0.0
    %3463 = vmatpush1.msra.mxu0 0.0
    %3464 = vmatprep.subr.mxu0 0.0
    %3465 = vmatpush1.msra.mxu0 0.0
    %3466 = vmatprep.subr.mxu0 0.0
    %3467 = vmatpush1.msra.mxu0 0.0
    %3468 = vmatprep.subr.mxu0 0.0
    %3469 = vmatpush1.msra.mxu0 0.0
    %3470 = vmatprep.subr.mxu0 0.0
    %3471 = vmatpush1.msra.mxu0 0.0
    %3472 = vmatprep.subr.mxu0 0.0
    %3473 = vmatpush1.msra.mxu0 0.0
    %3474 = vmatprep.subr.mxu0 0.0
    %3475 = vmatpush1.msra.mxu0 0.0
    %3476 = vmatprep.subr.mxu0 0.0
    %3477 = vmatpush1.msra.mxu0 0.0
    %3478 = vmatprep.subr.mxu0 0.0
    %3479 = vmatpush1.msra.mxu0 0.0
    %3480 = vmatprep.subr.mxu0 0.0
    %3481 = vmatpush1.msra.mxu0 0.0
    %3482 = vmatprep.subr.mxu0 0.0
    %3483 = vmatpush1.msra.mxu0 0.0
    %3484 = vmatprep.subr.mxu0 0.0
    %3485 = vmatpush1.msra.mxu0 0.0
    %3486 = vmatprep.subr.mxu0 0.0
    %3487 = vmatpush1.msra.mxu0 0.0
    %3488 = vmatprep.subr.mxu0 0.0
    %3489 = vmatpush1.msra.mxu0 0.0
    %3490 = vmatprep.subr.mxu0 0.0
    %3491 = vmatpush1.msra.mxu0 0.0
    %3492 = vmatprep.subr.mxu0 0.0
    %3493 = vmatpush1.msra.mxu0 0.0
    %3494 = vmatprep.subr.mxu0 0.0
    %3495 = vmatpush1.msra.mxu0 0.0
    %3496 = vmatprep.subr.mxu0 0.0
    %3497 = vmatpush1.msra.mxu0 0.0
    %3498 = vmatprep.subr.mxu0 0.0
    %3499 = vmatpush1.msra.mxu0 0.0
    %3500 = vmatprep.subr.mxu0 0.0
    %3501 = vmatpush1.msra.mxu0 0.0
    %3502 = vmatprep.subr.mxu0 0.0
    %3503 = vmatpush1.msra.mxu0 0.0
    %3504 = vmatprep.subr.mxu0 0.0
    %3505 = vmatpush1.msra.mxu0 0.0
    %3506 = vmatprep.subr.mxu0 0.0
    %3507 = vmatpush1.msra.mxu0 0.0
    %3508 = vmatprep.mubr.f32.mxu0 0.0
    %3509 = vmatmul.mubr.f32.gmra.mrb[0].mxu0 %v3430
    %v3510 = vpop.f32.mrb[0].mxu0
    %v3511 = vadd.f32 %v3427, %v3510
    %v3512 = vpop.f32.mrb[0].mxu0
    %3513 = vmatprep.mubr.f32.mxu0 0.0
    %3514 = vmatmul.mubr.f32.gmra.mrb[0].mxu0 %v3433
    %v3515 = vpop.f32.mrb[0].mxu0
    %v3516 = vadd.f32 %v3427, %v3515
    %v3517 = vpop.f32.mrb[0].mxu0
    %3518 = vmatprep.mubr.f32.mxu0 0.0
    %3519 = vmatmul.mubr.f32.gmra.mrb[0].mxu0 %v3436
    %v3520 = vpop.f32.mrb[0].mxu0
    %v3521 = vadd.f32 %v3427, %v3520
    %v3522 = vpop.f32.mrb[0].mxu0
    %3523 = vmatprep.mubr.f32.mxu0 0.0
    %3524 = vmatmul.mubr.f32.gmra.mrb[0].mxu0 %v3439
    %v3525 = vpop.f32.mrb[0].mxu0
    %v3526 = vadd.f32 %v3427, %v3525
    %v3527 = vpop.f32.mrb[0].mxu0
    %3528 = vmatprep.mubr.f32.mxu0 0.0
    %3529 = vmatmul.mubr.f32.gmra.mrb[0].mxu0 %v3442
    %v3530 = vpop.f32.mrb[0].mxu0
    %v3531 = vadd.f32 %v3427, %v3530
    %v3532 = vpop.f32.mrb[0].mxu0
    %3533 = vdwg.mxu0
    %v3534 = vadd.f32 %v3167, %v3511
    %v3535 = vadd.f32 %v3168, %v3516
    %v3536 = vadd.f32 %v3169, %v3521
    %v3537 = vadd.f32 %v3170, %v3526
    %v3538 = vadd.f32 %v3171, %v3531
    %s3539 = scalar_lea.vmem %s8, 16
    %v3540 = vld [vmem:[%s3539] sm:$0xff]
    %v3541 = vld [vmem:[%s3539 + $0x8] sm:$0x1]
    %v3542 = vsel %vm168, %v3534, 0.0
    %3543 = vadd.xlane.f32.xlu0 %v3542
    %v3544 = vpop.xlane.xlu0 %3543
    %v3545 = vsel %vm168, %v3535, 0.0
    %3546 = vadd.xlane.f32.xlu0 %v3545
    %v3547 = vpop.xlane.xlu0 %3546
    %v3548 = vsel %vm168, %v3536, 0.0
    %3549 = vadd.xlane.f32.xlu0 %v3548
    %v3550 = vpop.xlane.xlu0 %3549
    %v3551 = vsel %vm168, %v3537, 0.0
    %3552 = vadd.xlane.f32.xlu0 %v3551
    %v3553 = vpop.xlane.xlu0 %3552
    %v3554 = vsel %vm181, %v3538, 0.0
    %3555 = vadd.xlane.f32.xlu0 %v3554
    %v3556 = vpop.xlane.xlu0 %3555
    %v3557 = vmul.f32 %v3544, %v185
    %v3558 = vmul.f32 %v3547, %v185
    %v3559 = vmul.f32 %v3550, %v185
    %v3560 = vmul.f32 %v3553, %v185
    %v3561 = vmul.f32 %v3556, %v185
    %v3562 = vsub.f32 %v3534, %v3557
    %v3563 = vsub.f32 %v3535, %v3558
    %v3564 = vsub.f32 %v3536, %v3559
    %v3565 = vsub.f32 %v3537, %v3560
    %v3566 = vsub.f32 %v3538, %v3561
    %v3567 = vmul.f32 %v3562, %v3562
    %v3568 = vmul.f32 %v3563, %v3563
    %v3569 = vmul.f32 %v3564, %v3564
    %v3570 = vmul.f32 %v3565, %v3565
    %v3571 = vmul.f32 %v3566, %v3566
    %v3572 = vsel %vm168, %v3567, 0.0
    %3573 = vadd.xlane.f32.xlu0 %v3572
    %v3574 = vpop.xlane.xlu0 %3573
    %v3575 = vsel %vm168, %v3568, 0.0
    %3576 = vadd.xlane.f32.xlu0 %v3575
    %v3577 = vpop.xlane.xlu0 %3576
    %v3578 = vsel %vm168, %v3569, 0.0
    %3579 = vadd.xlane.f32.xlu0 %v3578
    %v3580 = vpop.xlane.xlu0 %3579
    %v3581 = vsel %vm168, %v3570, 0.0
    %3582 = vadd.xlane.f32.xlu0 %v3581
    %v3583 = vpop.xlane.xlu0 %3582
    %v3584 = vsel %vm181, %v3571, 0.0
    %3585 = vadd.xlane.f32.xlu0 %v3584
    %v3586 = vpop.xlane.xlu0 %3585
    %v3587 = vmul.f32 %v3574, %v185
    %v3588 = vmul.f32 %v3577, %v185
    %v3589 = vmul.f32 %v3580, %v185
    %v3590 = vmul.f32 %v3583, %v185
    %v3591 = vmul.f32 %v3586, %v185
    %v3592 = vadd.f32 %v3587, 1e-05
    %v3593 = vadd.f32 %v3588, 1e-05
    %v3594 = vadd.f32 %v3589, 1e-05
    %v3595 = vadd.f32 %v3590, 1e-05
    %v3596 = vadd.f32 %v3591, 1e-05
    %v3597 = vrsqrt.pop %v3592
    %v3598 = vrsqrt.pop %v3593
    %v3599 = vrsqrt.pop %v3594
    %v3600 = vrsqrt.pop %v3595
    %v3601 = vrsqrt.pop %v3596
    %v3602 = vmul.f32 %v3562, %v3597
    %v3603 = vmul.f32 %v3563, %v3598
    %v3604 = vmul.f32 %v3564, %v3599
    %v3605 = vmul.f32 %v3565, %v3600
    %v3606 = vmul.f32 %v3566, %v3601
    %v3607 = vlaneseq
    %v3608 = vshrl.u32 %v3607, 7
    %v3609 = vsub.s32 0, %v3608
    %v3610 = vrot.slane %v3540, %v3609
    %v3611 = vmul.f32 %v3602, %v3610
    %v3612 = vmul.f32 %v3603, %v3610
    %v3613 = vmul.f32 %v3604, %v3610
    %v3614 = vmul.f32 %v3605, %v3610
    %v3615 = vmul.f32 %v3606, %v3610
    %v3616 = vlaneseq
    %v3617 = vshrl.u32 %v3616, 7
    %v3618 = vsub.s32 1, %v3617
    %v3619 = vrot.slane %v3540, %v3618
    %v3620 = vadd.f32 %v3611, %v3619
    %v3621 = vadd.f32 %v3612, %v3619
    %v3622 = vadd.f32 %v3613, %v3619
    %v3623 = vadd.f32 %v3614, %v3619
    %v3624 = vadd.f32 %v3615, %v3619
    %s3625 = scalar_lea.vmem %s4, 32
    %v3626 = vld [vmem:[%s3625] sm:$0xff]
    %v3627 = vld [vmem:[%s3625 + $0x8] sm:$0xff]
    %v3628 = vld [vmem:[%s3625 + $0x10] sm:$0xff]
    %v3629 = vld [vmem:[%s3625 + $0x18] sm:$0xff]
    %v3631 = vsel %vm168, %v3620, 0
    %v3634 = vsel %vm168, %v3621, 0
    %v3637 = vsel %vm168, %v3622, 0
    %v3640 = vsel %vm168, %v3623, 0
    %v3643 = vsel %vm168, %v3624, 0
    %3645 = vmatprep.subr.mxu0 0.0
    %3646 = vmatpush1.msra.mxu0 %v3626
    %3647 = vmatprep.subr.mxu0 0.0
    %3648 = vmatpush1.msra.mxu0 %v3627
    %3649 = vmatprep.subr.mxu0 0.0
    %3650 = vmatpush1.msra.mxu0 %v3628
    %3651 = vmatprep.subr.mxu0 0.0
    %3652 = vmatpush1.msra.mxu0 %v3629
    %3653 = vmatprep.subr.mxu0 0.0
    %3654 = vmatpush1.msra.mxu0 0.0
    %3655 = vmatprep.subr.mxu0 0.0
    %3656 = vmatpush1.msra.mxu0 0.0
    %3657 = vmatprep.subr.mxu0 0.0
    %3658 = vmatpush1.msra.mxu0 0.0
    %3659 = vmatprep.subr.mxu0 0.0
    %3660 = vmatpush1.msra.mxu0 0.0
    %3661 = vmatprep.subr.mxu0 0.0
    %3662 = vmatpush1.msra.mxu0 0.0
    %3663 = vmatprep.subr.mxu0 0.0
    %3664 = vmatpush1.msra.mxu0 0.0
    %3665 = vmatprep.subr.mxu0 0.0
    %3666 = vmatpush1.msra.mxu0 0.0
    %3667 = vmatprep.subr.mxu0 0.0
    %3668 = vmatpush1.msra.mxu0 0.0
    %3669 = vmatprep.subr.mxu0 0.0
    %3670 = vmatpush1.msra.mxu0 0.0
    %3671 = vmatprep.subr.mxu0 0.0
    %3672 = vmatpush1.msra.mxu0 0.0
    %3673 = vmatprep.subr.mxu0 0.0
    %3674 = vmatpush1.msra.mxu0 0.0
    %3675 = vmatprep.subr.mxu0 0.0
    %3676 = vmatpush1.msra.mxu0 0.0
    %3677 = vmatprep.subr.mxu0 0.0
    %3678 = vmatpush1.msra.mxu0 0.0
    %3679 = vmatprep.subr.mxu0 0.0
    %3680 = vmatpush1.msra.mxu0 0.0
    %3681 = vmatprep.subr.mxu0 0.0
    %3682 = vmatpush1.msra.mxu0 0.0
    %3683 = vmatprep.subr.mxu0 0.0
    %3684 = vmatpush1.msra.mxu0 0.0
    %3685 = vmatprep.subr.mxu0 0.0
    %3686 = vmatpush1.msra.mxu0 0.0
    %3687 = vmatprep.subr.mxu0 0.0
    %3688 = vmatpush1.msra.mxu0 0.0
    %3689 = vmatprep.subr.mxu0 0.0
    %3690 = vmatpush1.msra.mxu0 0.0
    %3691 = vmatprep.subr.mxu0 0.0
    %3692 = vmatpush1.msra.mxu0 0.0
    %3693 = vmatprep.subr.mxu0 0.0
    %3694 = vmatpush1.msra.mxu0 0.0
    %3695 = vmatprep.subr.mxu0 0.0
    %3696 = vmatpush1.msra.mxu0 0.0
    %3697 = vmatprep.subr.mxu0 0.0
    %3698 = vmatpush1.msra.mxu0 0.0
    %3699 = vmatprep.subr.mxu0 0.0
    %3700 = vmatpush1.msra.mxu0 0.0
    %3701 = vmatprep.subr.mxu0 0.0
    %3702 = vmatpush1.msra.mxu0 0.0
    %3703 = vmatprep.subr.mxu0 0.0
    %3704 = vmatpush1.msra.mxu0 0.0
    %3705 = vmatprep.subr.mxu0 0.0
    %3706 = vmatpush1.msra.mxu0 0.0
    %3707 = vmatprep.subr.mxu0 0.0
    %3708 = vmatpush1.msra.mxu0 0.0
    %3709 = vmatprep.mubr.f32.mxu0 0.0
    %3710 = vmatmul.mubr.f32.gmra.mrb[0].mxu0 %v3631
    %v3711 = vpop.f32.mrb[0].mxu0
    %v3712 = vadd.f32 0.0, %v3711
    %v3713 = vpop.f32.mrb[0].mxu0
    %3714 = vmatprep.mubr.f32.mxu0 0.0
    %3715 = vmatmul.mubr.f32.gmra.mrb[0].mxu0 %v3634
    %v3716 = vpop.f32.mrb[0].mxu0
    %v3717 = vadd.f32 0.0, %v3716
    %v3718 = vpop.f32.mrb[0].mxu0
    %3719 = vmatprep.mubr.f32.mxu0 0.0
    %3720 = vmatmul.mubr.f32.gmra.mrb[0].mxu0 %v3637
    %v3721 = vpop.f32.mrb[0].mxu0
    %v3722 = vadd.f32 0.0, %v3721
    %v3723 = vpop.f32.mrb[0].mxu0
    %3724 = vmatprep.mubr.f32.mxu0 0.0
    %3725 = vmatmul.mubr.f32.gmra.mrb[0].mxu0 %v3640
    %v3726 = vpop.f32.mrb[0].mxu0
    %v3727 = vadd.f32 0.0, %v3726
    %v3728 = vpop.f32.mrb[0].mxu0
    %3729 = vmatprep.mubr.f32.mxu0 0.0
    %3730 = vmatmul.mubr.f32.gmra.mrb[0].mxu0 %v3643
    %v3731 = vpop.f32.mrb[0].mxu0
    %v3732 = vadd.f32 0.0, %v3731
    %v3733 = vpop.f32.mrb[0].mxu0
    %3734 = vdwg.mxu0
    %v3735 = vlaneseq
    %v3736 = vshrl.u32 %v3735, 7
    %v3737 = vsub.s32 2, %v3736
    %v3738 = vrot.slane %v3540, %v3737
    %v3739 = vadd.f32 %v3712, %v3738
    %v3740 = vadd.f32 %v3717, %v3738
    %v3741 = vadd.f32 %v3722, %v3738
    %v3742 = vadd.f32 %v3727, %v3738
    %v3743 = vadd.f32 %v3732, %v3738
    %v3744 = vlaneseq
    %v3745 = vshrl.u32 %v3744, 7
    %v3746 = vsub.s32 3, %v3745
    %v3747 = vrot.slane %v3540, %v3746
    %3749 = vrot.lane.b32.xlu0 %v3747, 32
    %v3750 = vpop.permute.xlu0 %3749
    %v3752 = vadd.f32 %v3712, %v3750
    %v3753 = vadd.f32 %v3717, %v3750
    %v3754 = vadd.f32 %v3722, %v3750
    %v3755 = vadd.f32 %v3727, %v3750
    %v3756 = vadd.f32 %v3732, %v3750
    %v3757 = vlaneseq
    %v3758 = vshrl.u32 %v3757, 7
    %v3759 = vsub.s32 4, %v3758
    %v3760 = vrot.slane %v3540, %v3759
    %3762 = vrot.lane.b32.xlu0 %v3760, 64
    %v3763 = vpop.permute.xlu0 %3762
    %v3765 = vadd.f32 %v3712, %v3763
    %v3766 = vadd.f32 %v3717, %v3763
    %v3767 = vadd.f32 %v3722, %v3763
    %v3768 = vadd.f32 %v3727, %v3763
    %v3769 = vadd.f32 %v3732, %v3763
    %s3770 = scalar_lea.vmem %s5, 32
    %v3771 = vld [vmem:[%s3770] sm:$0xff]
    %v3772 = vld [vmem:[%s3770 + $0x8] sm:$0xff]
    %v3773 = vld [vmem:[%s3770 + $0x10] sm:$0xff]
    %v3774 = vld [vmem:[%s3770 + $0x18] sm:$0xff]
    %3778 = vrot.lane.b32.xlu0 %v3752, 96
    %v3779 = vpop.permute.xlu0 %3778
    %3780 = vrot.lane.b32.xlu0 %v3753, 96
    %v3781 = vpop.permute.xlu0 %3780
    %3782 = vrot.lane.b32.xlu0 %v3754, 96
    %v3783 = vpop.permute.xlu0 %3782
    %v3785 = vsel %vm496, %v3739, 0
    %v3788 = vsel %vm496, %v3740, 0
    %v3791 = vsel %vm496, %v3741, 0
    %v3793 = vsel %vm496, %v3779, 0
    %v3795 = vsel %vm496, %v3781, 0
    %v3797 = vsel %vm496, %v3783, 0
    %3799 = vmatprep.subr.mxu0 0.0
    %3800 = vmatpush1.xpose.msra.mxu0 %v3793
    %3801 = vmatprep.subr.mxu0 0.0
    %3802 = vmatpush1.xpose.msra.mxu0 %v3795
    %3803 = vmatprep.subr.mxu0 0.0
    %3804 = vmatpush1.xpose.msra.mxu0 %v3797
    %3805 = vmatprep.subr.mxu0 0.0
    %3806 = vmatpush1.xpose.msra.mxu0 0.0
    %3807 = vmatprep.subr.mxu0 0.0
    %3808 = vmatpush1.xpose.msra.mxu0 0.0
    %3809 = vmatprep.subr.mxu0 0.0
    %3810 = vmatpush1.xpose.msra.mxu0 0.0
    %3811 = vmatprep.subr.mxu0 0.0
    %3812 = vmatpush1.xpose.msra.mxu0 0.0
    %3813 = vmatprep.subr.mxu0 0.0
    %3814 = vmatpush1.xpose.msra.mxu0 0.0
    %3815 = vmatprep.subr.mxu0 0.0
    %3816 = vmatpush1.xpose.msra.mxu0 0.0
    %3817 = vmatprep.subr.mxu0 0.0
    %3818 = vmatpush1.xpose.msra.mxu0 0.0
    %3819 = vmatprep.subr.mxu0 0.0
    %3820 = vmatpush1.xpose.msra.mxu0 0.0
    %3821 = vmatprep.subr.mxu0 0.0
    %3822 = vmatpush1.xpose.msra.mxu0 0.0
    %3823 = vmatprep.subr.mxu0 0.0
    %3824 = vmatpush1.xpose.msra.mxu0 0.0
    %3825 = vmatprep.subr.mxu0 0.0
    %3826 = vmatpush1.xpose.msra.mxu0 0.0
    %3827 = vmatprep.subr.mxu0 0.0
    %3828 = vmatpush1.xpose.msra.mxu0 0.0
    %3829 = vmatprep.subr.mxu0 0.0
    %3830 = vmatpush1.xpose.msra.mxu0 0.0
    %3831 = vmatprep.subr.mxu0 0.0
    %3832 = vmatpush1.xpose.msra.mxu0 0.0
    %3833 = vmatprep.subr.mxu0 0.0
    %3834 = vmatpush1.xpose.msra.mxu0 0.0
    %3835 = vmatprep.subr.mxu0 0.0
    %3836 = vmatpush1.xpose.msra.mxu0 0.0
    %3837 = vmatprep.subr.mxu0 0.0
    %3838 = vmatpush1.xpose.msra.mxu0 0.0
    %3839 = vmatprep.subr.mxu0 0.0
    %3840 = vmatpush1.xpose.msra.mxu0 0.0
    %3841 = vmatprep.subr.mxu0 0.0
    %3842 = vmatpush1.xpose.msra.mxu0 0.0
    %3843 = vmatprep.subr.mxu0 0.0
    %3844 = vmatpush1.xpose.msra.mxu0 0.0
    %3845 = vmatprep.subr.mxu0 0.0
    %3846 = vmatpush1.xpose.msra.mxu0 0.0
    %3847 = vmatprep.subr.mxu0 0.0
    %3848 = vmatpush1.xpose.msra.mxu0 0.0
    %3849 = vmatprep.subr.mxu0 0.0
    %3850 = vmatpush1.xpose.msra.mxu0 0.0
    %3851 = vmatprep.subr.mxu0 0.0
    %3852 = vmatpush1.xpose.msra.mxu0 0.0
    %3853 = vmatprep.subr.mxu0 0.0
    %3854 = vmatpush1.xpose.msra.mxu0 0.0
    %3855 = vmatprep.subr.mxu0 0.0
    %3856 = vmatpush1.xpose.msra.mxu0 0.0
    %3857 = vmatprep.subr.mxu0 0.0
    %3858 = vmatpush1.xpose.msra.mxu0 0.0
    %3859 = vmatprep.subr.mxu0 0.0
    %3860 = vmatpush1.xpose.msra.mxu0 0.0
    %3861 = vmatprep.subr.mxu0 0.0
    %3862 = vmatpush1.xpose.msra.mxu0 0.0
    %3863 = vmatprep.mubr.f32.mxu0 0.0
    %3864 = vmatmul.mubr.f32.gmra.mrb[0].mxu0 %v3785
    %v3865 = vpop.f32.mrb[0].mxu0
    %v3866 = vadd.f32 0.0, %v3865
    %v3867 = vpop.f32.mrb[0].mxu0
    %3868 = vmatprep.mubr.f32.mxu0 0.0
    %3869 = vmatmul.mubr.f32.gmra.mrb[0].mxu0 %v3788
    %v3870 = vpop.f32.mrb[0].mxu0
    %v3871 = vadd.f32 0.0, %v3870
    %v3872 = vpop.f32.mrb[0].mxu0
    %3873 = vmatprep.mubr.f32.mxu0 0.0
    %3874 = vmatmul.mubr.f32.gmra.mrb[0].mxu0 %v3791
    %v3875 = vpop.f32.mrb[0].mxu0
    %v3876 = vadd.f32 0.0, %v3875
    %v3877 = vpop.f32.mrb[0].mxu0
    %3878 = vdwg.mxu0
    %v3879 = vmul.f32 %v3866, 0.35355338
    %v3880 = vmul.f32 %v3871, 0.35355338
    %v3881 = vmul.f32 %v3876, 0.35355338
    %v3882 = vsel %vm595, %v3879, -inf
    %3883 = vmax.xlane.f32.xlu0 %v3882
    %v3884 = vpop.xlane.xlu0 %3883
    %v3885 = vsel %vm595, %v3880, -inf
    %3886 = vmax.xlane.f32.xlu0 %v3885
    %v3887 = vpop.xlane.xlu0 %3886
    %v3888 = vsel %vm602, %v3881, -inf
    %3889 = vmax.xlane.f32.xlu0 %v3888
    %v3890 = vpop.xlane.xlu0 %3889
    %v3891 = vsub.f32 %v3879, %v3884
    %v3892 = vsub.f32 %v3880, %v3887
    %v3893 = vsub.f32 %v3881, %v3890
    %v3894 = vmul.f32 %v3891, 1.442695
    %v3895 = vpow.pop %v3894
    %v3896 = vmul.f32 %v3892, 1.442695
    %v3897 = vpow.pop %v3896
    %v3898 = vmul.f32 %v3893, 1.442695
    %v3899 = vpow.pop %v3898
    %v3900 = vsel %vm595, %v3895, 0.0
    %3901 = vadd.xlane.f32.xlu0 %v3900
    %v3902 = vpop.xlane.xlu0 %3901
    %v3903 = vsel %vm595, %v3897, 0.0
    %3904 = vadd.xlane.f32.xlu0 %v3903
    %v3905 = vpop.xlane.xlu0 %3904
    %v3906 = vsel %vm602, %v3899, 0.0
    %3907 = vadd.xlane.f32.xlu0 %v3906
    %v3908 = vpop.xlane.xlu0 %3907
    %v3909 = vrcp.pop %v3902
    %v3910 = vmul.f32 %v3895, %v3909
    %v3911 = vrcp.pop %v3905
    %v3912 = vmul.f32 %v3897, %v3911
    %v3913 = vrcp.pop %v3908
    %v3914 = vmul.f32 %v3899, %v3913
    %3918 = vrot.lane.b32.xlu0 %v3765, 64
    %v3919 = vpop.permute.xlu0 %3918
    %3920 = vrot.lane.b32.xlu0 %v3766, 64
    %v3921 = vpop.permute.xlu0 %3920
    %3922 = vrot.lane.b32.xlu0 %v3767, 64
    %v3923 = vpop.permute.xlu0 %3922
    %v3927 = vsel %vm595, %v3910, 0
    %v3930 = vsel %vm595, %v3912, 0
    %v3933 = vsel %vm595, %v3914, 0
    %v3935 = vsel %vm650, %v3923, 0
    %3937 = vmatprep.subr.mxu0 0.0
    %3938 = vmatpush1.msra.mxu0 %v3919
    %3939 = vmatprep.subr.mxu0 0.0
    %3940 = vmatpush1.msra.mxu0 %v3921
    %3941 = vmatprep.subr.mxu0 0.0
    %3942 = vmatpush1.msra.mxu0 %v3935
    %3943 = vmatprep.subr.mxu0 0.0
    %3944 = vmatpush1.msra.mxu0 0.0
    %3945 = vmatprep.subr.mxu0 0.0
    %3946 = vmatpush1.msra.mxu0 0.0
    %3947 = vmatprep.subr.mxu0 0.0
    %3948 = vmatpush1.msra.mxu0 0.0
    %3949 = vmatprep.subr.mxu0 0.0
    %3950 = vmatpush1.msra.mxu0 0.0
    %3951 = vmatprep.subr.mxu0 0.0
    %3952 = vmatpush1.msra.mxu0 0.0
    %3953 = vmatprep.subr.mxu0 0.0
    %3954 = vmatpush1.msra.mxu0 0.0
    %3955 = vmatprep.subr.mxu0 0.0
    %3956 = vmatpush1.msra.mxu0 0.0
    %3957 = vmatprep.subr.mxu0 0.0
    %3958 = vmatpush1.msra.mxu0 0.0
    %3959 = vmatprep.subr.mxu0 0.0
    %3960 = vmatpush1.msra.mxu0 0.0
    %3961 = vmatprep.subr.mxu0 0.0
    %3962 = vmatpush1.msra.mxu0 0.0
    %3963 = vmatprep.subr.mxu0 0.0
    %3964 = vmatpush1.msra.mxu0 0.0
    %3965 = vmatprep.subr.mxu0 0.0
    %3966 = vmatpush1.msra.mxu0 0.0
    %3967 = vmatprep.subr.mxu0 0.0
    %3968 = vmatpush1.msra.mxu0 0.0
    %3969 = vmatprep.subr.mxu0 0.0
    %3970 = vmatpush1.msra.mxu0 0.0
    %3971 = vmatprep.subr.mxu0 0.0
    %3972 = vmatpush1.msra.mxu0 0.0
    %3973 = vmatprep.subr.mxu0 0.0
    %3974 = vmatpush1.msra.mxu0 0.0
    %3975 = vmatprep.subr.mxu0 0.0
    %3976 = vmatpush1.msra.mxu0 0.0
    %3977 = vmatprep.subr.mxu0 0.0
    %3978 = vmatpush1.msra.mxu0 0.0
    %3979 = vmatprep.subr.mxu0 0.0
    %3980 = vmatpush1.msra.mxu0 0.0
    %3981 = vmatprep.subr.mxu0 0.0
    %3982 = vmatpush1.msra.mxu0 0.0
    %3983 = vmatprep.subr.mxu0 0.0
    %3984 = vmatpush1.msra.mxu0 0.0
    %3985 = vmatprep.subr.mxu0 0.0
    %3986 = vmatpush1.msra.mxu0 0.0
    %3987 = vmatprep.subr.mxu0 0.0
    %3988 = vmatpush1.msra.mxu0 0.0
    %3989 = vmatprep.subr.mxu0 0.0
    %3990 = vmatpush1.msra.mxu0 0.0
    %3991 = vmatprep.subr.mxu0 0.0
    %3992 = vmatpush1.msra.mxu0 0.0
    %3993 = vmatprep.subr.mxu0 0.0
    %3994 = vmatpush1.msra.mxu0 0.0
    %3995 = vmatprep.subr.mxu0 0.0
    %3996 = vmatpush1.msra.mxu0 0.0
    %3997 = vmatprep.subr.mxu0 0.0
    %3998 = vmatpush1.msra.mxu0 0.0
    %3999 = vmatprep.subr.mxu0 0.0
    %4000 = vmatpush1.msra.mxu0 0.0
    %4001 = vmatprep.mubr.f32.mxu0 0.0
    %4002 = vmatmul.mubr.f32.gmra.mrb[0].mxu0 %v3927
    %v4003 = vpop.f32.mrb[0].mxu0
    %v4004 = vadd.f32 0.0, %v4003
    %v4005 = vpop.f32.mrb[0].mxu0
    %4006 = vmatprep.mubr.f32.mxu0 0.0
    %4007 = vmatmul.mubr.f32.gmra.mrb[0].mxu0 %v3930
    %v4008 = vpop.f32.mrb[0].mxu0
    %v4009 = vadd.f32 0.0, %v4008
    %v4010 = vpop.f32.mrb[0].mxu0
    %4011 = vmatprep.mubr.f32.mxu0 0.0
    %4012 = vmatmul.mubr.f32.gmra.mrb[0].mxu0 %v3933
    %v4013 = vpop.f32.mrb[0].mxu0
    %v4014 = vadd.f32 0.0, %v4013
    %v4015 = vpop.f32.mrb[0].mxu0
    %4016 = vdwg.mxu0
    %4017 = vrot.lane.b32.xlu0 %v3739, 120
    %v4018 = vpop.permute.xlu0 %4017
    %4019 = vrot.lane.b32.xlu0 %v3740, 120
    %v4020 = vpop.permute.xlu0 %4019
    %4021 = vrot.lane.b32.xlu0 %v3741, 120
    %v4022 = vpop.permute.xlu0 %4021
    %4023 = vrot.lane.b32.xlu0 %v3752, 88
    %v4024 = vpop.permute.xlu0 %4023
    %4025 = vrot.lane.b32.xlu0 %v3753, 88
    %v4026 = vpop.permute.xlu0 %4025
    %4027 = vrot.lane.b32.xlu0 %v3754, 88
    %v4028 = vpop.permute.xlu0 %4027
    %v4029 = vsel %vm496, %v4018, 0
    %v4031 = vsel %vm496, %v4020, 0
    %v4033 = vsel %vm496, %v4022, 0
    %v4035 = vsel %vm496, %v4024, 0
    %v4037 = vsel %vm496, %v4026, 0
    %v4039 = vsel %vm496, %v4028, 0
    %4041 = vmatprep.subr.mxu0 0.0
    %4042 = vmatpush1.xpose.msra.mxu0 %v4035
    %4043 = vmatprep.subr.mxu0 0.0
    %4044 = vmatpush1.xpose.msra.mxu0 %v4037
    %4045 = vmatprep.subr.mxu0 0.0
    %4046 = vmatpush1.xpose.msra.mxu0 %v4039
    %4047 = vmatprep.subr.mxu0 0.0
    %4048 = vmatpush1.xpose.msra.mxu0 0.0
    %4049 = vmatprep.subr.mxu0 0.0
    %4050 = vmatpush1.xpose.msra.mxu0 0.0
    %4051 = vmatprep.subr.mxu0 0.0
    %4052 = vmatpush1.xpose.msra.mxu0 0.0
    %4053 = vmatprep.subr.mxu0 0.0
    %4054 = vmatpush1.xpose.msra.mxu0 0.0
    %4055 = vmatprep.subr.mxu0 0.0
    %4056 = vmatpush1.xpose.msra.mxu0 0.0
    %4057 = vmatprep.subr.mxu0 0.0
    %4058 = vmatpush1.xpose.msra.mxu0 0.0
    %4059 = vmatprep.subr.mxu0 0.0
    %4060 = vmatpush1.xpose.msra.mxu0 0.0
    %4061 = vmatprep.subr.mxu0 0.0
    %4062 = vmatpush1.xpose.msra.mxu0 0.0
    %4063 = vmatprep.subr.mxu0 0.0
    %4064 = vmatpush1.xpose.msra.mxu0 0.0
    %4065 = vmatprep.subr.mxu0 0.0
    %4066 = vmatpush1.xpose.msra.mxu0 0.0
    %4067 = vmatprep.subr.mxu0 0.0
    %4068 = vmatpush1.xpose.msra.mxu0 0.0
    %4069 = vmatprep.subr.mxu0 0.0
    %4070 = vmatpush1.xpose.msra.mxu0 0.0
    %4071 = vmatprep.subr.mxu0 0.0
    %4072 = vmatpush1.xpose.msra.mxu0 0.0
    %4073 = vmatprep.subr.mxu0 0.0
    %4074 = vmatpush1.xpose.msra.mxu0 0.0
    %4075 = vmatprep.subr.mxu0 0.0
    %4076 = vmatpush1.xpose.msra.mxu0 0.0
    %4077 = vmatprep.subr.mxu0 0.0
    %4078 = vmatpush1.xpose.msra.mxu0 0.0
    %4079 = vmatprep.subr.mxu0 0.0
    %4080 = vmatpush1.xpose.msra.mxu0 0.0
    %4081 = vmatprep.subr.mxu0 0.0
    %4082 = vmatpush1.xpose.msra.mxu0 0.0
    %4083 = vmatprep.subr.mxu0 0.0
    %4084 = vmatpush1.xpose.msra.mxu0 0.0
    %4085 = vmatprep.subr.mxu0 0.0
    %4086 = vmatpush1.xpose.msra.mxu0 0.0
    %4087 = vmatprep.subr.mxu0 0.0
    %4088 = vmatpush1.xpose.msra.mxu0 0.0
    %4089 = vmatprep.subr.mxu0 0.0
    %4090 = vmatpush1.xpose.msra.mxu0 0.0
    %4091 = vmatprep.subr.mxu0 0.0
    %4092 = vmatpush1.xpose.msra.mxu0 0.0
    %4093 = vmatprep.subr.mxu0 0.0
    %4094 = vmatpush1.xpose.msra.mxu0 0.0
    %4095 = vmatprep.subr.mxu0 0.0
    %4096 = vmatpush1.xpose.msra.mxu0 0.0
    %4097 = vmatprep.subr.mxu0 0.0
    %4098 = vmatpush1.xpose.msra.mxu0 0.0
    %4099 = vmatprep.subr.mxu0 0.0
    %4100 = vmatpush1.xpose.msra.mxu0 0.0
    %4101 = vmatprep.subr.mxu0 0.0
    %4102 = vmatpush1.xpose.msra.mxu0 0.0
    %4103 = vmatprep.subr.mxu0 0.0
    %4104 = vmatpush1.xpose.msra.mxu0 0.0
    %4105 = vmatprep.mubr.f32.mxu0 0.0
    %4106 = vmatmul.mubr.f32.gmra.mrb[0].mxu0 %v4029
    %v4107 = vpop.f32.mrb[0].mxu0
    %v4108 = vadd.f32 0.0, %v4107
    %v4109 = vpop.f32.mrb[0].mxu0
    %4110 = vmatprep.mubr.f32.mxu0 0.0
    %4111 = vmatmul.mubr.f32.gmra.mrb[0].mxu0 %v4031
    %v4112 = vpop.f32.mrb[0].mxu0
    %v4113 = vadd.f32 0.0, %v4112
    %v4114 = vpop.f32.mrb[0].mxu0
    %4115 = vmatprep.mubr.f32.mxu0 0.0
    %4116 = vmatmul.mubr.f32.gmra.mrb[0].mxu0 %v4033
    %v4117 = vpop.f32.mrb[0].mxu0
    %v4118 = vadd.f32 0.0, %v4117
    %v4119 = vpop.f32.mrb[0].mxu0
    %4120 = vdwg.mxu0
    %v4121 = vmul.f32 %v4108, 0.35355338
    %v4122 = vmul.f32 %v4113, 0.35355338
    %v4123 = vmul.f32 %v4118, 0.35355338
    %v4124 = vsel %vm595, %v4121, -inf
    %4125 = vmax.xlane.f32.xlu0 %v4124
    %v4126 = vpop.xlane.xlu0 %4125
    %v4127 = vsel %vm595, %v4122, -inf
    %4128 = vmax.xlane.f32.xlu0 %v4127
    %v4129 = vpop.xlane.xlu0 %4128
    %v4130 = vsel %vm602, %v4123, -inf
    %4131 = vmax.xlane.f32.xlu0 %v4130
    %v4132 = vpop.xlane.xlu0 %4131
    %v4133 = vsub.f32 %v4121, %v4126
    %v4134 = vsub.f32 %v4122, %v4129
    %v4135 = vsub.f32 %v4123, %v4132
    %v4136 = vmul.f32 %v4133, 1.442695
    %v4137 = vpow.pop %v4136
    %v4138 = vmul.f32 %v4134, 1.442695
    %v4139 = vpow.pop %v4138
    %v4140 = vmul.f32 %v4135, 1.442695
    %v4141 = vpow.pop %v4140
    %v4142 = vsel %vm595, %v4137, 0.0
    %4143 = vadd.xlane.f32.xlu0 %v4142
    %v4144 = vpop.xlane.xlu0 %4143
    %v4145 = vsel %vm595, %v4139, 0.0
    %4146 = vadd.xlane.f32.xlu0 %v4145
    %v4147 = vpop.xlane.xlu0 %4146
    %v4148 = vsel %vm602, %v4141, 0.0
    %4149 = vadd.xlane.f32.xlu0 %v4148
    %v4150 = vpop.xlane.xlu0 %4149
    %v4151 = vrcp.pop %v4144
    %v4152 = vmul.f32 %v4137, %v4151
    %v4153 = vrcp.pop %v4147
    %v4154 = vmul.f32 %v4139, %v4153
    %v4155 = vrcp.pop %v4150
    %v4156 = vmul.f32 %v4141, %v4155
    %4157 = vrot.lane.b32.xlu0 %v3765, 56
    %v4158 = vpop.permute.xlu0 %4157
    %4159 = vrot.lane.b32.xlu0 %v3766, 56
    %v4160 = vpop.permute.xlu0 %4159
    %4161 = vrot.lane.b32.xlu0 %v3767, 56
    %v4162 = vpop.permute.xlu0 %4161
    %v4166 = vsel %vm595, %v4152, 0
    %v4169 = vsel %vm595, %v4154, 0
    %v4172 = vsel %vm595, %v4156, 0
    %v4174 = vsel %vm650, %v4162, 0
    %4176 = vmatprep.subr.mxu0 0.0
    %4177 = vmatpush1.msra.mxu0 %v4158
    %4178 = vmatprep.subr.mxu0 0.0
    %4179 = vmatpush1.msra.mxu0 %v4160
    %4180 = vmatprep.subr.mxu0 0.0
    %4181 = vmatpush1.msra.mxu0 %v4174
    %4182 = vmatprep.subr.mxu0 0.0
    %4183 = vmatpush1.msra.mxu0 0.0
    %4184 = vmatprep.subr.mxu0 0.0
    %4185 = vmatpush1.msra.mxu0 0.0
    %4186 = vmatprep.subr.mxu0 0.0
    %4187 = vmatpush1.msra.mxu0 0.0
    %4188 = vmatprep.subr.mxu0 0.0
    %4189 = vmatpush1.msra.mxu0 0.0
    %4190 = vmatprep.subr.mxu0 0.0
    %4191 = vmatpush1.msra.mxu0 0.0
    %4192 = vmatprep.subr.mxu0 0.0
    %4193 = vmatpush1.msra.mxu0 0.0
    %4194 = vmatprep.subr.mxu0 0.0
    %4195 = vmatpush1.msra.mxu0 0.0
    %4196 = vmatprep.subr.mxu0 0.0
    %4197 = vmatpush1.msra.mxu0 0.0
    %4198 = vmatprep.subr.mxu0 0.0
    %4199 = vmatpush1.msra.mxu0 0.0
    %4200 = vmatprep.subr.mxu0 0.0
    %4201 = vmatpush1.msra.mxu0 0.0
    %4202 = vmatprep.subr.mxu0 0.0
    %4203 = vmatpush1.msra.mxu0 0.0
    %4204 = vmatprep.subr.mxu0 0.0
    %4205 = vmatpush1.msra.mxu0 0.0
    %4206 = vmatprep.subr.mxu0 0.0
    %4207 = vmatpush1.msra.mxu0 0.0
    %4208 = vmatprep.subr.mxu0 0.0
    %4209 = vmatpush1.msra.mxu0 0.0
    %4210 = vmatprep.subr.mxu0 0.0
    %4211 = vmatpush1.msra.mxu0 0.0
    %4212 = vmatprep.subr.mxu0 0.0
    %4213 = vmatpush1.msra.mxu0 0.0
    %4214 = vmatprep.subr.mxu0 0.0
    %4215 = vmatpush1.msra.mxu0 0.0
    %4216 = vmatprep.subr.mxu0 0.0
    %4217 = vmatpush1.msra.mxu0 0.0
    %4218 = vmatprep.subr.mxu0 0.0
    %4219 = vmatpush1.msra.mxu0 0.0
    %4220 = vmatprep.subr.mxu0 0.0
    %4221 = vmatpush1.msra.mxu0 0.0
    %4222 = vmatprep.subr.mxu0 0.0
    %4223 = vmatpush1.msra.mxu0 0.0
    %4224 = vmatprep.subr.mxu0 0.0
    %4225 = vmatpush1.msra.mxu0 0.0
    %4226 = vmatprep.subr.mxu0 0.0
    %4227 = vmatpush1.msra.mxu0 0.0
    %4228 = vmatprep.subr.mxu0 0.0
    %4229 = vmatpush1.msra.mxu0 0.0
    %4230 = vmatprep.subr.mxu0 0.0
    %4231 = vmatpush1.msra.mxu0 0.0
    %4232 = vmatprep.subr.mxu0 0.0
    %4233 = vmatpush1.msra.mxu0 0.0
    %4234 = vmatprep.subr.mxu0 0.0
    %4235 = vmatpush1.msra.mxu0 0.0
    %4236 = vmatprep.subr.mxu0 0.0
    %4237 = vmatpush1.msra.mxu0 0.0
    %4238 = vmatprep.subr.mxu0 0.0
    %4239 = vmatpush1.msra.mxu0 0.0
    %4240 = vmatprep.mubr.f32.mxu0 0.0
    %4241 = vmatmul.mubr.f32.gmra.mrb[0].mxu0 %v4166
    %v4242 = vpop.f32.mrb[0].mxu0
    %v4243 = vadd.f32 0.0, %v4242
    %v4244 = vpop.f32.mrb[0].mxu0
    %4245 = vmatprep.mubr.f32.mxu0 0.0
    %4246 = vmatmul.mubr.f32.gmra.mrb[0].mxu0 %v4169
    %v4247 = vpop.f32.mrb[0].mxu0
    %v4248 = vadd.f32 0.0, %v4247
    %v4249 = vpop.f32.mrb[0].mxu0
    %4250 = vmatprep.mubr.f32.mxu0 0.0
    %4251 = vmatmul.mubr.f32.gmra.mrb[0].mxu0 %v4172
    %v4252 = vpop.f32.mrb[0].mxu0
    %v4253 = vadd.f32 0.0, %v4252
    %v4254 = vpop.f32.mrb[0].mxu0
    %4255 = vdwg.mxu0
    %v4257 = vsel %vm496, %v4243, 0
    %v4260 = vsel %vm496, %v4248, 0
    %v4263 = vsel %vm496, %v4253, 0
    %4265 = vmatprep.subr.mxu0 0.0
    %4266 = vmatpush1.msra.mxu0 %v3772
    %4267 = vmatprep.subr.mxu0 0.0
    %4268 = vmatpush1.msra.mxu0 0.0
    %4269 = vmatprep.subr.mxu0 0.0
    %4270 = vmatpush1.msra.mxu0 0.0
    %4271 = vmatprep.subr.mxu0 0.0
    %4272 = vmatpush1.msra.mxu0 0.0
    %4273 = vmatprep.subr.mxu0 0.0
    %4274 = vmatpush1.msra.mxu0 0.0
    %4275 = vmatprep.subr.mxu0 0.0
    %4276 = vmatpush1.msra.mxu0 0.0
    %4277 = vmatprep.subr.mxu0 0.0
    %4278 = vmatpush1.msra.mxu0 0.0
    %4279 = vmatprep.subr.mxu0 0.0
    %4280 = vmatpush1.msra.mxu0 0.0
    %4281 = vmatprep.subr.mxu0 0.0
    %4282 = vmatpush1.msra.mxu0 0.0
    %4283 = vmatprep.subr.mxu0 0.0
    %4284 = vmatpush1.msra.mxu0 0.0
    %4285 = vmatprep.subr.mxu0 0.0
    %4286 = vmatpush1.msra.mxu0 0.0
    %4287 = vmatprep.subr.mxu0 0.0
    %4288 = vmatpush1.msra.mxu0 0.0
    %4289 = vmatprep.subr.mxu0 0.0
    %4290 = vmatpush1.msra.mxu0 0.0
    %4291 = vmatprep.subr.mxu0 0.0
    %4292 = vmatpush1.msra.mxu0 0.0
    %4293 = vmatprep.subr.mxu0 0.0
    %4294 = vmatpush1.msra.mxu0 0.0
    %4295 = vmatprep.subr.mxu0 0.0
    %4296 = vmatpush1.msra.mxu0 0.0
    %4297 = vmatprep.subr.mxu0 0.0
    %4298 = vmatpush1.msra.mxu0 0.0
    %4299 = vmatprep.subr.mxu0 0.0
    %4300 = vmatpush1.msra.mxu0 0.0
    %4301 = vmatprep.subr.mxu0 0.0
    %4302 = vmatpush1.msra.mxu0 0.0
    %4303 = vmatprep.subr.mxu0 0.0
    %4304 = vmatpush1.msra.mxu0 0.0
    %4305 = vmatprep.subr.mxu0 0.0
    %4306 = vmatpush1.msra.mxu0 0.0
    %4307 = vmatprep.subr.mxu0 0.0
    %4308 = vmatpush1.msra.mxu0 0.0
    %4309 = vmatprep.subr.mxu0 0.0
    %4310 = vmatpush1.msra.mxu0 0.0
    %4311 = vmatprep.subr.mxu0 0.0
    %4312 = vmatpush1.msra.mxu0 0.0
    %4313 = vmatprep.subr.mxu0 0.0
    %4314 = vmatpush1.msra.mxu0 0.0
    %4315 = vmatprep.subr.mxu0 0.0
    %4316 = vmatpush1.msra.mxu0 0.0
    %4317 = vmatprep.subr.mxu0 0.0
    %4318 = vmatpush1.msra.mxu0 0.0
    %4319 = vmatprep.subr.mxu0 0.0
    %4320 = vmatpush1.msra.mxu0 0.0
    %4321 = vmatprep.subr.mxu0 0.0
    %4322 = vmatpush1.msra.mxu0 0.0
    %4323 = vmatprep.subr.mxu0 0.0
    %4324 = vmatpush1.msra.mxu0 0.0
    %4325 = vmatprep.subr.mxu0 0.0
    %4326 = vmatpush1.msra.mxu0 0.0
    %4327 = vmatprep.subr.mxu0 0.0
    %4328 = vmatpush1.msra.mxu0 0.0
    %4329 = vmatprep.mubr.f32.mxu0 0.0
    %4330 = vmatmul.mubr.f32.gmra.mrb[0].mxu0 %v4257
    %v4331 = vpop.f32.mrb[0].mxu0
    %v4332 = vadd.f32 0.0, %v4331
    %v4333 = vpop.f32.mrb[0].mxu0
    %4334 = vmatprep.mubr.f32.mxu0 0.0
    %4335 = vmatmul.mubr.f32.gmra.mrb[0].mxu0 %v4260
    %v4336 = vpop.f32.mrb[0].mxu0
    %v4337 = vadd.f32 0.0, %v4336
    %v4338 = vpop.f32.mrb[0].mxu0
    %4339 = vmatprep.mubr.f32.mxu0 0.0
    %4340 = vmatmul.mubr.f32.gmra.mrb[0].mxu0 %v4263
    %v4341 = vpop.f32.mrb[0].mxu0
    %v4342 = vadd.f32 0.0, %v4341
    %v4343 = vpop.f32.mrb[0].mxu0
    %4344 = vdwg.mxu0
    %v4346 = vsel %vm496, %v4004, 0
    %v4349 = vsel %vm496, %v4009, 0
    %v4352 = vsel %vm496, %v4014, 0
    %4354 = vmatprep.subr.mxu0 0.0
    %4355 = vmatpush1.msra.mxu0 %v3771
    %4356 = vmatprep.subr.mxu0 0.0
    %4357 = vmatpush1.msra.mxu0 0.0
    %4358 = vmatprep.subr.mxu0 0.0
    %4359 = vmatpush1.msra.mxu0 0.0
    %4360 = vmatprep.subr.mxu0 0.0
    %4361 = vmatpush1.msra.mxu0 0.0
    %4362 = vmatprep.subr.mxu0 0.0
    %4363 = vmatpush1.msra.mxu0 0.0
    %4364 = vmatprep.subr.mxu0 0.0
    %4365 = vmatpush1.msra.mxu0 0.0
    %4366 = vmatprep.subr.mxu0 0.0
    %4367 = vmatpush1.msra.mxu0 0.0
    %4368 = vmatprep.subr.mxu0 0.0
    %4369 = vmatpush1.msra.mxu0 0.0
    %4370 = vmatprep.subr.mxu0 0.0
    %4371 = vmatpush1.msra.mxu0 0.0
    %4372 = vmatprep.subr.mxu0 0.0
    %4373 = vmatpush1.msra.mxu0 0.0
    %4374 = vmatprep.subr.mxu0 0.0
    %4375 = vmatpush1.msra.mxu0 0.0
    %4376 = vmatprep.subr.mxu0 0.0
    %4377 = vmatpush1.msra.mxu0 0.0
    %4378 = vmatprep.subr.mxu0 0.0
    %4379 = vmatpush1.msra.mxu0 0.0
    %4380 = vmatprep.subr.mxu0 0.0
    %4381 = vmatpush1.msra.mxu0 0.0
    %4382 = vmatprep.subr.mxu0 0.0
    %4383 = vmatpush1.msra.mxu0 0.0
    %4384 = vmatprep.subr.mxu0 0.0
    %4385 = vmatpush1.msra.mxu0 0.0
    %4386 = vmatprep.subr.mxu0 0.0
    %4387 = vmatpush1.msra.mxu0 0.0
    %4388 = vmatprep.subr.mxu0 0.0
    %4389 = vmatpush1.msra.mxu0 0.0
    %4390 = vmatprep.subr.mxu0 0.0
    %4391 = vmatpush1.msra.mxu0 0.0
    %4392 = vmatprep.subr.mxu0 0.0
    %4393 = vmatpush1.msra.mxu0 0.0
    %4394 = vmatprep.subr.mxu0 0.0
    %4395 = vmatpush1.msra.mxu0 0.0
    %4396 = vmatprep.subr.mxu0 0.0
    %4397 = vmatpush1.msra.mxu0 0.0
    %4398 = vmatprep.subr.mxu0 0.0
    %4399 = vmatpush1.msra.mxu0 0.0
    %4400 = vmatprep.subr.mxu0 0.0
    %4401 = vmatpush1.msra.mxu0 0.0
    %4402 = vmatprep.subr.mxu0 0.0
    %4403 = vmatpush1.msra.mxu0 0.0
    %4404 = vmatprep.subr.mxu0 0.0
    %4405 = vmatpush1.msra.mxu0 0.0
    %4406 = vmatprep.subr.mxu0 0.0
    %4407 = vmatpush1.msra.mxu0 0.0
    %4408 = vmatprep.subr.mxu0 0.0
    %4409 = vmatpush1.msra.mxu0 0.0
    %4410 = vmatprep.subr.mxu0 0.0
    %4411 = vmatpush1.msra.mxu0 0.0
    %4412 = vmatprep.subr.mxu0 0.0
    %4413 = vmatpush1.msra.mxu0 0.0
    %4414 = vmatprep.subr.mxu0 0.0
    %4415 = vmatpush1.msra.mxu0 0.0
    %4416 = vmatprep.subr.mxu0 0.0
    %4417 = vmatpush1.msra.mxu0 0.0
    %4418 = vmatprep.mubr.f32.mxu0 0.0
    %4419 = vmatmul.mubr.f32.gmra.mrb[0].mxu0 %v4346
    %v4420 = vpop.f32.mrb[0].mxu0
    %v4421 = vadd.f32 %v4332, %v4420
    %v4422 = vpop.f32.mrb[0].mxu0
    %4423 = vmatprep.mubr.f32.mxu0 0.0
    %4424 = vmatmul.mubr.f32.gmra.mrb[0].mxu0 %v4349
    %v4425 = vpop.f32.mrb[0].mxu0
    %v4426 = vadd.f32 %v4337, %v4425
    %v4427 = vpop.f32.mrb[0].mxu0
    %4428 = vmatprep.mubr.f32.mxu0 0.0
    %4429 = vmatmul.mubr.f32.gmra.mrb[0].mxu0 %v4352
    %v4430 = vpop.f32.mrb[0].mxu0
    %v4431 = vadd.f32 %v4342, %v4430
    %v4432 = vpop.f32.mrb[0].mxu0
    %4433 = vdwg.mxu0
    %4434 = vrot.lane.b32.xlu0 %v3739, 112
    %v4435 = vpop.permute.xlu0 %4434
    %4436 = vrot.lane.b32.xlu0 %v3740, 112
    %v4437 = vpop.permute.xlu0 %4436
    %4438 = vrot.lane.b32.xlu0 %v3741, 112
    %v4439 = vpop.permute.xlu0 %4438
    %4440 = vrot.lane.b32.xlu0 %v3752, 80
    %v4441 = vpop.permute.xlu0 %4440
    %4442 = vrot.lane.b32.xlu0 %v3753, 80
    %v4443 = vpop.permute.xlu0 %4442
    %4444 = vrot.lane.b32.xlu0 %v3754, 80
    %v4445 = vpop.permute.xlu0 %4444
    %v4446 = vsel %vm496, %v4435, 0
    %v4448 = vsel %vm496, %v4437, 0
    %v4450 = vsel %vm496, %v4439, 0
    %v4452 = vsel %vm496, %v4441, 0
    %v4454 = vsel %vm496, %v4443, 0
    %v4456 = vsel %vm496, %v4445, 0
    %4458 = vmatprep.subr.mxu0 0.0
    %4459 = vmatpush1.xpose.msra.mxu0 %v4452
    %4460 = vmatprep.subr.mxu0 0.0
    %4461 = vmatpush1.xpose.msra.mxu0 %v4454
    %4462 = vmatprep.subr.mxu0 0.0
    %4463 = vmatpush1.xpose.msra.mxu0 %v4456
    %4464 = vmatprep.subr.mxu0 0.0
    %4465 = vmatpush1.xpose.msra.mxu0 0.0
    %4466 = vmatprep.subr.mxu0 0.0
    %4467 = vmatpush1.xpose.msra.mxu0 0.0
    %4468 = vmatprep.subr.mxu0 0.0
    %4469 = vmatpush1.xpose.msra.mxu0 0.0
    %4470 = vmatprep.subr.mxu0 0.0
    %4471 = vmatpush1.xpose.msra.mxu0 0.0
    %4472 = vmatprep.subr.mxu0 0.0
    %4473 = vmatpush1.xpose.msra.mxu0 0.0
    %4474 = vmatprep.subr.mxu0 0.0
    %4475 = vmatpush1.xpose.msra.mxu0 0.0
    %4476 = vmatprep.subr.mxu0 0.0
    %4477 = vmatpush1.xpose.msra.mxu0 0.0
    %4478 = vmatprep.subr.mxu0 0.0
    %4479 = vmatpush1.xpose.msra.mxu0 0.0
    %4480 = vmatprep.subr.mxu0 0.0
    %4481 = vmatpush1.xpose.msra.mxu0 0.0
    %4482 = vmatprep.subr.mxu0 0.0
    %4483 = vmatpush1.xpose.msra.mxu0 0.0
    %4484 = vmatprep.subr.mxu0 0.0
    %4485 = vmatpush1.xpose.msra.mxu0 0.0
    %4486 = vmatprep.subr.mxu0 0.0
    %4487 = vmatpush1.xpose.msra.mxu0 0.0
    %4488 = vmatprep.subr.mxu0 0.0
    %4489 = vmatpush1.xpose.msra.mxu0 0.0
    %4490 = vmatprep.subr.mxu0 0.0
    %4491 = vmatpush1.xpose.msra.mxu0 0.0
    %4492 = vmatprep.subr.mxu0 0.0
    %4493 = vmatpush1.xpose.msra.mxu0 0.0
    %4494 = vmatprep.subr.mxu0 0.0
    %4495 = vmatpush1.xpose.msra.mxu0 0.0
    %4496 = vmatprep.subr.mxu0 0.0
    %4497 = vmatpush1.xpose.msra.mxu0 0.0
    %4498 = vmatprep.subr.mxu0 0.0
    %4499 = vmatpush1.xpose.msra.mxu0 0.0
    %4500 = vmatprep.subr.mxu0 0.0
    %4501 = vmatpush1.xpose.msra.mxu0 0.0
    %4502 = vmatprep.subr.mxu0 0.0
    %4503 = vmatpush1.xpose.msra.mxu0 0.0
    %4504 = vmatprep.subr.mxu0 0.0
    %4505 = vmatpush1.xpose.msra.mxu0 0.0
    %4506 = vmatprep.subr.mxu0 0.0
    %4507 = vmatpush1.xpose.msra.mxu0 0.0
    %4508 = vmatprep.subr.mxu0 0.0
    %4509 = vmatpush1.xpose.msra.mxu0 0.0
    %4510 = vmatprep.subr.mxu0 0.0
    %4511 = vmatpush1.xpose.msra.mxu0 0.0
    %4512 = vmatprep.subr.mxu0 0.0
    %4513 = vmatpush1.xpose.msra.mxu0 0.0
    %4514 = vmatprep.subr.mxu0 0.0
    %4515 = vmatpush1.xpose.msra.mxu0 0.0
    %4516 = vmatprep.subr.mxu0 0.0
    %4517 = vmatpush1.xpose.msra.mxu0 0.0
    %4518 = vmatprep.subr.mxu0 0.0
    %4519 = vmatpush1.xpose.msra.mxu0 0.0
    %4520 = vmatprep.subr.mxu0 0.0
    %4521 = vmatpush1.xpose.msra.mxu0 0.0
    %4522 = vmatprep.mubr.f32.mxu0 0.0
    %4523 = vmatmul.mubr.f32.gmra.mrb[0].mxu0 %v4446
    %v4524 = vpop.f32.mrb[0].mxu0
    %v4525 = vadd.f32 0.0, %v4524
    %v4526 = vpop.f32.mrb[0].mxu0
    %4527 = vmatprep.mubr.f32.mxu0 0.0
    %4528 = vmatmul.mubr.f32.gmra.mrb[0].mxu0 %v4448
    %v4529 = vpop.f32.mrb[0].mxu0
    %v4530 = vadd.f32 0.0, %v4529
    %v4531 = vpop.f32.mrb[0].mxu0
    %4532 = vmatprep.mubr.f32.mxu0 0.0
    %4533 = vmatmul.mubr.f32.gmra.mrb[0].mxu0 %v4450
    %v4534 = vpop.f32.mrb[0].mxu0
    %v4535 = vadd.f32 0.0, %v4534
    %v4536 = vpop.f32.mrb[0].mxu0
    %4537 = vdwg.mxu0
    %v4538 = vmul.f32 %v4525, 0.35355338
    %v4539 = vmul.f32 %v4530, 0.35355338
    %v4540 = vmul.f32 %v4535, 0.35355338
    %v4541 = vsel %vm595, %v4538, -inf
    %4542 = vmax.xlane.f32.xlu0 %v4541
    %v4543 = vpop.xlane.xlu0 %4542
    %v4544 = vsel %vm595, %v4539, -inf
    %4545 = vmax.xlane.f32.xlu0 %v4544
    %v4546 = vpop.xlane.xlu0 %4545
    %v4547 = vsel %vm602, %v4540, -inf
    %4548 = vmax.xlane.f32.xlu0 %v4547
    %v4549 = vpop.xlane.xlu0 %4548
    %v4550 = vsub.f32 %v4538, %v4543
    %v4551 = vsub.f32 %v4539, %v4546
    %v4552 = vsub.f32 %v4540, %v4549
    %v4553 = vmul.f32 %v4550, 1.442695
    %v4554 = vpow.pop %v4553
    %v4555 = vmul.f32 %v4551, 1.442695
    %v4556 = vpow.pop %v4555
    %v4557 = vmul.f32 %v4552, 1.442695
    %v4558 = vpow.pop %v4557
    %v4559 = vsel %vm595, %v4554, 0.0
    %4560 = vadd.xlane.f32.xlu0 %v4559
    %v4561 = vpop.xlane.xlu0 %4560
    %v4562 = vsel %vm595, %v4556, 0.0
    %4563 = vadd.xlane.f32.xlu0 %v4562
    %v4564 = vpop.xlane.xlu0 %4563
    %v4565 = vsel %vm602, %v4558, 0.0
    %4566 = vadd.xlane.f32.xlu0 %v4565
    %v4567 = vpop.xlane.xlu0 %4566
    %v4568 = vrcp.pop %v4561
    %v4569 = vmul.f32 %v4554, %v4568
    %v4570 = vrcp.pop %v4564
    %v4571 = vmul.f32 %v4556, %v4570
    %v4572 = vrcp.pop %v4567
    %v4573 = vmul.f32 %v4558, %v4572
    %4574 = vrot.lane.b32.xlu0 %v3765, 48
    %v4575 = vpop.permute.xlu0 %4574
    %4576 = vrot.lane.b32.xlu0 %v3766, 48
    %v4577 = vpop.permute.xlu0 %4576
    %4578 = vrot.lane.b32.xlu0 %v3767, 48
    %v4579 = vpop.permute.xlu0 %4578
    %v4583 = vsel %vm595, %v4569, 0
    %v4586 = vsel %vm595, %v4571, 0
    %v4589 = vsel %vm595, %v4573, 0
    %v4591 = vsel %vm650, %v4579, 0
    %4593 = vmatprep.subr.mxu0 0.0
    %4594 = vmatpush1.msra.mxu0 %v4575
    %4595 = vmatprep.subr.mxu0 0.0
    %4596 = vmatpush1.msra.mxu0 %v4577
    %4597 = vmatprep.subr.mxu0 0.0
    %4598 = vmatpush1.msra.mxu0 %v4591
    %4599 = vmatprep.subr.mxu0 0.0
    %4600 = vmatpush1.msra.mxu0 0.0
    %4601 = vmatprep.subr.mxu0 0.0
    %4602 = vmatpush1.msra.mxu0 0.0
    %4603 = vmatprep.subr.mxu0 0.0
    %4604 = vmatpush1.msra.mxu0 0.0
    %4605 = vmatprep.subr.mxu0 0.0
    %4606 = vmatpush1.msra.mxu0 0.0
    %4607 = vmatprep.subr.mxu0 0.0
    %4608 = vmatpush1.msra.mxu0 0.0
    %4609 = vmatprep.subr.mxu0 0.0
    %4610 = vmatpush1.msra.mxu0 0.0
    %4611 = vmatprep.subr.mxu0 0.0
    %4612 = vmatpush1.msra.mxu0 0.0
    %4613 = vmatprep.subr.mxu0 0.0
    %4614 = vmatpush1.msra.mxu0 0.0
    %4615 = vmatprep.subr.mxu0 0.0
    %4616 = vmatpush1.msra.mxu0 0.0
    %4617 = vmatprep.subr.mxu0 0.0
    %4618 = vmatpush1.msra.mxu0 0.0
    %4619 = vmatprep.subr.mxu0 0.0
    %4620 = vmatpush1.msra.mxu0 0.0
    %4621 = vmatprep.subr.mxu0 0.0
    %4622 = vmatpush1.msra.mxu0 0.0
    %4623 = vmatprep.subr.mxu0 0.0
    %4624 = vmatpush1.msra.mxu0 0.0
    %4625 = vmatprep.subr.mxu0 0.0
    %4626 = vmatpush1.msra.mxu0 0.0
    %4627 = vmatprep.subr.mxu0 0.0
    %4628 = vmatpush1.msra.mxu0 0.0
    %4629 = vmatprep.subr.mxu0 0.0
    %4630 = vmatpush1.msra.mxu0 0.0
    %4631 = vmatprep.subr.mxu0 0.0
    %4632 = vmatpush1.msra.mxu0 0.0
    %4633 = vmatprep.subr.mxu0 0.0
    %4634 = vmatpush1.msra.mxu0 0.0
    %4635 = vmatprep.subr.mxu0 0.0
    %4636 = vmatpush1.msra.mxu0 0.0
    %4637 = vmatprep.subr.mxu0 0.0
    %4638 = vmatpush1.msra.mxu0 0.0
    %4639 = vmatprep.subr.mxu0 0.0
    %4640 = vmatpush1.msra.mxu0 0.0
    %4641 = vmatprep.subr.mxu0 0.0
    %4642 = vmatpush1.msra.mxu0 0.0
    %4643 = vmatprep.subr.mxu0 0.0
    %4644 = vmatpush1.msra.mxu0 0.0
    %4645 = vmatprep.subr.mxu0 0.0
    %4646 = vmatpush1.msra.mxu0 0.0
    %4647 = vmatprep.subr.mxu0 0.0
    %4648 = vmatpush1.msra.mxu0 0.0
    %4649 = vmatprep.subr.mxu0 0.0
    %4650 = vmatpush1.msra.mxu0 0.0
    %4651 = vmatprep.subr.mxu0 0.0
    %4652 = vmatpush1.msra.mxu0 0.0
    %4653 = vmatprep.subr.mxu0 0.0
    %4654 = vmatpush1.msra.mxu0 0.0
    %4655 = vmatprep.subr.mxu0 0.0
    %4656 = vmatpush1.msra.mxu0 0.0
    %4657 = vmatprep.mubr.f32.mxu0 0.0
    %4658 = vmatmul.mubr.f32.gmra.mrb[0].mxu0 %v4583
    %v4659 = vpop.f32.mrb[0].mxu0
    %v4660 = vadd.f32 0.0, %v4659
    %v4661 = vpop.f32.mrb[0].mxu0
    %4662 = vmatprep.mubr.f32.mxu0 0.0
    %4663 = vmatmul.mubr.f32.gmra.mrb[0].mxu0 %v4586
    %v4664 = vpop.f32.mrb[0].mxu0
    %v4665 = vadd.f32 0.0, %v4664
    %v4666 = vpop.f32.mrb[0].mxu0
    %4667 = vmatprep.mubr.f32.mxu0 0.0
    %4668 = vmatmul.mubr.f32.gmra.mrb[0].mxu0 %v4589
    %v4669 = vpop.f32.mrb[0].mxu0
    %v4670 = vadd.f32 0.0, %v4669
    %v4671 = vpop.f32.mrb[0].mxu0
    %4672 = vdwg.mxu0
    %v4674 = vsel %vm496, %v4660, 0
    %v4677 = vsel %vm496, %v4665, 0
    %v4680 = vsel %vm496, %v4670, 0
    %4682 = vmatprep.subr.mxu0 0.0
    %4683 = vmatpush1.msra.mxu0 %v3773
    %4684 = vmatprep.subr.mxu0 0.0
    %4685 = vmatpush1.msra.mxu0 0.0
    %4686 = vmatprep.subr.mxu0 0.0
    %4687 = vmatpush1.msra.mxu0 0.0
    %4688 = vmatprep.subr.mxu0 0.0
    %4689 = vmatpush1.msra.mxu0 0.0
    %4690 = vmatprep.subr.mxu0 0.0
    %4691 = vmatpush1.msra.mxu0 0.0
    %4692 = vmatprep.subr.mxu0 0.0
    %4693 = vmatpush1.msra.mxu0 0.0
    %4694 = vmatprep.subr.mxu0 0.0
    %4695 = vmatpush1.msra.mxu0 0.0
    %4696 = vmatprep.subr.mxu0 0.0
    %4697 = vmatpush1.msra.mxu0 0.0
    %4698 = vmatprep.subr.mxu0 0.0
    %4699 = vmatpush1.msra.mxu0 0.0
    %4700 = vmatprep.subr.mxu0 0.0
    %4701 = vmatpush1.msra.mxu0 0.0
    %4702 = vmatprep.subr.mxu0 0.0
    %4703 = vmatpush1.msra.mxu0 0.0
    %4704 = vmatprep.subr.mxu0 0.0
    %4705 = vmatpush1.msra.mxu0 0.0
    %4706 = vmatprep.subr.mxu0 0.0
    %4707 = vmatpush1.msra.mxu0 0.0
    %4708 = vmatprep.subr.mxu0 0.0
    %4709 = vmatpush1.msra.mxu0 0.0
    %4710 = vmatprep.subr.mxu0 0.0
    %4711 = vmatpush1.msra.mxu0 0.0
    %4712 = vmatprep.subr.mxu0 0.0
    %4713 = vmatpush1.msra.mxu0 0.0
    %4714 = vmatprep.subr.mxu0 0.0
    %4715 = vmatpush1.msra.mxu0 0.0
    %4716 = vmatprep.subr.mxu0 0.0
    %4717 = vmatpush1.msra.mxu0 0.0
    %4718 = vmatprep.subr.mxu0 0.0
    %4719 = vmatpush1.msra.mxu0 0.0
    %4720 = vmatprep.subr.mxu0 0.0
    %4721 = vmatpush1.msra.mxu0 0.0
    %4722 = vmatprep.subr.mxu0 0.0
    %4723 = vmatpush1.msra.mxu0 0.0
    %4724 = vmatprep.subr.mxu0 0.0
    %4725 = vmatpush1.msra.mxu0 0.0
    %4726 = vmatprep.subr.mxu0 0.0
    %4727 = vmatpush1.msra.mxu0 0.0
    %4728 = vmatprep.subr.mxu0 0.0
    %4729 = vmatpush1.msra.mxu0 0.0
    %4730 = vmatprep.subr.mxu0 0.0
    %4731 = vmatpush1.msra.mxu0 0.0
    %4732 = vmatprep.subr.mxu0 0.0
    %4733 = vmatpush1.msra.mxu0 0.0
    %4734 = vmatprep.subr.mxu0 0.0
    %4735 = vmatpush1.msra.mxu0 0.0
    %4736 = vmatprep.subr.mxu0 0.0
    %4737 = vmatpush1.msra.mxu0 0.0
    %4738 = vmatprep.subr.mxu0 0.0
    %4739 = vmatpush1.msra.mxu0 0.0
    %4740 = vmatprep.subr.mxu0 0.0
    %4741 = vmatpush1.msra.mxu0 0.0
    %4742 = vmatprep.subr.mxu0 0.0
    %4743 = vmatpush1.msra.mxu0 0.0
    %4744 = vmatprep.subr.mxu0 0.0
    %4745 = vmatpush1.msra.mxu0 0.0
    %4746 = vmatprep.mubr.f32.mxu0 0.0
    %4747 = vmatmul.mubr.f32.gmra.mrb[0].mxu0 %v4674
    %v4748 = vpop.f32.mrb[0].mxu0
    %v4749 = vadd.f32 0.0, %v4748
    %v4750 = vpop.f32.mrb[0].mxu0
    %4751 = vmatprep.mubr.f32.mxu0 0.0
    %4752 = vmatmul.mubr.f32.gmra.mrb[0].mxu0 %v4677
    %v4753 = vpop.f32.mrb[0].mxu0
    %v4754 = vadd.f32 0.0, %v4753
    %v4755 = vpop.f32.mrb[0].mxu0
    %4756 = vmatprep.mubr.f32.mxu0 0.0
    %4757 = vmatmul.mubr.f32.gmra.mrb[0].mxu0 %v4680
    %v4758 = vpop.f32.mrb[0].mxu0
    %v4759 = vadd.f32 0.0, %v4758
    %v4760 = vpop.f32.mrb[0].mxu0
    %4761 = vdwg.mxu0
    %v4762 = vadd.f32 %v4421, %v4749
    %v4763 = vadd.f32 %v4426, %v4754
    %v4764 = vadd.f32 %v4431, %v4759
    %4765 = vrot.lane.b32.xlu0 %v3739, 104
    %v4766 = vpop.permute.xlu0 %4765
    %4767 = vrot.lane.b32.xlu0 %v3740, 104
    %v4768 = vpop.permute.xlu0 %4767
    %4769 = vrot.lane.b32.xlu0 %v3741, 104
    %v4770 = vpop.permute.xlu0 %4769
    %4771 = vrot.lane.b32.xlu0 %v3752, 72
    %v4772 = vpop.permute.xlu0 %4771
    %4773 = vrot.lane.b32.xlu0 %v3753, 72
    %v4774 = vpop.permute.xlu0 %4773
    %4775 = vrot.lane.b32.xlu0 %v3754, 72
    %v4776 = vpop.permute.xlu0 %4775
    %v4777 = vsel %vm496, %v4766, 0
    %v4779 = vsel %vm496, %v4768, 0
    %v4781 = vsel %vm496, %v4770, 0
    %v4783 = vsel %vm496, %v4772, 0
    %v4785 = vsel %vm496, %v4774, 0
    %v4787 = vsel %vm496, %v4776, 0
    %4789 = vmatprep.subr.mxu0 0.0
    %4790 = vmatpush1.xpose.msra.mxu0 %v4783
    %4791 = vmatprep.subr.mxu0 0.0
    %4792 = vmatpush1.xpose.msra.mxu0 %v4785
    %4793 = vmatprep.subr.mxu0 0.0
    %4794 = vmatpush1.xpose.msra.mxu0 %v4787
    %4795 = vmatprep.subr.mxu0 0.0
    %4796 = vmatpush1.xpose.msra.mxu0 0.0
    %4797 = vmatprep.subr.mxu0 0.0
    %4798 = vmatpush1.xpose.msra.mxu0 0.0
    %4799 = vmatprep.subr.mxu0 0.0
    %4800 = vmatpush1.xpose.msra.mxu0 0.0
    %4801 = vmatprep.subr.mxu0 0.0
    %4802 = vmatpush1.xpose.msra.mxu0 0.0
    %4803 = vmatprep.subr.mxu0 0.0
    %4804 = vmatpush1.xpose.msra.mxu0 0.0
    %4805 = vmatprep.subr.mxu0 0.0
    %4806 = vmatpush1.xpose.msra.mxu0 0.0
    %4807 = vmatprep.subr.mxu0 0.0
    %4808 = vmatpush1.xpose.msra.mxu0 0.0
    %4809 = vmatprep.subr.mxu0 0.0
    %4810 = vmatpush1.xpose.msra.mxu0 0.0
    %4811 = vmatprep.subr.mxu0 0.0
    %4812 = vmatpush1.xpose.msra.mxu0 0.0
    %4813 = vmatprep.subr.mxu0 0.0
    %4814 = vmatpush1.xpose.msra.mxu0 0.0
    %4815 = vmatprep.subr.mxu0 0.0
    %4816 = vmatpush1.xpose.msra.mxu0 0.0
    %4817 = vmatprep.subr.mxu0 0.0
    %4818 = vmatpush1.xpose.msra.mxu0 0.0
    %4819 = vmatprep.subr.mxu0 0.0
    %4820 = vmatpush1.xpose.msra.mxu0 0.0
    %4821 = vmatprep.subr.mxu0 0.0
    %4822 = vmatpush1.xpose.msra.mxu0 0.0
    %4823 = vmatprep.subr.mxu0 0.0
    %4824 = vmatpush1.xpose.msra.mxu0 0.0
    %4825 = vmatprep.subr.mxu0 0.0
    %4826 = vmatpush1.xpose.msra.mxu0 0.0
    %4827 = vmatprep.subr.mxu0 0.0
    %4828 = vmatpush1.xpose.msra.mxu0 0.0
    %4829 = vmatprep.subr.mxu0 0.0
    %4830 = vmatpush1.xpose.msra.mxu0 0.0
    %4831 = vmatprep.subr.mxu0 0.0
    %4832 = vmatpush1.xpose.msra.mxu0 0.0
    %4833 = vmatprep.subr.mxu0 0.0
    %4834 = vmatpush1.xpose.msra.mxu0 0.0
    %4835 = vmatprep.subr.mxu0 0.0
    %4836 = vmatpush1.xpose.msra.mxu0 0.0
    %4837 = vmatprep.subr.mxu0 0.0
    %4838 = vmatpush1.xpose.msra.mxu0 0.0
    %4839 = vmatprep.subr.mxu0 0.0
    %4840 = vmatpush1.xpose.msra.mxu0 0.0
    %4841 = vmatprep.subr.mxu0 0.0
    %4842 = vmatpush1.xpose.msra.mxu0 0.0
    %4843 = vmatprep.subr.mxu0 0.0
    %4844 = vmatpush1.xpose.msra.mxu0 0.0
    %4845 = vmatprep.subr.mxu0 0.0
    %4846 = vmatpush1.xpose.msra.mxu0 0.0
    %4847 = vmatprep.subr.mxu0 0.0
    %4848 = vmatpush1.xpose.msra.mxu0 0.0
    %4849 = vmatprep.subr.mxu0 0.0
    %4850 = vmatpush1.xpose.msra.mxu0 0.0
    %4851 = vmatprep.subr.mxu0 0.0
    %4852 = vmatpush1.xpose.msra.mxu0 0.0
    %4853 = vmatprep.mubr.f32.mxu0 0.0
    %4854 = vmatmul.mubr.f32.gmra.mrb[0].mxu0 %v4777
    %v4855 = vpop.f32.mrb[0].mxu0
    %v4856 = vadd.f32 0.0, %v4855
    %v4857 = vpop.f32.mrb[0].mxu0
    %4858 = vmatprep.mubr.f32.mxu0 0.0
    %4859 = vmatmul.mubr.f32.gmra.mrb[0].mxu0 %v4779
    %v4860 = vpop.f32.mrb[0].mxu0
    %v4861 = vadd.f32 0.0, %v4860
    %v4862 = vpop.f32.mrb[0].mxu0
    %4863 = vmatprep.mubr.f32.mxu0 0.0
    %4864 = vmatmul.mubr.f32.gmra.mrb[0].mxu0 %v4781
    %v4865 = vpop.f32.mrb[0].mxu0
    %v4866 = vadd.f32 0.0, %v4865
    %v4867 = vpop.f32.mrb[0].mxu0
    %4868 = vdwg.mxu0
    %v4869 = vmul.f32 %v4856, 0.35355338
    %v4870 = vmul.f32 %v4861, 0.35355338
    %v4871 = vmul.f32 %v4866, 0.35355338
    %v4872 = vsel %vm595, %v4869, -inf
    %4873 = vmax.xlane.f32.xlu0 %v4872
    %v4874 = vpop.xlane.xlu0 %4873
    %v4875 = vsel %vm595, %v4870, -inf
    %4876 = vmax.xlane.f32.xlu0 %v4875
    %v4877 = vpop.xlane.xlu0 %4876
    %v4878 = vsel %vm602, %v4871, -inf
    %4879 = vmax.xlane.f32.xlu0 %v4878
    %v4880 = vpop.xlane.xlu0 %4879
    %v4881 = vsub.f32 %v4869, %v4874
    %v4882 = vsub.f32 %v4870, %v4877
    %v4883 = vsub.f32 %v4871, %v4880
    %v4884 = vmul.f32 %v4881, 1.442695
    %v4885 = vpow.pop %v4884
    %v4886 = vmul.f32 %v4882, 1.442695
    %v4887 = vpow.pop %v4886
    %v4888 = vmul.f32 %v4883, 1.442695
    %v4889 = vpow.pop %v4888
    %v4890 = vsel %vm595, %v4885, 0.0
    %4891 = vadd.xlane.f32.xlu0 %v4890
    %v4892 = vpop.xlane.xlu0 %4891
    %v4893 = vsel %vm595, %v4887, 0.0
    %4894 = vadd.xlane.f32.xlu0 %v4893
    %v4895 = vpop.xlane.xlu0 %4894
    %v4896 = vsel %vm602, %v4889, 0.0
    %4897 = vadd.xlane.f32.xlu0 %v4896
    %v4898 = vpop.xlane.xlu0 %4897
    %v4899 = vrcp.pop %v4892
    %v4900 = vmul.f32 %v4885, %v4899
    %v4901 = vrcp.pop %v4895
    %v4902 = vmul.f32 %v4887, %v4901
    %v4903 = vrcp.pop %v4898
    %v4904 = vmul.f32 %v4889, %v4903
    %4905 = vrot.lane.b32.xlu0 %v3765, 40
    %v4906 = vpop.permute.xlu0 %4905
    %4907 = vrot.lane.b32.xlu0 %v3766, 40
    %v4908 = vpop.permute.xlu0 %4907
    %4909 = vrot.lane.b32.xlu0 %v3767, 40
    %v4910 = vpop.permute.xlu0 %4909
    %v4914 = vsel %vm595, %v4900, 0
    %v4917 = vsel %vm595, %v4902, 0
    %v4920 = vsel %vm595, %v4904, 0
    %v4922 = vsel %vm650, %v4910, 0
    %4924 = vmatprep.subr.mxu0 0.0
    %4925 = vmatpush1.msra.mxu0 %v4906
    %4926 = vmatprep.subr.mxu0 0.0
    %4927 = vmatpush1.msra.mxu0 %v4908
    %4928 = vmatprep.subr.mxu0 0.0
    %4929 = vmatpush1.msra.mxu0 %v4922
    %4930 = vmatprep.subr.mxu0 0.0
    %4931 = vmatpush1.msra.mxu0 0.0
    %4932 = vmatprep.subr.mxu0 0.0
    %4933 = vmatpush1.msra.mxu0 0.0
    %4934 = vmatprep.subr.mxu0 0.0
    %4935 = vmatpush1.msra.mxu0 0.0
    %4936 = vmatprep.subr.mxu0 0.0
    %4937 = vmatpush1.msra.mxu0 0.0
    %4938 = vmatprep.subr.mxu0 0.0
    %4939 = vmatpush1.msra.mxu0 0.0
    %4940 = vmatprep.subr.mxu0 0.0
    %4941 = vmatpush1.msra.mxu0 0.0
    %4942 = vmatprep.subr.mxu0 0.0
    %4943 = vmatpush1.msra.mxu0 0.0
    %4944 = vmatprep.subr.mxu0 0.0
    %4945 = vmatpush1.msra.mxu0 0.0
    %4946 = vmatprep.subr.mxu0 0.0
    %4947 = vmatpush1.msra.mxu0 0.0
    %4948 = vmatprep.subr.mxu0 0.0
    %4949 = vmatpush1.msra.mxu0 0.0
    %4950 = vmatprep.subr.mxu0 0.0
    %4951 = vmatpush1.msra.mxu0 0.0
    %4952 = vmatprep.subr.mxu0 0.0
    %4953 = vmatpush1.msra.mxu0 0.0
    %4954 = vmatprep.subr.mxu0 0.0
    %4955 = vmatpush1.msra.mxu0 0.0
    %4956 = vmatprep.subr.mxu0 0.0
    %4957 = vmatpush1.msra.mxu0 0.0
    %4958 = vmatprep.subr.mxu0 0.0
    %4959 = vmatpush1.msra.mxu0 0.0
    %4960 = vmatprep.subr.mxu0 0.0
    %4961 = vmatpush1.msra.mxu0 0.0
    %4962 = vmatprep.subr.mxu0 0.0
    %4963 = vmatpush1.msra.mxu0 0.0
    %4964 = vmatprep.subr.mxu0 0.0
    %4965 = vmatpush1.msra.mxu0 0.0
    %4966 = vmatprep.subr.mxu0 0.0
    %4967 = vmatpush1.msra.mxu0 0.0
    %4968 = vmatprep.subr.mxu0 0.0
    %4969 = vmatpush1.msra.mxu0 0.0
    %4970 = vmatprep.subr.mxu0 0.0
    %4971 = vmatpush1.msra.mxu0 0.0
    %4972 = vmatprep.subr.mxu0 0.0
    %4973 = vmatpush1.msra.mxu0 0.0
    %4974 = vmatprep.subr.mxu0 0.0
    %4975 = vmatpush1.msra.mxu0 0.0
    %4976 = vmatprep.subr.mxu0 0.0
    %4977 = vmatpush1.msra.mxu0 0.0
    %4978 = vmatprep.subr.mxu0 0.0
    %4979 = vmatpush1.msra.mxu0 0.0
    %4980 = vmatprep.subr.mxu0 0.0
    %4981 = vmatpush1.msra.mxu0 0.0
    %4982 = vmatprep.subr.mxu0 0.0
    %4983 = vmatpush1.msra.mxu0 0.0
    %4984 = vmatprep.subr.mxu0 0.0
    %4985 = vmatpush1.msra.mxu0 0.0
    %4986 = vmatprep.subr.mxu0 0.0
    %4987 = vmatpush1.msra.mxu0 0.0
    %4988 = vmatprep.mubr.f32.mxu0 0.0
    %4989 = vmatmul.mubr.f32.gmra.mrb[0].mxu0 %v4914
    %v4990 = vpop.f32.mrb[0].mxu0
    %v4991 = vadd.f32 0.0, %v4990
    %v4992 = vpop.f32.mrb[0].mxu0
    %4993 = vmatprep.mubr.f32.mxu0 0.0
    %4994 = vmatmul.mubr.f32.gmra.mrb[0].mxu0 %v4917
    %v4995 = vpop.f32.mrb[0].mxu0
    %v4996 = vadd.f32 0.0, %v4995
    %v4997 = vpop.f32.mrb[0].mxu0
    %4998 = vmatprep.mubr.f32.mxu0 0.0
    %4999 = vmatmul.mubr.f32.gmra.mrb[0].mxu0 %v4920
    %v5000 = vpop.f32.mrb[0].mxu0
    %v5001 = vadd.f32 0.0, %v5000
    %v5002 = vpop.f32.mrb[0].mxu0
    %5003 = vdwg.mxu0
    %v5005 = vsel %vm496, %v4991, 0
    %v5008 = vsel %vm496, %v4996, 0
    %v5011 = vsel %vm496, %v5001, 0
    %5013 = vmatprep.subr.mxu0 0.0
    %5014 = vmatpush1.msra.mxu0 %v3774
    %5015 = vmatprep.subr.mxu0 0.0
    %5016 = vmatpush1.msra.mxu0 0.0
    %5017 = vmatprep.subr.mxu0 0.0
    %5018 = vmatpush1.msra.mxu0 0.0
    %5019 = vmatprep.subr.mxu0 0.0
    %5020 = vmatpush1.msra.mxu0 0.0
    %5021 = vmatprep.subr.mxu0 0.0
    %5022 = vmatpush1.msra.mxu0 0.0
    %5023 = vmatprep.subr.mxu0 0.0
    %5024 = vmatpush1.msra.mxu0 0.0
    %5025 = vmatprep.subr.mxu0 0.0
    %5026 = vmatpush1.msra.mxu0 0.0
    %5027 = vmatprep.subr.mxu0 0.0
    %5028 = vmatpush1.msra.mxu0 0.0
    %5029 = vmatprep.subr.mxu0 0.0
    %5030 = vmatpush1.msra.mxu0 0.0
    %5031 = vmatprep.subr.mxu0 0.0
    %5032 = vmatpush1.msra.mxu0 0.0
    %5033 = vmatprep.subr.mxu0 0.0
    %5034 = vmatpush1.msra.mxu0 0.0
    %5035 = vmatprep.subr.mxu0 0.0
    %5036 = vmatpush1.msra.mxu0 0.0
    %5037 = vmatprep.subr.mxu0 0.0
    %5038 = vmatpush1.msra.mxu0 0.0
    %5039 = vmatprep.subr.mxu0 0.0
    %5040 = vmatpush1.msra.mxu0 0.0
    %5041 = vmatprep.subr.mxu0 0.0
    %5042 = vmatpush1.msra.mxu0 0.0
    %5043 = vmatprep.subr.mxu0 0.0
    %5044 = vmatpush1.msra.mxu0 0.0
    %5045 = vmatprep.subr.mxu0 0.0
    %5046 = vmatpush1.msra.mxu0 0.0
    %5047 = vmatprep.subr.mxu0 0.0
    %5048 = vmatpush1.msra.mxu0 0.0
    %5049 = vmatprep.subr.mxu0 0.0
    %5050 = vmatpush1.msra.mxu0 0.0
    %5051 = vmatprep.subr.mxu0 0.0
    %5052 = vmatpush1.msra.mxu0 0.0
    %5053 = vmatprep.subr.mxu0 0.0
    %5054 = vmatpush1.msra.mxu0 0.0
    %5055 = vmatprep.subr.mxu0 0.0
    %5056 = vmatpush1.msra.mxu0 0.0
    %5057 = vmatprep.subr.mxu0 0.0
    %5058 = vmatpush1.msra.mxu0 0.0
    %5059 = vmatprep.subr.mxu0 0.0
    %5060 = vmatpush1.msra.mxu0 0.0
    %5061 = vmatprep.subr.mxu0 0.0
    %5062 = vmatpush1.msra.mxu0 0.0
    %5063 = vmatprep.subr.mxu0 0.0
    %5064 = vmatpush1.msra.mxu0 0.0
    %5065 = vmatprep.subr.mxu0 0.0
    %5066 = vmatpush1.msra.mxu0 0.0
    %5067 = vmatprep.subr.mxu0 0.0
    %5068 = vmatpush1.msra.mxu0 0.0
    %5069 = vmatprep.subr.mxu0 0.0
    %5070 = vmatpush1.msra.mxu0 0.0
    %5071 = vmatprep.subr.mxu0 0.0
    %5072 = vmatpush1.msra.mxu0 0.0
    %5073 = vmatprep.subr.mxu0 0.0
    %5074 = vmatpush1.msra.mxu0 0.0
    %5075 = vmatprep.subr.mxu0 0.0
    %5076 = vmatpush1.msra.mxu0 0.0
    %5077 = vmatprep.mubr.f32.mxu0 0.0
    %5078 = vmatmul.mubr.f32.gmra.mrb[0].mxu0 %v5005
    %v5079 = vpop.f32.mrb[0].mxu0
    %v5080 = vadd.f32 0.0, %v5079
    %v5081 = vpop.f32.mrb[0].mxu0
    %5082 = vmatprep.mubr.f32.mxu0 0.0
    %5083 = vmatmul.mubr.f32.gmra.mrb[0].mxu0 %v5008
    %v5084 = vpop.f32.mrb[0].mxu0
    %v5085 = vadd.f32 0.0, %v5084
    %v5086 = vpop.f32.mrb[0].mxu0
    %5087 = vmatprep.mubr.f32.mxu0 0.0
    %5088 = vmatmul.mubr.f32.gmra.mrb[0].mxu0 %v5011
    %v5089 = vpop.f32.mrb[0].mxu0
    %v5090 = vadd.f32 0.0, %v5089
    %v5091 = vpop.f32.mrb[0].mxu0
    %5092 = vdwg.mxu0
    %v5093 = vadd.f32 %v4762, %v5080
    %v5094 = vadd.f32 %v4763, %v5085
    %v5095 = vadd.f32 %v4764, %v5090
    %v5098 = vrot.slane %v3741, 1
    %v5099 = vrot.slane %v3742, 1
    %v5100 = vsel %vm1814, %v5098, %v5099
    %v5101 = vrot.slane %v3743, 1
    %v5102 = vsel %vm1814, %v5099, %v5101
    %v5105 = vrot.slane %v3754, 1
    %v5106 = vrot.slane %v3755, 1
    %v5107 = vsel %vm1814, %v5105, %v5106
    %v5108 = vrot.slane %v3756, 1
    %v5109 = vsel %vm1814, %v5106, %v5108
    %5110 = vrot.lane.b32.xlu0 %v5107, 96
    %v5111 = vpop.permute.xlu0 %5110
    %5112 = vrot.lane.b32.xlu0 %v5109, 96
    %v5113 = vpop.permute.xlu0 %5112
    %5114 = vrot.lane.b32.xlu0 %v5108, 96
    %v5115 = vpop.permute.xlu0 %5114
    %v5116 = vsel %vm496, %v5100, 0
    %v5118 = vsel %vm496, %v5102, 0
    %v5120 = vsel %vm496, %v5101, 0
    %v5122 = vsel %vm496, %v5111, 0
    %v5124 = vsel %vm496, %v5113, 0
    %v5126 = vsel %vm496, %v5115, 0
    %5128 = vmatprep.subr.mxu0 0.0
    %5129 = vmatpush1.xpose.msra.mxu0 %v5122
    %5130 = vmatprep.subr.mxu0 0.0
    %5131 = vmatpush1.xpose.msra.mxu0 %v5124
    %5132 = vmatprep.subr.mxu0 0.0
    %5133 = vmatpush1.xpose.msra.mxu0 %v5126
    %5134 = vmatprep.subr.mxu0 0.0
    %5135 = vmatpush1.xpose.msra.mxu0 0.0
    %5136 = vmatprep.subr.mxu0 0.0
    %5137 = vmatpush1.xpose.msra.mxu0 0.0
    %5138 = vmatprep.subr.mxu0 0.0
    %5139 = vmatpush1.xpose.msra.mxu0 0.0
    %5140 = vmatprep.subr.mxu0 0.0
    %5141 = vmatpush1.xpose.msra.mxu0 0.0
    %5142 = vmatprep.subr.mxu0 0.0
    %5143 = vmatpush1.xpose.msra.mxu0 0.0
    %5144 = vmatprep.subr.mxu0 0.0
    %5145 = vmatpush1.xpose.msra.mxu0 0.0
    %5146 = vmatprep.subr.mxu0 0.0
    %5147 = vmatpush1.xpose.msra.mxu0 0.0
    %5148 = vmatprep.subr.mxu0 0.0
    %5149 = vmatpush1.xpose.msra.mxu0 0.0
    %5150 = vmatprep.subr.mxu0 0.0
    %5151 = vmatpush1.xpose.msra.mxu0 0.0
    %5152 = vmatprep.subr.mxu0 0.0
    %5153 = vmatpush1.xpose.msra.mxu0 0.0
    %5154 = vmatprep.subr.mxu0 0.0
    %5155 = vmatpush1.xpose.msra.mxu0 0.0
    %5156 = vmatprep.subr.mxu0 0.0
    %5157 = vmatpush1.xpose.msra.mxu0 0.0
    %5158 = vmatprep.subr.mxu0 0.0
    %5159 = vmatpush1.xpose.msra.mxu0 0.0
    %5160 = vmatprep.subr.mxu0 0.0
    %5161 = vmatpush1.xpose.msra.mxu0 0.0
    %5162 = vmatprep.subr.mxu0 0.0
    %5163 = vmatpush1.xpose.msra.mxu0 0.0
    %5164 = vmatprep.subr.mxu0 0.0
    %5165 = vmatpush1.xpose.msra.mxu0 0.0
    %5166 = vmatprep.subr.mxu0 0.0
    %5167 = vmatpush1.xpose.msra.mxu0 0.0
    %5168 = vmatprep.subr.mxu0 0.0
    %5169 = vmatpush1.xpose.msra.mxu0 0.0
    %5170 = vmatprep.subr.mxu0 0.0
    %5171 = vmatpush1.xpose.msra.mxu0 0.0
    %5172 = vmatprep.subr.mxu0 0.0
    %5173 = vmatpush1.xpose.msra.mxu0 0.0
    %5174 = vmatprep.subr.mxu0 0.0
    %5175 = vmatpush1.xpose.msra.mxu0 0.0
    %5176 = vmatprep.subr.mxu0 0.0
    %5177 = vmatpush1.xpose.msra.mxu0 0.0
    %5178 = vmatprep.subr.mxu0 0.0
    %5179 = vmatpush1.xpose.msra.mxu0 0.0
    %5180 = vmatprep.subr.mxu0 0.0
    %5181 = vmatpush1.xpose.msra.mxu0 0.0
    %5182 = vmatprep.subr.mxu0 0.0
    %5183 = vmatpush1.xpose.msra.mxu0 0.0
    %5184 = vmatprep.subr.mxu0 0.0
    %5185 = vmatpush1.xpose.msra.mxu0 0.0
    %5186 = vmatprep.subr.mxu0 0.0
    %5187 = vmatpush1.xpose.msra.mxu0 0.0
    %5188 = vmatprep.subr.mxu0 0.0
    %5189 = vmatpush1.xpose.msra.mxu0 0.0
    %5190 = vmatprep.subr.mxu0 0.0
    %5191 = vmatpush1.xpose.msra.mxu0 0.0
    %5192 = vmatprep.mubr.f32.mxu0 0.0
    %5193 = vmatmul.mubr.f32.gmra.mrb[0].mxu0 %v5116
    %v5194 = vpop.f32.mrb[0].mxu0
    %v5195 = vadd.f32 0.0, %v5194
    %v5196 = vpop.f32.mrb[0].mxu0
    %5197 = vmatprep.mubr.f32.mxu0 0.0
    %5198 = vmatmul.mubr.f32.gmra.mrb[0].mxu0 %v5118
    %v5199 = vpop.f32.mrb[0].mxu0
    %v5200 = vadd.f32 0.0, %v5199
    %v5201 = vpop.f32.mrb[0].mxu0
    %5202 = vmatprep.mubr.f32.mxu0 0.0
    %5203 = vmatmul.mubr.f32.gmra.mrb[0].mxu0 %v5120
    %v5204 = vpop.f32.mrb[0].mxu0
    %v5205 = vadd.f32 0.0, %v5204
    %v5206 = vpop.f32.mrb[0].mxu0
    %5207 = vdwg.mxu0
    %v5208 = vmul.f32 %v5195, 0.35355338
    %v5209 = vmul.f32 %v5200, 0.35355338
    %v5210 = vmul.f32 %v5205, 0.35355338
    %v5211 = vsel %vm595, %v5208, -inf
    %5212 = vmax.xlane.f32.xlu0 %v5211
    %v5213 = vpop.xlane.xlu0 %5212
    %v5214 = vsel %vm595, %v5209, -inf
    %5215 = vmax.xlane.f32.xlu0 %v5214
    %v5216 = vpop.xlane.xlu0 %5215
    %v5217 = vsel %vm602, %v5210, -inf
    %5218 = vmax.xlane.f32.xlu0 %v5217
    %v5219 = vpop.xlane.xlu0 %5218
    %v5220 = vsub.f32 %v5208, %v5213
    %v5221 = vsub.f32 %v5209, %v5216
    %v5222 = vsub.f32 %v5210, %v5219
    %v5223 = vmul.f32 %v5220, 1.442695
    %v5224 = vpow.pop %v5223
    %v5225 = vmul.f32 %v5221, 1.442695
    %v5226 = vpow.pop %v5225
    %v5227 = vmul.f32 %v5222, 1.442695
    %v5228 = vpow.pop %v5227
    %v5229 = vsel %vm595, %v5224, 0.0
    %5230 = vadd.xlane.f32.xlu0 %v5229
    %v5231 = vpop.xlane.xlu0 %5230
    %v5232 = vsel %vm595, %v5226, 0.0
    %5233 = vadd.xlane.f32.xlu0 %v5232
    %v5234 = vpop.xlane.xlu0 %5233
    %v5235 = vsel %vm602, %v5228, 0.0
    %5236 = vadd.xlane.f32.xlu0 %v5235
    %v5237 = vpop.xlane.xlu0 %5236
    %v5238 = vrcp.pop %v5231
    %v5239 = vmul.f32 %v5224, %v5238
    %v5240 = vrcp.pop %v5234
    %v5241 = vmul.f32 %v5226, %v5240
    %v5242 = vrcp.pop %v5237
    %v5243 = vmul.f32 %v5228, %v5242
    %v5246 = vrot.slane %v3767, 1
    %v5247 = vrot.slane %v3768, 1
    %v5248 = vsel %vm1814, %v5246, %v5247
    %v5249 = vrot.slane %v3769, 1
    %v5250 = vsel %vm1814, %v5247, %v5249
    %5251 = vrot.lane.b32.xlu0 %v5248, 64
    %v5252 = vpop.permute.xlu0 %5251
    %5253 = vrot.lane.b32.xlu0 %v5250, 64
    %v5254 = vpop.permute.xlu0 %5253
    %5255 = vrot.lane.b32.xlu0 %v5249, 64
    %v5256 = vpop.permute.xlu0 %5255
    %v5260 = vsel %vm595, %v5239, 0
    %v5263 = vsel %vm595, %v5241, 0
    %v5266 = vsel %vm595, %v5243, 0
    %v5268 = vsel %vm650, %v5256, 0
    %5270 = vmatprep.subr.mxu0 0.0
    %5271 = vmatpush1.msra.mxu0 %v5252
    %5272 = vmatprep.subr.mxu0 0.0
    %5273 = vmatpush1.msra.mxu0 %v5254
    %5274 = vmatprep.subr.mxu0 0.0
    %5275 = vmatpush1.msra.mxu0 %v5268
    %5276 = vmatprep.subr.mxu0 0.0
    %5277 = vmatpush1.msra.mxu0 0.0
    %5278 = vmatprep.subr.mxu0 0.0
    %5279 = vmatpush1.msra.mxu0 0.0
    %5280 = vmatprep.subr.mxu0 0.0
    %5281 = vmatpush1.msra.mxu0 0.0
    %5282 = vmatprep.subr.mxu0 0.0
    %5283 = vmatpush1.msra.mxu0 0.0
    %5284 = vmatprep.subr.mxu0 0.0
    %5285 = vmatpush1.msra.mxu0 0.0
    %5286 = vmatprep.subr.mxu0 0.0
    %5287 = vmatpush1.msra.mxu0 0.0
    %5288 = vmatprep.subr.mxu0 0.0
    %5289 = vmatpush1.msra.mxu0 0.0
    %5290 = vmatprep.subr.mxu0 0.0
    %5291 = vmatpush1.msra.mxu0 0.0
    %5292 = vmatprep.subr.mxu0 0.0
    %5293 = vmatpush1.msra.mxu0 0.0
    %5294 = vmatprep.subr.mxu0 0.0
    %5295 = vmatpush1.msra.mxu0 0.0
    %5296 = vmatprep.subr.mxu0 0.0
    %5297 = vmatpush1.msra.mxu0 0.0
    %5298 = vmatprep.subr.mxu0 0.0
    %5299 = vmatpush1.msra.mxu0 0.0
    %5300 = vmatprep.subr.mxu0 0.0
    %5301 = vmatpush1.msra.mxu0 0.0
    %5302 = vmatprep.subr.mxu0 0.0
    %5303 = vmatpush1.msra.mxu0 0.0
    %5304 = vmatprep.subr.mxu0 0.0
    %5305 = vmatpush1.msra.mxu0 0.0
    %5306 = vmatprep.subr.mxu0 0.0
    %5307 = vmatpush1.msra.mxu0 0.0
    %5308 = vmatprep.subr.mxu0 0.0
    %5309 = vmatpush1.msra.mxu0 0.0
    %5310 = vmatprep.subr.mxu0 0.0
    %5311 = vmatpush1.msra.mxu0 0.0
    %5312 = vmatprep.subr.mxu0 0.0
    %5313 = vmatpush1.msra.mxu0 0.0
    %5314 = vmatprep.subr.mxu0 0.0
    %5315 = vmatpush1.msra.mxu0 0.0
    %5316 = vmatprep.subr.mxu0 0.0
    %5317 = vmatpush1.msra.mxu0 0.0
    %5318 = vmatprep.subr.mxu0 0.0
    %5319 = vmatpush1.msra.mxu0 0.0
    %5320 = vmatprep.subr.mxu0 0.0
    %5321 = vmatpush1.msra.mxu0 0.0
    %5322 = vmatprep.subr.mxu0 0.0
    %5323 = vmatpush1.msra.mxu0 0.0
    %5324 = vmatprep.subr.mxu0 0.0
    %5325 = vmatpush1.msra.mxu0 0.0
    %5326 = vmatprep.subr.mxu0 0.0
    %5327 = vmatpush1.msra.mxu0 0.0
    %5328 = vmatprep.subr.mxu0 0.0
    %5329 = vmatpush1.msra.mxu0 0.0
    %5330 = vmatprep.subr.mxu0 0.0
    %5331 = vmatpush1.msra.mxu0 0.0
    %5332 = vmatprep.subr.mxu0 0.0
    %5333 = vmatpush1.msra.mxu0 0.0
    %5334 = vmatprep.mubr.f32.mxu0 0.0
    %5335 = vmatmul.mubr.f32.gmra.mrb[0].mxu0 %v5260
    %v5336 = vpop.f32.mrb[0].mxu0
    %v5337 = vadd.f32 0.0, %v5336
    %v5338 = vpop.f32.mrb[0].mxu0
    %5339 = vmatprep.mubr.f32.mxu0 0.0
    %5340 = vmatmul.mubr.f32.gmra.mrb[0].mxu0 %v5263
    %v5341 = vpop.f32.mrb[0].mxu0
    %v5342 = vadd.f32 0.0, %v5341
    %v5343 = vpop.f32.mrb[0].mxu0
    %5344 = vmatprep.mubr.f32.mxu0 0.0
    %5345 = vmatmul.mubr.f32.gmra.mrb[0].mxu0 %v5266
    %v5346 = vpop.f32.mrb[0].mxu0
    %v5347 = vadd.f32 0.0, %v5346
    %v5348 = vpop.f32.mrb[0].mxu0
    %5349 = vdwg.mxu0
    %5350 = vrot.lane.b32.xlu0 %v5100, 120
    %v5351 = vpop.permute.xlu0 %5350
    %5352 = vrot.lane.b32.xlu0 %v5102, 120
    %v5353 = vpop.permute.xlu0 %5352
    %5354 = vrot.lane.b32.xlu0 %v5101, 120
    %v5355 = vpop.permute.xlu0 %5354
    %5356 = vrot.lane.b32.xlu0 %v5107, 88
    %v5357 = vpop.permute.xlu0 %5356
    %5358 = vrot.lane.b32.xlu0 %v5109, 88
    %v5359 = vpop.permute.xlu0 %5358
    %5360 = vrot.lane.b32.xlu0 %v5108, 88
    %v5361 = vpop.permute.xlu0 %5360
    %v5362 = vsel %vm496, %v5351, 0
    %v5364 = vsel %vm496, %v5353, 0
    %v5366 = vsel %vm496, %v5355, 0
    %v5368 = vsel %vm496, %v5357, 0
    %v5370 = vsel %vm496, %v5359, 0
    %v5372 = vsel %vm496, %v5361, 0
    %5374 = vmatprep.subr.mxu0 0.0
    %5375 = vmatpush1.xpose.msra.mxu0 %v5368
    %5376 = vmatprep.subr.mxu0 0.0
    %5377 = vmatpush1.xpose.msra.mxu0 %v5370
    %5378 = vmatprep.subr.mxu0 0.0
    %5379 = vmatpush1.xpose.msra.mxu0 %v5372
    %5380 = vmatprep.subr.mxu0 0.0
    %5381 = vmatpush1.xpose.msra.mxu0 0.0
    %5382 = vmatprep.subr.mxu0 0.0
    %5383 = vmatpush1.xpose.msra.mxu0 0.0
    %5384 = vmatprep.subr.mxu0 0.0
    %5385 = vmatpush1.xpose.msra.mxu0 0.0
    %5386 = vmatprep.subr.mxu0 0.0
    %5387 = vmatpush1.xpose.msra.mxu0 0.0
    %5388 = vmatprep.subr.mxu0 0.0
    %5389 = vmatpush1.xpose.msra.mxu0 0.0
    %5390 = vmatprep.subr.mxu0 0.0
    %5391 = vmatpush1.xpose.msra.mxu0 0.0
    %5392 = vmatprep.subr.mxu0 0.0
    %5393 = vmatpush1.xpose.msra.mxu0 0.0
    %5394 = vmatprep.subr.mxu0 0.0
    %5395 = vmatpush1.xpose.msra.mxu0 0.0
    %5396 = vmatprep.subr.mxu0 0.0
    %5397 = vmatpush1.xpose.msra.mxu0 0.0
    %5398 = vmatprep.subr.mxu0 0.0
    %5399 = vmatpush1.xpose.msra.mxu0 0.0
    %5400 = vmatprep.subr.mxu0 0.0
    %5401 = vmatpush1.xpose.msra.mxu0 0.0
    %5402 = vmatprep.subr.mxu0 0.0
    %5403 = vmatpush1.xpose.msra.mxu0 0.0
    %5404 = vmatprep.subr.mxu0 0.0
    %5405 = vmatpush1.xpose.msra.mxu0 0.0
    %5406 = vmatprep.subr.mxu0 0.0
    %5407 = vmatpush1.xpose.msra.mxu0 0.0
    %5408 = vmatprep.subr.mxu0 0.0
    %5409 = vmatpush1.xpose.msra.mxu0 0.0
    %5410 = vmatprep.subr.mxu0 0.0
    %5411 = vmatpush1.xpose.msra.mxu0 0.0
    %5412 = vmatprep.subr.mxu0 0.0
    %5413 = vmatpush1.xpose.msra.mxu0 0.0
    %5414 = vmatprep.subr.mxu0 0.0
    %5415 = vmatpush1.xpose.msra.mxu0 0.0
    %5416 = vmatprep.subr.mxu0 0.0
    %5417 = vmatpush1.xpose.msra.mxu0 0.0
    %5418 = vmatprep.subr.mxu0 0.0
    %5419 = vmatpush1.xpose.msra.mxu0 0.0
    %5420 = vmatprep.subr.mxu0 0.0
    %5421 = vmatpush1.xpose.msra.mxu0 0.0
    %5422 = vmatprep.subr.mxu0 0.0
    %5423 = vmatpush1.xpose.msra.mxu0 0.0
    %5424 = vmatprep.subr.mxu0 0.0
    %5425 = vmatpush1.xpose.msra.mxu0 0.0
    %5426 = vmatprep.subr.mxu0 0.0
    %5427 = vmatpush1.xpose.msra.mxu0 0.0
    %5428 = vmatprep.subr.mxu0 0.0
    %5429 = vmatpush1.xpose.msra.mxu0 0.0
    %5430 = vmatprep.subr.mxu0 0.0
    %5431 = vmatpush1.xpose.msra.mxu0 0.0
    %5432 = vmatprep.subr.mxu0 0.0
    %5433 = vmatpush1.xpose.msra.mxu0 0.0
    %5434 = vmatprep.subr.mxu0 0.0
    %5435 = vmatpush1.xpose.msra.mxu0 0.0
    %5436 = vmatprep.subr.mxu0 0.0
    %5437 = vmatpush1.xpose.msra.mxu0 0.0
    %5438 = vmatprep.mubr.f32.mxu0 0.0
    %5439 = vmatmul.mubr.f32.gmra.mrb[0].mxu0 %v5362
    %v5440 = vpop.f32.mrb[0].mxu0
    %v5441 = vadd.f32 0.0, %v5440
    %v5442 = vpop.f32.mrb[0].mxu0
    %5443 = vmatprep.mubr.f32.mxu0 0.0
    %5444 = vmatmul.mubr.f32.gmra.mrb[0].mxu0 %v5364
    %v5445 = vpop.f32.mrb[0].mxu0
    %v5446 = vadd.f32 0.0, %v5445
    %v5447 = vpop.f32.mrb[0].mxu0
    %5448 = vmatprep.mubr.f32.mxu0 0.0
    %5449 = vmatmul.mubr.f32.gmra.mrb[0].mxu0 %v5366
    %v5450 = vpop.f32.mrb[0].mxu0
    %v5451 = vadd.f32 0.0, %v5450
    %v5452 = vpop.f32.mrb[0].mxu0
    %5453 = vdwg.mxu0
    %v5454 = vmul.f32 %v5441, 0.35355338
    %v5455 = vmul.f32 %v5446, 0.35355338
    %v5456 = vmul.f32 %v5451, 0.35355338
    %v5457 = vsel %vm595, %v5454, -inf
    %5458 = vmax.xlane.f32.xlu0 %v5457
    %v5459 = vpop.xlane.xlu0 %5458
    %v5460 = vsel %vm595, %v5455, -inf
    %5461 = vmax.xlane.f32.xlu0 %v5460
    %v5462 = vpop.xlane.xlu0 %5461
    %v5463 = vsel %vm602, %v5456, -inf
    %5464 = vmax.xlane.f32.xlu0 %v5463
    %v5465 = vpop.xlane.xlu0 %5464
    %v5466 = vsub.f32 %v5454, %v5459
    %v5467 = vsub.f32 %v5455, %v5462
    %v5468 = vsub.f32 %v5456, %v5465
    %v5469 = vmul.f32 %v5466, 1.442695
    %v5470 = vpow.pop %v5469
    %v5471 = vmul.f32 %v5467, 1.442695
    %v5472 = vpow.pop %v5471
    %v5473 = vmul.f32 %v5468, 1.442695
    %v5474 = vpow.pop %v5473
    %v5475 = vsel %vm595, %v5470, 0.0
    %5476 = vadd.xlane.f32.xlu0 %v5475
    %v5477 = vpop.xlane.xlu0 %5476
    %v5478 = vsel %vm595, %v5472, 0.0
    %5479 = vadd.xlane.f32.xlu0 %v5478
    %v5480 = vpop.xlane.xlu0 %5479
    %v5481 = vsel %vm602, %v5474, 0.0
    %5482 = vadd.xlane.f32.xlu0 %v5481
    %v5483 = vpop.xlane.xlu0 %5482
    %v5484 = vrcp.pop %v5477
    %v5485 = vmul.f32 %v5470, %v5484
    %v5486 = vrcp.pop %v5480
    %v5487 = vmul.f32 %v5472, %v5486
    %v5488 = vrcp.pop %v5483
    %v5489 = vmul.f32 %v5474, %v5488
    %5490 = vrot.lane.b32.xlu0 %v5248, 56
    %v5491 = vpop.permute.xlu0 %5490
    %5492 = vrot.lane.b32.xlu0 %v5250, 56
    %v5493 = vpop.permute.xlu0 %5492
    %5494 = vrot.lane.b32.xlu0 %v5249, 56
    %v5495 = vpop.permute.xlu0 %5494
    %v5499 = vsel %vm595, %v5485, 0
    %v5502 = vsel %vm595, %v5487, 0
    %v5505 = vsel %vm595, %v5489, 0
    %v5507 = vsel %vm650, %v5495, 0
    %5509 = vmatprep.subr.mxu0 0.0
    %5510 = vmatpush1.msra.mxu0 %v5491
    %5511 = vmatprep.subr.mxu0 0.0
    %5512 = vmatpush1.msra.mxu0 %v5493
    %5513 = vmatprep.subr.mxu0 0.0
    %5514 = vmatpush1.msra.mxu0 %v5507
    %5515 = vmatprep.subr.mxu0 0.0
    %5516 = vmatpush1.msra.mxu0 0.0
    %5517 = vmatprep.subr.mxu0 0.0
    %5518 = vmatpush1.msra.mxu0 0.0
    %5519 = vmatprep.subr.mxu0 0.0
    %5520 = vmatpush1.msra.mxu0 0.0
    %5521 = vmatprep.subr.mxu0 0.0
    %5522 = vmatpush1.msra.mxu0 0.0
    %5523 = vmatprep.subr.mxu0 0.0
    %5524 = vmatpush1.msra.mxu0 0.0
    %5525 = vmatprep.subr.mxu0 0.0
    %5526 = vmatpush1.msra.mxu0 0.0
    %5527 = vmatprep.subr.mxu0 0.0
    %5528 = vmatpush1.msra.mxu0 0.0
    %5529 = vmatprep.subr.mxu0 0.0
    %5530 = vmatpush1.msra.mxu0 0.0
    %5531 = vmatprep.subr.mxu0 0.0
    %5532 = vmatpush1.msra.mxu0 0.0
    %5533 = vmatprep.subr.mxu0 0.0
    %5534 = vmatpush1.msra.mxu0 0.0
    %5535 = vmatprep.subr.mxu0 0.0
    %5536 = vmatpush1.msra.mxu0 0.0
    %5537 = vmatprep.subr.mxu0 0.0
    %5538 = vmatpush1.msra.mxu0 0.0
    %5539 = vmatprep.subr.mxu0 0.0
    %5540 = vmatpush1.msra.mxu0 0.0
    %5541 = vmatprep.subr.mxu0 0.0
    %5542 = vmatpush1.msra.mxu0 0.0
    %5543 = vmatprep.subr.mxu0 0.0
    %5544 = vmatpush1.msra.mxu0 0.0
    %5545 = vmatprep.subr.mxu0 0.0
    %5546 = vmatpush1.msra.mxu0 0.0
    %5547 = vmatprep.subr.mxu0 0.0
    %5548 = vmatpush1.msra.mxu0 0.0
    %5549 = vmatprep.subr.mxu0 0.0
    %5550 = vmatpush1.msra.mxu0 0.0
    %5551 = vmatprep.subr.mxu0 0.0
    %5552 = vmatpush1.msra.mxu0 0.0
    %5553 = vmatprep.subr.mxu0 0.0
    %5554 = vmatpush1.msra.mxu0 0.0
    %5555 = vmatprep.subr.mxu0 0.0
    %5556 = vmatpush1.msra.mxu0 0.0
    %5557 = vmatprep.subr.mxu0 0.0
    %5558 = vmatpush1.msra.mxu0 0.0
    %5559 = vmatprep.subr.mxu0 0.0
    %5560 = vmatpush1.msra.mxu0 0.0
    %5561 = vmatprep.subr.mxu0 0.0
    %5562 = vmatpush1.msra.mxu0 0.0
    %5563 = vmatprep.subr.mxu0 0.0
    %5564 = vmatpush1.msra.mxu0 0.0
    %5565 = vmatprep.subr.mxu0 0.0
    %5566 = vmatpush1.msra.mxu0 0.0
    %5567 = vmatprep.subr.mxu0 0.0
    %5568 = vmatpush1.msra.mxu0 0.0
    %5569 = vmatprep.subr.mxu0 0.0
    %5570 = vmatpush1.msra.mxu0 0.0
    %5571 = vmatprep.subr.mxu0 0.0
    %5572 = vmatpush1.msra.mxu0 0.0
    %5573 = vmatprep.mubr.f32.mxu0 0.0
    %5574 = vmatmul.mubr.f32.gmra.mrb[0].mxu0 %v5499
    %v5575 = vpop.f32.mrb[0].mxu0
    %v5576 = vadd.f32 0.0, %v5575
    %v5577 = vpop.f32.mrb[0].mxu0
    %5578 = vmatprep.mubr.f32.mxu0 0.0
    %5579 = vmatmul.mubr.f32.gmra.mrb[0].mxu0 %v5502
    %v5580 = vpop.f32.mrb[0].mxu0
    %v5581 = vadd.f32 0.0, %v5580
    %v5582 = vpop.f32.mrb[0].mxu0
    %5583 = vmatprep.mubr.f32.mxu0 0.0
    %5584 = vmatmul.mubr.f32.gmra.mrb[0].mxu0 %v5505
    %v5585 = vpop.f32.mrb[0].mxu0
    %v5586 = vadd.f32 0.0, %v5585
    %v5587 = vpop.f32.mrb[0].mxu0
    %5588 = vdwg.mxu0
    %v5590 = vsel %vm496, %v5576, 0
    %v5593 = vsel %vm496, %v5581, 0
    %v5596 = vsel %vm496, %v5586, 0
    %5598 = vmatprep.subr.mxu0 0.0
    %5599 = vmatpush1.msra.mxu0 %v3772
    %5600 = vmatprep.subr.mxu0 0.0
    %5601 = vmatpush1.msra.mxu0 0.0
    %5602 = vmatprep.subr.mxu0 0.0
    %5603 = vmatpush1.msra.mxu0 0.0
    %5604 = vmatprep.subr.mxu0 0.0
    %5605 = vmatpush1.msra.mxu0 0.0
    %5606 = vmatprep.subr.mxu0 0.0
    %5607 = vmatpush1.msra.mxu0 0.0
    %5608 = vmatprep.subr.mxu0 0.0
    %5609 = vmatpush1.msra.mxu0 0.0
    %5610 = vmatprep.subr.mxu0 0.0
    %5611 = vmatpush1.msra.mxu0 0.0
    %5612 = vmatprep.subr.mxu0 0.0
    %5613 = vmatpush1.msra.mxu0 0.0
    %5614 = vmatprep.subr.mxu0 0.0
    %5615 = vmatpush1.msra.mxu0 0.0
    %5616 = vmatprep.subr.mxu0 0.0
    %5617 = vmatpush1.msra.mxu0 0.0
    %5618 = vmatprep.subr.mxu0 0.0
    %5619 = vmatpush1.msra.mxu0 0.0
    %5620 = vmatprep.subr.mxu0 0.0
    %5621 = vmatpush1.msra.mxu0 0.0
    %5622 = vmatprep.subr.mxu0 0.0
    %5623 = vmatpush1.msra.mxu0 0.0
    %5624 = vmatprep.subr.mxu0 0.0
    %5625 = vmatpush1.msra.mxu0 0.0
    %5626 = vmatprep.subr.mxu0 0.0
    %5627 = vmatpush1.msra.mxu0 0.0
    %5628 = vmatprep.subr.mxu0 0.0
    %5629 = vmatpush1.msra.mxu0 0.0
    %5630 = vmatprep.subr.mxu0 0.0
    %5631 = vmatpush1.msra.mxu0 0.0
    %5632 = vmatprep.subr.mxu0 0.0
    %5633 = vmatpush1.msra.mxu0 0.0
    %5634 = vmatprep.subr.mxu0 0.0
    %5635 = vmatpush1.msra.mxu0 0.0
    %5636 = vmatprep.subr.mxu0 0.0
    %5637 = vmatpush1.msra.mxu0 0.0
    %5638 = vmatprep.subr.mxu0 0.0
    %5639 = vmatpush1.msra.mxu0 0.0
    %5640 = vmatprep.subr.mxu0 0.0
    %5641 = vmatpush1.msra.mxu0 0.0
    %5642 = vmatprep.subr.mxu0 0.0
    %5643 = vmatpush1.msra.mxu0 0.0
    %5644 = vmatprep.subr.mxu0 0.0
    %5645 = vmatpush1.msra.mxu0 0.0
    %5646 = vmatprep.subr.mxu0 0.0
    %5647 = vmatpush1.msra.mxu0 0.0
    %5648 = vmatprep.subr.mxu0 0.0
    %5649 = vmatpush1.msra.mxu0 0.0
    %5650 = vmatprep.subr.mxu0 0.0
    %5651 = vmatpush1.msra.mxu0 0.0
    %5652 = vmatprep.subr.mxu0 0.0
    %5653 = vmatpush1.msra.mxu0 0.0
    %5654 = vmatprep.subr.mxu0 0.0
    %5655 = vmatpush1.msra.mxu0 0.0
    %5656 = vmatprep.subr.mxu0 0.0
    %5657 = vmatpush1.msra.mxu0 0.0
    %5658 = vmatprep.subr.mxu0 0.0
    %5659 = vmatpush1.msra.mxu0 0.0
    %5660 = vmatprep.subr.mxu0 0.0
    %5661 = vmatpush1.msra.mxu0 0.0
    %5662 = vmatprep.mubr.f32.mxu0 0.0
    %5663 = vmatmul.mubr.f32.gmra.mrb[0].mxu0 %v5590
    %v5664 = vpop.f32.mrb[0].mxu0
    %v5665 = vadd.f32 0.0, %v5664
    %v5666 = vpop.f32.mrb[0].mxu0
    %5667 = vmatprep.mubr.f32.mxu0 0.0
    %5668 = vmatmul.mubr.f32.gmra.mrb[0].mxu0 %v5593
    %v5669 = vpop.f32.mrb[0].mxu0
    %v5670 = vadd.f32 0.0, %v5669
    %v5671 = vpop.f32.mrb[0].mxu0
    %5672 = vmatprep.mubr.f32.mxu0 0.0
    %5673 = vmatmul.mubr.f32.gmra.mrb[0].mxu0 %v5596
    %v5674 = vpop.f32.mrb[0].mxu0
    %v5675 = vadd.f32 0.0, %v5674
    %v5676 = vpop.f32.mrb[0].mxu0
    %5677 = vdwg.mxu0
    %v5679 = vsel %vm496, %v5337, 0
    %v5682 = vsel %vm496, %v5342, 0
    %v5685 = vsel %vm496, %v5347, 0
    %5687 = vmatprep.subr.mxu0 0.0
    %5688 = vmatpush1.msra.mxu0 %v3771
    %5689 = vmatprep.subr.mxu0 0.0
    %5690 = vmatpush1.msra.mxu0 0.0
    %5691 = vmatprep.subr.mxu0 0.0
    %5692 = vmatpush1.msra.mxu0 0.0
    %5693 = vmatprep.subr.mxu0 0.0
    %5694 = vmatpush1.msra.mxu0 0.0
    %5695 = vmatprep.subr.mxu0 0.0
    %5696 = vmatpush1.msra.mxu0 0.0
    %5697 = vmatprep.subr.mxu0 0.0
    %5698 = vmatpush1.msra.mxu0 0.0
    %5699 = vmatprep.subr.mxu0 0.0
    %5700 = vmatpush1.msra.mxu0 0.0
    %5701 = vmatprep.subr.mxu0 0.0
    %5702 = vmatpush1.msra.mxu0 0.0
    %5703 = vmatprep.subr.mxu0 0.0
    %5704 = vmatpush1.msra.mxu0 0.0
    %5705 = vmatprep.subr.mxu0 0.0
    %5706 = vmatpush1.msra.mxu0 0.0
    %5707 = vmatprep.subr.mxu0 0.0
    %5708 = vmatpush1.msra.mxu0 0.0
    %5709 = vmatprep.subr.mxu0 0.0
    %5710 = vmatpush1.msra.mxu0 0.0
    %5711 = vmatprep.subr.mxu0 0.0
    %5712 = vmatpush1.msra.mxu0 0.0
    %5713 = vmatprep.subr.mxu0 0.0
    %5714 = vmatpush1.msra.mxu0 0.0
    %5715 = vmatprep.subr.mxu0 0.0
    %5716 = vmatpush1.msra.mxu0 0.0
    %5717 = vmatprep.subr.mxu0 0.0
    %5718 = vmatpush1.msra.mxu0 0.0
    %5719 = vmatprep.subr.mxu0 0.0
    %5720 = vmatpush1.msra.mxu0 0.0
    %5721 = vmatprep.subr.mxu0 0.0
    %5722 = vmatpush1.msra.mxu0 0.0
    %5723 = vmatprep.subr.mxu0 0.0
    %5724 = vmatpush1.msra.mxu0 0.0
    %5725 = vmatprep.subr.mxu0 0.0
    %5726 = vmatpush1.msra.mxu0 0.0
    %5727 = vmatprep.subr.mxu0 0.0
    %5728 = vmatpush1.msra.mxu0 0.0
    %5729 = vmatprep.subr.mxu0 0.0
    %5730 = vmatpush1.msra.mxu0 0.0
    %5731 = vmatprep.subr.mxu0 0.0
    %5732 = vmatpush1.msra.mxu0 0.0
    %5733 = vmatprep.subr.mxu0 0.0
    %5734 = vmatpush1.msra.mxu0 0.0
    %5735 = vmatprep.subr.mxu0 0.0
    %5736 = vmatpush1.msra.mxu0 0.0
    %5737 = vmatprep.subr.mxu0 0.0
    %5738 = vmatpush1.msra.mxu0 0.0
    %5739 = vmatprep.subr.mxu0 0.0
    %5740 = vmatpush1.msra.mxu0 0.0
    %5741 = vmatprep.subr.mxu0 0.0
    %5742 = vmatpush1.msra.mxu0 0.0
    %5743 = vmatprep.subr.mxu0 0.0
    %5744 = vmatpush1.msra.mxu0 0.0
    %5745 = vmatprep.subr.mxu0 0.0
    %5746 = vmatpush1.msra.mxu0 0.0
    %5747 = vmatprep.subr.mxu0 0.0
    %5748 = vmatpush1.msra.mxu0 0.0
    %5749 = vmatprep.subr.mxu0 0.0
    %5750 = vmatpush1.msra.mxu0 0.0
    %5751 = vmatprep.mubr.f32.mxu0 0.0
    %5752 = vmatmul.mubr.f32.gmra.mrb[0].mxu0 %v5679
    %v5753 = vpop.f32.mrb[0].mxu0
    %v5754 = vadd.f32 %v5665, %v5753
    %v5755 = vpop.f32.mrb[0].mxu0
    %5756 = vmatprep.mubr.f32.mxu0 0.0
    %5757 = vmatmul.mubr.f32.gmra.mrb[0].mxu0 %v5682
    %v5758 = vpop.f32.mrb[0].mxu0
    %v5759 = vadd.f32 %v5670, %v5758
    %v5760 = vpop.f32.mrb[0].mxu0
    %5761 = vmatprep.mubr.f32.mxu0 0.0
    %5762 = vmatmul.mubr.f32.gmra.mrb[0].mxu0 %v5685
    %v5763 = vpop.f32.mrb[0].mxu0
    %v5764 = vadd.f32 %v5675, %v5763
    %v5765 = vpop.f32.mrb[0].mxu0
    %5766 = vdwg.mxu0
    %5767 = vrot.lane.b32.xlu0 %v5100, 112
    %v5768 = vpop.permute.xlu0 %5767
    %5769 = vrot.lane.b32.xlu0 %v5102, 112
    %v5770 = vpop.permute.xlu0 %5769
    %5771 = vrot.lane.b32.xlu0 %v5101, 112
    %v5772 = vpop.permute.xlu0 %5771
    %5773 = vrot.lane.b32.xlu0 %v5107, 80
    %v5774 = vpop.permute.xlu0 %5773
    %5775 = vrot.lane.b32.xlu0 %v5109, 80
    %v5776 = vpop.permute.xlu0 %5775
    %5777 = vrot.lane.b32.xlu0 %v5108, 80
    %v5778 = vpop.permute.xlu0 %5777
    %v5779 = vsel %vm496, %v5768, 0
    %v5781 = vsel %vm496, %v5770, 0
    %v5783 = vsel %vm496, %v5772, 0
    %v5785 = vsel %vm496, %v5774, 0
    %v5787 = vsel %vm496, %v5776, 0
    %v5789 = vsel %vm496, %v5778, 0
    %5791 = vmatprep.subr.mxu0 0.0
    %5792 = vmatpush1.xpose.msra.mxu0 %v5785
    %5793 = vmatprep.subr.mxu0 0.0
    %5794 = vmatpush1.xpose.msra.mxu0 %v5787
    %5795 = vmatprep.subr.mxu0 0.0
    %5796 = vmatpush1.xpose.msra.mxu0 %v5789
    %5797 = vmatprep.subr.mxu0 0.0
    %5798 = vmatpush1.xpose.msra.mxu0 0.0
    %5799 = vmatprep.subr.mxu0 0.0
    %5800 = vmatpush1.xpose.msra.mxu0 0.0
    %5801 = vmatprep.subr.mxu0 0.0
    %5802 = vmatpush1.xpose.msra.mxu0 0.0
    %5803 = vmatprep.subr.mxu0 0.0
    %5804 = vmatpush1.xpose.msra.mxu0 0.0
    %5805 = vmatprep.subr.mxu0 0.0
    %5806 = vmatpush1.xpose.msra.mxu0 0.0
    %5807 = vmatprep.subr.mxu0 0.0
    %5808 = vmatpush1.xpose.msra.mxu0 0.0
    %5809 = vmatprep.subr.mxu0 0.0
    %5810 = vmatpush1.xpose.msra.mxu0 0.0
    %5811 = vmatprep.subr.mxu0 0.0
    %5812 = vmatpush1.xpose.msra.mxu0 0.0
    %5813 = vmatprep.subr.mxu0 0.0
    %5814 = vmatpush1.xpose.msra.mxu0 0.0
    %5815 = vmatprep.subr.mxu0 0.0
    %5816 = vmatpush1.xpose.msra.mxu0 0.0
    %5817 = vmatprep.subr.mxu0 0.0
    %5818 = vmatpush1.xpose.msra.mxu0 0.0
    %5819 = vmatprep.subr.mxu0 0.0
    %5820 = vmatpush1.xpose.msra.mxu0 0.0
    %5821 = vmatprep.subr.mxu0 0.0
    %5822 = vmatpush1.xpose.msra.mxu0 0.0
    %5823 = vmatprep.subr.mxu0 0.0
    %5824 = vmatpush1.xpose.msra.mxu0 0.0
    %5825 = vmatprep.subr.mxu0 0.0
    %5826 = vmatpush1.xpose.msra.mxu0 0.0
    %5827 = vmatprep.subr.mxu0 0.0
    %5828 = vmatpush1.xpose.msra.mxu0 0.0
    %5829 = vmatprep.subr.mxu0 0.0
    %5830 = vmatpush1.xpose.msra.mxu0 0.0
    %5831 = vmatprep.subr.mxu0 0.0
    %5832 = vmatpush1.xpose.msra.mxu0 0.0
    %5833 = vmatprep.subr.mxu0 0.0
    %5834 = vmatpush1.xpose.msra.mxu0 0.0
    %5835 = vmatprep.subr.mxu0 0.0
    %5836 = vmatpush1.xpose.msra.mxu0 0.0
    %5837 = vmatprep.subr.mxu0 0.0
    %5838 = vmatpush1.xpose.msra.mxu0 0.0
    %5839 = vmatprep.subr.mxu0 0.0
    %5840 = vmatpush1.xpose.msra.mxu0 0.0
    %5841 = vmatprep.subr.mxu0 0.0
    %5842 = vmatpush1.xpose.msra.mxu0 0.0
    %5843 = vmatprep.subr.mxu0 0.0
    %5844 = vmatpush1.xpose.msra.mxu0 0.0
    %5845 = vmatprep.subr.mxu0 0.0
    %5846 = vmatpush1.xpose.msra.mxu0 0.0
    %5847 = vmatprep.subr.mxu0 0.0
    %5848 = vmatpush1.xpose.msra.mxu0 0.0
    %5849 = vmatprep.subr.mxu0 0.0
    %5850 = vmatpush1.xpose.msra.mxu0 0.0
    %5851 = vmatprep.subr.mxu0 0.0
    %5852 = vmatpush1.xpose.msra.mxu0 0.0
    %5853 = vmatprep.subr.mxu0 0.0
    %5854 = vmatpush1.xpose.msra.mxu0 0.0
    %5855 = vmatprep.mubr.f32.mxu0 0.0
    %5856 = vmatmul.mubr.f32.gmra.mrb[0].mxu0 %v5779
    %v5857 = vpop.f32.mrb[0].mxu0
    %v5858 = vadd.f32 0.0, %v5857
    %v5859 = vpop.f32.mrb[0].mxu0
    %5860 = vmatprep.mubr.f32.mxu0 0.0
    %5861 = vmatmul.mubr.f32.gmra.mrb[0].mxu0 %v5781
    %v5862 = vpop.f32.mrb[0].mxu0
    %v5863 = vadd.f32 0.0, %v5862
    %v5864 = vpop.f32.mrb[0].mxu0
    %5865 = vmatprep.mubr.f32.mxu0 0.0
    %5866 = vmatmul.mubr.f32.gmra.mrb[0].mxu0 %v5783
    %v5867 = vpop.f32.mrb[0].mxu0
    %v5868 = vadd.f32 0.0, %v5867
    %v5869 = vpop.f32.mrb[0].mxu0
    %5870 = vdwg.mxu0
    %v5871 = vmul.f32 %v5858, 0.35355338
    %v5872 = vmul.f32 %v5863, 0.35355338
    %v5873 = vmul.f32 %v5868, 0.35355338
    %v5874 = vsel %vm595, %v5871, -inf
    %5875 = vmax.xlane.f32.xlu0 %v5874
    %v5876 = vpop.xlane.xlu0 %5875
    %v5877 = vsel %vm595, %v5872, -inf
    %5878 = vmax.xlane.f32.xlu0 %v5877
    %v5879 = vpop.xlane.xlu0 %5878
    %v5880 = vsel %vm602, %v5873, -inf
    %5881 = vmax.xlane.f32.xlu0 %v5880
    %v5882 = vpop.xlane.xlu0 %5881
    %v5883 = vsub.f32 %v5871, %v5876
    %v5884 = vsub.f32 %v5872, %v5879
    %v5885 = vsub.f32 %v5873, %v5882
    %v5886 = vmul.f32 %v5883, 1.442695
    %v5887 = vpow.pop %v5886
    %v5888 = vmul.f32 %v5884, 1.442695
    %v5889 = vpow.pop %v5888
    %v5890 = vmul.f32 %v5885, 1.442695
    %v5891 = vpow.pop %v5890
    %v5892 = vsel %vm595, %v5887, 0.0
    %5893 = vadd.xlane.f32.xlu0 %v5892
    %v5894 = vpop.xlane.xlu0 %5893
    %v5895 = vsel %vm595, %v5889, 0.0
    %5896 = vadd.xlane.f32.xlu0 %v5895
    %v5897 = vpop.xlane.xlu0 %5896
    %v5898 = vsel %vm602, %v5891, 0.0
    %5899 = vadd.xlane.f32.xlu0 %v5898
    %v5900 = vpop.xlane.xlu0 %5899
    %v5901 = vrcp.pop %v5894
    %v5902 = vmul.f32 %v5887, %v5901
    %v5903 = vrcp.pop %v5897
    %v5904 = vmul.f32 %v5889, %v5903
    %v5905 = vrcp.pop %v5900
    %v5906 = vmul.f32 %v5891, %v5905
    %5907 = vrot.lane.b32.xlu0 %v5248, 48
    %v5908 = vpop.permute.xlu0 %5907
    %5909 = vrot.lane.b32.xlu0 %v5250, 48
    %v5910 = vpop.permute.xlu0 %5909
    %5911 = vrot.lane.b32.xlu0 %v5249, 48
    %v5912 = vpop.permute.xlu0 %5911
    %v5916 = vsel %vm595, %v5902, 0
    %v5919 = vsel %vm595, %v5904, 0
    %v5922 = vsel %vm595, %v5906, 0
    %v5924 = vsel %vm650, %v5912, 0
    %5926 = vmatprep.subr.mxu0 0.0
    %5927 = vmatpush1.msra.mxu0 %v5908
    %5928 = vmatprep.subr.mxu0 0.0
    %5929 = vmatpush1.msra.mxu0 %v5910
    %5930 = vmatprep.subr.mxu0 0.0
    %5931 = vmatpush1.msra.mxu0 %v5924
    %5932 = vmatprep.subr.mxu0 0.0
    %5933 = vmatpush1.msra.mxu0 0.0
    %5934 = vmatprep.subr.mxu0 0.0
    %5935 = vmatpush1.msra.mxu0 0.0
    %5936 = vmatprep.subr.mxu0 0.0
    %5937 = vmatpush1.msra.mxu0 0.0
    %5938 = vmatprep.subr.mxu0 0.0
    %5939 = vmatpush1.msra.mxu0 0.0
    %5940 = vmatprep.subr.mxu0 0.0
    %5941 = vmatpush1.msra.mxu0 0.0
    %5942 = vmatprep.subr.mxu0 0.0
    %5943 = vmatpush1.msra.mxu0 0.0
    %5944 = vmatprep.subr.mxu0 0.0
    %5945 = vmatpush1.msra.mxu0 0.0
    %5946 = vmatprep.subr.mxu0 0.0
    %5947 = vmatpush1.msra.mxu0 0.0
    %5948 = vmatprep.subr.mxu0 0.0
    %5949 = vmatpush1.msra.mxu0 0.0
    %5950 = vmatprep.subr.mxu0 0.0
    %5951 = vmatpush1.msra.mxu0 0.0
    %5952 = vmatprep.subr.mxu0 0.0
    %5953 = vmatpush1.msra.mxu0 0.0
    %5954 = vmatprep.subr.mxu0 0.0
    %5955 = vmatpush1.msra.mxu0 0.0
    %5956 = vmatprep.subr.mxu0 0.0
    %5957 = vmatpush1.msra.mxu0 0.0
    %5958 = vmatprep.subr.mxu0 0.0
    %5959 = vmatpush1.msra.mxu0 0.0
    %5960 = vmatprep.subr.mxu0 0.0
    %5961 = vmatpush1.msra.mxu0 0.0
    %5962 = vmatprep.subr.mxu0 0.0
    %5963 = vmatpush1.msra.mxu0 0.0
    %5964 = vmatprep.subr.mxu0 0.0
    %5965 = vmatpush1.msra.mxu0 0.0
    %5966 = vmatprep.subr.mxu0 0.0
    %5967 = vmatpush1.msra.mxu0 0.0
    %5968 = vmatprep.subr.mxu0 0.0
    %5969 = vmatpush1.msra.mxu0 0.0
    %5970 = vmatprep.subr.mxu0 0.0
    %5971 = vmatpush1.msra.mxu0 0.0
    %5972 = vmatprep.subr.mxu0 0.0
    %5973 = vmatpush1.msra.mxu0 0.0
    %5974 = vmatprep.subr.mxu0 0.0
    %5975 = vmatpush1.msra.mxu0 0.0
    %5976 = vmatprep.subr.mxu0 0.0
    %5977 = vmatpush1.msra.mxu0 0.0
    %5978 = vmatprep.subr.mxu0 0.0
    %5979 = vmatpush1.msra.mxu0 0.0
    %5980 = vmatprep.subr.mxu0 0.0
    %5981 = vmatpush1.msra.mxu0 0.0
    %5982 = vmatprep.subr.mxu0 0.0
    %5983 = vmatpush1.msra.mxu0 0.0
    %5984 = vmatprep.subr.mxu0 0.0
    %5985 = vmatpush1.msra.mxu0 0.0
    %5986 = vmatprep.subr.mxu0 0.0
    %5987 = vmatpush1.msra.mxu0 0.0
    %5988 = vmatprep.subr.mxu0 0.0
    %5989 = vmatpush1.msra.mxu0 0.0
    %5990 = vmatprep.mubr.f32.mxu0 0.0
    %5991 = vmatmul.mubr.f32.gmra.mrb[0].mxu0 %v5916
    %v5992 = vpop.f32.mrb[0].mxu0
    %v5993 = vadd.f32 0.0, %v5992
    %v5994 = vpop.f32.mrb[0].mxu0
    %5995 = vmatprep.mubr.f32.mxu0 0.0
    %5996 = vmatmul.mubr.f32.gmra.mrb[0].mxu0 %v5919
    %v5997 = vpop.f32.mrb[0].mxu0
    %v5998 = vadd.f32 0.0, %v5997
    %v5999 = vpop.f32.mrb[0].mxu0
    %6000 = vmatprep.mubr.f32.mxu0 0.0
    %6001 = vmatmul.mubr.f32.gmra.mrb[0].mxu0 %v5922
    %v6002 = vpop.f32.mrb[0].mxu0
    %v6003 = vadd.f32 0.0, %v6002
    %v6004 = vpop.f32.mrb[0].mxu0
    %6005 = vdwg.mxu0
    %v6007 = vsel %vm496, %v5993, 0
    %v6010 = vsel %vm496, %v5998, 0
    %v6013 = vsel %vm496, %v6003, 0
    %6015 = vmatprep.subr.mxu0 0.0
    %6016 = vmatpush1.msra.mxu0 %v3773
    %6017 = vmatprep.subr.mxu0 0.0
    %6018 = vmatpush1.msra.mxu0 0.0
    %6019 = vmatprep.subr.mxu0 0.0
    %6020 = vmatpush1.msra.mxu0 0.0
    %6021 = vmatprep.subr.mxu0 0.0
    %6022 = vmatpush1.msra.mxu0 0.0
    %6023 = vmatprep.subr.mxu0 0.0
    %6024 = vmatpush1.msra.mxu0 0.0
    %6025 = vmatprep.subr.mxu0 0.0
    %6026 = vmatpush1.msra.mxu0 0.0
    %6027 = vmatprep.subr.mxu0 0.0
    %6028 = vmatpush1.msra.mxu0 0.0
    %6029 = vmatprep.subr.mxu0 0.0
    %6030 = vmatpush1.msra.mxu0 0.0
    %6031 = vmatprep.subr.mxu0 0.0
    %6032 = vmatpush1.msra.mxu0 0.0
    %6033 = vmatprep.subr.mxu0 0.0
    %6034 = vmatpush1.msra.mxu0 0.0
    %6035 = vmatprep.subr.mxu0 0.0
    %6036 = vmatpush1.msra.mxu0 0.0
    %6037 = vmatprep.subr.mxu0 0.0
    %6038 = vmatpush1.msra.mxu0 0.0
    %6039 = vmatprep.subr.mxu0 0.0
    %6040 = vmatpush1.msra.mxu0 0.0
    %6041 = vmatprep.subr.mxu0 0.0
    %6042 = vmatpush1.msra.mxu0 0.0
    %6043 = vmatprep.subr.mxu0 0.0
    %6044 = vmatpush1.msra.mxu0 0.0
    %6045 = vmatprep.subr.mxu0 0.0
    %6046 = vmatpush1.msra.mxu0 0.0
    %6047 = vmatprep.subr.mxu0 0.0
    %6048 = vmatpush1.msra.mxu0 0.0
    %6049 = vmatprep.subr.mxu0 0.0
    %6050 = vmatpush1.msra.mxu0 0.0
    %6051 = vmatprep.subr.mxu0 0.0
    %6052 = vmatpush1.msra.mxu0 0.0
    %6053 = vmatprep.subr.mxu0 0.0
    %6054 = vmatpush1.msra.mxu0 0.0
    %6055 = vmatprep.subr.mxu0 0.0
    %6056 = vmatpush1.msra.mxu0 0.0
    %6057 = vmatprep.subr.mxu0 0.0
    %6058 = vmatpush1.msra.mxu0 0.0
    %6059 = vmatprep.subr.mxu0 0.0
    %6060 = vmatpush1.msra.mxu0 0.0
    %6061 = vmatprep.subr.mxu0 0.0
    %6062 = vmatpush1.msra.mxu0 0.0
    %6063 = vmatprep.subr.mxu0 0.0
    %6064 = vmatpush1.msra.mxu0 0.0
    %6065 = vmatprep.subr.mxu0 0.0
    %6066 = vmatpush1.msra.mxu0 0.0
    %6067 = vmatprep.subr.mxu0 0.0
    %6068 = vmatpush1.msra.mxu0 0.0
    %6069 = vmatprep.subr.mxu0 0.0
    %6070 = vmatpush1.msra.mxu0 0.0
    %6071 = vmatprep.subr.mxu0 0.0
    %6072 = vmatpush1.msra.mxu0 0.0
    %6073 = vmatprep.subr.mxu0 0.0
    %6074 = vmatpush1.msra.mxu0 0.0
    %6075 = vmatprep.subr.mxu0 0.0
    %6076 = vmatpush1.msra.mxu0 0.0
    %6077 = vmatprep.subr.mxu0 0.0
    %6078 = vmatpush1.msra.mxu0 0.0
    %6079 = vmatprep.mubr.f32.mxu0 0.0
    %6080 = vmatmul.mubr.f32.gmra.mrb[0].mxu0 %v6007
    %v6081 = vpop.f32.mrb[0].mxu0
    %v6082 = vadd.f32 0.0, %v6081
    %v6083 = vpop.f32.mrb[0].mxu0
    %6084 = vmatprep.mubr.f32.mxu0 0.0
    %6085 = vmatmul.mubr.f32.gmra.mrb[0].mxu0 %v6010
    %v6086 = vpop.f32.mrb[0].mxu0
    %v6087 = vadd.f32 0.0, %v6086
    %v6088 = vpop.f32.mrb[0].mxu0
    %6089 = vmatprep.mubr.f32.mxu0 0.0
    %6090 = vmatmul.mubr.f32.gmra.mrb[0].mxu0 %v6013
    %v6091 = vpop.f32.mrb[0].mxu0
    %v6092 = vadd.f32 0.0, %v6091
    %v6093 = vpop.f32.mrb[0].mxu0
    %6094 = vdwg.mxu0
    %v6095 = vadd.f32 %v5754, %v6082
    %v6096 = vadd.f32 %v5759, %v6087
    %v6097 = vadd.f32 %v5764, %v6092
    %6098 = vrot.lane.b32.xlu0 %v5100, 104
    %v6099 = vpop.permute.xlu0 %6098
    %6100 = vrot.lane.b32.xlu0 %v5102, 104
    %v6101 = vpop.permute.xlu0 %6100
    %6102 = vrot.lane.b32.xlu0 %v5101, 104
    %v6103 = vpop.permute.xlu0 %6102
    %6104 = vrot.lane.b32.xlu0 %v5107, 72
    %v6105 = vpop.permute.xlu0 %6104
    %6106 = vrot.lane.b32.xlu0 %v5109, 72
    %v6107 = vpop.permute.xlu0 %6106
    %6108 = vrot.lane.b32.xlu0 %v5108, 72
    %v6109 = vpop.permute.xlu0 %6108
    %v6110 = vsel %vm496, %v6099, 0
    %v6112 = vsel %vm496, %v6101, 0
    %v6114 = vsel %vm496, %v6103, 0
    %v6116 = vsel %vm496, %v6105, 0
    %v6118 = vsel %vm496, %v6107, 0
    %v6120 = vsel %vm496, %v6109, 0
    %6122 = vmatprep.subr.mxu0 0.0
    %6123 = vmatpush1.xpose.msra.mxu0 %v6116
    %6124 = vmatprep.subr.mxu0 0.0
    %6125 = vmatpush1.xpose.msra.mxu0 %v6118
    %6126 = vmatprep.subr.mxu0 0.0
    %6127 = vmatpush1.xpose.msra.mxu0 %v6120
    %6128 = vmatprep.subr.mxu0 0.0
    %6129 = vmatpush1.xpose.msra.mxu0 0.0
    %6130 = vmatprep.subr.mxu0 0.0
    %6131 = vmatpush1.xpose.msra.mxu0 0.0
    %6132 = vmatprep.subr.mxu0 0.0
    %6133 = vmatpush1.xpose.msra.mxu0 0.0
    %6134 = vmatprep.subr.mxu0 0.0
    %6135 = vmatpush1.xpose.msra.mxu0 0.0
    %6136 = vmatprep.subr.mxu0 0.0
    %6137 = vmatpush1.xpose.msra.mxu0 0.0
    %6138 = vmatprep.subr.mxu0 0.0
    %6139 = vmatpush1.xpose.msra.mxu0 0.0
    %6140 = vmatprep.subr.mxu0 0.0
    %6141 = vmatpush1.xpose.msra.mxu0 0.0
    %6142 = vmatprep.subr.mxu0 0.0
    %6143 = vmatpush1.xpose.msra.mxu0 0.0
    %6144 = vmatprep.subr.mxu0 0.0
    %6145 = vmatpush1.xpose.msra.mxu0 0.0
    %6146 = vmatprep.subr.mxu0 0.0
    %6147 = vmatpush1.xpose.msra.mxu0 0.0
    %6148 = vmatprep.subr.mxu0 0.0
    %6149 = vmatpush1.xpose.msra.mxu0 0.0
    %6150 = vmatprep.subr.mxu0 0.0
    %6151 = vmatpush1.xpose.msra.mxu0 0.0
    %6152 = vmatprep.subr.mxu0 0.0
    %6153 = vmatpush1.xpose.msra.mxu0 0.0
    %6154 = vmatprep.subr.mxu0 0.0
    %6155 = vmatpush1.xpose.msra.mxu0 0.0
    %6156 = vmatprep.subr.mxu0 0.0
    %6157 = vmatpush1.xpose.msra.mxu0 0.0
    %6158 = vmatprep.subr.mxu0 0.0
    %6159 = vmatpush1.xpose.msra.mxu0 0.0
    %6160 = vmatprep.subr.mxu0 0.0
    %6161 = vmatpush1.xpose.msra.mxu0 0.0
    %6162 = vmatprep.subr.mxu0 0.0
    %6163 = vmatpush1.xpose.msra.mxu0 0.0
    %6164 = vmatprep.subr.mxu0 0.0
    %6165 = vmatpush1.xpose.msra.mxu0 0.0
    %6166 = vmatprep.subr.mxu0 0.0
    %6167 = vmatpush1.xpose.msra.mxu0 0.0
    %6168 = vmatprep.subr.mxu0 0.0
    %6169 = vmatpush1.xpose.msra.mxu0 0.0
    %6170 = vmatprep.subr.mxu0 0.0
    %6171 = vmatpush1.xpose.msra.mxu0 0.0
    %6172 = vmatprep.subr.mxu0 0.0
    %6173 = vmatpush1.xpose.msra.mxu0 0.0
    %6174 = vmatprep.subr.mxu0 0.0
    %6175 = vmatpush1.xpose.msra.mxu0 0.0
    %6176 = vmatprep.subr.mxu0 0.0
    %6177 = vmatpush1.xpose.msra.mxu0 0.0
    %6178 = vmatprep.subr.mxu0 0.0
    %6179 = vmatpush1.xpose.msra.mxu0 0.0
    %6180 = vmatprep.subr.mxu0 0.0
    %6181 = vmatpush1.xpose.msra.mxu0 0.0
    %6182 = vmatprep.subr.mxu0 0.0
    %6183 = vmatpush1.xpose.msra.mxu0 0.0
    %6184 = vmatprep.subr.mxu0 0.0
    %6185 = vmatpush1.xpose.msra.mxu0 0.0
    %6186 = vmatprep.mubr.f32.mxu0 0.0
    %6187 = vmatmul.mubr.f32.gmra.mrb[0].mxu0 %v6110
    %v6188 = vpop.f32.mrb[0].mxu0
    %v6189 = vadd.f32 0.0, %v6188
    %v6190 = vpop.f32.mrb[0].mxu0
    %6191 = vmatprep.mubr.f32.mxu0 0.0
    %6192 = vmatmul.mubr.f32.gmra.mrb[0].mxu0 %v6112
    %v6193 = vpop.f32.mrb[0].mxu0
    %v6194 = vadd.f32 0.0, %v6193
    %v6195 = vpop.f32.mrb[0].mxu0
    %6196 = vmatprep.mubr.f32.mxu0 0.0
    %6197 = vmatmul.mubr.f32.gmra.mrb[0].mxu0 %v6114
    %v6198 = vpop.f32.mrb[0].mxu0
    %v6199 = vadd.f32 0.0, %v6198
    %v6200 = vpop.f32.mrb[0].mxu0
    %6201 = vdwg.mxu0
    %v6202 = vmul.f32 %v6189, 0.35355338
    %v6203 = vmul.f32 %v6194, 0.35355338
    %v6204 = vmul.f32 %v6199, 0.35355338
    %v6205 = vsel %vm595, %v6202, -inf
    %6206 = vmax.xlane.f32.xlu0 %v6205
    %v6207 = vpop.xlane.xlu0 %6206
    %v6208 = vsel %vm595, %v6203, -inf
    %6209 = vmax.xlane.f32.xlu0 %v6208
    %v6210 = vpop.xlane.xlu0 %6209
    %v6211 = vsel %vm602, %v6204, -inf
    %6212 = vmax.xlane.f32.xlu0 %v6211
    %v6213 = vpop.xlane.xlu0 %6212
    %v6214 = vsub.f32 %v6202, %v6207
    %v6215 = vsub.f32 %v6203, %v6210
    %v6216 = vsub.f32 %v6204, %v6213
    %v6217 = vmul.f32 %v6214, 1.442695
    %v6218 = vpow.pop %v6217
    %v6219 = vmul.f32 %v6215, 1.442695
    %v6220 = vpow.pop %v6219
    %v6221 = vmul.f32 %v6216, 1.442695
    %v6222 = vpow.pop %v6221
    %v6223 = vsel %vm595, %v6218, 0.0
    %6224 = vadd.xlane.f32.xlu0 %v6223
    %v6225 = vpop.xlane.xlu0 %6224
    %v6226 = vsel %vm595, %v6220, 0.0
    %6227 = vadd.xlane.f32.xlu0 %v6226
    %v6228 = vpop.xlane.xlu0 %6227
    %v6229 = vsel %vm602, %v6222, 0.0
    %6230 = vadd.xlane.f32.xlu0 %v6229
    %v6231 = vpop.xlane.xlu0 %6230
    %v6232 = vrcp.pop %v6225
    %v6233 = vmul.f32 %v6218, %v6232
    %v6234 = vrcp.pop %v6228
    %v6235 = vmul.f32 %v6220, %v6234
    %v6236 = vrcp.pop %v6231
    %v6237 = vmul.f32 %v6222, %v6236
    %6238 = vrot.lane.b32.xlu0 %v5248, 40
    %v6239 = vpop.permute.xlu0 %6238
    %6240 = vrot.lane.b32.xlu0 %v5250, 40
    %v6241 = vpop.permute.xlu0 %6240
    %6242 = vrot.lane.b32.xlu0 %v5249, 40
    %v6243 = vpop.permute.xlu0 %6242
    %v6247 = vsel %vm595, %v6233, 0
    %v6250 = vsel %vm595, %v6235, 0
    %v6253 = vsel %vm595, %v6237, 0
    %v6255 = vsel %vm650, %v6243, 0
    %6257 = vmatprep.subr.mxu0 0.0
    %6258 = vmatpush1.msra.mxu0 %v6239
    %6259 = vmatprep.subr.mxu0 0.0
    %6260 = vmatpush1.msra.mxu0 %v6241
    %6261 = vmatprep.subr.mxu0 0.0
    %6262 = vmatpush1.msra.mxu0 %v6255
    %6263 = vmatprep.subr.mxu0 0.0
    %6264 = vmatpush1.msra.mxu0 0.0
    %6265 = vmatprep.subr.mxu0 0.0
    %6266 = vmatpush1.msra.mxu0 0.0
    %6267 = vmatprep.subr.mxu0 0.0
    %6268 = vmatpush1.msra.mxu0 0.0
    %6269 = vmatprep.subr.mxu0 0.0
    %6270 = vmatpush1.msra.mxu0 0.0
    %6271 = vmatprep.subr.mxu0 0.0
    %6272 = vmatpush1.msra.mxu0 0.0
    %6273 = vmatprep.subr.mxu0 0.0
    %6274 = vmatpush1.msra.mxu0 0.0
    %6275 = vmatprep.subr.mxu0 0.0
    %6276 = vmatpush1.msra.mxu0 0.0
    %6277 = vmatprep.subr.mxu0 0.0
    %6278 = vmatpush1.msra.mxu0 0.0
    %6279 = vmatprep.subr.mxu0 0.0
    %6280 = vmatpush1.msra.mxu0 0.0
    %6281 = vmatprep.subr.mxu0 0.0
    %6282 = vmatpush1.msra.mxu0 0.0
    %6283 = vmatprep.subr.mxu0 0.0
    %6284 = vmatpush1.msra.mxu0 0.0
    %6285 = vmatprep.subr.mxu0 0.0
    %6286 = vmatpush1.msra.mxu0 0.0
    %6287 = vmatprep.subr.mxu0 0.0
    %6288 = vmatpush1.msra.mxu0 0.0
    %6289 = vmatprep.subr.mxu0 0.0
    %6290 = vmatpush1.msra.mxu0 0.0
    %6291 = vmatprep.subr.mxu0 0.0
    %6292 = vmatpush1.msra.mxu0 0.0
    %6293 = vmatprep.subr.mxu0 0.0
    %6294 = vmatpush1.msra.mxu0 0.0
    %6295 = vmatprep.subr.mxu0 0.0
    %6296 = vmatpush1.msra.mxu0 0.0
    %6297 = vmatprep.subr.mxu0 0.0
    %6298 = vmatpush1.msra.mxu0 0.0
    %6299 = vmatprep.subr.mxu0 0.0
    %6300 = vmatpush1.msra.mxu0 0.0
    %6301 = vmatprep.subr.mxu0 0.0
    %6302 = vmatpush1.msra.mxu0 0.0
    %6303 = vmatprep.subr.mxu0 0.0
    %6304 = vmatpush1.msra.mxu0 0.0
    %6305 = vmatprep.subr.mxu0 0.0
    %6306 = vmatpush1.msra.mxu0 0.0
    %6307 = vmatprep.subr.mxu0 0.0
    %6308 = vmatpush1.msra.mxu0 0.0
    %6309 = vmatprep.subr.mxu0 0.0
    %6310 = vmatpush1.msra.mxu0 0.0
    %6311 = vmatprep.subr.mxu0 0.0
    %6312 = vmatpush1.msra.mxu0 0.0
    %6313 = vmatprep.subr.mxu0 0.0
    %6314 = vmatpush1.msra.mxu0 0.0
    %6315 = vmatprep.subr.mxu0 0.0
    %6316 = vmatpush1.msra.mxu0 0.0
    %6317 = vmatprep.subr.mxu0 0.0
    %6318 = vmatpush1.msra.mxu0 0.0
    %6319 = vmatprep.subr.mxu0 0.0
    %6320 = vmatpush1.msra.mxu0 0.0
    %6321 = vmatprep.mubr.f32.mxu0 0.0
    %6322 = vmatmul.mubr.f32.gmra.mrb[0].mxu0 %v6247
    %v6323 = vpop.f32.mrb[0].mxu0
    %v6324 = vadd.f32 0.0, %v6323
    %v6325 = vpop.f32.mrb[0].mxu0
    %6326 = vmatprep.mubr.f32.mxu0 0.0
    %6327 = vmatmul.mubr.f32.gmra.mrb[0].mxu0 %v6250
    %v6328 = vpop.f32.mrb[0].mxu0
    %v6329 = vadd.f32 0.0, %v6328
    %v6330 = vpop.f32.mrb[0].mxu0
    %6331 = vmatprep.mubr.f32.mxu0 0.0
    %6332 = vmatmul.mubr.f32.gmra.mrb[0].mxu0 %v6253
    %v6333 = vpop.f32.mrb[0].mxu0
    %v6334 = vadd.f32 0.0, %v6333
    %v6335 = vpop.f32.mrb[0].mxu0
    %6336 = vdwg.mxu0
    %v6338 = vsel %vm496, %v6324, 0
    %v6341 = vsel %vm496, %v6329, 0
    %v6344 = vsel %vm496, %v6334, 0
    %6346 = vmatprep.subr.mxu0 0.0
    %6347 = vmatpush1.msra.mxu0 %v3774
    %6348 = vmatprep.subr.mxu0 0.0
    %6349 = vmatpush1.msra.mxu0 0.0
    %6350 = vmatprep.subr.mxu0 0.0
    %6351 = vmatpush1.msra.mxu0 0.0
    %6352 = vmatprep.subr.mxu0 0.0
    %6353 = vmatpush1.msra.mxu0 0.0
    %6354 = vmatprep.subr.mxu0 0.0
    %6355 = vmatpush1.msra.mxu0 0.0
    %6356 = vmatprep.subr.mxu0 0.0
    %6357 = vmatpush1.msra.mxu0 0.0
    %6358 = vmatprep.subr.mxu0 0.0
    %6359 = vmatpush1.msra.mxu0 0.0
    %6360 = vmatprep.subr.mxu0 0.0
    %6361 = vmatpush1.msra.mxu0 0.0
    %6362 = vmatprep.subr.mxu0 0.0
    %6363 = vmatpush1.msra.mxu0 0.0
    %6364 = vmatprep.subr.mxu0 0.0
    %6365 = vmatpush1.msra.mxu0 0.0
    %6366 = vmatprep.subr.mxu0 0.0
    %6367 = vmatpush1.msra.mxu0 0.0
    %6368 = vmatprep.subr.mxu0 0.0
    %6369 = vmatpush1.msra.mxu0 0.0
    %6370 = vmatprep.subr.mxu0 0.0
    %6371 = vmatpush1.msra.mxu0 0.0
    %6372 = vmatprep.subr.mxu0 0.0
    %6373 = vmatpush1.msra.mxu0 0.0
    %6374 = vmatprep.subr.mxu0 0.0
    %6375 = vmatpush1.msra.mxu0 0.0
    %6376 = vmatprep.subr.mxu0 0.0
    %6377 = vmatpush1.msra.mxu0 0.0
    %6378 = vmatprep.subr.mxu0 0.0
    %6379 = vmatpush1.msra.mxu0 0.0
    %6380 = vmatprep.subr.mxu0 0.0
    %6381 = vmatpush1.msra.mxu0 0.0
    %6382 = vmatprep.subr.mxu0 0.0
    %6383 = vmatpush1.msra.mxu0 0.0
    %6384 = vmatprep.subr.mxu0 0.0
    %6385 = vmatpush1.msra.mxu0 0.0
    %6386 = vmatprep.subr.mxu0 0.0
    %6387 = vmatpush1.msra.mxu0 0.0
    %6388 = vmatprep.subr.mxu0 0.0
    %6389 = vmatpush1.msra.mxu0 0.0
    %6390 = vmatprep.subr.mxu0 0.0
    %6391 = vmatpush1.msra.mxu0 0.0
    %6392 = vmatprep.subr.mxu0 0.0
    %6393 = vmatpush1.msra.mxu0 0.0
    %6394 = vmatprep.subr.mxu0 0.0
    %6395 = vmatpush1.msra.mxu0 0.0
    %6396 = vmatprep.subr.mxu0 0.0
    %6397 = vmatpush1.msra.mxu0 0.0
    %6398 = vmatprep.subr.mxu0 0.0
    %6399 = vmatpush1.msra.mxu0 0.0
    %6400 = vmatprep.subr.mxu0 0.0
    %6401 = vmatpush1.msra.mxu0 0.0
    %6402 = vmatprep.subr.mxu0 0.0
    %6403 = vmatpush1.msra.mxu0 0.0
    %6404 = vmatprep.subr.mxu0 0.0
    %6405 = vmatpush1.msra.mxu0 0.0
    %6406 = vmatprep.subr.mxu0 0.0
    %6407 = vmatpush1.msra.mxu0 0.0
    %6408 = vmatprep.subr.mxu0 0.0
    %6409 = vmatpush1.msra.mxu0 0.0
    %6410 = vmatprep.mubr.f32.mxu0 0.0
    %6411 = vmatmul.mubr.f32.gmra.mrb[0].mxu0 %v6338
    %v6412 = vpop.f32.mrb[0].mxu0
    %v6413 = vadd.f32 0.0, %v6412
    %v6414 = vpop.f32.mrb[0].mxu0
    %6415 = vmatprep.mubr.f32.mxu0 0.0
    %6416 = vmatmul.mubr.f32.gmra.mrb[0].mxu0 %v6341
    %v6417 = vpop.f32.mrb[0].mxu0
    %v6418 = vadd.f32 0.0, %v6417
    %v6419 = vpop.f32.mrb[0].mxu0
    %6420 = vmatprep.mubr.f32.mxu0 0.0
    %6421 = vmatmul.mubr.f32.gmra.mrb[0].mxu0 %v6344
    %v6422 = vpop.f32.mrb[0].mxu0
    %v6423 = vadd.f32 0.0, %v6422
    %v6424 = vpop.f32.mrb[0].mxu0
    %6425 = vdwg.mxu0
    %v6426 = vadd.f32 %v6095, %v6413
    %v6427 = vadd.f32 %v6096, %v6418
    %v6428 = vadd.f32 %v6097, %v6423
    %v6432 = vrot.slane %v6426, 7
    %v6433 = vrot.slane %v6427, 7
    %v6434 = vsel %vm650, %v6432, %v6433
    %v6435 = vrot.slane %v6428, 7
    %v6436 = vsel %vm650, %v6433, %v6435
    %v6440 = vsel %vm650, %v5095, %v6432
    %v6441 = vadd.f32 %v3534, %v5093
    %v6442 = vadd.f32 %v3535, %v5094
    %v6443 = vadd.f32 %v3536, %v6440
    %v6444 = vadd.f32 %v3537, %v6434
    %v6445 = vadd.f32 %v3538, %v6436
    %v6446 = vlaneseq
    %v6447 = vshrl.u32 %v6446, 7
    %v6448 = vsub.s32 5, %v6447
    %v6449 = vrot.slane %v3540, %v6448
    %v6450 = vadd.f32 %v6441, %v6449
    %v6451 = vadd.f32 %v6442, %v6449
    %v6452 = vadd.f32 %v6443, %v6449
    %v6453 = vadd.f32 %v6444, %v6449
    %v6454 = vadd.f32 %v6445, %v6449
    %v6455 = vsel %vm168, %v6450, 0.0
    %6456 = vadd.xlane.f32.xlu0 %v6455
    %v6457 = vpop.xlane.xlu0 %6456
    %v6458 = vsel %vm168, %v6451, 0.0
    %6459 = vadd.xlane.f32.xlu0 %v6458
    %v6460 = vpop.xlane.xlu0 %6459
    %v6461 = vsel %vm168, %v6452, 0.0
    %6462 = vadd.xlane.f32.xlu0 %v6461
    %v6463 = vpop.xlane.xlu0 %6462
    %v6464 = vsel %vm168, %v6453, 0.0
    %6465 = vadd.xlane.f32.xlu0 %v6464
    %v6466 = vpop.xlane.xlu0 %6465
    %v6467 = vsel %vm181, %v6454, 0.0
    %6468 = vadd.xlane.f32.xlu0 %v6467
    %v6469 = vpop.xlane.xlu0 %6468
    %v6470 = vmul.f32 %v6457, %v185
    %v6471 = vmul.f32 %v6460, %v185
    %v6472 = vmul.f32 %v6463, %v185
    %v6473 = vmul.f32 %v6466, %v185
    %v6474 = vmul.f32 %v6469, %v185
    %v6475 = vsub.f32 %v6450, %v6470
    %v6476 = vsub.f32 %v6451, %v6471
    %v6477 = vsub.f32 %v6452, %v6472
    %v6478 = vsub.f32 %v6453, %v6473
    %v6479 = vsub.f32 %v6454, %v6474
    %v6480 = vmul.f32 %v6475, %v6475
    %v6481 = vmul.f32 %v6476, %v6476
    %v6482 = vmul.f32 %v6477, %v6477
    %v6483 = vmul.f32 %v6478, %v6478
    %v6484 = vmul.f32 %v6479, %v6479
    %v6485 = vsel %vm168, %v6480, 0.0
    %6486 = vadd.xlane.f32.xlu0 %v6485
    %v6487 = vpop.xlane.xlu0 %6486
    %v6488 = vsel %vm168, %v6481, 0.0
    %6489 = vadd.xlane.f32.xlu0 %v6488
    %v6490 = vpop.xlane.xlu0 %6489
    %v6491 = vsel %vm168, %v6482, 0.0
    %6492 = vadd.xlane.f32.xlu0 %v6491
    %v6493 = vpop.xlane.xlu0 %6492
    %v6494 = vsel %vm168, %v6483, 0.0
    %6495 = vadd.xlane.f32.xlu0 %v6494
    %v6496 = vpop.xlane.xlu0 %6495
    %v6497 = vsel %vm181, %v6484, 0.0
    %6498 = vadd.xlane.f32.xlu0 %v6497
    %v6499 = vpop.xlane.xlu0 %6498
    %v6500 = vmul.f32 %v6487, %v185
    %v6501 = vmul.f32 %v6490, %v185
    %v6502 = vmul.f32 %v6493, %v185
    %v6503 = vmul.f32 %v6496, %v185
    %v6504 = vmul.f32 %v6499, %v185
    %v6505 = vadd.f32 %v6500, 1e-05
    %v6506 = vadd.f32 %v6501, 1e-05
    %v6507 = vadd.f32 %v6502, 1e-05
    %v6508 = vadd.f32 %v6503, 1e-05
    %v6509 = vadd.f32 %v6504, 1e-05
    %v6510 = vrsqrt.pop %v6505
    %v6511 = vrsqrt.pop %v6506
    %v6512 = vrsqrt.pop %v6507
    %v6513 = vrsqrt.pop %v6508
    %v6514 = vrsqrt.pop %v6509
    %v6515 = vmul.f32 %v6475, %v6510
    %v6516 = vmul.f32 %v6476, %v6511
    %v6517 = vmul.f32 %v6477, %v6512
    %v6518 = vmul.f32 %v6478, %v6513
    %v6519 = vmul.f32 %v6479, %v6514
    %v6520 = vlaneseq
    %v6521 = vshrl.u32 %v6520, 7
    %v6522 = vsub.s32 6, %v6521
    %v6523 = vrot.slane %v3540, %v6522
    %v6524 = vmul.f32 %v6515, %v6523
    %v6525 = vmul.f32 %v6516, %v6523
    %v6526 = vmul.f32 %v6517, %v6523
    %v6527 = vmul.f32 %v6518, %v6523
    %v6528 = vmul.f32 %v6519, %v6523
    %v6529 = vlaneseq
    %v6530 = vshrl.u32 %v6529, 7
    %v6531 = vsub.s32 7, %v6530
    %v6532 = vrot.slane %v3540, %v6531
    %v6533 = vadd.f32 %v6524, %v6532
    %v6534 = vadd.f32 %v6525, %v6532
    %v6535 = vadd.f32 %v6526, %v6532
    %v6536 = vadd.f32 %v6527, %v6532
    %v6537 = vadd.f32 %v6528, %v6532
    %s6538 = scalar_lea.vmem %s6, 32
    %v6539 = vld [vmem:[%s6538] sm:$0xff]
    %v6540 = vld [vmem:[%s6538 + $0x8] sm:$0xff]
    %v6541 = vld [vmem:[%s6538 + $0x10] sm:$0xff]
    %v6542 = vld [vmem:[%s6538 + $0x18] sm:$0xff]
    %s6543 = scalar_lea.vmem %s9, 1
    %v6544 = vld [vmem:[%s6543] sm:$0x1]
    %v6546 = vlaneseq
    %v6547 = vshrl.u32 %v6546, 7
    %v6548 = vsub.s32 0, %v6547
    %v6549 = vrot.slane %v6544, %v6548
    %v6552 = vsel %vm168, %v6533, 0
    %v6555 = vsel %vm168, %v6534, 0
    %v6558 = vsel %vm168, %v6535, 0
    %v6561 = vsel %vm168, %v6536, 0
    %v6564 = vsel %vm168, %v6537, 0
    %6566 = vmatprep.subr.mxu0 0.0
    %6567 = vmatpush1.msra.mxu0 %v6539
    %6568 = vmatprep.subr.mxu0 0.0
    %6569 = vmatpush1.msra.mxu0 %v6540
    %6570 = vmatprep.subr.mxu0 0.0
    %6571 = vmatpush1.msra.mxu0 %v6541
    %6572 = vmatprep.subr.mxu0 0.0
    %6573 = vmatpush1.msra.mxu0 %v6542
    %6574 = vmatprep.subr.mxu0 0.0
    %6575 = vmatpush1.msra.mxu0 0.0
    %6576 = vmatprep.subr.mxu0 0.0
    %6577 = vmatpush1.msra.mxu0 0.0
    %6578 = vmatprep.subr.mxu0 0.0
    %6579 = vmatpush1.msra.mxu0 0.0
    %6580 = vmatprep.subr.mxu0 0.0
    %6581 = vmatpush1.msra.mxu0 0.0
    %6582 = vmatprep.subr.mxu0 0.0
    %6583 = vmatpush1.msra.mxu0 0.0
    %6584 = vmatprep.subr.mxu0 0.0
    %6585 = vmatpush1.msra.mxu0 0.0
    %6586 = vmatprep.subr.mxu0 0.0
    %6587 = vmatpush1.msra.mxu0 0.0
    %6588 = vmatprep.subr.mxu0 0.0
    %6589 = vmatpush1.msra.mxu0 0.0
    %6590 = vmatprep.subr.mxu0 0.0
    %6591 = vmatpush1.msra.mxu0 0.0
    %6592 = vmatprep.subr.mxu0 0.0
    %6593 = vmatpush1.msra.mxu0 0.0
    %6594 = vmatprep.subr.mxu0 0.0
    %6595 = vmatpush1.msra.mxu0 0.0
    %6596 = vmatprep.subr.mxu0 0.0
    %6597 = vmatpush1.msra.mxu0 0.0
    %6598 = vmatprep.subr.mxu0 0.0
    %6599 = vmatpush1.msra.mxu0 0.0
    %6600 = vmatprep.subr.mxu0 0.0
    %6601 = vmatpush1.msra.mxu0 0.0
    %6602 = vmatprep.subr.mxu0 0.0
    %6603 = vmatpush1.msra.mxu0 0.0
    %6604 = vmatprep.subr.mxu0 0.0
    %6605 = vmatpush1.msra.mxu0 0.0
    %6606 = vmatprep.subr.mxu0 0.0
    %6607 = vmatpush1.msra.mxu0 0.0
    %6608 = vmatprep.subr.mxu0 0.0
    %6609 = vmatpush1.msra.mxu0 0.0
    %6610 = vmatprep.subr.mxu0 0.0
    %6611 = vmatpush1.msra.mxu0 0.0
    %6612 = vmatprep.subr.mxu0 0.0
    %6613 = vmatpush1.msra.mxu0 0.0
    %6614 = vmatprep.subr.mxu0 0.0
    %6615 = vmatpush1.msra.mxu0 0.0
    %6616 = vmatprep.subr.mxu0 0.0
    %6617 = vmatpush1.msra.mxu0 0.0
    %6618 = vmatprep.subr.mxu0 0.0
    %6619 = vmatpush1.msra.mxu0 0.0
    %6620 = vmatprep.subr.mxu0 0.0
    %6621 = vmatpush1.msra.mxu0 0.0
    %6622 = vmatprep.subr.mxu0 0.0
    %6623 = vmatpush1.msra.mxu0 0.0
    %6624 = vmatprep.subr.mxu0 0.0
    %6625 = vmatpush1.msra.mxu0 0.0
    %6626 = vmatprep.subr.mxu0 0.0
    %6627 = vmatpush1.msra.mxu0 0.0
    %6628 = vmatprep.subr.mxu0 0.0
    %6629 = vmatpush1.msra.mxu0 0.0
    %6630 = vmatprep.mubr.f32.mxu0 0.0
    %6631 = vmatmul.mubr.f32.gmra.mrb[0].mxu0 %v6552
    %v6632 = vpop.f32.mrb[0].mxu0
    %v6633 = vadd.f32 %v6549, %v6632
    %v6634 = vpop.f32.mrb[0].mxu0
    %6635 = vmatprep.mubr.f32.mxu0 0.0
    %6636 = vmatmul.mubr.f32.gmra.mrb[0].mxu0 %v6555
    %v6637 = vpop.f32.mrb[0].mxu0
    %v6638 = vadd.f32 %v6549, %v6637
    %v6639 = vpop.f32.mrb[0].mxu0
    %6640 = vmatprep.mubr.f32.mxu0 0.0
    %6641 = vmatmul.mubr.f32.gmra.mrb[0].mxu0 %v6558
    %v6642 = vpop.f32.mrb[0].mxu0
    %v6643 = vadd.f32 %v6549, %v6642
    %v6644 = vpop.f32.mrb[0].mxu0
    %6645 = vmatprep.mubr.f32.mxu0 0.0
    %6646 = vmatmul.mubr.f32.gmra.mrb[0].mxu0 %v6561
    %v6647 = vpop.f32.mrb[0].mxu0
    %v6648 = vadd.f32 %v6549, %v6647
    %v6649 = vpop.f32.mrb[0].mxu0
    %6650 = vmatprep.mubr.f32.mxu0 0.0
    %6651 = vmatmul.mubr.f32.gmra.mrb[0].mxu0 %v6564
    %v6652 = vpop.f32.mrb[0].mxu0
    %v6653 = vadd.f32 %v6549, %v6652
    %v6654 = vpop.f32.mrb[0].mxu0
    %6655 = vdwg.mxu0
    %v6656 = vmul.f32 %v6633, 0.5
    %v6657 = vmul.f32 %v6638, 0.5
    %v6658 = vmul.f32 %v6643, 0.5
    %v6659 = vmul.f32 %v6648, 0.5
    %v6660 = vmul.f32 %v6653, 0.5
    %v6661 = vmul.f32 %v6633, 0.044715
    %v6662 = vmul.f32 %v6638, 0.044715
    %v6663 = vmul.f32 %v6643, 0.044715
    %v6664 = vmul.f32 %v6648, 0.044715
    %v6665 = vmul.f32 %v6653, 0.044715
    %v6666 = vmul.f32 %v6661, %v6633
    %v6667 = vmul.f32 %v6662, %v6638
    %v6668 = vmul.f32 %v6663, %v6643
    %v6669 = vmul.f32 %v6664, %v6648
    %v6670 = vmul.f32 %v6665, %v6653
    %v6671 = vmul.f32 %v6666, %v6633
    %v6672 = vmul.f32 %v6667, %v6638
    %v6673 = vmul.f32 %v6668, %v6643
    %v6674 = vmul.f32 %v6669, %v6648
    %v6675 = vmul.f32 %v6670, %v6653
    %v6676 = vadd.f32 %v6633, %v6671
    %v6677 = vadd.f32 %v6638, %v6672
    %v6678 = vadd.f32 %v6643, %v6673
    %v6679 = vadd.f32 %v6648, %v6674
    %v6680 = vadd.f32 %v6653, %v6675
    %v6681 = vmul.f32 %v6676, 0.7978846
    %v6682 = vmul.f32 %v6677, 0.7978846
    %v6683 = vmul.f32 %v6678, 0.7978846
    %v6684 = vmul.f32 %v6679, 0.7978846
    %v6685 = vmul.f32 %v6680, 0.7978846
    %v6686 = vtanh.pop %v6681
    %v6687 = vtanh.pop %v6682
    %v6688 = vtanh.pop %v6683
    %v6689 = vtanh.pop %v6684
    %v6690 = vtanh.pop %v6685
    %v6691 = vadd.f32 %v6686, 1.0
    %v6692 = vadd.f32 %v6687, 1.0
    %v6693 = vadd.f32 %v6688, 1.0
    %v6694 = vadd.f32 %v6689, 1.0
    %v6695 = vadd.f32 %v6690, 1.0
    %v6696 = vmul.f32 %v6656, %v6691
    %v6697 = vmul.f32 %v6657, %v6692
    %v6698 = vmul.f32 %v6658, %v6693
    %v6699 = vmul.f32 %v6659, %v6694
    %v6700 = vmul.f32 %v6660, %v6695
    %s6701 = scalar_lea.vmem %s7, 64
    %v6702 = vld [vmem:[%s6701] sm:$0xff]
    %v6703 = vld [vmem:[%s6701 + $0x8] sm:$0xff]
    %v6704 = vld [vmem:[%s6701 + $0x10] sm:$0xff]
    %v6705 = vld [vmem:[%s6701 + $0x18] sm:$0xff]
    %v6706 = vld [vmem:[%s6701 + $0x20] sm:$0xff]
    %v6707 = vld [vmem:[%s6701 + $0x28] sm:$0xff]
    %v6708 = vld [vmem:[%s6701 + $0x30] sm:$0xff]
    %v6709 = vld [vmem:[%s6701 + $0x38] sm:$0xff]
    %v6710 = vlaneseq
    %v6711 = vshrl.u32 %v6710, 7
    %v6712 = vsub.s32 0, %v6711
    %v6713 = vrot.slane %v3541, %v6712
    %v6715 = vsel %vm3428, %v6696, 0
    %v6718 = vsel %vm3428, %v6697, 0
    %v6721 = vsel %vm3428, %v6698, 0
    %v6724 = vsel %vm3428, %v6699, 0
    %v6727 = vsel %vm3428, %v6700, 0
    %6729 = vmatprep.subr.mxu0 0.0
    %6730 = vmatpush1.msra.mxu0 %v6702
    %6731 = vmatprep.subr.mxu0 0.0
    %6732 = vmatpush1.msra.mxu0 %v6703
    %6733 = vmatprep.subr.mxu0 0.0
    %6734 = vmatpush1.msra.mxu0 %v6704
    %6735 = vmatprep.subr.mxu0 0.0
    %6736 = vmatpush1.msra.mxu0 %v6705
    %6737 = vmatprep.subr.mxu0 0.0
    %6738 = vmatpush1.msra.mxu0 %v6706
    %6739 = vmatprep.subr.mxu0 0.0
    %6740 = vmatpush1.msra.mxu0 %v6707
    %6741 = vmatprep.subr.mxu0 0.0
    %6742 = vmatpush1.msra.mxu0 %v6708
    %6743 = vmatprep.subr.mxu0 0.0
    %6744 = vmatpush1.msra.mxu0 %v6709
    %6745 = vmatprep.subr.mxu0 0.0
    %6746 = vmatpush1.msra.mxu0 0.0
    %6747 = vmatprep.subr.mxu0 0.0
    %6748 = vmatpush1.msra.mxu0 0.0
    %6749 = vmatprep.subr.mxu0 0.0
    %6750 = vmatpush1.msra.mxu0 0.0
    %6751 = vmatprep.subr.mxu0 0.0
    %6752 = vmatpush1.msra.mxu0 0.0
    %6753 = vmatprep.subr.mxu0 0.0
    %6754 = vmatpush1.msra.mxu0 0.0
    %6755 = vmatprep.subr.mxu0 0.0
    %6756 = vmatpush1.msra.mxu0 0.0
    %6757 = vmatprep.subr.mxu0 0.0
    %6758 = vmatpush1.msra.mxu0 0.0
    %6759 = vmatprep.subr.mxu0 0.0
    %6760 = vmatpush1.msra.mxu0 0.0
    %6761 = vmatprep.subr.mxu0 0.0
    %6762 = vmatpush1.msra.mxu0 0.0
    %6763 = vmatprep.subr.mxu0 0.0
    %6764 = vmatpush1.msra.mxu0 0.0
    %6765 = vmatprep.subr.mxu0 0.0
    %6766 = vmatpush1.msra.mxu0 0.0
    %6767 = vmatprep.subr.mxu0 0.0
    %6768 = vmatpush1.msra.mxu0 0.0
    %6769 = vmatprep.subr.mxu0 0.0
    %6770 = vmatpush1.msra.mxu0 0.0
    %6771 = vmatprep.subr.mxu0 0.0
    %6772 = vmatpush1.msra.mxu0 0.0
    %6773 = vmatprep.subr.mxu0 0.0
    %6774 = vmatpush1.msra.mxu0 0.0
    %6775 = vmatprep.subr.mxu0 0.0
    %6776 = vmatpush1.msra.mxu0 0.0
    %6777 = vmatprep.subr.mxu0 0.0
    %6778 = vmatpush1.msra.mxu0 0.0
    %6779 = vmatprep.subr.mxu0 0.0
    %6780 = vmatpush1.msra.mxu0 0.0
    %6781 = vmatprep.subr.mxu0 0.0
    %6782 = vmatpush1.msra.mxu0 0.0
    %6783 = vmatprep.subr.mxu0 0.0
    %6784 = vmatpush1.msra.mxu0 0.0
    %6785 = vmatprep.subr.mxu0 0.0
    %6786 = vmatpush1.msra.mxu0 0.0
    %6787 = vmatprep.subr.mxu0 0.0
    %6788 = vmatpush1.msra.mxu0 0.0
    %6789 = vmatprep.subr.mxu0 0.0
    %6790 = vmatpush1.msra.mxu0 0.0
    %6791 = vmatprep.subr.mxu0 0.0
    %6792 = vmatpush1.msra.mxu0 0.0
    %6793 = vmatprep.mubr.f32.mxu0 0.0
    %6794 = vmatmul.mubr.f32.gmra.mrb[0].mxu0 %v6715
    %v6795 = vpop.f32.mrb[0].mxu0
    %v6796 = vadd.f32 %v6713, %v6795
    %v6797 = vpop.f32.mrb[0].mxu0
    %6798 = vmatprep.mubr.f32.mxu0 0.0
    %6799 = vmatmul.mubr.f32.gmra.mrb[0].mxu0 %v6718
    %v6800 = vpop.f32.mrb[0].mxu0
    %v6801 = vpop.f32.mrb[0].mxu0
    %6802 = vmatprep.mubr.f32.mxu0 0.0
    %6803 = vmatmul.mubr.f32.gmra.mrb[0].mxu0 %v6721
    %v6804 = vpop.f32.mrb[0].mxu0
    %v6805 = vadd.f32 %v6713, %v6804
    %v6806 = vpop.f32.mrb[0].mxu0
    %6807 = vmatprep.mubr.f32.mxu0 0.0
    %6808 = vmatmul.mubr.f32.gmra.mrb[0].mxu0 %v6724
    %v6809 = vpop.f32.mrb[0].mxu0
    %v6810 = vpop.f32.mrb[0].mxu0
    %6811 = vmatprep.mubr.f32.mxu0 0.0
    %6812 = vmatmul.mubr.f32.gmra.mrb[0].mxu0 %v6727
    %v6813 = vpop.f32.mrb[0].mxu0
    %v6814 = vpop.f32.mrb[0].mxu0
    %6815 = vdwg.mxu0
    %v6816 = vadd.f32 %v6450, %v6796
    %v6817 = vadd.f32 %v6452, %v6805
    %v6818 = vsel %vm650, %v6816, %v6817
    %v6819 = vsel %vm181, %v6818, 0.0
    %6820 = vadd.xlane.f32.xlu0 %v6819
    %v6821 = vpop.xlane.xlu0 %6820
    %v6822 = vmul.f32 %v6821, %v185
    %v6823 = vsub.f32 %v6818, %v6822
    %v6824 = vmul.f32 %v6823, %v6823
    %v6825 = vsel %vm181, %v6824, 0.0
    %6826 = vadd.xlane.f32.xlu0 %v6825
    %v6827 = vpop.xlane.xlu0 %6826
    %v6828 = vmul.f32 %v6827, %v185
    %v6829 = vadd.f32 %v6828, 1e-05
    %v6830 = vrsqrt.pop %v6829
    %v6831 = vmul.f32 %v6823, %v6830
    %v6832 = vlaneseq
    %v6833 = vshrl.u32 %v6832, 7
    %v6834 = vsub.s32 2, %v6833
    %v6835 = vrot.slane %v167, %v6834
    %v6836 = vmul.f32 %v6831, %v6835
    %v6837 = vlaneseq
    %v6838 = vshrl.u32 %v6837, 7
    %v6839 = vsub.s32 3, %v6838
    %v6840 = vrot.slane %v167, %v6839
    %v6841 = vadd.f32 %v6836, %v6840
    %v6842 = vld [vmem:[%s10] sm:$0xff]
    %v6843 = vld [vmem:[%s10 + $0x8] sm:$0xff]
    %v6844 = vld [vmem:[%s10 + $0x10] sm:$0xff]
    %v6845 = vld [vmem:[%s10 + $0x18] sm:$0xff]
    %v6846 = vld [vmem:[%s10 + $0x20] sm:$0x1]
    %v6847 = vlaneseq
    %v6848 = vshrl.u32 %v6847, 7
    %v6849 = vsub.s32 0, %v6848
    %v6850 = vrot.slane %v6846, %v6849
    %v6852 = vsel %vm168, %v6841, 0
    %6854 = vmatprep.subr.mxu0 0.0
    %6855 = vmatpush1.msra.mxu0 %v6842
    %6856 = vmatprep.subr.mxu0 0.0
    %6857 = vmatpush1.msra.mxu0 %v6843
    %6858 = vmatprep.subr.mxu0 0.0
    %6859 = vmatpush1.msra.mxu0 %v6844
    %6860 = vmatprep.subr.mxu0 0.0
    %6861 = vmatpush1.msra.mxu0 %v6845
    %6862 = vmatprep.subr.mxu0 0.0
    %6863 = vmatpush1.msra.mxu0 0.0
    %6864 = vmatprep.subr.mxu0 0.0
    %6865 = vmatpush1.msra.mxu0 0.0
    %6866 = vmatprep.subr.mxu0 0.0
    %6867 = vmatpush1.msra.mxu0 0.0
    %6868 = vmatprep.subr.mxu0 0.0
    %6869 = vmatpush1.msra.mxu0 0.0
    %6870 = vmatprep.subr.mxu0 0.0
    %6871 = vmatpush1.msra.mxu0 0.0
    %6872 = vmatprep.subr.mxu0 0.0
    %6873 = vmatpush1.msra.mxu0 0.0
    %6874 = vmatprep.subr.mxu0 0.0
    %6875 = vmatpush1.msra.mxu0 0.0
    %6876 = vmatprep.subr.mxu0 0.0
    %6877 = vmatpush1.msra.mxu0 0.0
    %6878 = vmatprep.subr.mxu0 0.0
    %6879 = vmatpush1.msra.mxu0 0.0
    %6880 = vmatprep.subr.mxu0 0.0
    %6881 = vmatpush1.msra.mxu0 0.0
    %6882 = vmatprep.subr.mxu0 0.0
    %6883 = vmatpush1.msra.mxu0 0.0
    %6884 = vmatprep.subr.mxu0 0.0
    %6885 = vmatpush1.msra.mxu0 0.0
    %6886 = vmatprep.subr.mxu0 0.0
    %6887 = vmatpush1.msra.mxu0 0.0
    %6888 = vmatprep.subr.mxu0 0.0
    %6889 = vmatpush1.msra.mxu0 0.0
    %6890 = vmatprep.subr.mxu0 0.0
    %6891 = vmatpush1.msra.mxu0 0.0
    %6892 = vmatprep.subr.mxu0 0.0
    %6893 = vmatpush1.msra.mxu0 0.0
    %6894 = vmatprep.subr.mxu0 0.0
    %6895 = vmatpush1.msra.mxu0 0.0
    %6896 = vmatprep.subr.mxu0 0.0
    %6897 = vmatpush1.msra.mxu0 0.0
    %6898 = vmatprep.subr.mxu0 0.0
    %6899 = vmatpush1.msra.mxu0 0.0
    %6900 = vmatprep.subr.mxu0 0.0
    %6901 = vmatpush1.msra.mxu0 0.0
    %6902 = vmatprep.subr.mxu0 0.0
    %6903 = vmatpush1.msra.mxu0 0.0
    %6904 = vmatprep.subr.mxu0 0.0
    %6905 = vmatpush1.msra.mxu0 0.0
    %6906 = vmatprep.subr.mxu0 0.0
    %6907 = vmatpush1.msra.mxu0 0.0
    %6908 = vmatprep.subr.mxu0 0.0
    %6909 = vmatpush1.msra.mxu0 0.0
    %6910 = vmatprep.subr.mxu0 0.0
    %6911 = vmatpush1.msra.mxu0 0.0
    %6912 = vmatprep.subr.mxu0 0.0
    %6913 = vmatpush1.msra.mxu0 0.0
    %6914 = vmatprep.subr.mxu0 0.0
    %6915 = vmatpush1.msra.mxu0 0.0
    %6916 = vmatprep.subr.mxu0 0.0
    %6917 = vmatpush1.msra.mxu0 0.0
    %6918 = vmatprep.mubr.f32.mxu0 0.0
    %6919 = vmatmul.mubr.f32.gmra.mrb[0].mxu0 %v6852
    %v6920 = vpop.f32.mrb[0].mxu0
    %v6921 = vadd.f32 %v6850, %v6920
    %v6922 = vpop.f32.mrb[0].mxu0
    %6923 = vdwg.mxu0
    %6924 = vst [vmem:[#allocation2] sm:$0x3] %v6921
    // Predicated region
    $region46: #{vit_forward.1} parent=1 // pred_check
      _
    $region47: #{vit_forward.1} parent=1 // pred_check_branch
      %6926 = sbr.rel (0) target = $region49
    $region48: #{vit_forward.1} parent=1 // pred_region
      %s6928 = ssub.s32 32, 32
      %6929 = vsyncadd [#allocation3], %s6928
      %s6931 = sshll.u32 [#allocation2], 4
      %s6932 = int_to_ptr.vmem [resolvable:$true] %s6931
      %6934 = dma.vmem_to_hbm [thread:$0]  %s6932, 32, %s11, [#allocation3]
    $region49: #{vit_forward.1} parent=1 // pred_fallthru
      _
    // Predicated region
    $region50: #{vit_forward.1} parent=1 // pred_check
      _
    $region51: #{vit_forward.1} parent=1 // pred_check_branch
      %6936 = sbr.rel (0) target = $region53
    $region52: #{vit_forward.1} parent=1 // pred_region
      %6937 = dma.done [#allocation3], 32
    $region53: #{vit_forward.1} parent=1 // pred_fallthru
      _
    %6938 = vsyncpa [#allocation3], 1

</llo_original>
